<compile_context>
chip_gen: v7x
topology: tpu7x:2x2x1
jax: 0.10.0
libtpu: 0.0.40
codegen_flags: <defaults>
</compile_context>

<pallas_src>
import math
import functools

import jax
import jax.numpy as jnp
from jax.experimental import pallas as pl
from jax.experimental.pallas import tpu as pltpu


DP = 128   # lane-padded per-head dim (128-aligned head slices / MXU K dim)


# ----------------------------- kernel helpers -------------------------------


def _layer_norm(z, gamma, beta, eps=1e-5):
    mu = jnp.mean(z, axis=-1, keepdims=True)
    var = jnp.mean((z - mu) ** 2, axis=-1, keepdims=True)
    return (z - mu) * jax.lax.rsqrt(var + eps) * gamma + beta


def _time_shift(z, o):
    # y[t] = z[t + o] with zeros outside [0, T)  (same-padded conv tap, sublanes).
    if o == 0:
        return z
    T = z.shape[0]
    zeros = jnp.zeros((abs(o), z.shape[1]), z.dtype)
    if o > 0:
        return jnp.concatenate([z[o:, :], zeros], axis=0)
    return jnp.concatenate([zeros, z[:T + o, :]], axis=0)


# ------------------------------- the kernel ----------------------------------


def encoder_kernel(x_ref, mask_ref, krow_ref, band_ref,
                   wqkv_ref, bqkv_ref, wo_ref, vecs_ref, ekT_ref, ev_ref,
                   w1_ref, cb1_ref, w2_ref, wp_ref, bp_ref,
                   xout_ref, st_ref, xc_ref,
                   *, n_heads, d_head, ksize, window):
    bf16 = jnp.bfloat16
    f32 = jnp.float32
    l = pl.program_id(1)
    n_layers = pl.num_programs(1)

    nh = n_heads
    nrel = 2 * window + 1
    M = max(8, pl.next_power_of_2(nrel))   # routing modulus (static)
    assert M >= nrel

    @pl.when(l == 0)
    def _():
        xc_ref[...] = x_ref[...]            # masked embeddings -> VMEM carry

    x = xc_ref[...]                         # (T, H) f32, resident across layers
    mask = mask_ref[...]                    # (T, 1)
    krow = krow_ref[...]                    # (1, T)
    band = band_ref[...]                    # (T, T) 0/1, |s - t| <= window
    T, H = x.shape
    scale = 1.0 / math.sqrt(d_head)

    # ---------------- fused QKV projection (one MXU matmul) ------------------
    qkv = jnp.dot(x.astype(bf16), wqkv_ref[...],
                  preferred_element_type=f32) + bqkv_ref[...]       # (T, 3*nh*DP)
    qh = jnp.stack([qkv[:, (0 * nh + h) * DP:(0 * nh + h + 1) * DP]
                    for h in range(nh)]) * scale                    # (nh, T, DP)
    kh = jnp.stack([qkv[:, (1 * nh + h) * DP:(1 * nh + h + 1) * DP]
                    for h in range(nh)])
    vh = jnp.stack([qkv[:, (2 * nh + h) * DP:(2 * nh + h + 1) * DP]
                    for h in range(nh)])
    qh_b = qh.astype(bf16)

    scores = jnp.einsum('htd,hsd->hts', qh_b, kh.astype(bf16),
                        preferred_element_type=f32)                 # (nh, T, T)

    # ------- relative-position key bias via mod-M slot routing (MXU spread) --
    # relk[h,t,j] = (q/sqrt(d))[h,t,:] . emb_rel_k[j,:]
    relk = jnp.dot(qh_b.reshape(nh * T, DP), ekT_ref[...],
                   preferred_element_type=f32).reshape(nh, T, nrel)
    row_tm = jax.lax.broadcasted_iota(jnp.int32, (T, M), 0)
    col_tm = jax.lax.broadcasted_iota(jnp.int32, (T, M), 1)
    slot = jnp.remainder(col_tm - row_tm, M)                        # (T, M)
    tap_masks = [(slot == j).astype(f32) for j in range(nrel)]      # tiny (T, M)
    relkm = tap_masks[0][None] * relk[:, :, 0:1]
    for j in range(1, nrel):
        relkm = relkm + tap_masks[j][None] * relk[:, :, j:j + 1]    # (nh, T, M)
    row_mt = jax.lax.broadcasted_iota(jnp.int32, (M, T), 0)
    col_mt = jax.lax.broadcasted_iota(jnp.int32, (M, T), 1)
    spread = (jnp.remainder(col_mt + window, M) == row_mt).astype(bf16)  # (M, T)
    bias = jnp.dot(relkm.reshape(nh * T, M).astype(bf16), spread,
                   preferred_element_type=f32).reshape(nh, T, T)
    scores = scores + bias * band[None]

    # key-only mask (masked query rows are zeroed downstream, as in reference)
    scores = jnp.where(krow[None] > 0.0, scores, -1e4)

    smax = jnp.max(scores, axis=-1, keepdims=True)
    p = jnp.exp(scores - smax)
    p = p * pl.reciprocal(jnp.sum(p, axis=-1, keepdims=True), approx=True)
    # TODO(synk): attention dropout (p_dropout) omitted -- eval-mode identity.

    o = jnp.einsum('hts,hsd->htd', p.astype(bf16), vh.astype(bf16),
                   preferred_element_type=f32)                      # (nh, T, DP)

    # ------- relative-position value term: band of p -> slots (MXU) -> taps ---
    route = (jnp.remainder(row_tm + window, M) == col_tm).astype(bf16)   # (T, M)
    prm = jnp.dot((p * band[None]).reshape(nh * T, T).astype(bf16), route,
                  preferred_element_type=f32).reshape(nh, T, M)
    pr = jnp.concatenate(
        [jnp.sum(prm * tap_masks[j][None], axis=-1, keepdims=True)
         for j in range(nrel)], axis=-1)                            # (nh, T, nrel)
    o = o + jnp.dot(pr.reshape(nh * T, nrel).astype(bf16), ev_ref[...],
                    preferred_element_type=f32).reshape(nh, T, DP)

    # ------- output projection: per-head accumulation (128-aligned) ----------
    y = jnp.dot(o[0].astype(bf16), wo_ref[0], preferred_element_type=f32)
    for h in range(1, nh):
        y = y + jnp.dot(o[h].astype(bf16), wo_ref[h], preferred_element_type=f32)
    y = y + vecs_ref[0:1, :]                                        # + bo

    x = _layer_norm(x + y, vecs_ref[1:2, :], vecs_ref[2:3, :])

    # ------- FFN: k accumulated matmuls over sublane time-shifts -------------
    pad_l = (ksize - 1) // 2
    xmb = (x * mask).astype(bf16)
    h1 = jnp.dot(_time_shift(xmb, -pad_l), w1_ref[0], preferred_element_type=f32)
    for tau in range(1, ksize):
        h1 = h1 + jnp.dot(_time_shift(xmb, tau - pad_l), w1_ref[tau],
                          preferred_element_type=f32)
    h1b = (jnp.maximum(h1 + cb1_ref[...], 0.0) * mask).astype(bf16)
    y = jnp.dot(_time_shift(h1b, -pad_l), w2_ref[0], preferred_element_type=f32)
    for tau in range(1, ksize):
        y = y + jnp.dot(_time_shift(h1b, tau - pad_l), w2_ref[tau],
                        preferred_element_type=f32)
    y = (y + vecs_ref[3:4, :]) * mask

    x = _layer_norm(x + y, vecs_ref[4:5, :], vecs_ref[5:6, :])
    xc_ref[...] = x

    # ------- last layer: fused trailing x*mask + 1x1-conv projection head ----
    @pl.when(l == n_layers - 1)
    def _():
        xm = x * mask
        xout_ref[...] = xm
        st = jnp.dot(xm.astype(bf16), wp_ref[...],
                     preferred_element_type=f32) + bp_ref[...]
        st_ref[...] = st * mask


# ------------------------------ spec helpers ----------------------------------


def _spec_batch(a):
    nd = a.ndim - 1
    return pl.BlockSpec((None,) + tuple(a.shape[1:]),
                        lambda b, l, _n=nd: (b,) + (0,) * _n)


def _spec_layer(a):
    nd = a.ndim - 1
    return pl.BlockSpec((None,) + tuple(a.shape[1:]),
                        lambda b, l, _n=nd: (l,) + (0,) * _n)


def _spec_const(a):
    nd = a.ndim
    return pl.BlockSpec(tuple(a.shape), lambda b, l, _n=nd: (0,) * _n)


# ------------------------------ JAX wrapper ------------------------------------


def text_encoder_forward(tokens, x_lengths, packed, *, n_heads, ksize, window,
                         out_ch):
    B, T = tokens.shape
    H = packed["emb"].shape[1]
    n_layers = packed["wqkv"].shape[0]
    P = packed["wp"].shape[1]
    d_head = H // n_heads
    T_pad = ((T + 127) // 128) * 128

    # Embedding lookup (data-dependent gather kept in plain JAX) + scale.
    x = jnp.take(packed["emb"], tokens, axis=0) * math.sqrt(H)      # (B, T, H)
    x = jnp.pad(x, ((0, 0), (0, T_pad - T), (0, 0)))

    mask = (jnp.arange(T_pad)[None, :] < x_lengths[:, None]).astype(jnp.float32)
    mask3 = mask[:, :, None]                                        # (B, Tp, 1)
    krow = mask[:, None, :]                                         # (B, 1, Tp)
    x = x * mask3

    pos = jnp.arange(T_pad)
    band = (jnp.abs(pos[None, :] - pos[:, None]) <= window).astype(jnp.float32)

    kernel = functools.partial(encoder_kernel, n_heads=n_heads, d_head=d_head,
                               ksize=ksize, window=window)

    batch_in = [x, mask3, krow]
    consts1 = [band]
    layer_in = [packed["wqkv"], packed["bqkv"], packed["wo"], packed["vecs"],
                packed["ekT"], packed["ev"], packed["w1"], packed["cb1"],
                packed["w2"]]
    consts2 = [packed["wp"], packed["bp"]]

    in_specs = ([_spec_batch(a) for a in batch_in]
                + [_spec_const(a) for a in consts1]
                + [_spec_layer(a) for a in layer_in]
                + [_spec_const(a) for a in consts2])

    xm, stats = pl.pallas_call(
        kernel,
        out_shape=(jax.ShapeDtypeStruct((B, T_pad, H), jnp.float32),
                   jax.ShapeDtypeStruct((B, T_pad, P), jnp.float32)),
        grid=(B, n_layers),
        in_specs=in_specs,
        out_specs=(pl.BlockSpec((None, T_pad, H), lambda b, l: (b, 0, 0)),
                   pl.BlockSpec((None, T_pad, P), lambda b, l: (b, 0, 0))),
        scratch_shapes=[pltpu.VMEM((T_pad, H), jnp.float32)],
        compiler_params=pltpu.CompilerParams(
            dimension_semantics=("parallel", "arbitrary"),
            vmem_limit_bytes=64 * 1024 * 1024),
    )(*batch_in, *consts1, *layer_in, *consts2)

    xm = xm[:, :T, :]
    stats = stats[:, :T, :2 * out_ch]
    m = stats[..., :out_ch]
    logs = stats[..., out_ch:]
    x_mask = mask3[:, :T, :]

    # Back to PyTorch NCT layout.
    return (jnp.transpose(xm, (0, 2, 1)),
            jnp.transpose(m, (0, 2, 1)),
            jnp.transpose(logs, (0, 2, 1)),
            jnp.transpose(x_mask, (0, 2, 1)))


# --------------------- parameter packing (hoisted, one-time) -------------------


def pack_params(params, *, n_heads):
    bf16 = jnp.bfloat16
    H = params["emb"].shape[1]
    d = H // n_heads

    def pad_head_cols(w):          # (R, n_heads*d) -> (R, n_heads*DP)
        return jnp.concatenate(
            [jnp.pad(w[:, h * d:(h + 1) * d], ((0, 0), (0, DP - d)))
             for h in range(n_heads)], axis=1)

    wqkv, bqkv, wo, vecs, ekT, ev, w1, cb1, w2 = ([] for _ in range(9))
    for p in params["layers"]:
        wqkv.append(jnp.concatenate([pad_head_cols(p["wq"]), pad_head_cols(p["wk"]),
                                     pad_head_cols(p["wv"])], axis=1).astype(bf16))
        bqkv.append(jnp.concatenate([pad_head_cols(p["bq"]), pad_head_cols(p["bk"]),
                                     pad_head_cols(p["bv"])], axis=1))
        wo.append(jnp.stack([jnp.pad(p["wo"][h * d:(h + 1) * d, :],
                                     ((0, DP - d), (0, 0)))
                             for h in range(n_heads)]).astype(bf16))
        vecs.append(jnp.concatenate([p["bo"], p["g1"], p["be1"],
                                     p["cb2"], p["g2"], p["be2"]], axis=0))
        ekT.append(jnp.pad(p["emb_rel_k"], ((0, 0), (0, DP - d))).T.astype(bf16))
        ev.append(jnp.pad(p["emb_rel_v"], ((0, 0), (0, DP - d))).astype(bf16))
        w1.append(p["w1"].astype(bf16))
        cb1.append(p["cb1"])
        w2.append(p["w2"].astype(bf16))

    C2 = params["proj_w"].shape[1]
    P = ((C2 + 127) // 128) * 128
    return dict(
        emb=params["emb"],
        wqkv=jnp.stack(wqkv), bqkv=jnp.stack(bqkv), wo=jnp.stack(wo),
        vecs=jnp.stack(vecs), ekT=jnp.stack(ekT), ev=jnp.stack(ev),
        w1=jnp.stack(w1), cb1=jnp.stack(cb1), w2=jnp.stack(w2),
        wp=jnp.pad(params["proj_w"], ((0, 0), (0, P - C2))).astype(bf16),
        bp=jnp.pad(params["proj_b"], ((0, 0), (0, P - C2))),
    )


# ------------------------------ parameter init ---------------------------------


def init_params(key, *, n_vocab, H, F, out_ch, n_heads, n_layers, ksize, window):
    d = H // n_heads
    keys = jax.random.split(key, 3 + n_layers)
    params = {
        "emb": jax.random.normal(keys[0], (n_vocab, H)) * (H ** -0.5),
        "proj_w": jax.random.normal(keys[1], (H, 2 * out_ch)) * (H ** -0.5),
        "proj_b": jax.random.normal(keys[2], (1, 2 * out_ch)) * 0.01,
        "layers": [],
    }
    for li in range(n_layers):
        lk = jax.random.split(keys[3 + li], 8)
        params["layers"].append(dict(
            wq=jax.random.normal(lk[0], (H, H)) * (H ** -0.5), bq=jnp.zeros((1, H)),
            wk=jax.random.normal(lk[1], (H, H)) * (H ** -0.5), bk=jnp.zeros((1, H)),
            wv=jax.random.normal(lk[2], (H, H)) * (H ** -0.5), bv=jnp.zeros((1, H)),
            wo=jax.random.normal(lk[3], (H, H)) * (H ** -0.5), bo=jnp.zeros((1, H)),
            emb_rel_k=jax.random.normal(lk[4], (2 * window + 1, d)) * (d ** -0.5),
            emb_rel_v=jax.random.normal(lk[5], (2 * window + 1, d)) * (d ** -0.5),
            g1=jnp.ones((1, H)), be1=jnp.zeros((1, H)),
            w1=jax.random.normal(lk[6], (ksize, H, F)) * ((H * ksize) ** -0.5),
            cb1=jnp.zeros((1, F)),
            w2=jax.random.normal(lk[7], (ksize, F, H)) * ((F * ksize) ** -0.5),
            cb2=jnp.zeros((1, H)),
            g2=jnp.ones((1, H)), be2=jnp.zeros((1, H)),
        ))
    return params


# ----------------------------------- main --------------------------------------


if __name__ == "__main__":
    # TextEncoder(n_vocab, out_channels, hidden_channels, filter_channels,
    #             n_heads, n_layers, kernel_size, p_dropout)
    n_vocab, out_ch, H, F = 40, 4, 32, 64
    n_heads, n_layers, ksize, p_dropout = 2, 2, 3, 0.1
    window = 4                      # VITS attentions.Encoder default window_size
    B, T = 2, 8

    key = jax.random.PRNGKey(0)
    k_par, k_tok = jax.random.split(key)
    params = init_params(k_par, n_vocab=n_vocab, H=H, F=F, out_ch=out_ch,
                         n_heads=n_heads, n_layers=n_layers, ksize=ksize,
                         window=window)
    packed = pack_params(params, n_heads=n_heads)          # one-time packing

    tokens = jax.random.randint(k_tok, (B, T), 0, n_vocab, dtype=jnp.int32)
    x_lengths = jnp.array([T, 5], dtype=jnp.int32)

    fwd = jax.jit(functools.partial(text_encoder_forward, n_heads=n_heads,
                                    ksize=ksize, window=window, out_ch=out_ch))
    x, m, logs, x_mask = fwd(tokens, x_lengths, packed)
    jax.block_until_ready((x, m, logs, x_mask))

    assert x.shape == (B, H, T)
    assert m.shape == (B, out_ch, T)
    assert logs.shape == (B, out_ch, T)
    assert x_mask.shape == (B, 1, T)
    assert bool(jnp.all(jnp.isfinite(x))) and bool(jnp.all(jnp.isfinite(m)))
    print("KERNEL_OK")
</pallas_src>

<mosaic_0001>
module attributes {stable_mosaic.version = 11 : i64} {
  func.func @encoder_kernel(%arg0: i32, %arg1: i32, %arg2: memref<1x128x32xf32, #tpu.memory_space<vmem>>, %arg3: memref<1x128x1xf32, #tpu.memory_space<vmem>>, %arg4: memref<1x1x128xf32, #tpu.memory_space<vmem>>, %arg5: memref<128x128xf32, #tpu.memory_space<vmem>>, %arg6: memref<1x32x768xbf16, #tpu.memory_space<vmem>>, %arg7: memref<1x1x768xf32, #tpu.memory_space<vmem>>, %arg8: memref<1x2x128x32xbf16, #tpu.memory_space<vmem>>, %arg9: memref<1x6x32xf32, #tpu.memory_space<vmem>>, %arg10: memref<1x128x9xbf16, #tpu.memory_space<vmem>>, %arg11: memref<1x9x128xbf16, #tpu.memory_space<vmem>>, %arg12: memref<1x3x32x64xbf16, #tpu.memory_space<vmem>>, %arg13: memref<1x1x64xf32, #tpu.memory_space<vmem>>, %arg14: memref<1x3x64x32xbf16, #tpu.memory_space<vmem>>, %arg15: memref<32x128xbf16, #tpu.memory_space<vmem>>, %arg16: memref<1x128xf32, #tpu.memory_space<vmem>>, %arg17: memref<1x128x32xf32, #tpu.memory_space<vmem>>, %arg18: memref<1x128x128xf32, #tpu.memory_space<vmem>>, %arg19: memref<128x32xf32, #tpu.memory_space<vmem>>) attributes {dimension_semantics = [#tpu.dimension_semantics<parallel>, #tpu.dimension_semantics<arbitrary>], iteration_bounds = array<i64: 2, 2>, scalar_prefetch = 0 : i64, scratch_operands = 1 : i64, tpu.core_type = #tpu.core_type<tc>, window_params = [{transform_indices = @transform_0, window_bounds = array<i64: 1, 128, 32>}, {transform_indices = @transform_1, window_bounds = array<i64: 1, 128, 1>}, {transform_indices = @transform_2, window_bounds = array<i64: 1, 1, 128>}, {pipeline_mode = #tpu.pipeline_mode<synchronous>, transform_indices = @transform_3, window_bounds = array<i64: 128, 128>}, {transform_indices = @transform_4, window_bounds = array<i64: 1, 32, 768>}, {transform_indices = @transform_5, window_bounds = array<i64: 1, 1, 768>}, {transform_indices = @transform_6, window_bounds = array<i64: 1, 2, 128, 32>}, {transform_indices = @transform_7, window_bounds = array<i64: 1, 6, 32>}, {transform_indices = @transform_8, window_bounds = array<i64: 1, 128, 9>}, {transform_indices = @transform_9, window_bounds = array<i64: 1, 9, 128>}, {transform_indices = @transform_10, window_bounds = array<i64: 1, 3, 32, 64>}, {transform_indices = @transform_11, window_bounds = array<i64: 1, 1, 64>}, {transform_indices = @transform_12, window_bounds = array<i64: 1, 3, 64, 32>}, {pipeline_mode = #tpu.pipeline_mode<synchronous>, transform_indices = @transform_13, window_bounds = array<i64: 32, 128>}, {pipeline_mode = #tpu.pipeline_mode<synchronous>, transform_indices = @transform_14, window_bounds = array<i64: 1, 128>}, {transform_indices = @transform_15, window_bounds = array<i64: 1, 128, 32>}, {transform_indices = @transform_16, window_bounds = array<i64: 1, 128, 128>}]} {
    %c0_i32 = arith.constant 0 : i32
    %0 = arith.cmpi eq, %arg1, %c0_i32 : i32
    %1 = arith.extui %0 : i1 to i32
    %c0_i32_0 = arith.constant 0 : i32
    %2 = arith.cmpi ne, %1, %c0_i32_0 : i32
    scf.if %2 {
      %c0_137 = arith.constant 0 : index
      %c0_138 = arith.constant 0 : index
      %c0_139 = arith.constant 0 : index
      %411 = vector.load %arg2[%c0_137, %c0_138, %c0_139] : memref<1x128x32xf32, #tpu.memory_space<vmem>>, vector<1x128x32xf32>
      %412 = vector.shape_cast %411 : vector<1x128x32xf32> to vector<128x32xf32>
      %c0_140 = arith.constant 0 : index
      %c0_141 = arith.constant 0 : index
      %413 = vector.load %arg19[%c0_140, %c0_141] : memref<128x32xf32, #tpu.memory_space<vmem>>, vector<128x32xf32>
      tpu.vector_store %arg19[%c0_140, %c0_141], %412 {strides = array<i32>} : memref<128x32xf32, #tpu.memory_space<vmem>>, vector<128x32xf32>,
    } else {
    }
    %c0 = arith.constant 0 : index
    %c0_1 = arith.constant 0 : index
    %3 = vector.load %arg19[%c0, %c0_1] : memref<128x32xf32, #tpu.memory_space<vmem>>, vector<128x32xf32>
    %c0_2 = arith.constant 0 : index
    %c0_3 = arith.constant 0 : index
    %c0_4 = arith.constant 0 : index
    %4 = vector.load %arg3[%c0_2, %c0_3, %c0_4] : memref<1x128x1xf32, #tpu.memory_space<vmem>>, vector<1x128x1xf32>
    %5 = vector.shape_cast %4 : vector<1x128x1xf32> to vector<128x1xf32>
    %c0_5 = arith.constant 0 : index
    %c0_6 = arith.constant 0 : index
    %c0_7 = arith.constant 0 : index
    %6 = vector.load %arg4[%c0_5, %c0_6, %c0_7] : memref<1x1x128xf32, #tpu.memory_space<vmem>>, vector<1x1x128xf32>
    %7 = vector.shape_cast %6 : vector<1x1x128xf32> to vector<1x128xf32>
    %c0_8 = arith.constant 0 : index
    %c0_9 = arith.constant 0 : index
    %8 = vector.load %arg5[%c0_8, %c0_9] : memref<128x128xf32, #tpu.memory_space<vmem>>, vector<128x128xf32>
    %9 = arith.truncf %3 : vector<128x32xf32> to vector<128x32xbf16>
    %c0_10 = arith.constant 0 : index
    %c0_11 = arith.constant 0 : index
    %c0_12 = arith.constant 0 : index
    %10 = vector.load %arg6[%c0_10, %c0_11, %c0_12] : memref<1x32x768xbf16, #tpu.memory_space<vmem>>, vector<1x32x768xbf16>
    %11 = vector.shape_cast %10 : vector<1x32x768xbf16> to vector<32x768xbf16>
    %cst = arith.constant dense<0.000000e+00> : vector<128x768xf32>
    %12 = tpu.matmul %9, %11, %cst {dimension_numbers = #tpu.dot_dimension_numbers<[1], [0], [0], [1], [0, 0, 1, 1], [], []>} : vector<128x32xbf16>, vector<32x768xbf16>, vector<128x768xf32> -> vector<128x768xf32>
    %c0_13 = arith.constant 0 : index
    %c0_14 = arith.constant 0 : index
    %c0_15 = arith.constant 0 : index
    %13 = vector.load %arg7[%c0_13, %c0_14, %c0_15] : memref<1x1x768xf32, #tpu.memory_space<vmem>>, vector<1x1x768xf32>
    %14 = vector.shape_cast %13 : vector<1x1x768xf32> to vector<1x768xf32>
    %15 = vector.broadcast %14 : vector<1x768xf32> to vector<128x768xf32>
    %16 = arith.addf %12, %15 : vector<128x768xf32>
    %17 = vector.extract_strided_slice %16 {offsets = [0, 0], sizes = [128, 128], strides = [1, 1]} : vector<128x768xf32> to vector<128x128xf32>
    %18 = vector.extract_strided_slice %16 {offsets = [0, 128], sizes = [128, 128], strides = [1, 1]} : vector<128x768xf32> to vector<128x128xf32>
    %19 = vector.shape_cast %17 : vector<128x128xf32> to vector<1x128x128xf32>
    %20 = vector.shape_cast %18 : vector<128x128xf32> to vector<1x128x128xf32>
    %21 = tpu.concatenate %19, %20 in 0 : vector<1x128x128xf32>, vector<1x128x128xf32> -> vector<2x128x128xf32>
    %cst_16 = arith.constant 2.500000e-01 : f32
    %22 = vector.broadcast %cst_16 : f32 to vector<2x128x128xf32>
    %23 = arith.mulf %21, %22 : vector<2x128x128xf32>
    %24 = vector.extract_strided_slice %16 {offsets = [0, 256], sizes = [128, 128], strides = [1, 1]} : vector<128x768xf32> to vector<128x128xf32>
    %25 = vector.extract_strided_slice %16 {offsets = [0, 384], sizes = [128, 128], strides = [1, 1]} : vector<128x768xf32> to vector<128x128xf32>
    %26 = vector.shape_cast %24 : vector<128x128xf32> to vector<1x128x128xf32>
    %27 = vector.shape_cast %25 : vector<128x128xf32> to vector<1x128x128xf32>
    %28 = tpu.concatenate %26, %27 in 0 : vector<1x128x128xf32>, vector<1x128x128xf32> -> vector<2x128x128xf32>
    %29 = vector.extract_strided_slice %16 {offsets = [0, 512], sizes = [128, 128], strides = [1, 1]} : vector<128x768xf32> to vector<128x128xf32>
    %30 = vector.extract_strided_slice %16 {offsets = [0, 640], sizes = [128, 128], strides = [1, 1]} : vector<128x768xf32> to vector<128x128xf32>
    %31 = vector.shape_cast %29 : vector<128x128xf32> to vector<1x128x128xf32>
    %32 = vector.shape_cast %30 : vector<128x128xf32> to vector<1x128x128xf32>
    %33 = tpu.concatenate %31, %32 in 0 : vector<1x128x128xf32>, vector<1x128x128xf32> -> vector<2x128x128xf32>
    %34 = arith.truncf %23 : vector<2x128x128xf32> to vector<2x128x128xbf16>
    %35 = arith.truncf %28 : vector<2x128x128xf32> to vector<2x128x128xbf16>
    "tpu.trace_start"() <{level = 10 : i32, message = "htd,hsd->hts"}> : () -> ()
    %cst_17 = arith.constant dense<0.000000e+00> : vector<2x128x128xf32>
    %36 = tpu.matmul %34, %35, %cst_17 {dimension_numbers = #tpu.dot_dimension_numbers<[2], [2], [1], [1], [0, 0, 0, 1, 1, 1], [0], [0]>} : vector<2x128x128xbf16>, vector<2x128x128xbf16>, vector<2x128x128xf32> -> vector<2x128x128xf32>
    "tpu.trace_stop"() : () -> ()
    %37 = vector.shape_cast %34 : vector<2x128x128xbf16> to vector<256x128xbf16>
    %c0_18 = arith.constant 0 : index
    %c0_19 = arith.constant 0 : index
    %c0_20 = arith.constant 0 : index
    %38 = vector.load %arg10[%c0_18, %c0_19, %c0_20] : memref<1x128x9xbf16, #tpu.memory_space<vmem>>, vector<1x128x9xbf16>
    %39 = vector.shape_cast %38 : vector<1x128x9xbf16> to vector<128x9xbf16>
    %cst_21 = arith.constant dense<0.000000e+00> : vector<256x9xf32>
    %40 = tpu.matmul %37, %39, %cst_21 {dimension_numbers = #tpu.dot_dimension_numbers<[1], [0], [0], [1], [0, 0, 1, 1], [], []>} : vector<256x128xbf16>, vector<128x9xbf16>, vector<256x9xf32> -> vector<256x9xf32>
    %41 = vector.shape_cast %40 : vector<256x9xf32> to vector<2x128x9xf32>
    %42 = tpu.iota {dimensions = array<i32: 0>} : vector<128x16xi32>
    %43 = tpu.iota {dimensions = array<i32: 1>} : vector<128x16xi32>
    %44 = arith.subi %43, %42 : vector<128x16xi32>
    %c16_i32 = arith.constant 16 : i32
    %c0_i32_22 = arith.constant 0 : i32
    %45 = arith.cmpi eq, %c16_i32, %c0_i32_22 : i32
    %c1_i32 = arith.constant 1 : i32
    %46 = arith.select %45, %c1_i32, %c16_i32 : i32
    %47 = vector.broadcast %46 : i32 to vector<128x16xi32>
    %48 = arith.remsi %44, %47 : vector<128x16xi32>
    %c0_i32_23 = arith.constant 0 : i32
    %49 = vector.broadcast %c0_i32_23 : i32 to vector<128x16xi32>
    %50 = arith.cmpi ne, %48, %49 : vector<128x16xi32>
    %c0_i32_24 = arith.constant 0 : i32
    %51 = vector.broadcast %c0_i32_24 : i32 to vector<128x16xi32>
    %52 = arith.cmpi slt, %48, %51 : vector<128x16xi32>
    %c0_i32_25 = arith.constant 0 : i32
    %53 = arith.cmpi slt, %46, %c0_i32_25 : i32
    %54 = vector.broadcast %53 : i1 to vector<128x16xi1>
    %55 = vector.broadcast %54 : vector<128x16xi1> to vector<128x16xi1>
    %56 = arith.xori %52, %55 : vector<128x16xi1>
    %57 = arith.andi %56, %50 : vector<128x16xi1>
    %58 = vector.broadcast %46 : i32 to vector<128x16xi32>
    %59 = arith.addi %48, %58 : vector<128x16xi32>
    %60 = arith.select %57, %59, %48 : vector<128x16xi1>, vector<128x16xi32>
    %c0_i32_26 = arith.constant 0 : i32
    %61 = vector.broadcast %c0_i32_26 : i32 to vector<128x16xi32>
    %62 = arith.cmpi eq, %60, %61 : vector<128x16xi32>
    %63 = arith.extui %62 : vector<128x16xi1> to vector<128x16xi32>
    %64 = arith.sitofp %63 : vector<128x16xi32> to vector<128x16xf32>
    %c1_i32_27 = arith.constant 1 : i32
    %65 = vector.broadcast %c1_i32_27 : i32 to vector<128x16xi32>
    %66 = arith.cmpi eq, %60, %65 : vector<128x16xi32>
    %67 = arith.extui %66 : vector<128x16xi1> to vector<128x16xi32>
    %68 = arith.sitofp %67 : vector<128x16xi32> to vector<128x16xf32>
    %c2_i32 = arith.constant 2 : i32
    %69 = vector.broadcast %c2_i32 : i32 to vector<128x16xi32>
    %70 = arith.cmpi eq, %60, %69 : vector<128x16xi32>
    %71 = arith.extui %70 : vector<128x16xi1> to vector<128x16xi32>
    %72 = arith.sitofp %71 : vector<128x16xi32> to vector<128x16xf32>
    %c3_i32 = arith.constant 3 : i32
    %73 = vector.broadcast %c3_i32 : i32 to vector<128x16xi32>
    %74 = arith.cmpi eq, %60, %73 : vector<128x16xi32>
    %75 = arith.extui %74 : vector<128x16xi1> to vector<128x16xi32>
    %76 = arith.sitofp %75 : vector<128x16xi32> to vector<128x16xf32>
    %c4_i32 = arith.constant 4 : i32
    %77 = vector.broadcast %c4_i32 : i32 to vector<128x16xi32>
    %78 = arith.cmpi eq, %60, %77 : vector<128x16xi32>
    %79 = arith.extui %78 : vector<128x16xi1> to vector<128x16xi32>
    %80 = arith.sitofp %79 : vector<128x16xi32> to vector<128x16xf32>
    %c5_i32 = arith.constant 5 : i32
    %81 = vector.broadcast %c5_i32 : i32 to vector<128x16xi32>
    %82 = arith.cmpi eq, %60, %81 : vector<128x16xi32>
    %83 = arith.extui %82 : vector<128x16xi1> to vector<128x16xi32>
    %84 = arith.sitofp %83 : vector<128x16xi32> to vector<128x16xf32>
    %c6_i32 = arith.constant 6 : i32
    %85 = vector.broadcast %c6_i32 : i32 to vector<128x16xi32>
    %86 = arith.cmpi eq, %60, %85 : vector<128x16xi32>
    %87 = arith.extui %86 : vector<128x16xi1> to vector<128x16xi32>
    %88 = arith.sitofp %87 : vector<128x16xi32> to vector<128x16xf32>
    %c7_i32 = arith.constant 7 : i32
    %89 = vector.broadcast %c7_i32 : i32 to vector<128x16xi32>
    %90 = arith.cmpi eq, %60, %89 : vector<128x16xi32>
    %91 = arith.extui %90 : vector<128x16xi1> to vector<128x16xi32>
    %92 = arith.sitofp %91 : vector<128x16xi32> to vector<128x16xf32>
    %c8_i32 = arith.constant 8 : i32
    %93 = vector.broadcast %c8_i32 : i32 to vector<128x16xi32>
    %94 = arith.cmpi eq, %60, %93 : vector<128x16xi32>
    %95 = arith.extui %94 : vector<128x16xi1> to vector<128x16xi32>
    %96 = arith.sitofp %95 : vector<128x16xi32> to vector<128x16xf32>
    %97 = vector.shape_cast %64 : vector<128x16xf32> to vector<1x128x16xf32>
    %98 = vector.extract_strided_slice %41 {offsets = [0, 0, 0], sizes = [2, 128, 1], strides = [1, 1, 1]} : vector<2x128x9xf32> to vector<2x128x1xf32>
    %99 = vector.broadcast %97 : vector<1x128x16xf32> to vector<2x128x16xf32>
    %100 = vector.broadcast %98 : vector<2x128x1xf32> to vector<2x128x16xf32>
    %101 = arith.mulf %99, %100 : vector<2x128x16xf32>
    %102 = vector.shape_cast %68 : vector<128x16xf32> to vector<1x128x16xf32>
    %103 = vector.extract_strided_slice %41 {offsets = [0, 0, 1], sizes = [2, 128, 1], strides = [1, 1, 1]} : vector<2x128x9xf32> to vector<2x128x1xf32>
    %104 = vector.broadcast %102 : vector<1x128x16xf32> to vector<2x128x16xf32>
    %105 = vector.broadcast %103 : vector<2x128x1xf32> to vector<2x128x16xf32>
    %106 = arith.mulf %104, %105 : vector<2x128x16xf32>
    %107 = arith.addf %101, %106 : vector<2x128x16xf32>
    %108 = vector.shape_cast %72 : vector<128x16xf32> to vector<1x128x16xf32>
    %109 = vector.extract_strided_slice %41 {offsets = [0, 0, 2], sizes = [2, 128, 1], strides = [1, 1, 1]} : vector<2x128x9xf32> to vector<2x128x1xf32>
    %110 = vector.broadcast %108 : vector<1x128x16xf32> to vector<2x128x16xf32>
    %111 = vector.broadcast %109 : vector<2x128x1xf32> to vector<2x128x16xf32>
    %112 = arith.mulf %110, %111 : vector<2x128x16xf32>
    %113 = arith.addf %107, %112 : vector<2x128x16xf32>
    %114 = vector.shape_cast %76 : vector<128x16xf32> to vector<1x128x16xf32>
    %115 = vector.extract_strided_slice %41 {offsets = [0, 0, 3], sizes = [2, 128, 1], strides = [1, 1, 1]} : vector<2x128x9xf32> to vector<2x128x1xf32>
    %116 = vector.broadcast %114 : vector<1x128x16xf32> to vector<2x128x16xf32>
    %117 = vector.broadcast %115 : vector<2x128x1xf32> to vector<2x128x16xf32>
    %118 = arith.mulf %116, %117 : vector<2x128x16xf32>
    %119 = arith.addf %113, %118 : vector<2x128x16xf32>
    %120 = vector.shape_cast %80 : vector<128x16xf32> to vector<1x128x16xf32>
    %121 = vector.extract_strided_slice %41 {offsets = [0, 0, 4], sizes = [2, 128, 1], strides = [1, 1, 1]} : vector<2x128x9xf32> to vector<2x128x1xf32>
    %122 = vector.broadcast %120 : vector<1x128x16xf32> to vector<2x128x16xf32>
    %123 = vector.broadcast %121 : vector<2x128x1xf32> to vector<2x128x16xf32>
    %124 = arith.mulf %122, %123 : vector<2x128x16xf32>
    %125 = arith.addf %119, %124 : vector<2x128x16xf32>
    %126 = vector.shape_cast %84 : vector<128x16xf32> to vector<1x128x16xf32>
    %127 = vector.extract_strided_slice %41 {offsets = [0, 0, 5], sizes = [2, 128, 1], strides = [1, 1, 1]} : vector<2x128x9xf32> to vector<2x128x1xf32>
    %128 = vector.broadcast %126 : vector<1x128x16xf32> to vector<2x128x16xf32>
    %129 = vector.broadcast %127 : vector<2x128x1xf32> to vector<2x128x16xf32>
    %130 = arith.mulf %128, %129 : vector<2x128x16xf32>
    %131 = arith.addf %125, %130 : vector<2x128x16xf32>
    %132 = vector.shape_cast %88 : vector<128x16xf32> to vector<1x128x16xf32>
    %133 = vector.extract_strided_slice %41 {offsets = [0, 0, 6], sizes = [2, 128, 1], strides = [1, 1, 1]} : vector<2x128x9xf32> to vector<2x128x1xf32>
    %134 = vector.broadcast %132 : vector<1x128x16xf32> to vector<2x128x16xf32>
    %135 = vector.broadcast %133 : vector<2x128x1xf32> to vector<2x128x16xf32>
    %136 = arith.mulf %134, %135 : vector<2x128x16xf32>
    %137 = arith.addf %131, %136 : vector<2x128x16xf32>
    %138 = vector.shape_cast %92 : vector<128x16xf32> to vector<1x128x16xf32>
    %139 = vector.extract_strided_slice %41 {offsets = [0, 0, 7], sizes = [2, 128, 1], strides = [1, 1, 1]} : vector<2x128x9xf32> to vector<2x128x1xf32>
    %140 = vector.broadcast %138 : vector<1x128x16xf32> to vector<2x128x16xf32>
    %141 = vector.broadcast %139 : vector<2x128x1xf32> to vector<2x128x16xf32>
    %142 = arith.mulf %140, %141 : vector<2x128x16xf32>
    %143 = arith.addf %137, %142 : vector<2x128x16xf32>
    %144 = vector.shape_cast %96 : vector<128x16xf32> to vector<1x128x16xf32>
    %145 = vector.extract_strided_slice %41 {offsets = [0, 0, 8], sizes = [2, 128, 1], strides = [1, 1, 1]} : vector<2x128x9xf32> to vector<2x128x1xf32>
    %146 = vector.broadcast %144 : vector<1x128x16xf32> to vector<2x128x16xf32>
    %147 = vector.broadcast %145 : vector<2x128x1xf32> to vector<2x128x16xf32>
    %148 = arith.mulf %146, %147 : vector<2x128x16xf32>
    %149 = arith.addf %143, %148 : vector<2x128x16xf32>
    %150 = tpu.iota {dimensions = array<i32: 0>} : vector<16x128xi32>
    %151 = tpu.iota {dimensions = array<i32: 1>} : vector<16x128xi32>
    %c4_i32_28 = arith.constant 4 : i32
    %152 = vector.broadcast %c4_i32_28 : i32 to vector<16x128xi32>
    %153 = arith.addi %151, %152 : vector<16x128xi32>
    %c16_i32_29 = arith.constant 16 : i32
    %c0_i32_30 = arith.constant 0 : i32
    %154 = arith.cmpi eq, %c16_i32_29, %c0_i32_30 : i32
    %c1_i32_31 = arith.constant 1 : i32
    %155 = arith.select %154, %c1_i32_31, %c16_i32_29 : i32
    %156 = vector.broadcast %155 : i32 to vector<16x128xi32>
    %157 = arith.remsi %153, %156 : vector<16x128xi32>
    %c0_i32_32 = arith.constant 0 : i32
    %158 = vector.broadcast %c0_i32_32 : i32 to vector<16x128xi32>
    %159 = arith.cmpi ne, %157, %158 : vector<16x128xi32>
    %c0_i32_33 = arith.constant 0 : i32
    %160 = vector.broadcast %c0_i32_33 : i32 to vector<16x128xi32>
    %161 = arith.cmpi slt, %157, %160 : vector<16x128xi32>
    %c0_i32_34 = arith.constant 0 : i32
    %162 = arith.cmpi slt, %155, %c0_i32_34 : i32
    %163 = vector.broadcast %162 : i1 to vector<16x128xi1>
    %164 = vector.broadcast %163 : vector<16x128xi1> to vector<16x128xi1>
    %165 = arith.xori %161, %164 : vector<16x128xi1>
    %166 = arith.andi %165, %159 : vector<16x128xi1>
    %167 = vector.broadcast %155 : i32 to vector<16x128xi32>
    %168 = arith.addi %157, %167 : vector<16x128xi32>
    %169 = arith.select %166, %168, %157 : vector<16x128xi1>, vector<16x128xi32>
    %170 = arith.cmpi eq, %169, %150 : vector<16x128xi32>
    %171 = arith.extui %170 : vector<16x128xi1> to vector<16x128xi32>
    %172 = arith.sitofp %171 : vector<16x128xi32> to vector<16x128xf32>
    %173 = arith.truncf %172 : vector<16x128xf32> to vector<16x128xbf16>
    %174 = vector.shape_cast %149 : vector<2x128x16xf32> to vector<256x16xf32>
    %175 = arith.truncf %174 : vector<256x16xf32> to vector<256x16xbf16>
    %cst_35 = arith.constant dense<0.000000e+00> : vector<256x128xf32>
    %176 = tpu.matmul %175, %173, %cst_35 {dimension_numbers = #tpu.dot_dimension_numbers<[1], [0], [0], [1], [0, 0, 1, 1], [], []>} : vector<256x16xbf16>, vector<16x128xbf16>, vector<256x128xf32> -> vector<256x128xf32>
    %177 = vector.shape_cast %176 : vector<256x128xf32> to vector<2x128x128xf32>
    %178 = vector.shape_cast %8 : vector<128x128xf32> to vector<1x128x128xf32>
    %179 = vector.broadcast %178 : vector<1x128x128xf32> to vector<2x128x128xf32>
    %180 = arith.mulf %177, %179 : vector<2x128x128xf32>
    %181 = arith.addf %36, %180 : vector<2x128x128xf32>
    %182 = vector.shape_cast %7 : vector<1x128xf32> to vector<1x1x128xf32>
    %cst_36 = arith.constant 0.000000e+00 : f32
    %183 = vector.broadcast %cst_36 : f32 to vector<1x1x128xf32>
    %184 = arith.cmpf ogt, %182, %183 : vector<1x1x128xf32>
    %cst_37 = arith.constant -1.000000e+04 : f32
    %185 = vector.shape_cast %184 : vector<1x1x128xi1> to vector<1x1x128xi1>
    %186 = vector.broadcast %185 : vector<1x1x128xi1> to vector<2x128x128xi1>
    %187 = vector.broadcast %cst_37 : f32 to vector<2x128x128xf32>
    %188 = arith.select %186, %181, %187 : vector<2x128x128xi1>, vector<2x128x128xf32>
    %cst_38 = arith.constant dense<0xFF800000> : vector<2x128xf32>
    %189 = vector.multi_reduction <maximumf>, %188, %cst_38 [2] : vector<2x128x128xf32> to vector<2x128xf32>
    %190 = vector.shape_cast %189 : vector<2x128xf32> to vector<2x128x1xf32>
    %191 = vector.broadcast %190 : vector<2x128x1xf32> to vector<2x128x128xf32>
    %192 = arith.subf %188, %191 : vector<2x128x128xf32>
    %193 = math.exp %192 : vector<2x128x128xf32>
    %cst_39 = arith.constant dense<0.000000e+00> : vector<2x128xf32>
    %194 = vector.multi_reduction <add>, %193, %cst_39 [2] : vector<2x128x128xf32> to vector<2x128xf32>
    %195 = vector.shape_cast %194 : vector<2x128xf32> to vector<2x128x1xf32>
    %196 = tpu.reciprocal %195 {approx = true} : vector<2x128x1xf32> -> vector<2x128x1xf32>
    %197 = vector.broadcast %196 : vector<2x128x1xf32> to vector<2x128x128xf32>
    %198 = arith.mulf %193, %197 : vector<2x128x128xf32>
    %199 = arith.truncf %198 : vector<2x128x128xf32> to vector<2x128x128xbf16>
    %200 = arith.truncf %33 : vector<2x128x128xf32> to vector<2x128x128xbf16>
    "tpu.trace_start"() <{level = 10 : i32, message = "hts,hsd->htd"}> : () -> ()
    %cst_40 = arith.constant dense<0.000000e+00> : vector<2x128x128xf32>
    %201 = tpu.matmul %199, %200, %cst_40 {dimension_numbers = #tpu.dot_dimension_numbers<[2], [1], [1], [2], [0, 0, 0, 1, 1, 2], [0], [0]>} : vector<2x128x128xbf16>, vector<2x128x128xbf16>, vector<2x128x128xf32> -> vector<2x128x128xf32>
    "tpu.trace_stop"() : () -> ()
    %c4_i32_41 = arith.constant 4 : i32
    %202 = vector.broadcast %c4_i32_41 : i32 to vector<128x16xi32>
    %203 = arith.addi %42, %202 : vector<128x16xi32>
    %c16_i32_42 = arith.constant 16 : i32
    %c0_i32_43 = arith.constant 0 : i32
    %204 = arith.cmpi eq, %c16_i32_42, %c0_i32_43 : i32
    %c1_i32_44 = arith.constant 1 : i32
    %205 = arith.select %204, %c1_i32_44, %c16_i32_42 : i32
    %206 = vector.broadcast %205 : i32 to vector<128x16xi32>
    %207 = arith.remsi %203, %206 : vector<128x16xi32>
    %c0_i32_45 = arith.constant 0 : i32
    %208 = vector.broadcast %c0_i32_45 : i32 to vector<128x16xi32>
    %209 = arith.cmpi ne, %207, %208 : vector<128x16xi32>
    %c0_i32_46 = arith.constant 0 : i32
    %210 = vector.broadcast %c0_i32_46 : i32 to vector<128x16xi32>
    %211 = arith.cmpi slt, %207, %210 : vector<128x16xi32>
    %c0_i32_47 = arith.constant 0 : i32
    %212 = arith.cmpi slt, %205, %c0_i32_47 : i32
    %213 = vector.broadcast %212 : i1 to vector<128x16xi1>
    %214 = vector.broadcast %213 : vector<128x16xi1> to vector<128x16xi1>
    %215 = arith.xori %211, %214 : vector<128x16xi1>
    %216 = arith.andi %215, %209 : vector<128x16xi1>
    %217 = vector.broadcast %205 : i32 to vector<128x16xi32>
    %218 = arith.addi %207, %217 : vector<128x16xi32>
    %219 = arith.select %216, %218, %207 : vector<128x16xi1>, vector<128x16xi32>
    %220 = arith.cmpi eq, %219, %43 : vector<128x16xi32>
    %221 = arith.extui %220 : vector<128x16xi1> to vector<128x16xi32>
    %222 = arith.sitofp %221 : vector<128x16xi32> to vector<128x16xf32>
    %223 = arith.truncf %222 : vector<128x16xf32> to vector<128x16xbf16>
    %224 = vector.shape_cast %8 : vector<128x128xf32> to vector<1x128x128xf32>
    %225 = vector.broadcast %224 : vector<1x128x128xf32> to vector<2x128x128xf32>
    %226 = arith.mulf %198, %225 : vector<2x128x128xf32>
    %227 = vector.shape_cast %226 : vector<2x128x128xf32> to vector<256x128xf32>
    %228 = arith.truncf %227 : vector<256x128xf32> to vector<256x128xbf16>
    %cst_48 = arith.constant dense<0.000000e+00> : vector<256x16xf32>
    %229 = tpu.matmul %228, %223, %cst_48 {dimension_numbers = #tpu.dot_dimension_numbers<[1], [0], [0], [1], [0, 0, 1, 1], [], []>} : vector<256x128xbf16>, vector<128x16xbf16>, vector<256x16xf32> -> vector<256x16xf32>
    %230 = vector.shape_cast %229 : vector<256x16xf32> to vector<2x128x16xf32>
    %231 = vector.shape_cast %64 : vector<128x16xf32> to vector<1x128x16xf32>
    %232 = vector.broadcast %231 : vector<1x128x16xf32> to vector<2x128x16xf32>
    %233 = arith.mulf %230, %232 : vector<2x128x16xf32>
    %cst_49 = arith.constant dense<0.000000e+00> : vector<2x128xf32>
    %234 = vector.multi_reduction <add>, %233, %cst_49 [2] : vector<2x128x16xf32> to vector<2x128xf32>
    %235 = vector.shape_cast %234 : vector<2x128xf32> to vector<2x128x1xf32>
    %236 = vector.shape_cast %68 : vector<128x16xf32> to vector<1x128x16xf32>
    %237 = vector.broadcast %236 : vector<1x128x16xf32> to vector<2x128x16xf32>
    %238 = arith.mulf %230, %237 : vector<2x128x16xf32>
    %cst_50 = arith.constant dense<0.000000e+00> : vector<2x128xf32>
    %239 = vector.multi_reduction <add>, %238, %cst_50 [2] : vector<2x128x16xf32> to vector<2x128xf32>
    %240 = vector.shape_cast %239 : vector<2x128xf32> to vector<2x128x1xf32>
    %241 = vector.shape_cast %72 : vector<128x16xf32> to vector<1x128x16xf32>
    %242 = vector.broadcast %241 : vector<1x128x16xf32> to vector<2x128x16xf32>
    %243 = arith.mulf %230, %242 : vector<2x128x16xf32>
    %cst_51 = arith.constant dense<0.000000e+00> : vector<2x128xf32>
    %244 = vector.multi_reduction <add>, %243, %cst_51 [2] : vector<2x128x16xf32> to vector<2x128xf32>
    %245 = vector.shape_cast %244 : vector<2x128xf32> to vector<2x128x1xf32>
    %246 = vector.shape_cast %76 : vector<128x16xf32> to vector<1x128x16xf32>
    %247 = vector.broadcast %246 : vector<1x128x16xf32> to vector<2x128x16xf32>
    %248 = arith.mulf %230, %247 : vector<2x128x16xf32>
    %cst_52 = arith.constant dense<0.000000e+00> : vector<2x128xf32>
    %249 = vector.multi_reduction <add>, %248, %cst_52 [2] : vector<2x128x16xf32> to vector<2x128xf32>
    %250 = vector.shape_cast %249 : vector<2x128xf32> to vector<2x128x1xf32>
    %251 = vector.shape_cast %80 : vector<128x16xf32> to vector<1x128x16xf32>
    %252 = vector.broadcast %251 : vector<1x128x16xf32> to vector<2x128x16xf32>
    %253 = arith.mulf %230, %252 : vector<2x128x16xf32>
    %cst_53 = arith.constant dense<0.000000e+00> : vector<2x128xf32>
    %254 = vector.multi_reduction <add>, %253, %cst_53 [2] : vector<2x128x16xf32> to vector<2x128xf32>
    %255 = vector.shape_cast %254 : vector<2x128xf32> to vector<2x128x1xf32>
    %256 = vector.shape_cast %84 : vector<128x16xf32> to vector<1x128x16xf32>
    %257 = vector.broadcast %256 : vector<1x128x16xf32> to vector<2x128x16xf32>
    %258 = arith.mulf %230, %257 : vector<2x128x16xf32>
    %cst_54 = arith.constant dense<0.000000e+00> : vector<2x128xf32>
    %259 = vector.multi_reduction <add>, %258, %cst_54 [2] : vector<2x128x16xf32> to vector<2x128xf32>
    %260 = vector.shape_cast %259 : vector<2x128xf32> to vector<2x128x1xf32>
    %261 = vector.shape_cast %88 : vector<128x16xf32> to vector<1x128x16xf32>
    %262 = vector.broadcast %261 : vector<1x128x16xf32> to vector<2x128x16xf32>
    %263 = arith.mulf %230, %262 : vector<2x128x16xf32>
    %cst_55 = arith.constant dense<0.000000e+00> : vector<2x128xf32>
    %264 = vector.multi_reduction <add>, %263, %cst_55 [2] : vector<2x128x16xf32> to vector<2x128xf32>
    %265 = vector.shape_cast %264 : vector<2x128xf32> to vector<2x128x1xf32>
    %266 = vector.shape_cast %92 : vector<128x16xf32> to vector<1x128x16xf32>
    %267 = vector.broadcast %266 : vector<1x128x16xf32> to vector<2x128x16xf32>
    %268 = arith.mulf %230, %267 : vector<2x128x16xf32>
    %cst_56 = arith.constant dense<0.000000e+00> : vector<2x128xf32>
    %269 = vector.multi_reduction <add>, %268, %cst_56 [2] : vector<2x128x16xf32> to vector<2x128xf32>
    %270 = vector.shape_cast %269 : vector<2x128xf32> to vector<2x128x1xf32>
    %271 = vector.shape_cast %96 : vector<128x16xf32> to vector<1x128x16xf32>
    %272 = vector.broadcast %271 : vector<1x128x16xf32> to vector<2x128x16xf32>
    %273 = arith.mulf %230, %272 : vector<2x128x16xf32>
    %cst_57 = arith.constant dense<0.000000e+00> : vector<2x128xf32>
    %274 = vector.multi_reduction <add>, %273, %cst_57 [2] : vector<2x128x16xf32> to vector<2x128xf32>
    %275 = vector.shape_cast %274 : vector<2x128xf32> to vector<2x128x1xf32>
    %276 = tpu.concatenate %235, %240, %245, %250, %255, %260, %265, %270, %275 in 2 : vector<2x128x1xf32>, vector<2x128x1xf32>, vector<2x128x1xf32>, vector<2x128x1xf32>, vector<2x128x1xf32>, vector<2x128x1xf32>, vector<2x128x1xf32>, vector<2x128x1xf32>, vector<2x128x1xf32> -> vector<2x128x9xf32>
    %277 = vector.shape_cast %276 : vector<2x128x9xf32> to vector<256x9xf32>
    %278 = arith.truncf %277 : vector<256x9xf32> to vector<256x9xbf16>
    %c0_58 = arith.constant 0 : index
    %c0_59 = arith.constant 0 : index
    %c0_60 = arith.constant 0 : index
    %279 = vector.load %arg11[%c0_58, %c0_59, %c0_60] : memref<1x9x128xbf16, #tpu.memory_space<vmem>>, vector<1x9x128xbf16>
    %280 = vector.shape_cast %279 : vector<1x9x128xbf16> to vector<9x128xbf16>
    %cst_61 = arith.constant dense<0.000000e+00> : vector<256x128xf32>
    %281 = tpu.matmul %278, %280, %cst_61 {dimension_numbers = #tpu.dot_dimension_numbers<[1], [0], [0], [1], [0, 0, 1, 1], [], []>} : vector<256x9xbf16>, vector<9x128xbf16>, vector<256x128xf32> -> vector<256x128xf32>
    %282 = vector.shape_cast %281 : vector<256x128xf32> to vector<2x128x128xf32>
    %283 = arith.addf %201, %282 : vector<2x128x128xf32>
    %284 = vector.extract_strided_slice %283 {offsets = [0, 0, 0], sizes = [1, 128, 128], strides = [1, 1, 1]} : vector<2x128x128xf32> to vector<1x128x128xf32>
    %285 = vector.shape_cast %284 : vector<1x128x128xf32> to vector<128x128xf32>
    %286 = arith.truncf %285 : vector<128x128xf32> to vector<128x128xbf16>
    %c0_62 = arith.constant 0 : index
    %c0_63 = arith.constant 0 : index
    %c0_64 = arith.constant 0 : index
    %c0_65 = arith.constant 0 : index
    %287 = vector.load %arg8[%c0_62, %c0_63, %c0_64, %c0_65] : memref<1x2x128x32xbf16, #tpu.memory_space<vmem>>, vector<1x1x128x32xbf16>
    %288 = vector.shape_cast %287 : vector<1x1x128x32xbf16> to vector<128x32xbf16>
    %cst_66 = arith.constant dense<0.000000e+00> : vector<128x32xf32>
    %289 = tpu.matmul %286, %288, %cst_66 {dimension_numbers = #tpu.dot_dimension_numbers<[1], [0], [0], [1], [0, 0, 1, 1], [], []>} : vector<128x128xbf16>, vector<128x32xbf16>, vector<128x32xf32> -> vector<128x32xf32>
    %290 = vector.extract_strided_slice %283 {offsets = [1, 0, 0], sizes = [1, 128, 128], strides = [1, 1, 1]} : vector<2x128x128xf32> to vector<1x128x128xf32>
    %291 = vector.shape_cast %290 : vector<1x128x128xf32> to vector<128x128xf32>
    %292 = arith.truncf %291 : vector<128x128xf32> to vector<128x128xbf16>
    %c0_67 = arith.constant 0 : index
    %c1 = arith.constant 1 : index
    %c0_68 = arith.constant 0 : index
    %c0_69 = arith.constant 0 : index
    %293 = vector.load %arg8[%c0_67, %c1, %c0_68, %c0_69] : memref<1x2x128x32xbf16, #tpu.memory_space<vmem>>, vector<1x1x128x32xbf16>
    %294 = vector.shape_cast %293 : vector<1x1x128x32xbf16> to vector<128x32xbf16>
    %cst_70 = arith.constant dense<0.000000e+00> : vector<128x32xf32>
    %295 = tpu.matmul %292, %294, %cst_70 {dimension_numbers = #tpu.dot_dimension_numbers<[1], [0], [0], [1], [0, 0, 1, 1], [], []>} : vector<128x128xbf16>, vector<128x32xbf16>, vector<128x32xf32> -> vector<128x32xf32>
    %296 = arith.addf %289, %295 : vector<128x32xf32>
    %c0_71 = arith.constant 0 : index
    %c0_72 = arith.constant 0 : index
    %c0_73 = arith.constant 0 : index
    %297 = vector.load %arg9[%c0_71, %c0_72, %c0_73] : memref<1x6x32xf32, #tpu.memory_space<vmem>>, vector<1x1x32xf32>
    %298 = vector.shape_cast %297 : vector<1x1x32xf32> to vector<1x32xf32>
    %299 = vector.broadcast %298 : vector<1x32xf32> to vector<128x32xf32>
    %300 = arith.addf %296, %299 : vector<128x32xf32>
    %301 = arith.addf %3, %300 : vector<128x32xf32>
    %c0_74 = arith.constant 0 : index
    %c1_75 = arith.constant 1 : index
    %c0_76 = arith.constant 0 : index
    %302 = vector.load %arg9[%c0_74, %c1_75, %c0_76] : memref<1x6x32xf32, #tpu.memory_space<vmem>>, vector<1x1x32xf32>
    %303 = vector.shape_cast %302 : vector<1x1x32xf32> to vector<1x32xf32>
    %c0_77 = arith.constant 0 : index
    %c2 = arith.constant 2 : index
    %c0_78 = arith.constant 0 : index
    %304 = vector.load %arg9[%c0_77, %c2, %c0_78] : memref<1x6x32xf32, #tpu.memory_space<vmem>>, vector<1x1x32xf32>
    %305 = vector.shape_cast %304 : vector<1x1x32xf32> to vector<1x32xf32>
    %cst_79 = arith.constant dense<0.000000e+00> : vector<128xf32>
    %306 = vector.multi_reduction <add>, %301, %cst_79 [1] : vector<128x32xf32> to vector<128xf32>
    %307 = vector.shape_cast %306 : vector<128xf32> to vector<128x1xf32>
    %cst_80 = arith.constant 3.200000e+01 : f32
    %308 = vector.broadcast %cst_80 : f32 to vector<128x1xf32>
    %309 = arith.divf %307, %308 : vector<128x1xf32>
    %310 = vector.broadcast %309 : vector<128x1xf32> to vector<128x32xf32>
    %311 = arith.subf %301, %310 : vector<128x32xf32>
    %312 = arith.mulf %311, %311 : vector<128x32xf32>
    %cst_81 = arith.constant dense<0.000000e+00> : vector<128xf32>
    %313 = vector.multi_reduction <add>, %312, %cst_81 [1] : vector<128x32xf32> to vector<128xf32>
    %314 = vector.shape_cast %313 : vector<128xf32> to vector<128x1xf32>
    %cst_82 = arith.constant 3.200000e+01 : f32
    %315 = vector.broadcast %cst_82 : f32 to vector<128x1xf32>
    %316 = arith.divf %314, %315 : vector<128x1xf32>
    %317 = vector.broadcast %309 : vector<128x1xf32> to vector<128x32xf32>
    %318 = arith.subf %301, %317 : vector<128x32xf32>
    %cst_83 = arith.constant 9.99999974E-6 : f32
    %319 = vector.broadcast %cst_83 : f32 to vector<128x1xf32>
    %320 = arith.addf %316, %319 : vector<128x1xf32>
    %321 = math.rsqrt %320 : vector<128x1xf32>
    %322 = vector.broadcast %321 : vector<128x1xf32> to vector<128x32xf32>
    %323 = arith.mulf %318, %322 : vector<128x32xf32>
    %324 = vector.broadcast %303 : vector<1x32xf32> to vector<128x32xf32>
    %325 = arith.mulf %323, %324 : vector<128x32xf32>
    %326 = vector.broadcast %305 : vector<1x32xf32> to vector<128x32xf32>
    %327 = arith.addf %325, %326 : vector<128x32xf32>
    %328 = vector.broadcast %5 : vector<128x1xf32> to vector<128x32xf32>
    %329 = arith.mulf %327, %328 : vector<128x32xf32>
    %330 = arith.truncf %329 : vector<128x32xf32> to vector<128x32xbf16>
    %cst_84 = arith.constant 0.000000e+00 : bf16
    %331 = vector.broadcast %cst_84 : bf16 to vector<1x32xbf16>
    %332 = vector.extract_strided_slice %330 {offsets = [0, 0], sizes = [127, 32], strides = [1, 1]} : vector<128x32xbf16> to vector<127x32xbf16>
    %333 = tpu.concatenate %331, %332 in 0 : vector<1x32xbf16>, vector<127x32xbf16> -> vector<128x32xbf16>
    %c0_85 = arith.constant 0 : index
    %c0_86 = arith.constant 0 : index
    %c0_87 = arith.constant 0 : index
    %c0_88 = arith.constant 0 : index
    %334 = vector.load %arg12[%c0_85, %c0_86, %c0_87, %c0_88] : memref<1x3x32x64xbf16, #tpu.memory_space<vmem>>, vector<1x1x32x64xbf16>
    %335 = vector.shape_cast %334 : vector<1x1x32x64xbf16> to vector<32x64xbf16>
    %cst_89 = arith.constant dense<0.000000e+00> : vector<128x64xf32>
    %336 = tpu.matmul %333, %335, %cst_89 {dimension_numbers = #tpu.dot_dimension_numbers<[1], [0], [0], [1], [0, 0, 1, 1], [], []>} : vector<128x32xbf16>, vector<32x64xbf16>, vector<128x64xf32> -> vector<128x64xf32>
    %c0_90 = arith.constant 0 : index
    %c1_91 = arith.constant 1 : index
    %c0_92 = arith.constant 0 : index
    %c0_93 = arith.constant 0 : index
    %337 = vector.load %arg12[%c0_90, %c1_91, %c0_92, %c0_93] : memref<1x3x32x64xbf16, #tpu.memory_space<vmem>>, vector<1x1x32x64xbf16>
    %338 = vector.shape_cast %337 : vector<1x1x32x64xbf16> to vector<32x64xbf16>
    %cst_94 = arith.constant dense<0.000000e+00> : vector<128x64xf32>
    %339 = tpu.matmul %330, %338, %cst_94 {dimension_numbers = #tpu.dot_dimension_numbers<[1], [0], [0], [1], [0, 0, 1, 1], [], []>} : vector<128x32xbf16>, vector<32x64xbf16>, vector<128x64xf32> -> vector<128x64xf32>
    %340 = arith.addf %336, %339 : vector<128x64xf32>
    %cst_95 = arith.constant 0.000000e+00 : bf16
    %341 = vector.broadcast %cst_95 : bf16 to vector<1x32xbf16>
    %342 = vector.extract_strided_slice %330 {offsets = [1, 0], sizes = [127, 32], strides = [1, 1]} : vector<128x32xbf16> to vector<127x32xbf16>
    %343 = tpu.concatenate %342, %341 in 0 : vector<127x32xbf16>, vector<1x32xbf16> -> vector<128x32xbf16>
    %c0_96 = arith.constant 0 : index
    %c2_97 = arith.constant 2 : index
    %c0_98 = arith.constant 0 : index
    %c0_99 = arith.constant 0 : index
    %344 = vector.load %arg12[%c0_96, %c2_97, %c0_98, %c0_99] : memref<1x3x32x64xbf16, #tpu.memory_space<vmem>>, vector<1x1x32x64xbf16>
    %345 = vector.shape_cast %344 : vector<1x1x32x64xbf16> to vector<32x64xbf16>
    %cst_100 = arith.constant dense<0.000000e+00> : vector<128x64xf32>
    %346 = tpu.matmul %343, %345, %cst_100 {dimension_numbers = #tpu.dot_dimension_numbers<[1], [0], [0], [1], [0, 0, 1, 1], [], []>} : vector<128x32xbf16>, vector<32x64xbf16>, vector<128x64xf32> -> vector<128x64xf32>
    %347 = arith.addf %340, %346 : vector<128x64xf32>
    %c0_101 = arith.constant 0 : index
    %c0_102 = arith.constant 0 : index
    %c0_103 = arith.constant 0 : index
    %348 = vector.load %arg13[%c0_101, %c0_102, %c0_103] : memref<1x1x64xf32, #tpu.memory_space<vmem>>, vector<1x1x64xf32>
    %349 = vector.shape_cast %348 : vector<1x1x64xf32> to vector<1x64xf32>
    %350 = vector.broadcast %349 : vector<1x64xf32> to vector<128x64xf32>
    %351 = arith.addf %347, %350 : vector<128x64xf32>
    %cst_104 = arith.constant 0.000000e+00 : f32
    %352 = vector.broadcast %cst_104 : f32 to vector<128x64xf32>
    %353 = arith.maximumf %351, %352 : vector<128x64xf32>
    %354 = vector.broadcast %5 : vector<128x1xf32> to vector<128x64xf32>
    %355 = arith.mulf %353, %354 : vector<128x64xf32>
    %356 = arith.truncf %355 : vector<128x64xf32> to vector<128x64xbf16>
    %cst_105 = arith.constant 0.000000e+00 : bf16
    %357 = vector.broadcast %cst_105 : bf16 to vector<1x64xbf16>
    %358 = vector.extract_strided_slice %356 {offsets = [0, 0], sizes = [127, 64], strides = [1, 1]} : vector<128x64xbf16> to vector<127x64xbf16>
    %359 = tpu.concatenate %357, %358 in 0 : vector<1x64xbf16>, vector<127x64xbf16> -> vector<128x64xbf16>
    %c0_106 = arith.constant 0 : index
    %c0_107 = arith.constant 0 : index
    %c0_108 = arith.constant 0 : index
    %c0_109 = arith.constant 0 : index
    %360 = vector.load %arg14[%c0_106, %c0_107, %c0_108, %c0_109] : memref<1x3x64x32xbf16, #tpu.memory_space<vmem>>, vector<1x1x64x32xbf16>
    %361 = vector.shape_cast %360 : vector<1x1x64x32xbf16> to vector<64x32xbf16>
    %cst_110 = arith.constant dense<0.000000e+00> : vector<128x32xf32>
    %362 = tpu.matmul %359, %361, %cst_110 {dimension_numbers = #tpu.dot_dimension_numbers<[1], [0], [0], [1], [0, 0, 1, 1], [], []>} : vector<128x64xbf16>, vector<64x32xbf16>, vector<128x32xf32> -> vector<128x32xf32>
    %c0_111 = arith.constant 0 : index
    %c1_112 = arith.constant 1 : index
    %c0_113 = arith.constant 0 : index
    %c0_114 = arith.constant 0 : index
    %363 = vector.load %arg14[%c0_111, %c1_112, %c0_113, %c0_114] : memref<1x3x64x32xbf16, #tpu.memory_space<vmem>>, vector<1x1x64x32xbf16>
    %364 = vector.shape_cast %363 : vector<1x1x64x32xbf16> to vector<64x32xbf16>
    %cst_115 = arith.constant dense<0.000000e+00> : vector<128x32xf32>
    %365 = tpu.matmul %356, %364, %cst_115 {dimension_numbers = #tpu.dot_dimension_numbers<[1], [0], [0], [1], [0, 0, 1, 1], [], []>} : vector<128x64xbf16>, vector<64x32xbf16>, vector<128x32xf32> -> vector<128x32xf32>
    %366 = arith.addf %362, %365 : vector<128x32xf32>
    %cst_116 = arith.constant 0.000000e+00 : bf16
    %367 = vector.broadcast %cst_116 : bf16 to vector<1x64xbf16>
    %368 = vector.extract_strided_slice %356 {offsets = [1, 0], sizes = [127, 64], strides = [1, 1]} : vector<128x64xbf16> to vector<127x64xbf16>
    %369 = tpu.concatenate %368, %367 in 0 : vector<127x64xbf16>, vector<1x64xbf16> -> vector<128x64xbf16>
    %c0_117 = arith.constant 0 : index
    %c2_118 = arith.constant 2 : index
    %c0_119 = arith.constant 0 : index
    %c0_120 = arith.constant 0 : index
    %370 = vector.load %arg14[%c0_117, %c2_118, %c0_119, %c0_120] : memref<1x3x64x32xbf16, #tpu.memory_space<vmem>>, vector<1x1x64x32xbf16>
    %371 = vector.shape_cast %370 : vector<1x1x64x32xbf16> to vector<64x32xbf16>
    %cst_121 = arith.constant dense<0.000000e+00> : vector<128x32xf32>
    %372 = tpu.matmul %369, %371, %cst_121 {dimension_numbers = #tpu.dot_dimension_numbers<[1], [0], [0], [1], [0, 0, 1, 1], [], []>} : vector<128x64xbf16>, vector<64x32xbf16>, vector<128x32xf32> -> vector<128x32xf32>
    %373 = arith.addf %366, %372 : vector<128x32xf32>
    %c0_122 = arith.constant 0 : index
    %c3 = arith.constant 3 : index
    %c0_123 = arith.constant 0 : index
    %374 = vector.load %arg9[%c0_122, %c3, %c0_123] : memref<1x6x32xf32, #tpu.memory_space<vmem>>, vector<1x1x32xf32>
    %375 = vector.shape_cast %374 : vector<1x1x32xf32> to vector<1x32xf32>
    %376 = vector.broadcast %375 : vector<1x32xf32> to vector<128x32xf32>
    %377 = arith.addf %373, %376 : vector<128x32xf32>
    %378 = vector.broadcast %5 : vector<128x1xf32> to vector<128x32xf32>
    %379 = arith.mulf %377, %378 : vector<128x32xf32>
    %380 = arith.addf %327, %379 : vector<128x32xf32>
    %c0_124 = arith.constant 0 : index
    %c4 = arith.constant 4 : index
    %c0_125 = arith.constant 0 : index
    %381 = vector.load %arg9[%c0_124, %c4, %c0_125] : memref<1x6x32xf32, #tpu.memory_space<vmem>>, vector<1x1x32xf32>
    %382 = vector.shape_cast %381 : vector<1x1x32xf32> to vector<1x32xf32>
    %c0_126 = arith.constant 0 : index
    %c5 = arith.constant 5 : index
    %c0_127 = arith.constant 0 : index
    %383 = vector.load %arg9[%c0_126, %c5, %c0_127] : memref<1x6x32xf32, #tpu.memory_space<vmem>>, vector<1x1x32xf32>
    %384 = vector.shape_cast %383 : vector<1x1x32xf32> to vector<1x32xf32>
    %cst_128 = arith.constant dense<0.000000e+00> : vector<128xf32>
    %385 = vector.multi_reduction <add>, %380, %cst_128 [1] : vector<128x32xf32> to vector<128xf32>
    %386 = vector.shape_cast %385 : vector<128xf32> to vector<128x1xf32>
    %cst_129 = arith.constant 3.200000e+01 : f32
    %387 = vector.broadcast %cst_129 : f32 to vector<128x1xf32>
    %388 = arith.divf %386, %387 : vector<128x1xf32>
    %389 = vector.broadcast %388 : vector<128x1xf32> to vector<128x32xf32>
    %390 = arith.subf %380, %389 : vector<128x32xf32>
    %391 = arith.mulf %390, %390 : vector<128x32xf32>
    %cst_130 = arith.constant dense<0.000000e+00> : vector<128xf32>
    %392 = vector.multi_reduction <add>, %391, %cst_130 [1] : vector<128x32xf32> to vector<128xf32>
    %393 = vector.shape_cast %392 : vector<128xf32> to vector<128x1xf32>
    %cst_131 = arith.constant 3.200000e+01 : f32
    %394 = vector.broadcast %cst_131 : f32 to vector<128x1xf32>
    %395 = arith.divf %393, %394 : vector<128x1xf32>
    %396 = vector.broadcast %388 : vector<128x1xf32> to vector<128x32xf32>
    %397 = arith.subf %380, %396 : vector<128x32xf32>
    %cst_132 = arith.constant 9.99999974E-6 : f32
    %398 = vector.broadcast %cst_132 : f32 to vector<128x1xf32>
    %399 = arith.addf %395, %398 : vector<128x1xf32>
    %400 = math.rsqrt %399 : vector<128x1xf32>
    %401 = vector.broadcast %400 : vector<128x1xf32> to vector<128x32xf32>
    %402 = arith.mulf %397, %401 : vector<128x32xf32>
    %403 = vector.broadcast %382 : vector<1x32xf32> to vector<128x32xf32>
    %404 = arith.mulf %402, %403 : vector<128x32xf32>
    %405 = vector.broadcast %384 : vector<1x32xf32> to vector<128x32xf32>
    %406 = arith.addf %404, %405 : vector<128x32xf32>
    %c0_133 = arith.constant 0 : index
    %c0_134 = arith.constant 0 : index
    %407 = vector.load %arg19[%c0_133, %c0_134] : memref<128x32xf32, #tpu.memory_space<vmem>>, vector<128x32xf32>
    tpu.vector_store %arg19[%c0_133, %c0_134], %406 {strides = array<i32>} : memref<128x32xf32, #tpu.memory_space<vmem>>, vector<128x32xf32>,
    %c1_i32_135 = arith.constant 1 : i32
    %408 = arith.cmpi eq, %arg1, %c1_i32_135 : i32
    %409 = arith.extui %408 : i1 to i32
    %c0_i32_136 = arith.constant 0 : i32
    %410 = arith.cmpi ne, %409, %c0_i32_136 : i32
    scf.if %410 {
      %411 = vector.broadcast %5 : vector<128x1xf32> to vector<128x32xf32>
      %412 = arith.mulf %406, %411 : vector<128x32xf32>
      %c0_137 = arith.constant 0 : index
      %c0_138 = arith.constant 0 : index
      %c0_139 = arith.constant 0 : index
      %413 = vector.load %arg17[%c0_137, %c0_138, %c0_139] : memref<1x128x32xf32, #tpu.memory_space<vmem>>, vector<1x128x32xf32>
      %414 = vector.shape_cast %413 : vector<1x128x32xf32> to vector<128x32xf32>
      %415 = vector.shape_cast %412 : vector<128x32xf32> to vector<1x128x32xf32>
      tpu.vector_store %arg17[%c0_137, %c0_138, %c0_139], %415 {strides = array<i32>} : memref<1x128x32xf32, #tpu.memory_space<vmem>>, vector<1x128x32xf32>,
      %416 = arith.truncf %412 : vector<128x32xf32> to vector<128x32xbf16>
      %c0_140 = arith.constant 0 : index
      %c0_141 = arith.constant 0 : index
      %417 = vector.load %arg15[%c0_140, %c0_141] : memref<32x128xbf16, #tpu.memory_space<vmem>>, vector<32x128xbf16>
      %cst_142 = arith.constant dense<0.000000e+00> : vector<128x128xf32>
      %418 = tpu.matmul %416, %417, %cst_142 {dimension_numbers = #tpu.dot_dimension_numbers<[1], [0], [0], [1], [0, 0, 1, 1], [], []>} : vector<128x32xbf16>, vector<32x128xbf16>, vector<128x128xf32> -> vector<128x128xf32>
      %c0_143 = arith.constant 0 : index
      %c0_144 = arith.constant 0 : index
      %419 = vector.load %arg16[%c0_143, %c0_144] : memref<1x128xf32, #tpu.memory_space<vmem>>, vector<1x128xf32>
      %420 = vector.broadcast %419 : vector<1x128xf32> to vector<128x128xf32>
      %421 = arith.addf %418, %420 : vector<128x128xf32>
      %422 = vector.broadcast %5 : vector<128x1xf32> to vector<128x128xf32>
      %423 = arith.mulf %421, %422 : vector<128x128xf32>
      %c0_145 = arith.constant 0 : index
      %c0_146 = arith.constant 0 : index
      %c0_147 = arith.constant 0 : index
      %424 = vector.load %arg18[%c0_145, %c0_146, %c0_147] : memref<1x128x128xf32, #tpu.memory_space<vmem>>, vector<1x128x128xf32>
      %425 = vector.shape_cast %424 : vector<1x128x128xf32> to vector<128x128xf32>
      %426 = vector.shape_cast %423 : vector<128x128xf32> to vector<1x128x128xf32>
      tpu.vector_store %arg18[%c0_145, %c0_146, %c0_147], %426 {strides = array<i32>} : memref<1x128x128xf32, #tpu.memory_space<vmem>>, vector<1x128x128xf32>,
    } else {
    }
    return
  }
  func.func @transform_0(%arg0: i32, %arg1: i32) -> (i32, i32, i32) {
    %c0_i32 = arith.constant 0 : i32
    %c0_i32_0 = arith.constant 0 : i32
    %c0_i32_1 = arith.constant 0 : i32
    return %arg0, %c0_i32, %c0_i32_0 : i32, i32, i32
  }
  func.func @transform_1(%arg0: i32, %arg1: i32) -> (i32, i32, i32) {
    %c0_i32 = arith.constant 0 : i32
    %c0_i32_0 = arith.constant 0 : i32
    %c0_i32_1 = arith.constant 0 : i32
    return %arg0, %c0_i32, %c0_i32_0 : i32, i32, i32
  }
  func.func @transform_2(%arg0: i32, %arg1: i32) -> (i32, i32, i32) {
    %c0_i32 = arith.constant 0 : i32
    %c0_i32_0 = arith.constant 0 : i32
    %c0_i32_1 = arith.constant 0 : i32
    return %arg0, %c0_i32, %c0_i32_0 : i32, i32, i32
  }
  func.func @transform_3(%arg0: i32, %arg1: i32) -> (i32, i32) {
    %c0_i32 = arith.constant 0 : i32
    %c0_i32_0 = arith.constant 0 : i32
    %c0_i32_1 = arith.constant 0 : i32
    return %c0_i32, %c0_i32_0 : i32, i32
  }
  func.func @transform_4(%arg0: i32, %arg1: i32) -> (i32, i32, i32) {
    %c0_i32 = arith.constant 0 : i32
    %c0_i32_0 = arith.constant 0 : i32
    %c0_i32_1 = arith.constant 0 : i32
    return %arg1, %c0_i32, %c0_i32_0 : i32, i32, i32
  }
  func.func @transform_5(%arg0: i32, %arg1: i32) -> (i32, i32, i32) {
    %c0_i32 = arith.constant 0 : i32
    %c0_i32_0 = arith.constant 0 : i32
    %c0_i32_1 = arith.constant 0 : i32
    return %arg1, %c0_i32, %c0_i32_0 : i32, i32, i32
  }
  func.func @transform_6(%arg0: i32, %arg1: i32) -> (i32, i32, i32, i32) {
    %c0_i32 = arith.constant 0 : i32
    %c0_i32_0 = arith.constant 0 : i32
    %c0_i32_1 = arith.constant 0 : i32
    %c0_i32_2 = arith.constant 0 : i32
    return %arg1, %c0_i32, %c0_i32_0, %c0_i32_1 : i32, i32, i32, i32
  }
  func.func @transform_7(%arg0: i32, %arg1: i32) -> (i32, i32, i32) {
    %c0_i32 = arith.constant 0 : i32
    %c0_i32_0 = arith.constant 0 : i32
    %c0_i32_1 = arith.constant 0 : i32
    return %arg1, %c0_i32, %c0_i32_0 : i32, i32, i32
  }
  func.func @transform_8(%arg0: i32, %arg1: i32) -> (i32, i32, i32) {
    %c0_i32 = arith.constant 0 : i32
    %c0_i32_0 = arith.constant 0 : i32
    %c0_i32_1 = arith.constant 0 : i32
    return %arg1, %c0_i32, %c0_i32_0 : i32, i32, i32
  }
  func.func @transform_9(%arg0: i32, %arg1: i32) -> (i32, i32, i32) {
    %c0_i32 = arith.constant 0 : i32
    %c0_i32_0 = arith.constant 0 : i32
    %c0_i32_1 = arith.constant 0 : i32
    return %arg1, %c0_i32, %c0_i32_0 : i32, i32, i32
  }
  func.func @transform_10(%arg0: i32, %arg1: i32) -> (i32, i32, i32, i32) {
    %c0_i32 = arith.constant 0 : i32
    %c0_i32_0 = arith.constant 0 : i32
    %c0_i32_1 = arith.constant 0 : i32
    %c0_i32_2 = arith.constant 0 : i32
    return %arg1, %c0_i32, %c0_i32_0, %c0_i32_1 : i32, i32, i32, i32
  }
  func.func @transform_11(%arg0: i32, %arg1: i32) -> (i32, i32, i32) {
    %c0_i32 = arith.constant 0 : i32
    %c0_i32_0 = arith.constant 0 : i32
    %c0_i32_1 = arith.constant 0 : i32
    return %arg1, %c0_i32, %c0_i32_0 : i32, i32, i32
  }
  func.func @transform_12(%arg0: i32, %arg1: i32) -> (i32, i32, i32, i32) {
    %c0_i32 = arith.constant 0 : i32
    %c0_i32_0 = arith.constant 0 : i32
    %c0_i32_1 = arith.constant 0 : i32
    %c0_i32_2 = arith.constant 0 : i32
    return %arg1, %c0_i32, %c0_i32_0, %c0_i32_1 : i32, i32, i32, i32
  }
  func.func @transform_13(%arg0: i32, %arg1: i32) -> (i32, i32) {
    %c0_i32 = arith.constant 0 : i32
    %c0_i32_0 = arith.constant 0 : i32
    %c0_i32_1 = arith.constant 0 : i32
    return %c0_i32, %c0_i32_0 : i32, i32
  }
  func.func @transform_14(%arg0: i32, %arg1: i32) -> (i32, i32) {
    %c0_i32 = arith.constant 0 : i32
    %c0_i32_0 = arith.constant 0 : i32
    %c0_i32_1 = arith.constant 0 : i32
    return %c0_i32, %c0_i32_0 : i32, i32
  }
  func.func @transform_15(%arg0: i32, %arg1: i32) -> (i32, i32, i32) {
    %c0_i32 = arith.constant 0 : i32
    %c0_i32_0 = arith.constant 0 : i32
    %c0_i32_1 = arith.constant 0 : i32
    return %arg0, %c0_i32, %c0_i32_0 : i32, i32, i32
  }
  func.func @transform_16(%arg0: i32, %arg1: i32) -> (i32, i32, i32) {
    %c0_i32 = arith.constant 0 : i32
    %c0_i32_0 = arith.constant 0 : i32
    %c0_i32_1 = arith.constant 0 : i32
    return %arg0, %c0_i32, %c0_i32_0 : i32, i32, i32
  }
}

</mosaic_0001>

<llo_original>
// kernel: text_encoder_forward.1
$region0: #{text_encoder_forward.1}
  #allocation0 [shape = 'u32[]', space=smem, size = 0x4, offset = 0x4, fixed_abs, tag = 'smem constant byte address 0x4 - core index']
  #allocation1 [shape = 'u32[144,128]{1,0:T(1,128)}', space=vmem, size = 0x12000, scoped, tag = 'internal scratch']
  #allocation2 [shape = 'f32[128,32]{1,0:T(8,128)}', space=vmem, size = 0x10000, scoped, tag = 'scratch operand']
  %s0 = inlined_call_operand.hbm [shape: f32[2,128,32], index: 0, kind: input, shape index: {}]
  %s1 = inlined_call_operand.hbm [shape: f32[2,128,1], index: 1, kind: input, shape index: {}]
  %s2 = inlined_call_operand.hbm [shape: f32[2,1,128], index: 2, kind: input, shape index: {}]
  %s3 = inlined_call_operand.hbm [shape: f32[128,128], index: 3, kind: input, shape index: {}]
  %s4 = inlined_call_operand.hbm [shape: bf16[2,32,768], index: 4, kind: input, shape index: {}]
  %s5 = inlined_call_operand.hbm [shape: f32[2,1,768], index: 5, kind: input, shape index: {}]
  %s6 = inlined_call_operand.hbm [shape: bf16[2,2,128,32], index: 6, kind: input, shape index: {}]
  %s7 = inlined_call_operand.hbm [shape: f32[2,6,32], index: 7, kind: input, shape index: {}]
  %s8 = inlined_call_operand.hbm [shape: bf16[2,128,9], index: 8, kind: input, shape index: {}]
  %s9 = inlined_call_operand.hbm [shape: bf16[2,9,128], index: 9, kind: input, shape index: {}]
  %s10 = inlined_call_operand.hbm [shape: bf16[2,3,32,64], index: 10, kind: input, shape index: {}]
  %s11 = inlined_call_operand.hbm [shape: f32[2,1,64], index: 11, kind: input, shape index: {}]
  %s12 = inlined_call_operand.hbm [shape: bf16[2,3,64,32], index: 12, kind: input, shape index: {}]
  %s13 = inlined_call_operand.hbm [shape: bf16[32,128], index: 13, kind: input, shape index: {}]
  %s14 = inlined_call_operand.hbm [shape: f32[1,128], index: 14, kind: input, shape index: {}]
  %s15 = inlined_call_operand.hbm [shape: f32[2,128,32], index: 15, kind: output, shape index: {0}]
  %s16 = inlined_call_operand.hbm [shape: f32[2,128,128], index: 16, kind: output, shape index: {1}]
  %17 = xla_tuple %s15, %s16
  %s18 = sld [smem:[#allocation0]]
  $region169: #{text_encoder_forward.1} parent=0
    _
  %s20 = ssub.s32 1, %s18
  %s21 = scalar_select 0, %s20, %s18
  $region1: #{text_encoder_forward.1} parent=0
    #allocation3 [shape = 'u8[131072]{0}', space=vmem, size = 0x20000, scoped, tag = 'input window, operand 0']
    #allocation4 [shape = 's32[2]{0}', space=sflag, size = 0x8, scoped, tag = 'scoped memory for text_encoder_forward.1']
    #allocation5 [shape = 's32[2]{0}', space=sflag, size = 0x8, scoped, tag = 'scoped memory for text_encoder_forward.1']
    #allocation6 [shape = 'u8[131072]{0}', space=vmem, size = 0x20000, scoped, tag = 'input window, operand 1']
    #allocation7 [shape = 's32[2]{0}', space=sflag, size = 0x8, scoped, tag = 'scoped memory for text_encoder_forward.1']
    #allocation8 [shape = 'u8[1024]{0}', space=vmem, size = 0x400, scoped, tag = 'input window, operand 2']
    #allocation9 [shape = 'u8[65536]{0}', space=vmem, size = 0x10000, scoped, tag = 'input window, operand 3, single buffered']
    #allocation10 [shape = 's32[1]{0}', space=sflag, size = 0x4, scoped, tag = 'scoped memory for text_encoder_forward.1']
    #allocation11 [shape = 'u8[98304]{0}', space=vmem, size = 0x18000, scoped, tag = 'input window, operand 4']
    #allocation12 [shape = 'u8[6144]{0}', space=vmem, size = 0x1800, scoped, tag = 'input window, operand 5']
    #allocation13 [shape = 'u8[131072]{0}', space=vmem, size = 0x20000, scoped, tag = 'input window, operand 6']
    #allocation14 [shape = 'u8[8192]{0}', space=vmem, size = 0x2000, scoped, tag = 'input window, operand 7']
    #allocation15 [shape = 'u8[65536]{0}', space=vmem, size = 0x10000, scoped, tag = 'input window, operand 8']
    #allocation16 [shape = 'u8[8192]{0}', space=vmem, size = 0x2000, scoped, tag = 'input window, operand 9']
    #allocation17 [shape = 'u8[49152]{0}', space=vmem, size = 0xc000, scoped, tag = 'input window, operand 10']
    #allocation18 [shape = 'u8[1024]{0}', space=vmem, size = 0x400, scoped, tag = 'input window, operand 11']
    #allocation19 [shape = 'u8[98304]{0}', space=vmem, size = 0x18000, scoped, tag = 'input window, operand 12']
    #allocation20 [shape = 'u8[8192]{0}', space=vmem, size = 0x2000, scoped, tag = 'input window, operand 13, single buffered']
    #allocation21 [shape = 'u8[512]{0}', space=vmem, size = 0x400, scoped, tag = 'input window, operand 14, single buffered']
    #allocation22 [shape = 'u8[131072]{0}', space=vmem, size = 0x20000, scoped, tag = 'output window, operand 0']
    #allocation23 [shape = 'u8[131072]{0}', space=vmem, size = 0x20000, scoped, tag = 'output window, operand 1']
    #allocation24 [shape = 's32[2]{0}', space=sflag, size = 0x8, scoped, tag = 'scoped memory for text_encoder_forward.1']
    %22 = vsyncpa [#allocation4], 0
    %s23 = scalar_lea.sflag [#allocation4], 1
    %24 = vsyncpa %s23, 0
    %25 = vsyncpa [#allocation7], 0
    %s26 = scalar_lea.sflag [#allocation7], 1
    %27 = vsyncpa %s26, 0
    %28 = vsyncpa [#allocation10], 0
    %29 = vsyncpa [#allocation5], 0
    %s30 = scalar_lea.sflag [#allocation5], 1
    %31 = vsyncpa %s30, 0
    %32 = vsyncpa [#allocation24], 0
    %s33 = scalar_lea.sflag [#allocation24], 1
    %34 = vsyncpa %s33, 0
    loop: start=0, step=1, limit=6
    $region2: #{text_encoder_forward.1} parent=1 // loop_pre_header
      _
    $region3: #{text_encoder_forward.1} parent=1 // loop_header
      %s36 = sphi 0, %s40
      %p37 = scmp.ge.s32.totalorder %s36, 6
      %s43 = sphi 0, %s55
      %s44 = sphi 0, %s51
      %s45 = sphi 0, %s43
      %s46 = sphi 0, %s44
      %s47 = sphi 0, %s45
      %s48 = sphi 0, %s46
      %s58 = sphi 0, %s60
      %s61 = sphi 0, %s58
      %s62 = sphi 0, %s61
      %s78 = sphi 0, %s62
      %s84 = sphi 0, %s86
      %s87 = sphi 0, %s84
      %s88 = sphi 0, %s87
      %s104 = sphi 0, %s88
      %s110 = sphi 0, %s112
      %s113 = sphi 0, %s110
      %s114 = sphi 0, %s113
      %s130 = sphi 0, %s114
      %s134 = sphi 0, %s134
      %s136 = sphi 0, %s134
      %s137 = sphi 0, %s136
      %s151 = sphi 0, %s137
      %s157 = sphi 0, %s159
      %s160 = sphi 0, %s157
      %s161 = sphi 0, %s160
      %s177 = sphi 0, %s161
      %s183 = sphi 0, %s185
      %s186 = sphi 0, %s183
      %s187 = sphi 0, %s186
      %s203 = sphi 0, %s187
      %s209 = sphi 0, %s211
      %s212 = sphi 0, %s209
      %s213 = sphi 0, %s212
      %s229 = sphi 0, %s213
      %s235 = sphi 0, %s237
      %s238 = sphi 0, %s235
      %s239 = sphi 0, %s238
      %s255 = sphi 0, %s239
      %s261 = sphi 0, %s263
      %s264 = sphi 0, %s261
      %s265 = sphi 0, %s264
      %s281 = sphi 0, %s265
      %s287 = sphi 0, %s289
      %s290 = sphi 0, %s287
      %s291 = sphi 0, %s290
      %s307 = sphi 0, %s291
      %s313 = sphi 0, %s315
      %s316 = sphi 0, %s313
      %s317 = sphi 0, %s316
      %s333 = sphi 0, %s317
      %s339 = sphi 0, %s341
      %s342 = sphi 0, %s339
      %s343 = sphi 0, %s342
      %s359 = sphi 0, %s343
      %s365 = sphi 0, %s367
      %s368 = sphi 0, %s365
      %s369 = sphi 0, %s368
      %s385 = sphi 0, %s369
      %s389 = sphi 0, %s389
      %s391 = sphi 0, %s389
      %s392 = sphi 0, %s391
      %s406 = sphi 0, %s392
      %s410 = sphi 0, %s410
      %s412 = sphi 0, %s410
      %s413 = sphi 0, %s412
      %s427 = sphi 0, %s413
      %s433 = sphi 0, %s435
      %s436 = sphi 0, %s433
      %s437 = sphi 0, %s436
      %s453 = sphi 0, %s437
      %s459 = sphi 0, %s461
      %s462 = sphi 0, %s459
      %s463 = sphi 0, %s462
      %s479 = sphi 0, %s463
    $region4: #{text_encoder_forward.1} parent=1 // loop_header_branch
      %39 = sbr.rel (%p37) target = $region8
    $region5: #{text_encoder_forward.1} parent=1 // loop_body
      %s41 = ssub.s32 %s36, 1
      %s42 = ssub.s32 %s36, 2
      %s49 = sadd.s32 1, %s44
      %p50 = scmp.ge.s32.totalorder %s49, 2
      %s51 = scalar_select %p50, 0, %s49
      %s52 = sadd.s32 1, %s43
      %s53 = scalar_select %p50, %s52, %s43
      %p54 = scmp.ge.s32.totalorder %s53, 2
      %s55 = scalar_select %p54, 0, %s53
      %s56 = ssub.s32 %s43, %s55
      %p57 = scmp.eq.s32.totalorder %s56, 0
      %s59 = sadd.s32 %s58, 1
      %s60 = scalar_select %p57, %s58, %s59
      %p63 = pneg %p57
      %p64 = scmp.eq.s32.totalorder %s36, 3
      %p65 = por %p63, %p64
      %p66 = scmp.ne.s32.totalorder %s58, %s61
      %p67 = scmp.eq.s32.totalorder %s36, 0
      %p68 = por %p66, %p67
      %p69 = scmp.ne.s32.totalorder %s58, %s61
      %p70 = scmp.eq.s32.totalorder %s41, 3
      %p71 = por %p69, %p70
      %p72 = scmp.ne.s32.totalorder %s61, %s62
      %p73 = scmp.eq.s32.totalorder %s41, 0
      %p74 = por %p72, %p73
      %p75 = scmp.ne.s32.totalorder %s61, %s62
      %p76 = scmp.eq.s32.totalorder %s42, 3
      %p77 = por %p75, %p76
      %p79 = scmp.ne.s32.totalorder %s62, %s78
      %p80 = scmp.eq.s32.totalorder %s42, 0
      %p81 = por %p79, %p80
      %s82 = ssub.s32 %s43, %s55
      %p83 = scmp.eq.s32.totalorder %s82, 0
      %s85 = sadd.s32 %s84, 1
      %s86 = scalar_select %p83, %s84, %s85
      %p89 = pneg %p83
      %p90 = scmp.eq.s32.totalorder %s36, 3
      %p91 = por %p89, %p90
      %p92 = scmp.ne.s32.totalorder %s84, %s87
      %p93 = scmp.eq.s32.totalorder %s36, 0
      %p94 = por %p92, %p93
      %p95 = scmp.ne.s32.totalorder %s84, %s87
      %p96 = scmp.eq.s32.totalorder %s41, 3
      %p97 = por %p95, %p96
      %p98 = scmp.ne.s32.totalorder %s87, %s88
      %p99 = scmp.eq.s32.totalorder %s41, 0
      %p100 = por %p98, %p99
      %p101 = scmp.ne.s32.totalorder %s87, %s88
      %p102 = scmp.eq.s32.totalorder %s42, 3
      %p103 = por %p101, %p102
      %p105 = scmp.ne.s32.totalorder %s88, %s104
      %p106 = scmp.eq.s32.totalorder %s42, 0
      %p107 = por %p105, %p106
      %s108 = ssub.s32 %s43, %s55
      %p109 = scmp.eq.s32.totalorder %s108, 0
      %s111 = sadd.s32 %s110, 1
      %s112 = scalar_select %p109, %s110, %s111
      %p115 = pneg %p109
      %p116 = scmp.eq.s32.totalorder %s36, 3
      %p117 = por %p115, %p116
      %p118 = scmp.ne.s32.totalorder %s110, %s113
      %p119 = scmp.eq.s32.totalorder %s36, 0
      %p120 = por %p118, %p119
      %p121 = scmp.ne.s32.totalorder %s110, %s113
      %p122 = scmp.eq.s32.totalorder %s41, 3
      %p123 = por %p121, %p122
      %p124 = scmp.ne.s32.totalorder %s113, %s114
      %p125 = scmp.eq.s32.totalorder %s41, 0
      %p126 = por %p124, %p125
      %p127 = scmp.ne.s32.totalorder %s113, %s114
      %p128 = scmp.eq.s32.totalorder %s42, 3
      %p129 = por %p127, %p128
      %p131 = scmp.ne.s32.totalorder %s114, %s130
      %p132 = scmp.eq.s32.totalorder %s42, 0
      %p133 = por %p131, %p132
      %s135 = sadd.s32 %s134, 1
      %p138 = scmp.eq.s32.totalorder %s36, 3
      %p139 = scmp.ne.s32.totalorder %s134, %s136
      %p140 = scmp.eq.s32.totalorder %s36, 0
      %p141 = por %p139, %p140
      %p142 = scmp.ne.s32.totalorder %s134, %s136
      %p143 = scmp.eq.s32.totalorder %s41, 3
      %p144 = por %p142, %p143
      %p145 = scmp.ne.s32.totalorder %s136, %s137
      %p146 = scmp.eq.s32.totalorder %s41, 0
      %p147 = por %p145, %p146
      %p148 = scmp.ne.s32.totalorder %s136, %s137
      %p149 = scmp.eq.s32.totalorder %s42, 3
      %p150 = por %p148, %p149
      %p152 = scmp.ne.s32.totalorder %s137, %s151
      %p153 = scmp.eq.s32.totalorder %s42, 0
      %p154 = por %p152, %p153
      %s155 = ssub.s32 %s44, %s51
      %p156 = scmp.eq.s32.totalorder %s155, 0
      %s158 = sadd.s32 %s157, 1
      %s159 = scalar_select %p156, %s157, %s158
      %p162 = pneg %p156
      %p163 = scmp.eq.s32.totalorder %s36, 3
      %p164 = por %p162, %p163
      %p165 = scmp.ne.s32.totalorder %s157, %s160
      %p166 = scmp.eq.s32.totalorder %s36, 0
      %p167 = por %p165, %p166
      %p168 = scmp.ne.s32.totalorder %s157, %s160
      %p169 = scmp.eq.s32.totalorder %s41, 3
      %p170 = por %p168, %p169
      %p171 = scmp.ne.s32.totalorder %s160, %s161
      %p172 = scmp.eq.s32.totalorder %s41, 0
      %p173 = por %p171, %p172
      %p174 = scmp.ne.s32.totalorder %s160, %s161
      %p175 = scmp.eq.s32.totalorder %s42, 3
      %p176 = por %p174, %p175
      %p178 = scmp.ne.s32.totalorder %s161, %s177
      %p179 = scmp.eq.s32.totalorder %s42, 0
      %p180 = por %p178, %p179
      %s181 = ssub.s32 %s44, %s51
      %p182 = scmp.eq.s32.totalorder %s181, 0
      %s184 = sadd.s32 %s183, 1
      %s185 = scalar_select %p182, %s183, %s184
      %p188 = pneg %p182
      %p189 = scmp.eq.s32.totalorder %s36, 3
      %p190 = por %p188, %p189
      %p191 = scmp.ne.s32.totalorder %s183, %s186
      %p192 = scmp.eq.s32.totalorder %s36, 0
      %p193 = por %p191, %p192
      %p194 = scmp.ne.s32.totalorder %s183, %s186
      %p195 = scmp.eq.s32.totalorder %s41, 3
      %p196 = por %p194, %p195
      %p197 = scmp.ne.s32.totalorder %s186, %s187
      %p198 = scmp.eq.s32.totalorder %s41, 0
      %p199 = por %p197, %p198
      %p200 = scmp.ne.s32.totalorder %s186, %s187
      %p201 = scmp.eq.s32.totalorder %s42, 3
      %p202 = por %p200, %p201
      %p204 = scmp.ne.s32.totalorder %s187, %s203
      %p205 = scmp.eq.s32.totalorder %s42, 0
      %p206 = por %p204, %p205
      %s207 = ssub.s32 %s44, %s51
      %p208 = scmp.eq.s32.totalorder %s207, 0
      %s210 = sadd.s32 %s209, 1
      %s211 = scalar_select %p208, %s209, %s210
      %p214 = pneg %p208
      %p215 = scmp.eq.s32.totalorder %s36, 3
      %p216 = por %p214, %p215
      %p217 = scmp.ne.s32.totalorder %s209, %s212
      %p218 = scmp.eq.s32.totalorder %s36, 0
      %p219 = por %p217, %p218
      %p220 = scmp.ne.s32.totalorder %s209, %s212
      %p221 = scmp.eq.s32.totalorder %s41, 3
      %p222 = por %p220, %p221
      %p223 = scmp.ne.s32.totalorder %s212, %s213
      %p224 = scmp.eq.s32.totalorder %s41, 0
      %p225 = por %p223, %p224
      %p226 = scmp.ne.s32.totalorder %s212, %s213
      %p227 = scmp.eq.s32.totalorder %s42, 3
      %p228 = por %p226, %p227
      %p230 = scmp.ne.s32.totalorder %s213, %s229
      %p231 = scmp.eq.s32.totalorder %s42, 0
      %p232 = por %p230, %p231
      %s233 = ssub.s32 %s44, %s51
      %p234 = scmp.eq.s32.totalorder %s233, 0
      %s236 = sadd.s32 %s235, 1
      %s237 = scalar_select %p234, %s235, %s236
      %p240 = pneg %p234
      %p241 = scmp.eq.s32.totalorder %s36, 3
      %p242 = por %p240, %p241
      %p243 = scmp.ne.s32.totalorder %s235, %s238
      %p244 = scmp.eq.s32.totalorder %s36, 0
      %p245 = por %p243, %p244
      %p246 = scmp.ne.s32.totalorder %s235, %s238
      %p247 = scmp.eq.s32.totalorder %s41, 3
      %p248 = por %p246, %p247
      %p249 = scmp.ne.s32.totalorder %s238, %s239
      %p250 = scmp.eq.s32.totalorder %s41, 0
      %p251 = por %p249, %p250
      %p252 = scmp.ne.s32.totalorder %s238, %s239
      %p253 = scmp.eq.s32.totalorder %s42, 3
      %p254 = por %p252, %p253
      %p256 = scmp.ne.s32.totalorder %s239, %s255
      %p257 = scmp.eq.s32.totalorder %s42, 0
      %p258 = por %p256, %p257
      %s259 = ssub.s32 %s44, %s51
      %p260 = scmp.eq.s32.totalorder %s259, 0
      %s262 = sadd.s32 %s261, 1
      %s263 = scalar_select %p260, %s261, %s262
      %p266 = pneg %p260
      %p267 = scmp.eq.s32.totalorder %s36, 3
      %p268 = por %p266, %p267
      %p269 = scmp.ne.s32.totalorder %s261, %s264
      %p270 = scmp.eq.s32.totalorder %s36, 0
      %p271 = por %p269, %p270
      %p272 = scmp.ne.s32.totalorder %s261, %s264
      %p273 = scmp.eq.s32.totalorder %s41, 3
      %p274 = por %p272, %p273
      %p275 = scmp.ne.s32.totalorder %s264, %s265
      %p276 = scmp.eq.s32.totalorder %s41, 0
      %p277 = por %p275, %p276
      %p278 = scmp.ne.s32.totalorder %s264, %s265
      %p279 = scmp.eq.s32.totalorder %s42, 3
      %p280 = por %p278, %p279
      %p282 = scmp.ne.s32.totalorder %s265, %s281
      %p283 = scmp.eq.s32.totalorder %s42, 0
      %p284 = por %p282, %p283
      %s285 = ssub.s32 %s44, %s51
      %p286 = scmp.eq.s32.totalorder %s285, 0
      %s288 = sadd.s32 %s287, 1
      %s289 = scalar_select %p286, %s287, %s288
      %p292 = pneg %p286
      %p293 = scmp.eq.s32.totalorder %s36, 3
      %p294 = por %p292, %p293
      %p295 = scmp.ne.s32.totalorder %s287, %s290
      %p296 = scmp.eq.s32.totalorder %s36, 0
      %p297 = por %p295, %p296
      %p298 = scmp.ne.s32.totalorder %s287, %s290
      %p299 = scmp.eq.s32.totalorder %s41, 3
      %p300 = por %p298, %p299
      %p301 = scmp.ne.s32.totalorder %s290, %s291
      %p302 = scmp.eq.s32.totalorder %s41, 0
      %p303 = por %p301, %p302
      %p304 = scmp.ne.s32.totalorder %s290, %s291
      %p305 = scmp.eq.s32.totalorder %s42, 3
      %p306 = por %p304, %p305
      %p308 = scmp.ne.s32.totalorder %s291, %s307
      %p309 = scmp.eq.s32.totalorder %s42, 0
      %p310 = por %p308, %p309
      %s311 = ssub.s32 %s44, %s51
      %p312 = scmp.eq.s32.totalorder %s311, 0
      %s314 = sadd.s32 %s313, 1
      %s315 = scalar_select %p312, %s313, %s314
      %p318 = pneg %p312
      %p319 = scmp.eq.s32.totalorder %s36, 3
      %p320 = por %p318, %p319
      %p321 = scmp.ne.s32.totalorder %s313, %s316
      %p322 = scmp.eq.s32.totalorder %s36, 0
      %p323 = por %p321, %p322
      %p324 = scmp.ne.s32.totalorder %s313, %s316
      %p325 = scmp.eq.s32.totalorder %s41, 3
      %p326 = por %p324, %p325
      %p327 = scmp.ne.s32.totalorder %s316, %s317
      %p328 = scmp.eq.s32.totalorder %s41, 0
      %p329 = por %p327, %p328
      %p330 = scmp.ne.s32.totalorder %s316, %s317
      %p331 = scmp.eq.s32.totalorder %s42, 3
      %p332 = por %p330, %p331
      %p334 = scmp.ne.s32.totalorder %s317, %s333
      %p335 = scmp.eq.s32.totalorder %s42, 0
      %p336 = por %p334, %p335
      %s337 = ssub.s32 %s44, %s51
      %p338 = scmp.eq.s32.totalorder %s337, 0
      %s340 = sadd.s32 %s339, 1
      %s341 = scalar_select %p338, %s339, %s340
      %p344 = pneg %p338
      %p345 = scmp.eq.s32.totalorder %s36, 3
      %p346 = por %p344, %p345
      %p347 = scmp.ne.s32.totalorder %s339, %s342
      %p348 = scmp.eq.s32.totalorder %s36, 0
      %p349 = por %p347, %p348
      %p350 = scmp.ne.s32.totalorder %s339, %s342
      %p351 = scmp.eq.s32.totalorder %s41, 3
      %p352 = por %p350, %p351
      %p353 = scmp.ne.s32.totalorder %s342, %s343
      %p354 = scmp.eq.s32.totalorder %s41, 0
      %p355 = por %p353, %p354
      %p356 = scmp.ne.s32.totalorder %s342, %s343
      %p357 = scmp.eq.s32.totalorder %s42, 3
      %p358 = por %p356, %p357
      %p360 = scmp.ne.s32.totalorder %s343, %s359
      %p361 = scmp.eq.s32.totalorder %s42, 0
      %p362 = por %p360, %p361
      %s363 = ssub.s32 %s44, %s51
      %p364 = scmp.eq.s32.totalorder %s363, 0
      %s366 = sadd.s32 %s365, 1
      %s367 = scalar_select %p364, %s365, %s366
      %p370 = pneg %p364
      %p371 = scmp.eq.s32.totalorder %s36, 3
      %p372 = por %p370, %p371
      %p373 = scmp.ne.s32.totalorder %s365, %s368
      %p374 = scmp.eq.s32.totalorder %s36, 0
      %p375 = por %p373, %p374
      %p376 = scmp.ne.s32.totalorder %s365, %s368
      %p377 = scmp.eq.s32.totalorder %s41, 3
      %p378 = por %p376, %p377
      %p379 = scmp.ne.s32.totalorder %s368, %s369
      %p380 = scmp.eq.s32.totalorder %s41, 0
      %p381 = por %p379, %p380
      %p382 = scmp.ne.s32.totalorder %s368, %s369
      %p383 = scmp.eq.s32.totalorder %s42, 3
      %p384 = por %p382, %p383
      %p386 = scmp.ne.s32.totalorder %s369, %s385
      %p387 = scmp.eq.s32.totalorder %s42, 0
      %p388 = por %p386, %p387
      %s390 = sadd.s32 %s389, 1
      %p393 = scmp.eq.s32.totalorder %s36, 3
      %p394 = scmp.ne.s32.totalorder %s389, %s391
      %p395 = scmp.eq.s32.totalorder %s36, 0
      %p396 = por %p394, %p395
      %p397 = scmp.ne.s32.totalorder %s389, %s391
      %p398 = scmp.eq.s32.totalorder %s41, 3
      %p399 = por %p397, %p398
      %p400 = scmp.ne.s32.totalorder %s391, %s392
      %p401 = scmp.eq.s32.totalorder %s41, 0
      %p402 = por %p400, %p401
      %p403 = scmp.ne.s32.totalorder %s391, %s392
      %p404 = scmp.eq.s32.totalorder %s42, 3
      %p405 = por %p403, %p404
      %p407 = scmp.ne.s32.totalorder %s392, %s406
      %p408 = scmp.eq.s32.totalorder %s42, 0
      %p409 = por %p407, %p408
      %s411 = sadd.s32 %s410, 1
      %p414 = scmp.eq.s32.totalorder %s36, 3
      %p415 = scmp.ne.s32.totalorder %s410, %s412
      %p416 = scmp.eq.s32.totalorder %s36, 0
      %p417 = por %p415, %p416
      %p418 = scmp.ne.s32.totalorder %s410, %s412
      %p419 = scmp.eq.s32.totalorder %s41, 3
      %p420 = por %p418, %p419
      %p421 = scmp.ne.s32.totalorder %s412, %s413
      %p422 = scmp.eq.s32.totalorder %s41, 0
      %p423 = por %p421, %p422
      %p424 = scmp.ne.s32.totalorder %s412, %s413
      %p425 = scmp.eq.s32.totalorder %s42, 3
      %p426 = por %p424, %p425
      %p428 = scmp.ne.s32.totalorder %s413, %s427
      %p429 = scmp.eq.s32.totalorder %s42, 0
      %p430 = por %p428, %p429
      %s431 = ssub.s32 %s43, %s55
      %p432 = scmp.eq.s32.totalorder %s431, 0
      %s434 = sadd.s32 %s433, 1
      %s435 = scalar_select %p432, %s433, %s434
      %p438 = pneg %p432
      %p439 = scmp.eq.s32.totalorder %s36, 3
      %p440 = por %p438, %p439
      %p441 = scmp.ne.s32.totalorder %s433, %s436
      %p442 = scmp.eq.s32.totalorder %s36, 0
      %p443 = por %p441, %p442
      %p444 = scmp.ne.s32.totalorder %s433, %s436
      %p445 = scmp.eq.s32.totalorder %s41, 3
      %p446 = por %p444, %p445
      %p447 = scmp.ne.s32.totalorder %s436, %s437
      %p448 = scmp.eq.s32.totalorder %s41, 0
      %p449 = por %p447, %p448
      %p450 = scmp.ne.s32.totalorder %s436, %s437
      %p451 = scmp.eq.s32.totalorder %s42, 3
      %p452 = por %p450, %p451
      %p454 = scmp.ne.s32.totalorder %s437, %s453
      %p455 = scmp.eq.s32.totalorder %s42, 0
      %p456 = por %p454, %p455
      %s457 = ssub.s32 %s43, %s55
      %p458 = scmp.eq.s32.totalorder %s457, 0
      %s460 = sadd.s32 %s459, 1
      %s461 = scalar_select %p458, %s459, %s460
      %p464 = pneg %p458
      %p465 = scmp.eq.s32.totalorder %s36, 3
      %p466 = por %p464, %p465
      %p467 = scmp.ne.s32.totalorder %s459, %s462
      %p468 = scmp.eq.s32.totalorder %s36, 0
      %p469 = por %p467, %p468
      %p470 = scmp.ne.s32.totalorder %s459, %s462
      %p471 = scmp.eq.s32.totalorder %s41, 3
      %p472 = por %p470, %p471
      %p473 = scmp.ne.s32.totalorder %s462, %s463
      %p474 = scmp.eq.s32.totalorder %s41, 0
      %p475 = por %p473, %p474
      %p476 = scmp.ne.s32.totalorder %s462, %s463
      %p477 = scmp.eq.s32.totalorder %s42, 3
      %p478 = por %p476, %p477
      %p480 = scmp.ne.s32.totalorder %s463, %s479
      %p481 = scmp.eq.s32.totalorder %s42, 0
      %p482 = por %p480, %p481
      %p483 = scmp.le.s32.totalorder 1, %s36
      %p484 = scmp.lt.s32.totalorder %s36, 5
      %p485 = pnand %p483, %p484
      %p486 = pneg %p485
      // Predicated region
      $region9: #{text_encoder_forward.1} parent=5 // pred_check
        _
      $region10: #{text_encoder_forward.1} parent=5 // pred_check_branch
        %488 = sbr.rel (%p485) target = $region12
      $region11: #{text_encoder_forward.1} parent=5 // pred_region
        %s489 = ssub.s32 %s36, 1
        // Predicated region
        $region13: #{text_encoder_forward.1} parent=11 // pred_check
          %p490 = pneg %p147
        $region14: #{text_encoder_forward.1} parent=11 // pred_check_branch
          %492 = sbr.rel (%p490) target = $region16
        $region15: #{text_encoder_forward.1} parent=11 // pred_region
          %s494 = ssub.s32 2048, 2048
          %495 = vsyncadd [#allocation10], %s494
          %s496 = sshll.u32 [#allocation9], 4
          %s497 = int_to_ptr.vmem [resolvable:$true] %s496
          %502 = dma.hbm_to_vmem [thread:$0]  %s3, 2048, %s497, [#allocation10], 128, 128, 8
        $region16: #{text_encoder_forward.1} parent=11 // pred_fallthru
          _
        // Predicated region
        $region17: #{text_encoder_forward.1} parent=11 // pred_check
          %p503 = pneg %p402
        $region18: #{text_encoder_forward.1} parent=11 // pred_check_branch
          %505 = sbr.rel (%p503) target = $region20
        $region19: #{text_encoder_forward.1} parent=11 // pred_region
          %s507 = ssub.s32 256, 256
          %508 = vsyncadd [#allocation7], %s507
          %s509 = sshll.u32 [#allocation20], 4
          %s510 = int_to_ptr.vmem [resolvable:$true] %s509
          %515 = dma.hbm_to_vmem [thread:$0]  %s13, 256, %s510, [#allocation7], 64, 64, 4
        $region20: #{text_encoder_forward.1} parent=11 // pred_fallthru
          _
        // Predicated region
        $region21: #{text_encoder_forward.1} parent=11 // pred_check
          %p516 = pneg %p423
        $region22: #{text_encoder_forward.1} parent=11 // pred_check_branch
          %518 = sbr.rel (%p516) target = $region24
        $region23: #{text_encoder_forward.1} parent=11 // pred_region
          %s520 = ssub.s32 16, 16
          %521 = vsyncadd [#allocation10], %s520
          %s523 = sshll.u32 [#allocation21], 4
          %s524 = int_to_ptr.vmem [resolvable:$true] %s523
          %526 = dma.hbm_to_vmem [thread:$0]  %s14, 16, %s524, [#allocation10]
        $region24: #{text_encoder_forward.1} parent=11 // pred_fallthru
          _
      $region12: #{text_encoder_forward.1} parent=5 // pred_fallthru
        _
      %p527 = scmp.lt.s32.totalorder %s36, 4
      // Predicated region
      $region25: #{text_encoder_forward.1} parent=5 // pred_check
        %p528 = pneg %p527
      $region26: #{text_encoder_forward.1} parent=5 // pred_check_branch
        %530 = sbr.rel (%p528) target = $region28
      $region27: #{text_encoder_forward.1} parent=5 // pred_region
        // Predicated region
        $region29: #{text_encoder_forward.1} parent=27 // pred_check
          %p531 = pneg %p68
        $region30: #{text_encoder_forward.1} parent=27 // pred_check_branch
          %533 = sbr.rel (%p531) target = $region32
        $region31: #{text_encoder_forward.1} parent=27 // pred_region
          %s534 = sand.u32 %s36, 1
          %s535 = scalar_lea.sflag [#allocation4], %s534
          %s536 = sand.u32 %s58, 1
          %s537 = smul.addr %s536, 128
          %s538 = scalar_lea.vmem [#allocation3], %s537
          %s540 = ssub.s32 2048, 2048
          %541 = vsyncadd %s535, %s540
          %s542 = smul.addr %s43, 16
          %s543 = smul.addr %s542, 128
          %s544 = scalar_lea.hbm %s0, %s543
          %s545 = sshll.u32 %s538, 4
          %s546 = int_to_ptr.vmem [resolvable:$true] %s545
          %551 = dma.hbm_to_vmem [thread:$0]  %s544, 2048, %s546, %s535, 128, 128, 8
        $region32: #{text_encoder_forward.1} parent=27 // pred_fallthru
          _
        // Predicated region
        $region33: #{text_encoder_forward.1} parent=27 // pred_check
          %p552 = pneg %p94
        $region34: #{text_encoder_forward.1} parent=27 // pred_check_branch
          %554 = sbr.rel (%p552) target = $region36
        $region35: #{text_encoder_forward.1} parent=27 // pred_region
          %s555 = sand.u32 %s36, 1
          %s556 = scalar_lea.sflag [#allocation7], %s555
          %s557 = sand.u32 %s84, 1
          %s558 = smul.addr %s557, 128
          %s559 = scalar_lea.vmem [#allocation6], %s558
          %s561 = ssub.s32 2048, 2048
          %562 = vsyncadd %s556, %s561
          %s563 = smul.addr %s43, 16
          %s564 = smul.addr %s563, 128
          %s565 = scalar_lea.hbm %s1, %s564
          %s566 = sshll.u32 %s559, 4
          %s567 = int_to_ptr.vmem [resolvable:$true] %s566
          %572 = dma.hbm_to_vmem [thread:$0]  %s565, 2048, %s567, %s556, 128, 128, 8
        $region36: #{text_encoder_forward.1} parent=27 // pred_fallthru
          _
        // Predicated region
        $region37: #{text_encoder_forward.1} parent=27 // pred_check
          %p573 = pneg %p120
        $region38: #{text_encoder_forward.1} parent=27 // pred_check_branch
          %575 = sbr.rel (%p573) target = $region40
        $region39: #{text_encoder_forward.1} parent=27 // pred_region
          %s576 = sand.u32 %s36, 1
          %s577 = scalar_lea.sflag [#allocation7], %s576
          %s578 = sand.u32 %s110, 1
          %s579 = scalar_lea.vmem [#allocation8], %s578
          %s581 = ssub.s32 16, 16
          %582 = vsyncadd %s577, %s581
          %s583 = smul.addr %s43, 16
          %s584 = scalar_lea.hbm %s2, %s583
          %s586 = sshll.u32 %s579, 4
          %s587 = int_to_ptr.vmem [resolvable:$true] %s586
          %589 = dma.hbm_to_vmem [thread:$0]  %s584, 16, %s587, %s577
        $region40: #{text_encoder_forward.1} parent=27 // pred_fallthru
          _
        // Predicated region
        $region41: #{text_encoder_forward.1} parent=27 // pred_check
          %p590 = pneg %p167
        $region42: #{text_encoder_forward.1} parent=27 // pred_check_branch
          %592 = sbr.rel (%p590) target = $region44
        $region43: #{text_encoder_forward.1} parent=27 // pred_region
          %s593 = sand.u32 %s36, 1
          %s594 = scalar_lea.sflag [#allocation4], %s593
          %s595 = sand.u32 %s157, 1
          %s596 = smul.addr %s595, 96
          %s597 = scalar_lea.vmem [#allocation11], %s596
          %s599 = ssub.s32 1536, 1536
          %600 = vsyncadd %s594, %s599
          %s601 = smul.addr %s44, 24
          %s602 = smul.addr %s601, 64
          %s603 = scalar_lea.hbm %s4, %s602
          %s604 = sshll.u32 %s597, 4
          %s605 = int_to_ptr.vmem [resolvable:$true] %s604
          %610 = dma.hbm_to_vmem [thread:$0]  %s603, 1536, %s605, %s594, 384, 384, 24
        $region44: #{text_encoder_forward.1} parent=27 // pred_fallthru
          _
        // Predicated region
        $region45: #{text_encoder_forward.1} parent=27 // pred_check
          %p611 = pneg %p193
        $region46: #{text_encoder_forward.1} parent=27 // pred_check_branch
          %613 = sbr.rel (%p611) target = $region48
        $region47: #{text_encoder_forward.1} parent=27 // pred_region
          %s614 = sand.u32 %s36, 1
          %s615 = scalar_lea.sflag [#allocation7], %s614
          %s616 = sand.u32 %s183, 1
          %s617 = smul.addr %s616, 6
          %s618 = scalar_lea.vmem [#allocation12], %s617
          %s620 = ssub.s32 96, 96
          %621 = vsyncadd %s615, %s620
          %s622 = smul.addr %s44, 6
          %s623 = smul.addr %s622, 16
          %s624 = scalar_lea.hbm %s5, %s623
          %s626 = sshll.u32 %s618, 4
          %s627 = int_to_ptr.vmem [resolvable:$true] %s626
          %629 = dma.hbm_to_vmem [thread:$0]  %s624, 96, %s627, %s615
        $region48: #{text_encoder_forward.1} parent=27 // pred_fallthru
          _
        // Predicated region
        $region49: #{text_encoder_forward.1} parent=27 // pred_check
          %p630 = pneg %p219
        $region50: #{text_encoder_forward.1} parent=27 // pred_check_branch
          %632 = sbr.rel (%p630) target = $region52
        $region51: #{text_encoder_forward.1} parent=27 // pred_region
          %s633 = sand.u32 %s36, 1
          %s634 = scalar_lea.sflag [#allocation4], %s633
          %s635 = sand.u32 %s209, 1
          %s636 = smul.addr %s635, 128
          %s637 = scalar_lea.vmem [#allocation13], %s636
          %s639 = ssub.s32 2048, 2048
          %640 = vsyncadd %s634, %s639
          %s641 = smul.addr %s44, 32
          %s642 = smul.addr %s641, 64
          %s643 = scalar_lea.hbm %s6, %s642
          %s644 = sshll.u32 %s637, 4
          %s645 = int_to_ptr.vmem [resolvable:$true] %s644
          %650 = dma.hbm_to_vmem [thread:$0]  %s643, 2048, %s645, %s634, 64, 64, 4
        $region52: #{text_encoder_forward.1} parent=27 // pred_fallthru
          _
        // Predicated region
        $region53: #{text_encoder_forward.1} parent=27 // pred_check
          %p651 = pneg %p245
        $region54: #{text_encoder_forward.1} parent=27 // pred_check_branch
          %653 = sbr.rel (%p651) target = $region56
        $region55: #{text_encoder_forward.1} parent=27 // pred_region
          %s654 = sand.u32 %s36, 1
          %s655 = scalar_lea.sflag [#allocation7], %s654
          %s656 = sand.u32 %s235, 1
          %s657 = smul.addr %s656, 8
          %s658 = scalar_lea.vmem [#allocation14], %s657
          %s660 = ssub.s32 128, 128
          %661 = vsyncadd %s655, %s660
          %s662 = smul.addr %s44, 128
          %s663 = scalar_lea.hbm %s7, %s662
          %s665 = sshll.u32 %s658, 4
          %s666 = int_to_ptr.vmem [resolvable:$true] %s665
          %668 = dma.hbm_to_vmem [thread:$0]  %s663, 128, %s666, %s655
        $region56: #{text_encoder_forward.1} parent=27 // pred_fallthru
          _
        // Predicated region
        $region57: #{text_encoder_forward.1} parent=27 // pred_check
          %p669 = pneg %p271
        $region58: #{text_encoder_forward.1} parent=27 // pred_check_branch
          %671 = sbr.rel (%p669) target = $region60
        $region59: #{text_encoder_forward.1} parent=27 // pred_region
          %s672 = sand.u32 %s36, 1
          %s673 = scalar_lea.sflag [#allocation4], %s672
          %s674 = sand.u32 %s261, 1
          %s675 = smul.addr %s674, 64
          %s676 = scalar_lea.vmem [#allocation15], %s675
          %s678 = ssub.s32 1024, 1024
          %679 = vsyncadd %s673, %s678
          %s680 = smul.addr %s44, 16
          %s681 = smul.addr %s680, 64
          %s682 = scalar_lea.hbm %s8, %s681
          %s683 = sshll.u32 %s676, 4
          %s684 = int_to_ptr.vmem [resolvable:$true] %s683
          %689 = dma.hbm_to_vmem [thread:$0]  %s682, 1024, %s684, %s673, 64, 64, 4
        $region60: #{text_encoder_forward.1} parent=27 // pred_fallthru
          _
        // Predicated region
        $region61: #{text_encoder_forward.1} parent=27 // pred_check
          %p690 = pneg %p297
        $region62: #{text_encoder_forward.1} parent=27 // pred_check_branch
          %692 = sbr.rel (%p690) target = $region64
        $region63: #{text_encoder_forward.1} parent=27 // pred_region
          %s693 = sand.u32 %s36, 1
          %s694 = scalar_lea.sflag [#allocation7], %s693
          %s695 = sand.u32 %s287, 1
          %s696 = smul.addr %s695, 8
          %s697 = scalar_lea.vmem [#allocation16], %s696
          %s699 = ssub.s32 128, 128
          %700 = vsyncadd %s694, %s699
          %s701 = smul.addr %s44, 2
          %s702 = smul.addr %s701, 64
          %s703 = scalar_lea.hbm %s9, %s702
          %s704 = sshll.u32 %s697, 4
          %s705 = int_to_ptr.vmem [resolvable:$true] %s704
          %710 = dma.hbm_to_vmem [thread:$0]  %s703, 128, %s705, %s694, 64, 64, 4
        $region64: #{text_encoder_forward.1} parent=27 // pred_fallthru
          _
        // Predicated region
        $region65: #{text_encoder_forward.1} parent=27 // pred_check
          %p711 = pneg %p323
        $region66: #{text_encoder_forward.1} parent=27 // pred_check_branch
          %713 = sbr.rel (%p711) target = $region68
        $region67: #{text_encoder_forward.1} parent=27 // pred_region
          %s714 = sand.u32 %s36, 1
          %s715 = scalar_lea.sflag [#allocation4], %s714
          %s716 = sand.u32 %s313, 1
          %s717 = smul.addr %s716, 48
          %s718 = scalar_lea.vmem [#allocation17], %s717
          %s720 = ssub.s32 768, 768
          %721 = vsyncadd %s715, %s720
          %s722 = smul.addr %s44, 12
          %s723 = smul.addr %s722, 64
          %s724 = scalar_lea.hbm %s10, %s723
          %s725 = sshll.u32 %s718, 4
          %s726 = int_to_ptr.vmem [resolvable:$true] %s725
          %731 = dma.hbm_to_vmem [thread:$0]  %s724, 768, %s726, %s715, 64, 64, 4
        $region68: #{text_encoder_forward.1} parent=27 // pred_fallthru
          _
        // Predicated region
        $region69: #{text_encoder_forward.1} parent=27 // pred_check
          %p732 = pneg %p349
        $region70: #{text_encoder_forward.1} parent=27 // pred_check_branch
          %734 = sbr.rel (%p732) target = $region72
        $region71: #{text_encoder_forward.1} parent=27 // pred_region
          %s735 = sand.u32 %s36, 1
          %s736 = scalar_lea.sflag [#allocation7], %s735
          %s737 = sand.u32 %s339, 1
          %s738 = scalar_lea.vmem [#allocation18], %s737
          %s740 = ssub.s32 16, 16
          %741 = vsyncadd %s736, %s740
          %s742 = smul.addr %s44, 16
          %s743 = scalar_lea.hbm %s11, %s742
          %s745 = sshll.u32 %s738, 4
          %s746 = int_to_ptr.vmem [resolvable:$true] %s745
          %748 = dma.hbm_to_vmem [thread:$0]  %s743, 16, %s746, %s736
        $region72: #{text_encoder_forward.1} parent=27 // pred_fallthru
          _
        // Predicated region
        $region73: #{text_encoder_forward.1} parent=27 // pred_check
          %p749 = pneg %p375
        $region74: #{text_encoder_forward.1} parent=27 // pred_check_branch
          %751 = sbr.rel (%p749) target = $region76
        $region75: #{text_encoder_forward.1} parent=27 // pred_region
          %s752 = sand.u32 %s36, 1
          %s753 = scalar_lea.sflag [#allocation4], %s752
          %s754 = sand.u32 %s365, 1
          %s755 = smul.addr %s754, 96
          %s756 = scalar_lea.vmem [#allocation19], %s755
          %s758 = ssub.s32 1536, 1536
          %759 = vsyncadd %s753, %s758
          %s760 = smul.addr %s44, 24
          %s761 = smul.addr %s760, 64
          %s762 = scalar_lea.hbm %s12, %s761
          %s763 = sshll.u32 %s756, 4
          %s764 = int_to_ptr.vmem [resolvable:$true] %s763
          %769 = dma.hbm_to_vmem [thread:$0]  %s762, 1536, %s764, %s753, 64, 64, 4
        $region76: #{text_encoder_forward.1} parent=27 // pred_fallthru
          _
      $region28: #{text_encoder_forward.1} parent=5 // pred_fallthru
        _
      %p770 = scmp.le.s32.totalorder 1, %s36
      %p771 = scmp.lt.s32.totalorder %s36, 5
      %p772 = pnand %p770, %p771
      %p773 = pneg %p772
      // Predicated region
      $region77: #{text_encoder_forward.1} parent=5 // pred_check
        _
      $region78: #{text_encoder_forward.1} parent=5 // pred_check_branch
        %775 = sbr.rel (%p772) target = $region80
      $region79: #{text_encoder_forward.1} parent=5 // pred_region
        %s776 = ssub.s32 %s36, 1
        %s777 = sand.u32 %s41, 1
        %s778 = scalar_lea.sflag [#allocation4], %s777
        %s779 = sand.u32 %s61, 1
        %s780 = smul.addr %s779, 128
        %s781 = scalar_lea.vmem [#allocation3], %s780
        // Predicated region
        $region81: #{text_encoder_forward.1} parent=79 // pred_check
          %p782 = pneg %p74
        $region82: #{text_encoder_forward.1} parent=79 // pred_check_branch
          %784 = sbr.rel (%p782) target = $region84
        $region83: #{text_encoder_forward.1} parent=79 // pred_region
          %785 = dma.done %s778, 2048
        $region84: #{text_encoder_forward.1} parent=79 // pred_fallthru
          _
        %s786 = sand.u32 %s41, 1
        %s787 = scalar_lea.sflag [#allocation7], %s786
        %s788 = sand.u32 %s87, 1
        %s789 = smul.addr %s788, 128
        %s790 = scalar_lea.vmem [#allocation6], %s789
        // Predicated region
        $region85: #{text_encoder_forward.1} parent=79 // pred_check
          %p791 = pneg %p100
        $region86: #{text_encoder_forward.1} parent=79 // pred_check_branch
          %793 = sbr.rel (%p791) target = $region88
        $region87: #{text_encoder_forward.1} parent=79 // pred_region
          %794 = dma.done %s787, 2048
        $region88: #{text_encoder_forward.1} parent=79 // pred_fallthru
          _
        %s795 = sand.u32 %s41, 1
        %s796 = scalar_lea.sflag [#allocation7], %s795
        %s797 = sand.u32 %s113, 1
        %s798 = scalar_lea.vmem [#allocation8], %s797
        // Predicated region
        $region89: #{text_encoder_forward.1} parent=79 // pred_check
          %p799 = pneg %p126
        $region90: #{text_encoder_forward.1} parent=79 // pred_check_branch
          %801 = sbr.rel (%p799) target = $region92
        $region91: #{text_encoder_forward.1} parent=79 // pred_region
          %802 = dma.done %s796, 16
        $region92: #{text_encoder_forward.1} parent=79 // pred_fallthru
          _
        // Predicated region
        $region93: #{text_encoder_forward.1} parent=79 // pred_check
          %p803 = pneg %p147
        $region94: #{text_encoder_forward.1} parent=79 // pred_check_branch
          %805 = sbr.rel (%p803) target = $region96
        $region95: #{text_encoder_forward.1} parent=79 // pred_region
          %806 = dma.done [#allocation10], 2048
        $region96: #{text_encoder_forward.1} parent=79 // pred_fallthru
          _
        %s807 = sand.u32 %s41, 1
        %s808 = scalar_lea.sflag [#allocation4], %s807
        %s809 = sand.u32 %s160, 1
        %s810 = smul.addr %s809, 96
        %s811 = scalar_lea.vmem [#allocation11], %s810
        // Predicated region
        $region97: #{text_encoder_forward.1} parent=79 // pred_check
          %p812 = pneg %p173
        $region98: #{text_encoder_forward.1} parent=79 // pred_check_branch
          %814 = sbr.rel (%p812) target = $region100
        $region99: #{text_encoder_forward.1} parent=79 // pred_region
          %815 = dma.done %s808, 1536
        $region100: #{text_encoder_forward.1} parent=79 // pred_fallthru
          _
        %s816 = sand.u32 %s41, 1
        %s817 = scalar_lea.sflag [#allocation7], %s816
        %s818 = sand.u32 %s186, 1
        %s819 = smul.addr %s818, 6
        %s820 = scalar_lea.vmem [#allocation12], %s819
        // Predicated region
        $region101: #{text_encoder_forward.1} parent=79 // pred_check
          %p821 = pneg %p199
        $region102: #{text_encoder_forward.1} parent=79 // pred_check_branch
          %823 = sbr.rel (%p821) target = $region104
        $region103: #{text_encoder_forward.1} parent=79 // pred_region
          %824 = dma.done %s817, 96
        $region104: #{text_encoder_forward.1} parent=79 // pred_fallthru
          _
        %s825 = sand.u32 %s41, 1
        %s826 = scalar_lea.sflag [#allocation4], %s825
        %s827 = sand.u32 %s212, 1
        %s828 = smul.addr %s827, 128
        %s829 = scalar_lea.vmem [#allocation13], %s828
        // Predicated region
        $region105: #{text_encoder_forward.1} parent=79 // pred_check
          %p830 = pneg %p225
        $region106: #{text_encoder_forward.1} parent=79 // pred_check_branch
          %832 = sbr.rel (%p830) target = $region108
        $region107: #{text_encoder_forward.1} parent=79 // pred_region
          %833 = dma.done %s826, 2048
        $region108: #{text_encoder_forward.1} parent=79 // pred_fallthru
          _
        %s834 = sand.u32 %s41, 1
        %s835 = scalar_lea.sflag [#allocation7], %s834
        %s836 = sand.u32 %s238, 1
        %s837 = smul.addr %s836, 8
        %s838 = scalar_lea.vmem [#allocation14], %s837
        // Predicated region
        $region109: #{text_encoder_forward.1} parent=79 // pred_check
          %p839 = pneg %p251
        $region110: #{text_encoder_forward.1} parent=79 // pred_check_branch
          %841 = sbr.rel (%p839) target = $region112
        $region111: #{text_encoder_forward.1} parent=79 // pred_region
          %842 = dma.done %s835, 128
        $region112: #{text_encoder_forward.1} parent=79 // pred_fallthru
          _
        %s843 = sand.u32 %s41, 1
        %s844 = scalar_lea.sflag [#allocation4], %s843
        %s845 = sand.u32 %s264, 1
        %s846 = smul.addr %s845, 64
        %s847 = scalar_lea.vmem [#allocation15], %s846
        // Predicated region
        $region113: #{text_encoder_forward.1} parent=79 // pred_check
          %p848 = pneg %p277
        $region114: #{text_encoder_forward.1} parent=79 // pred_check_branch
          %850 = sbr.rel (%p848) target = $region116
        $region115: #{text_encoder_forward.1} parent=79 // pred_region
          %851 = dma.done %s844, 1024
        $region116: #{text_encoder_forward.1} parent=79 // pred_fallthru
          _
        %s852 = sand.u32 %s41, 1
        %s853 = scalar_lea.sflag [#allocation7], %s852
        %s854 = sand.u32 %s290, 1
        %s855 = smul.addr %s854, 8
        %s856 = scalar_lea.vmem [#allocation16], %s855
        // Predicated region
        $region117: #{text_encoder_forward.1} parent=79 // pred_check
          %p857 = pneg %p303
        $region118: #{text_encoder_forward.1} parent=79 // pred_check_branch
          %859 = sbr.rel (%p857) target = $region120
        $region119: #{text_encoder_forward.1} parent=79 // pred_region
          %860 = dma.done %s853, 128
        $region120: #{text_encoder_forward.1} parent=79 // pred_fallthru
          _
        %s861 = sand.u32 %s41, 1
        %s862 = scalar_lea.sflag [#allocation4], %s861
        %s863 = sand.u32 %s316, 1
        %s864 = smul.addr %s863, 48
        %s865 = scalar_lea.vmem [#allocation17], %s864
        // Predicated region
        $region121: #{text_encoder_forward.1} parent=79 // pred_check
          %p866 = pneg %p329
        $region122: #{text_encoder_forward.1} parent=79 // pred_check_branch
          %868 = sbr.rel (%p866) target = $region124
        $region123: #{text_encoder_forward.1} parent=79 // pred_region
          %869 = dma.done %s862, 768
        $region124: #{text_encoder_forward.1} parent=79 // pred_fallthru
          _
        %s870 = sand.u32 %s41, 1
        %s871 = scalar_lea.sflag [#allocation7], %s870
        %s872 = sand.u32 %s342, 1
        %s873 = scalar_lea.vmem [#allocation18], %s872
        // Predicated region
        $region125: #{text_encoder_forward.1} parent=79 // pred_check
          %p874 = pneg %p355
        $region126: #{text_encoder_forward.1} parent=79 // pred_check_branch
          %876 = sbr.rel (%p874) target = $region128
        $region127: #{text_encoder_forward.1} parent=79 // pred_region
          %877 = dma.done %s871, 16
        $region128: #{text_encoder_forward.1} parent=79 // pred_fallthru
          _
        %s878 = sand.u32 %s41, 1
        %s879 = scalar_lea.sflag [#allocation4], %s878
        %s880 = sand.u32 %s368, 1
        %s881 = smul.addr %s880, 96
        %s882 = scalar_lea.vmem [#allocation19], %s881
        // Predicated region
        $region129: #{text_encoder_forward.1} parent=79 // pred_check
          %p883 = pneg %p381
        $region130: #{text_encoder_forward.1} parent=79 // pred_check_branch
          %885 = sbr.rel (%p883) target = $region132
        $region131: #{text_encoder_forward.1} parent=79 // pred_region
          %886 = dma.done %s879, 1536
        $region132: #{text_encoder_forward.1} parent=79 // pred_fallthru
          _
        // Predicated region
        $region133: #{text_encoder_forward.1} parent=79 // pred_check
          %p887 = pneg %p402
        $region134: #{text_encoder_forward.1} parent=79 // pred_check_branch
          %889 = sbr.rel (%p887) target = $region136
        $region135: #{text_encoder_forward.1} parent=79 // pred_region
          %890 = dma.done [#allocation7], 256
        $region136: #{text_encoder_forward.1} parent=79 // pred_fallthru
          _
        // Predicated region
        $region137: #{text_encoder_forward.1} parent=79 // pred_check
          %p891 = pneg %p423
        $region138: #{text_encoder_forward.1} parent=79 // pred_check_branch
          %893 = sbr.rel (%p891) target = $region140
        $region139: #{text_encoder_forward.1} parent=79 // pred_region
          %894 = dma.done [#allocation10], 16
        $region140: #{text_encoder_forward.1} parent=79 // pred_fallthru
          _
        %s895 = sand.u32 %s41, 1
        %s896 = scalar_lea.sflag [#allocation4], %s895
        %s897 = sand.u32 %s61, 1
        %s898 = smul.addr %s897, 128
        %s899 = scalar_lea.vmem [#allocation3], %s898
        %p900 = pneg %p74
        %p901 = pneg %p71
        %s902 = sand.u32 %s41, 1
        %s903 = scalar_lea.sflag [#allocation7], %s902
        %s904 = sand.u32 %s87, 1
        %s905 = smul.addr %s904, 128
        %s906 = scalar_lea.vmem [#allocation6], %s905
        %p907 = pneg %p100
        %p908 = pneg %p97
        %s909 = sand.u32 %s41, 1
        %s910 = scalar_lea.sflag [#allocation7], %s909
        %s911 = sand.u32 %s113, 1
        %s912 = scalar_lea.vmem [#allocation8], %s911
        %p913 = pneg %p126
        %p914 = pneg %p123
        %p915 = pneg %p147
        %p916 = pneg %p144
        %s917 = sand.u32 %s41, 1
        %s918 = scalar_lea.sflag [#allocation4], %s917
        %s919 = sand.u32 %s160, 1
        %s920 = smul.addr %s919, 96
        %s921 = scalar_lea.vmem [#allocation11], %s920
        %p922 = pneg %p173
        %p923 = pneg %p170
        %s924 = sand.u32 %s41, 1
        %s925 = scalar_lea.sflag [#allocation7], %s924
        %s926 = sand.u32 %s186, 1
        %s927 = smul.addr %s926, 6
        %s928 = scalar_lea.vmem [#allocation12], %s927
        %p929 = pneg %p199
        %p930 = pneg %p196
        %s931 = sand.u32 %s41, 1
        %s932 = scalar_lea.sflag [#allocation4], %s931
        %s933 = sand.u32 %s212, 1
        %s934 = smul.addr %s933, 128
        %s935 = scalar_lea.vmem [#allocation13], %s934
        %p936 = pneg %p225
        %p937 = pneg %p222
        %s938 = sand.u32 %s41, 1
        %s939 = scalar_lea.sflag [#allocation7], %s938
        %s940 = sand.u32 %s238, 1
        %s941 = smul.addr %s940, 8
        %s942 = scalar_lea.vmem [#allocation14], %s941
        %p943 = pneg %p251
        %p944 = pneg %p248
        %s945 = sand.u32 %s41, 1
        %s946 = scalar_lea.sflag [#allocation4], %s945
        %s947 = sand.u32 %s264, 1
        %s948 = smul.addr %s947, 64
        %s949 = scalar_lea.vmem [#allocation15], %s948
        %p950 = pneg %p277
        %p951 = pneg %p274
        %s952 = sand.u32 %s41, 1
        %s953 = scalar_lea.sflag [#allocation7], %s952
        %s954 = sand.u32 %s290, 1
        %s955 = smul.addr %s954, 8
        %s956 = scalar_lea.vmem [#allocation16], %s955
        %p957 = pneg %p303
        %p958 = pneg %p300
        %s959 = sand.u32 %s41, 1
        %s960 = scalar_lea.sflag [#allocation4], %s959
        %s961 = sand.u32 %s316, 1
        %s962 = smul.addr %s961, 48
        %s963 = scalar_lea.vmem [#allocation17], %s962
        %p964 = pneg %p329
        %p965 = pneg %p326
        %s966 = sand.u32 %s41, 1
        %s967 = scalar_lea.sflag [#allocation7], %s966
        %s968 = sand.u32 %s342, 1
        %s969 = scalar_lea.vmem [#allocation18], %s968
        %p970 = pneg %p355
        %p971 = pneg %p352
        %s972 = sand.u32 %s41, 1
        %s973 = scalar_lea.sflag [#allocation4], %s972
        %s974 = sand.u32 %s368, 1
        %s975 = smul.addr %s974, 96
        %s976 = scalar_lea.vmem [#allocation19], %s975
        %p977 = pneg %p381
        %p978 = pneg %p378
        %p979 = pneg %p402
        %p980 = pneg %p399
        %p981 = pneg %p423
        %p982 = pneg %p420
        %p983 = pneg %p449
        %p984 = pneg %p446
        %s985 = sand.u32 %s436, 1
        %s986 = scalar_lea.sflag [#allocation5], %s985
        %s987 = sand.u32 %s436, 1
        %s988 = smul.addr %s987, 128
        %s989 = scalar_lea.vmem [#allocation22], %s988
        %p990 = pneg %p475
        %p991 = pneg %p472
        %s992 = sand.u32 %s462, 1
        %s993 = scalar_lea.sflag [#allocation24], %s992
        %s994 = sand.u32 %s462, 1
        %s995 = smul.addr %s994, 128
        %s996 = scalar_lea.vmem [#allocation23], %s995
        %p998 = scmp.eq.s32.totalorder %s46, 0
        // Predicated region
        $region141: #{text_encoder_forward.1} parent=79 // pred_check
          %p999 = pneg %p998
        $region142: #{text_encoder_forward.1} parent=79 // pred_check_branch
          %1001 = sbr.rel (%p999) target = $region144
        $region143: #{text_encoder_forward.1} parent=79 // pred_region
          %v1002 = vld [vmem:[%s781] sm:$0xff]
          %v1003 = vld [vmem:[%s781 + $0x8] sm:$0xff]
          %v1004 = vld [vmem:[%s781 + $0x10] sm:$0xff]
          %v1005 = vld [vmem:[%s781 + $0x18] sm:$0xff]
          %v1006 = vld [vmem:[%s781 + $0x20] sm:$0xff]
          %v1007 = vld [vmem:[%s781 + $0x28] sm:$0xff]
          %v1008 = vld [vmem:[%s781 + $0x30] sm:$0xff]
          %v1009 = vld [vmem:[%s781 + $0x38] sm:$0xff]
          %v1010 = vld [vmem:[%s781 + $0x40] sm:$0xff]
          %v1011 = vld [vmem:[%s781 + $0x48] sm:$0xff]
          %v1012 = vld [vmem:[%s781 + $0x50] sm:$0xff]
          %v1013 = vld [vmem:[%s781 + $0x58] sm:$0xff]
          %v1014 = vld [vmem:[%s781 + $0x60] sm:$0xff]
          %v1015 = vld [vmem:[%s781 + $0x68] sm:$0xff]
          %v1016 = vld [vmem:[%s781 + $0x70] sm:$0xff]
          %v1017 = vld [vmem:[%s781 + $0x78] sm:$0xff]
          %vm1018 = vcmask 261120
          %1019 = vst.msk [vmem:[#allocation2] sm:$0xff] %vm1018, %v1002
          %1020 = vst.msk [vmem:[#allocation2 + $0x8] sm:$0xff] %vm1018, %v1003
          %1021 = vst.msk [vmem:[#allocation2 + $0x10] sm:$0xff] %vm1018, %v1004
          %1022 = vst.msk [vmem:[#allocation2 + $0x18] sm:$0xff] %vm1018, %v1005
          %1023 = vst.msk [vmem:[#allocation2 + $0x20] sm:$0xff] %vm1018, %v1006
          %1024 = vst.msk [vmem:[#allocation2 + $0x28] sm:$0xff] %vm1018, %v1007
          %1025 = vst.msk [vmem:[#allocation2 + $0x30] sm:$0xff] %vm1018, %v1008
          %1026 = vst.msk [vmem:[#allocation2 + $0x38] sm:$0xff] %vm1018, %v1009
          %1027 = vst.msk [vmem:[#allocation2 + $0x40] sm:$0xff] %vm1018, %v1010
          %1028 = vst.msk [vmem:[#allocation2 + $0x48] sm:$0xff] %vm1018, %v1011
          %1029 = vst.msk [vmem:[#allocation2 + $0x50] sm:$0xff] %vm1018, %v1012
          %1030 = vst.msk [vmem:[#allocation2 + $0x58] sm:$0xff] %vm1018, %v1013
          %1031 = vst.msk [vmem:[#allocation2 + $0x60] sm:$0xff] %vm1018, %v1014
          %1032 = vst.msk [vmem:[#allocation2 + $0x68] sm:$0xff] %vm1018, %v1015
          %1033 = vst.msk [vmem:[#allocation2 + $0x70] sm:$0xff] %vm1018, %v1016
          %1034 = vst.msk [vmem:[#allocation2 + $0x78] sm:$0xff] %vm1018, %v1017
        $region144: #{text_encoder_forward.1} parent=79 // pred_fallthru
          _
        %v1035 = vld [vmem:[#allocation2] sm:$0xff]
        %v1036 = vld [vmem:[#allocation2 + $0x8] sm:$0xff]
        %v1037 = vld [vmem:[#allocation2 + $0x10] sm:$0xff]
        %v1038 = vld [vmem:[#allocation2 + $0x18] sm:$0xff]
        %v1039 = vld [vmem:[#allocation2 + $0x20] sm:$0xff]
        %v1040 = vld [vmem:[#allocation2 + $0x28] sm:$0xff]
        %v1041 = vld [vmem:[#allocation2 + $0x30] sm:$0xff]
        %v1042 = vld [vmem:[#allocation2 + $0x38] sm:$0xff]
        %v1043 = vld [vmem:[#allocation2 + $0x40] sm:$0xff]
        %v1044 = vld [vmem:[#allocation2 + $0x48] sm:$0xff]
        %v1045 = vld [vmem:[#allocation2 + $0x50] sm:$0xff]
        %v1046 = vld [vmem:[#allocation2 + $0x58] sm:$0xff]
        %v1047 = vld [vmem:[#allocation2 + $0x60] sm:$0xff]
        %v1048 = vld [vmem:[#allocation2 + $0x68] sm:$0xff]
        %v1049 = vld [vmem:[#allocation2 + $0x70] sm:$0xff]
        %v1050 = vld [vmem:[#allocation2 + $0x78] sm:$0xff]
        %v1051 = vld [vmem:[%s790] sm:$0xff]
        %v1052 = vld [vmem:[%s790 + $0x8] sm:$0xff]
        %v1053 = vld [vmem:[%s790 + $0x10] sm:$0xff]
        %v1054 = vld [vmem:[%s790 + $0x18] sm:$0xff]
        %v1055 = vld [vmem:[%s790 + $0x20] sm:$0xff]
        %v1056 = vld [vmem:[%s790 + $0x28] sm:$0xff]
        %v1057 = vld [vmem:[%s790 + $0x30] sm:$0xff]
        %v1058 = vld [vmem:[%s790 + $0x38] sm:$0xff]
        %v1059 = vld [vmem:[%s790 + $0x40] sm:$0xff]
        %v1060 = vld [vmem:[%s790 + $0x48] sm:$0xff]
        %v1061 = vld [vmem:[%s790 + $0x50] sm:$0xff]
        %v1062 = vld [vmem:[%s790 + $0x58] sm:$0xff]
        %v1063 = vld [vmem:[%s790 + $0x60] sm:$0xff]
        %v1064 = vld [vmem:[%s790 + $0x68] sm:$0xff]
        %v1065 = vld [vmem:[%s790 + $0x70] sm:$0xff]
        %v1066 = vld [vmem:[%s790 + $0x78] sm:$0xff]
        %v1067 = vld [vmem:[%s798] sm:$0x1]
        %v1068 = vld [vmem:[#allocation9] sm:$0xff]
        %v1069 = vld [vmem:[#allocation9 + $0x8] sm:$0xff]
        %v1070 = vld [vmem:[#allocation9 + $0x10] sm:$0xff]
        %v1071 = vld [vmem:[#allocation9 + $0x18] sm:$0xff]
        %v1072 = vld [vmem:[#allocation9 + $0x20] sm:$0xff]
        %v1073 = vld [vmem:[#allocation9 + $0x28] sm:$0xff]
        %v1074 = vld [vmem:[#allocation9 + $0x30] sm:$0xff]
        %v1075 = vld [vmem:[#allocation9 + $0x38] sm:$0xff]
        %v1076 = vld [vmem:[#allocation9 + $0x40] sm:$0xff]
        %v1077 = vld [vmem:[#allocation9 + $0x48] sm:$0xff]
        %v1078 = vld [vmem:[#allocation9 + $0x50] sm:$0xff]
        %v1079 = vld [vmem:[#allocation9 + $0x58] sm:$0xff]
        %v1080 = vld [vmem:[#allocation9 + $0x60] sm:$0xff]
        %v1081 = vld [vmem:[#allocation9 + $0x68] sm:$0xff]
        %v1082 = vld [vmem:[#allocation9 + $0x70] sm:$0xff]
        %v1083 = vld [vmem:[#allocation9 + $0x78] sm:$0xff]
        %v1084 = vpack.c.bf16 %v1036, %v1035
        %v1085 = vpack.c.bf16 %v1038, %v1037
        %v1086 = vpack.c.bf16 %v1040, %v1039
        %v1087 = vpack.c.bf16 %v1042, %v1041
        %v1088 = vpack.c.bf16 %v1044, %v1043
        %v1089 = vpack.c.bf16 %v1046, %v1045
        %v1090 = vpack.c.bf16 %v1048, %v1047
        %v1091 = vpack.c.bf16 %v1050, %v1049
        %v1092 = vld [vmem:[%s811] sm:$0xff]
        %v1093 = vld [vmem:[%s811 + $0x8] sm:$0xff]
        %v1094 = vld [vmem:[%s811 + $0x10] sm:$0xff]
        %v1095 = vld [vmem:[%s811 + $0x18] sm:$0xff]
        %v1096 = vld [vmem:[%s811 + $0x20] sm:$0xff]
        %v1097 = vld [vmem:[%s811 + $0x28] sm:$0xff]
        %v1098 = vld [vmem:[%s811 + $0x30] sm:$0xff]
        %v1099 = vld [vmem:[%s811 + $0x38] sm:$0xff]
        %v1100 = vld [vmem:[%s811 + $0x40] sm:$0xff]
        %v1101 = vld [vmem:[%s811 + $0x48] sm:$0xff]
        %v1102 = vld [vmem:[%s811 + $0x50] sm:$0xff]
        %v1103 = vld [vmem:[%s811 + $0x58] sm:$0xff]
        %v1104 = vld [vmem:[%s820] sm:$0x3f]
        %v1106 = vlaneseq
        %v1107 = vshrl.u32 %v1106, 7
        %v1108 = vsub.s32 0, %v1107
        %v1109 = vrot.slane %v1104, %v1108
        %v1110 = vlaneseq
        %v1111 = vshrl.u32 %v1110, 7
        %v1112 = vsub.s32 1, %v1111
        %v1113 = vrot.slane %v1104, %v1112
        %v1114 = vlaneseq
        %v1115 = vshrl.u32 %v1114, 7
        %v1116 = vsub.s32 2, %v1115
        %v1117 = vrot.slane %v1104, %v1116
        %v1118 = vlaneseq
        %v1119 = vshrl.u32 %v1118, 7
        %v1120 = vsub.s32 3, %v1119
        %v1121 = vrot.slane %v1104, %v1120
        %v1122 = vlaneseq
        %v1123 = vshrl.u32 %v1122, 7
        %v1124 = vsub.s32 4, %v1123
        %v1125 = vrot.slane %v1104, %v1124
        %v1126 = vlaneseq
        %v1127 = vshrl.u32 %v1126, 7
        %v1128 = vsub.s32 5, %v1127
        %v1129 = vrot.slane %v1104, %v1128
        %v1148 = vunpack.c.l.b16 %v1092
        %v1149 = vunpack.c.h.b16 %v1092
        %v1150 = vunpack.c.l.b16 %v1093
        %v1151 = vunpack.c.h.b16 %v1093
        %v1152 = vunpack.c.l.b16 %v1094
        %v1153 = vunpack.c.h.b16 %v1094
        %v1154 = vunpack.c.l.b16 %v1095
        %v1155 = vunpack.c.h.b16 %v1095
        %v1156 = vunpack.c.l.b16 %v1096
        %v1157 = vunpack.c.h.b16 %v1096
        %v1158 = vunpack.c.l.b16 %v1097
        %v1159 = vunpack.c.h.b16 %v1097
        %v1160 = vunpack.c.l.b16 %v1098
        %v1161 = vunpack.c.h.b16 %v1098
        %v1162 = vunpack.c.l.b16 %v1099
        %v1163 = vunpack.c.h.b16 %v1099
        %v1164 = vunpack.c.l.b16 %v1100
        %v1165 = vunpack.c.h.b16 %v1100
        %v1166 = vunpack.c.l.b16 %v1101
        %v1167 = vunpack.c.h.b16 %v1101
        %v1168 = vunpack.c.l.b16 %v1102
        %v1169 = vunpack.c.h.b16 %v1102
        %v1170 = vunpack.c.l.b16 %v1103
        %v1171 = vunpack.c.h.b16 %v1103
        %v1172 = vpack.c.b16 %v1154, %v1148
        %v1173 = vpack.c.b16 %v1155, %v1149
        %v1174 = vpack.c.b16 %v1156, %v1150
        %v1175 = vpack.c.b16 %v1157, %v1151
        %v1176 = vpack.c.b16 %v1158, %v1152
        %v1177 = vpack.c.b16 %v1159, %v1153
        %v1178 = vpack.c.b16 %v1166, %v1160
        %v1179 = vpack.c.b16 %v1167, %v1161
        %v1180 = vpack.c.b16 %v1168, %v1162
        %v1181 = vpack.c.b16 %v1169, %v1163
        %v1182 = vpack.c.b16 %v1170, %v1164
        %v1183 = vpack.c.b16 %v1171, %v1165
        %vm1196 = vcmask 261120
        %v1198 = vsel %vm1196, %v1084, 0
        %v1201 = vsel %vm1196, %v1085, 0
        %v1204 = vsel %vm1196, %v1086, 0
        %v1207 = vsel %vm1196, %v1087, 0
        %v1210 = vsel %vm1196, %v1088, 0
        %v1213 = vsel %vm1196, %v1089, 0
        %v1216 = vsel %vm1196, %v1090, 0
        %v1219 = vsel %vm1196, %v1091, 0
        %1221 = vmatprep.subr.bf16.mxu0 %v1173
        %1222 = vmatpush1.bf16.msra.mxu0 %v1172
        %1223 = vmatprep.subr.bf16.mxu0 %v1179
        %1224 = vmatpush1.bf16.msra.mxu0 %v1178
        %1225 = vmatprep.subr.bf16.mxu0 0
        %1226 = vmatpush1.bf16.msra.mxu0 0
        %1227 = vmatprep.subr.bf16.mxu0 0
        %1228 = vmatpush1.bf16.msra.mxu0 0
        %1229 = vmatprep.subr.bf16.mxu0 0
        %1230 = vmatpush1.bf16.msra.mxu0 0
        %1231 = vmatprep.subr.bf16.mxu0 0
        %1232 = vmatpush1.bf16.msra.mxu0 0
        %1233 = vmatprep.subr.bf16.mxu0 0
        %1234 = vmatpush1.bf16.msra.mxu0 0
        %1235 = vmatprep.subr.bf16.mxu0 0
        %1236 = vmatpush1.bf16.msra.mxu0 0
        %1237 = vmatprep.subr.bf16.mxu0 0
        %1238 = vmatpush1.bf16.msra.mxu0 0
        %1239 = vmatprep.subr.bf16.mxu0 0
        %1240 = vmatpush1.bf16.msra.mxu0 0
        %1241 = vmatprep.subr.bf16.mxu0 0
        %1242 = vmatpush1.bf16.msra.mxu0 0
        %1243 = vmatprep.subr.bf16.mxu0 0
        %1244 = vmatpush1.bf16.msra.mxu0 0
        %1245 = vmatprep.subr.bf16.mxu0 0
        %1246 = vmatpush1.bf16.msra.mxu0 0
        %1247 = vmatprep.subr.bf16.mxu0 0
        %1248 = vmatpush1.bf16.msra.mxu0 0
        %1249 = vmatprep.subr.bf16.mxu0 0
        %1250 = vmatpush1.bf16.msra.mxu0 0
        %1251 = vmatprep.subr.bf16.mxu0 0
        %1252 = vmatpush1.bf16.msra.mxu0 0
        %1253 = vmatprep.mubr.bf16.mxu0 0
        %1254 = vmatmul.mubr.bf16.gmra.mrb[0].mxu0 %v1198
        %v1255 = vpop.f32.mrb[0].mxu0
        %v1256 = vadd.f32 %v1109, %v1255
        %v1257 = vpop.f32.mrb[0].mxu0
        %v1258 = vadd.f32 %v1113, %v1257
        %v1259 = vpop.f32.mrb[0].mxu0
        %v1260 = vadd.f32 %v1109, %v1259
        %v1261 = vpop.f32.mrb[0].mxu0
        %v1262 = vadd.f32 %v1113, %v1261
        %1263 = vmatprep.mubr.bf16.mxu0 0
        %1264 = vmatmul.mubr.bf16.gmra.mrb[0].mxu0 %v1201
        %v1265 = vpop.f32.mrb[0].mxu0
        %v1266 = vadd.f32 %v1109, %v1265
        %v1267 = vpop.f32.mrb[0].mxu0
        %v1268 = vadd.f32 %v1113, %v1267
        %v1269 = vpop.f32.mrb[0].mxu0
        %v1270 = vadd.f32 %v1109, %v1269
        %v1271 = vpop.f32.mrb[0].mxu0
        %v1272 = vadd.f32 %v1113, %v1271
        %1273 = vmatprep.mubr.bf16.mxu0 0
        %1274 = vmatmul.mubr.bf16.gmra.mrb[0].mxu0 %v1204
        %v1275 = vpop.f32.mrb[0].mxu0
        %v1276 = vadd.f32 %v1109, %v1275
        %v1277 = vpop.f32.mrb[0].mxu0
        %v1278 = vadd.f32 %v1113, %v1277
        %v1279 = vpop.f32.mrb[0].mxu0
        %v1280 = vadd.f32 %v1109, %v1279
        %v1281 = vpop.f32.mrb[0].mxu0
        %v1282 = vadd.f32 %v1113, %v1281
        %1283 = vmatprep.mubr.bf16.mxu0 0
        %1284 = vmatmul.mubr.bf16.gmra.mrb[0].mxu0 %v1207
        %v1285 = vpop.f32.mrb[0].mxu0
        %v1286 = vadd.f32 %v1109, %v1285
        %v1287 = vpop.f32.mrb[0].mxu0
        %v1288 = vadd.f32 %v1113, %v1287
        %v1289 = vpop.f32.mrb[0].mxu0
        %v1290 = vadd.f32 %v1109, %v1289
        %v1291 = vpop.f32.mrb[0].mxu0
        %v1292 = vadd.f32 %v1113, %v1291
        %1293 = vmatprep.mubr.bf16.mxu0 0
        %1294 = vmatmul.mubr.bf16.gmra.mrb[0].mxu0 %v1210
        %v1295 = vpop.f32.mrb[0].mxu0
        %v1296 = vadd.f32 %v1109, %v1295
        %v1297 = vpop.f32.mrb[0].mxu0
        %v1298 = vadd.f32 %v1113, %v1297
        %v1299 = vpop.f32.mrb[0].mxu0
        %v1300 = vadd.f32 %v1109, %v1299
        %v1301 = vpop.f32.mrb[0].mxu0
        %v1302 = vadd.f32 %v1113, %v1301
        %1303 = vmatprep.mubr.bf16.mxu0 0
        %1304 = vmatmul.mubr.bf16.gmra.mrb[0].mxu0 %v1213
        %v1305 = vpop.f32.mrb[0].mxu0
        %v1306 = vadd.f32 %v1109, %v1305
        %v1307 = vpop.f32.mrb[0].mxu0
        %v1308 = vadd.f32 %v1113, %v1307
        %v1309 = vpop.f32.mrb[0].mxu0
        %v1310 = vadd.f32 %v1109, %v1309
        %v1311 = vpop.f32.mrb[0].mxu0
        %v1312 = vadd.f32 %v1113, %v1311
        %1313 = vmatprep.mubr.bf16.mxu0 0
        %1314 = vmatmul.mubr.bf16.gmra.mrb[0].mxu0 %v1216
        %v1315 = vpop.f32.mrb[0].mxu0
        %v1316 = vadd.f32 %v1109, %v1315
        %v1317 = vpop.f32.mrb[0].mxu0
        %v1318 = vadd.f32 %v1113, %v1317
        %v1319 = vpop.f32.mrb[0].mxu0
        %v1320 = vadd.f32 %v1109, %v1319
        %v1321 = vpop.f32.mrb[0].mxu0
        %v1322 = vadd.f32 %v1113, %v1321
        %1323 = vmatprep.mubr.bf16.mxu0 0
        %1324 = vmatmul.mubr.bf16.gmra.mrb[0].mxu0 %v1219
        %v1325 = vpop.f32.mrb[0].mxu0
        %v1326 = vadd.f32 %v1109, %v1325
        %v1327 = vpop.f32.mrb[0].mxu0
        %v1328 = vadd.f32 %v1113, %v1327
        %v1329 = vpop.f32.mrb[0].mxu0
        %v1330 = vadd.f32 %v1109, %v1329
        %v1331 = vpop.f32.mrb[0].mxu0
        %v1332 = vadd.f32 %v1113, %v1331
        %1333 = vdwg.mxu0
        %1334 = vmatprep.subr.bf16.mxu0 %v1175
        %1335 = vmatpush1.bf16.msra.mxu0 %v1174
        %1336 = vmatprep.subr.bf16.mxu0 %v1181
        %1337 = vmatpush1.bf16.msra.mxu0 %v1180
        %1338 = vmatprep.subr.bf16.mxu0 0
        %1339 = vmatpush1.bf16.msra.mxu0 0
        %1340 = vmatprep.subr.bf16.mxu0 0
        %1341 = vmatpush1.bf16.msra.mxu0 0
        %1342 = vmatprep.subr.bf16.mxu0 0
        %1343 = vmatpush1.bf16.msra.mxu0 0
        %1344 = vmatprep.subr.bf16.mxu0 0
        %1345 = vmatpush1.bf16.msra.mxu0 0
        %1346 = vmatprep.subr.bf16.mxu0 0
        %1347 = vmatpush1.bf16.msra.mxu0 0
        %1348 = vmatprep.subr.bf16.mxu0 0
        %1349 = vmatpush1.bf16.msra.mxu0 0
        %1350 = vmatprep.subr.bf16.mxu0 0
        %1351 = vmatpush1.bf16.msra.mxu0 0
        %1352 = vmatprep.subr.bf16.mxu0 0
        %1353 = vmatpush1.bf16.msra.mxu0 0
        %1354 = vmatprep.subr.bf16.mxu0 0
        %1355 = vmatpush1.bf16.msra.mxu0 0
        %1356 = vmatprep.subr.bf16.mxu0 0
        %1357 = vmatpush1.bf16.msra.mxu0 0
        %1358 = vmatprep.subr.bf16.mxu0 0
        %1359 = vmatpush1.bf16.msra.mxu0 0
        %1360 = vmatprep.subr.bf16.mxu0 0
        %1361 = vmatpush1.bf16.msra.mxu0 0
        %1362 = vmatprep.subr.bf16.mxu0 0
        %1363 = vmatpush1.bf16.msra.mxu0 0
        %1364 = vmatprep.subr.bf16.mxu0 0
        %1365 = vmatpush1.bf16.msra.mxu0 0
        %1366 = vmatprep.mubr.bf16.mxu0 0
        %1367 = vmatmul.mubr.bf16.gmra.mrb[0].mxu0 %v1198
        %v1368 = vpop.f32.mrb[0].mxu0
        %v1369 = vadd.f32 %v1117, %v1368
        %v1370 = vpop.f32.mrb[0].mxu0
        %v1371 = vadd.f32 %v1121, %v1370
        %v1372 = vpop.f32.mrb[0].mxu0
        %v1373 = vadd.f32 %v1117, %v1372
        %v1374 = vpop.f32.mrb[0].mxu0
        %v1375 = vadd.f32 %v1121, %v1374
        %1376 = vmatprep.mubr.bf16.mxu0 0
        %1377 = vmatmul.mubr.bf16.gmra.mrb[0].mxu0 %v1201
        %v1378 = vpop.f32.mrb[0].mxu0
        %v1379 = vadd.f32 %v1117, %v1378
        %v1380 = vpop.f32.mrb[0].mxu0
        %v1381 = vadd.f32 %v1121, %v1380
        %v1382 = vpop.f32.mrb[0].mxu0
        %v1383 = vadd.f32 %v1117, %v1382
        %v1384 = vpop.f32.mrb[0].mxu0
        %v1385 = vadd.f32 %v1121, %v1384
        %1386 = vmatprep.mubr.bf16.mxu0 0
        %1387 = vmatmul.mubr.bf16.gmra.mrb[0].mxu0 %v1204
        %v1388 = vpop.f32.mrb[0].mxu0
        %v1389 = vadd.f32 %v1117, %v1388
        %v1390 = vpop.f32.mrb[0].mxu0
        %v1391 = vadd.f32 %v1121, %v1390
        %v1392 = vpop.f32.mrb[0].mxu0
        %v1393 = vadd.f32 %v1117, %v1392
        %v1394 = vpop.f32.mrb[0].mxu0
        %v1395 = vadd.f32 %v1121, %v1394
        %1396 = vmatprep.mubr.bf16.mxu0 0
        %1397 = vmatmul.mubr.bf16.gmra.mrb[0].mxu0 %v1207
        %v1398 = vpop.f32.mrb[0].mxu0
        %v1399 = vadd.f32 %v1117, %v1398
        %v1400 = vpop.f32.mrb[0].mxu0
        %v1401 = vadd.f32 %v1121, %v1400
        %v1402 = vpop.f32.mrb[0].mxu0
        %v1403 = vadd.f32 %v1117, %v1402
        %v1404 = vpop.f32.mrb[0].mxu0
        %v1405 = vadd.f32 %v1121, %v1404
        %1406 = vmatprep.mubr.bf16.mxu0 0
        %1407 = vmatmul.mubr.bf16.gmra.mrb[0].mxu0 %v1210
        %v1408 = vpop.f32.mrb[0].mxu0
        %v1409 = vadd.f32 %v1117, %v1408
        %v1410 = vpop.f32.mrb[0].mxu0
        %v1411 = vadd.f32 %v1121, %v1410
        %v1412 = vpop.f32.mrb[0].mxu0
        %v1413 = vadd.f32 %v1117, %v1412
        %v1414 = vpop.f32.mrb[0].mxu0
        %v1415 = vadd.f32 %v1121, %v1414
        %1416 = vmatprep.mubr.bf16.mxu0 0
        %1417 = vmatmul.mubr.bf16.gmra.mrb[0].mxu0 %v1213
        %v1418 = vpop.f32.mrb[0].mxu0
        %v1419 = vadd.f32 %v1117, %v1418
        %v1420 = vpop.f32.mrb[0].mxu0
        %v1421 = vadd.f32 %v1121, %v1420
        %v1422 = vpop.f32.mrb[0].mxu0
        %v1423 = vadd.f32 %v1117, %v1422
        %v1424 = vpop.f32.mrb[0].mxu0
        %v1425 = vadd.f32 %v1121, %v1424
        %1426 = vmatprep.mubr.bf16.mxu0 0
        %1427 = vmatmul.mubr.bf16.gmra.mrb[0].mxu0 %v1216
        %v1428 = vpop.f32.mrb[0].mxu0
        %v1429 = vadd.f32 %v1117, %v1428
        %v1430 = vpop.f32.mrb[0].mxu0
        %v1431 = vadd.f32 %v1121, %v1430
        %v1432 = vpop.f32.mrb[0].mxu0
        %v1433 = vadd.f32 %v1117, %v1432
        %v1434 = vpop.f32.mrb[0].mxu0
        %v1435 = vadd.f32 %v1121, %v1434
        %1436 = vmatprep.mubr.bf16.mxu0 0
        %1437 = vmatmul.mubr.bf16.gmra.mrb[0].mxu0 %v1219
        %v1438 = vpop.f32.mrb[0].mxu0
        %v1439 = vadd.f32 %v1117, %v1438
        %v1440 = vpop.f32.mrb[0].mxu0
        %v1441 = vadd.f32 %v1121, %v1440
        %v1442 = vpop.f32.mrb[0].mxu0
        %v1443 = vadd.f32 %v1117, %v1442
        %v1444 = vpop.f32.mrb[0].mxu0
        %v1445 = vadd.f32 %v1121, %v1444
        %1446 = vdwg.mxu0
        %1447 = vmatprep.subr.bf16.mxu0 %v1177
        %1448 = vmatpush1.bf16.msra.mxu0 %v1176
        %1449 = vmatprep.subr.bf16.mxu0 %v1183
        %1450 = vmatpush1.bf16.msra.mxu0 %v1182
        %1451 = vmatprep.subr.bf16.mxu0 0
        %1452 = vmatpush1.bf16.msra.mxu0 0
        %1453 = vmatprep.subr.bf16.mxu0 0
        %1454 = vmatpush1.bf16.msra.mxu0 0
        %1455 = vmatprep.subr.bf16.mxu0 0
        %1456 = vmatpush1.bf16.msra.mxu0 0
        %1457 = vmatprep.subr.bf16.mxu0 0
        %1458 = vmatpush1.bf16.msra.mxu0 0
        %1459 = vmatprep.subr.bf16.mxu0 0
        %1460 = vmatpush1.bf16.msra.mxu0 0
        %1461 = vmatprep.subr.bf16.mxu0 0
        %1462 = vmatpush1.bf16.msra.mxu0 0
        %1463 = vmatprep.subr.bf16.mxu0 0
        %1464 = vmatpush1.bf16.msra.mxu0 0
        %1465 = vmatprep.subr.bf16.mxu0 0
        %1466 = vmatpush1.bf16.msra.mxu0 0
        %1467 = vmatprep.subr.bf16.mxu0 0
        %1468 = vmatpush1.bf16.msra.mxu0 0
        %1469 = vmatprep.subr.bf16.mxu0 0
        %1470 = vmatpush1.bf16.msra.mxu0 0
        %1471 = vmatprep.subr.bf16.mxu0 0
        %1472 = vmatpush1.bf16.msra.mxu0 0
        %1473 = vmatprep.subr.bf16.mxu0 0
        %1474 = vmatpush1.bf16.msra.mxu0 0
        %1475 = vmatprep.subr.bf16.mxu0 0
        %1476 = vmatpush1.bf16.msra.mxu0 0
        %1477 = vmatprep.subr.bf16.mxu0 0
        %1478 = vmatpush1.bf16.msra.mxu0 0
        %1479 = vmatprep.mubr.bf16.mxu0 0
        %1480 = vmatmul.mubr.bf16.gmra.mrb[0].mxu0 %v1198
        %v1481 = vpop.f32.mrb[0].mxu0
        %v1482 = vadd.f32 %v1125, %v1481
        %v1483 = vpop.f32.mrb[0].mxu0
        %v1484 = vadd.f32 %v1129, %v1483
        %v1485 = vpop.f32.mrb[0].mxu0
        %v1486 = vadd.f32 %v1125, %v1485
        %v1487 = vpop.f32.mrb[0].mxu0
        %v1488 = vadd.f32 %v1129, %v1487
        %1489 = vmatprep.mubr.bf16.mxu0 0
        %1490 = vmatmul.mubr.bf16.gmra.mrb[0].mxu0 %v1201
        %v1491 = vpop.f32.mrb[0].mxu0
        %v1492 = vadd.f32 %v1125, %v1491
        %v1493 = vpop.f32.mrb[0].mxu0
        %v1494 = vadd.f32 %v1129, %v1493
        %v1495 = vpop.f32.mrb[0].mxu0
        %v1496 = vadd.f32 %v1125, %v1495
        %v1497 = vpop.f32.mrb[0].mxu0
        %v1498 = vadd.f32 %v1129, %v1497
        %1499 = vmatprep.mubr.bf16.mxu0 0
        %1500 = vmatmul.mubr.bf16.gmra.mrb[0].mxu0 %v1204
        %v1501 = vpop.f32.mrb[0].mxu0
        %v1502 = vadd.f32 %v1125, %v1501
        %v1503 = vpop.f32.mrb[0].mxu0
        %v1504 = vadd.f32 %v1129, %v1503
        %v1505 = vpop.f32.mrb[0].mxu0
        %v1506 = vadd.f32 %v1125, %v1505
        %v1507 = vpop.f32.mrb[0].mxu0
        %v1508 = vadd.f32 %v1129, %v1507
        %1509 = vmatprep.mubr.bf16.mxu0 0
        %1510 = vmatmul.mubr.bf16.gmra.mrb[0].mxu0 %v1207
        %v1511 = vpop.f32.mrb[0].mxu0
        %v1512 = vadd.f32 %v1125, %v1511
        %v1513 = vpop.f32.mrb[0].mxu0
        %v1514 = vadd.f32 %v1129, %v1513
        %v1515 = vpop.f32.mrb[0].mxu0
        %v1516 = vadd.f32 %v1125, %v1515
        %v1517 = vpop.f32.mrb[0].mxu0
        %v1518 = vadd.f32 %v1129, %v1517
        %1519 = vmatprep.mubr.bf16.mxu0 0
        %1520 = vmatmul.mubr.bf16.gmra.mrb[0].mxu0 %v1210
        %v1521 = vpop.f32.mrb[0].mxu0
        %v1522 = vadd.f32 %v1125, %v1521
        %v1523 = vpop.f32.mrb[0].mxu0
        %v1524 = vadd.f32 %v1129, %v1523
        %v1525 = vpop.f32.mrb[0].mxu0
        %v1526 = vadd.f32 %v1125, %v1525
        %v1527 = vpop.f32.mrb[0].mxu0
        %v1528 = vadd.f32 %v1129, %v1527
        %1529 = vmatprep.mubr.bf16.mxu0 0
        %1530 = vmatmul.mubr.bf16.gmra.mrb[0].mxu0 %v1213
        %v1531 = vpop.f32.mrb[0].mxu0
        %v1532 = vadd.f32 %v1125, %v1531
        %v1533 = vpop.f32.mrb[0].mxu0
        %v1534 = vadd.f32 %v1129, %v1533
        %v1535 = vpop.f32.mrb[0].mxu0
        %v1536 = vadd.f32 %v1125, %v1535
        %v1537 = vpop.f32.mrb[0].mxu0
        %v1538 = vadd.f32 %v1129, %v1537
        %1539 = vmatprep.mubr.bf16.mxu0 0
        %1540 = vmatmul.mubr.bf16.gmra.mrb[0].mxu0 %v1216
        %v1541 = vpop.f32.mrb[0].mxu0
        %v1542 = vadd.f32 %v1125, %v1541
        %v1543 = vpop.f32.mrb[0].mxu0
        %v1544 = vadd.f32 %v1129, %v1543
        %v1545 = vpop.f32.mrb[0].mxu0
        %v1546 = vadd.f32 %v1125, %v1545
        %v1547 = vpop.f32.mrb[0].mxu0
        %v1548 = vadd.f32 %v1129, %v1547
        %1549 = vmatprep.mubr.bf16.mxu0 0
        %1550 = vmatmul.mubr.bf16.gmra.mrb[0].mxu0 %v1219
        %v1551 = vpop.f32.mrb[0].mxu0
        %v1552 = vadd.f32 %v1125, %v1551
        %v1553 = vpop.f32.mrb[0].mxu0
        %v1554 = vadd.f32 %v1129, %v1553
        %v1555 = vpop.f32.mrb[0].mxu0
        %v1556 = vadd.f32 %v1125, %v1555
        %v1557 = vpop.f32.mrb[0].mxu0
        %v1558 = vadd.f32 %v1129, %v1557
        %1559 = vdwg.mxu0
        %v1560 = vmul.f32 %v1256, 0.25
        %v1561 = vmul.f32 %v1260, 0.25
        %v1562 = vmul.f32 %v1266, 0.25
        %v1563 = vmul.f32 %v1270, 0.25
        %v1564 = vmul.f32 %v1276, 0.25
        %v1565 = vmul.f32 %v1280, 0.25
        %v1566 = vmul.f32 %v1286, 0.25
        %v1567 = vmul.f32 %v1290, 0.25
        %v1568 = vmul.f32 %v1296, 0.25
        %v1569 = vmul.f32 %v1300, 0.25
        %v1570 = vmul.f32 %v1306, 0.25
        %v1571 = vmul.f32 %v1310, 0.25
        %v1572 = vmul.f32 %v1316, 0.25
        %v1573 = vmul.f32 %v1320, 0.25
        %v1574 = vmul.f32 %v1326, 0.25
        %v1575 = vmul.f32 %v1330, 0.25
        %v1576 = vmul.f32 %v1258, 0.25
        %v1577 = vmul.f32 %v1262, 0.25
        %v1578 = vmul.f32 %v1268, 0.25
        %v1579 = vmul.f32 %v1272, 0.25
        %v1580 = vmul.f32 %v1278, 0.25
        %v1581 = vmul.f32 %v1282, 0.25
        %v1582 = vmul.f32 %v1288, 0.25
        %v1583 = vmul.f32 %v1292, 0.25
        %v1584 = vmul.f32 %v1298, 0.25
        %v1585 = vmul.f32 %v1302, 0.25
        %v1586 = vmul.f32 %v1308, 0.25
        %v1587 = vmul.f32 %v1312, 0.25
        %v1588 = vmul.f32 %v1318, 0.25
        %v1589 = vmul.f32 %v1322, 0.25
        %v1590 = vmul.f32 %v1328, 0.25
        %v1591 = vmul.f32 %v1332, 0.25
        %v1592 = vpack.c.bf16 %v1561, %v1560
        %v1593 = vpack.c.bf16 %v1563, %v1562
        %v1594 = vpack.c.bf16 %v1565, %v1564
        %v1595 = vpack.c.bf16 %v1567, %v1566
        %v1596 = vpack.c.bf16 %v1569, %v1568
        %v1597 = vpack.c.bf16 %v1571, %v1570
        %v1598 = vpack.c.bf16 %v1573, %v1572
        %v1599 = vpack.c.bf16 %v1575, %v1574
        %v1600 = vpack.c.bf16 %v1577, %v1576
        %v1601 = vpack.c.bf16 %v1579, %v1578
        %v1602 = vpack.c.bf16 %v1581, %v1580
        %v1603 = vpack.c.bf16 %v1583, %v1582
        %v1604 = vpack.c.bf16 %v1585, %v1584
        %v1605 = vpack.c.bf16 %v1587, %v1586
        %v1606 = vpack.c.bf16 %v1589, %v1588
        %v1607 = vpack.c.bf16 %v1591, %v1590
        %v1608 = vpack.c.bf16 %v1373, %v1369
        %v1609 = vpack.c.bf16 %v1383, %v1379
        %v1610 = vpack.c.bf16 %v1393, %v1389
        %v1611 = vpack.c.bf16 %v1403, %v1399
        %v1612 = vpack.c.bf16 %v1413, %v1409
        %v1613 = vpack.c.bf16 %v1423, %v1419
        %v1614 = vpack.c.bf16 %v1433, %v1429
        %v1615 = vpack.c.bf16 %v1443, %v1439
        %v1616 = vpack.c.bf16 %v1375, %v1371
        %v1617 = vpack.c.bf16 %v1385, %v1381
        %v1618 = vpack.c.bf16 %v1395, %v1391
        %v1619 = vpack.c.bf16 %v1405, %v1401
        %v1620 = vpack.c.bf16 %v1415, %v1411
        %v1621 = vpack.c.bf16 %v1425, %v1421
        %v1622 = vpack.c.bf16 %v1435, %v1431
        %v1623 = vpack.c.bf16 %v1445, %v1441
        %v1624 = vld [vmem:[%s847] sm:$0xf]
        %v1625 = vld [vmem:[%s847 + $0x4] sm:$0xf]
        %v1626 = vld [vmem:[%s847 + $0x8] sm:$0xf]
        %v1627 = vld [vmem:[%s847 + $0xc] sm:$0xf]
        %v1628 = vld [vmem:[%s847 + $0x10] sm:$0xf]
        %v1629 = vld [vmem:[%s847 + $0x14] sm:$0xf]
        %v1630 = vld [vmem:[%s847 + $0x18] sm:$0xf]
        %v1631 = vld [vmem:[%s847 + $0x1c] sm:$0xf]
        %v1632 = vld [vmem:[%s847 + $0x20] sm:$0xf]
        %v1633 = vld [vmem:[%s847 + $0x24] sm:$0xf]
        %v1634 = vld [vmem:[%s847 + $0x28] sm:$0xf]
        %v1635 = vld [vmem:[%s847 + $0x2c] sm:$0xf]
        %v1636 = vld [vmem:[%s847 + $0x30] sm:$0xf]
        %v1637 = vld [vmem:[%s847 + $0x34] sm:$0xf]
        %v1638 = vld [vmem:[%s847 + $0x38] sm:$0xf]
        %v1639 = vld [vmem:[%s847 + $0x3c] sm:$0xf]
        %v1656 = vunpack.c.l.b16 %v1624
        %v1657 = vunpack.c.l.b16 %v1625
        %v1658 = vunpack.c.l.b16 %v1626
        %v1659 = vunpack.c.l.b16 %v1627
        %v1660 = vunpack.c.l.b16 %v1628
        %v1661 = vunpack.c.l.b16 %v1629
        %v1662 = vunpack.c.l.b16 %v1630
        %v1663 = vunpack.c.l.b16 %v1631
        %v1664 = vunpack.c.l.b16 %v1632
        %v1665 = vunpack.c.l.b16 %v1633
        %v1666 = vunpack.c.l.b16 %v1634
        %v1667 = vunpack.c.l.b16 %v1635
        %v1668 = vunpack.c.l.b16 %v1636
        %v1669 = vunpack.c.l.b16 %v1637
        %v1670 = vunpack.c.l.b16 %v1638
        %v1671 = vunpack.c.l.b16 %v1639
        %v1672 = vpack.c.b16 %v1657, %v1656
        %v1673 = vpack.c.b16 %v1659, %v1658
        %v1674 = vpack.c.b16 %v1661, %v1660
        %v1675 = vpack.c.b16 %v1663, %v1662
        %v1676 = vpack.c.b16 %v1665, %v1664
        %v1677 = vpack.c.b16 %v1667, %v1666
        %v1678 = vpack.c.b16 %v1669, %v1668
        %v1679 = vpack.c.b16 %v1671, %v1670
        %1688 = vmatprep.subr.bf16.mxu0 0
        %1689 = vmatpush1.bf16.msra.mxu0 %v1672
        %1690 = vmatprep.subr.bf16.mxu0 0
        %1691 = vmatpush1.bf16.msra.mxu0 %v1673
        %1692 = vmatprep.subr.bf16.mxu0 0
        %1693 = vmatpush1.bf16.msra.mxu0 %v1674
        %1694 = vmatprep.subr.bf16.mxu0 0
        %1695 = vmatpush1.bf16.msra.mxu0 %v1675
        %1696 = vmatprep.subr.bf16.mxu0 0
        %1697 = vmatpush1.bf16.msra.mxu0 %v1676
        %1698 = vmatprep.subr.bf16.mxu0 0
        %1699 = vmatpush1.bf16.msra.mxu0 %v1677
        %1700 = vmatprep.subr.bf16.mxu0 0
        %1701 = vmatpush1.bf16.msra.mxu0 %v1678
        %1702 = vmatprep.subr.bf16.mxu0 0
        %1703 = vmatpush1.bf16.msra.mxu0 %v1679
        %1704 = vmatprep.subr.bf16.mxu0 0
        %1705 = vmatpush1.bf16.msra.mxu0 0
        %1706 = vmatprep.subr.bf16.mxu0 0
        %1707 = vmatpush1.bf16.msra.mxu0 0
        %1708 = vmatprep.subr.bf16.mxu0 0
        %1709 = vmatpush1.bf16.msra.mxu0 0
        %1710 = vmatprep.subr.bf16.mxu0 0
        %1711 = vmatpush1.bf16.msra.mxu0 0
        %1712 = vmatprep.subr.bf16.mxu0 0
        %1713 = vmatpush1.bf16.msra.mxu0 0
        %1714 = vmatprep.subr.bf16.mxu0 0
        %1715 = vmatpush1.bf16.msra.mxu0 0
        %1716 = vmatprep.subr.bf16.mxu0 0
        %1717 = vmatpush1.bf16.msra.mxu0 0
        %1718 = vmatprep.subr.bf16.mxu0 0
        %1719 = vmatpush1.bf16.msra.mxu0 0
        %1720 = vmatprep.mubr.bf16.mxu0 0
        %1721 = vmatmul.mubr.bf16.gmra.mrb[0].mxu0 %v1592
        %v1722 = vpop.f32.mrb[0].mxu0
        %v1723 = vadd.f32 0.0, %v1722
        %v1724 = vpop.f32.mrb[0].mxu0
        %v1725 = vpop.f32.mrb[0].mxu0
        %v1726 = vadd.f32 0.0, %v1725
        %v1727 = vpop.f32.mrb[0].mxu0
        %1728 = vmatprep.mubr.bf16.mxu0 0
        %1729 = vmatmul.mubr.bf16.gmra.mrb[0].mxu0 %v1593
        %v1730 = vpop.f32.mrb[0].mxu0
        %v1731 = vadd.f32 0.0, %v1730
        %v1732 = vpop.f32.mrb[0].mxu0
        %v1733 = vpop.f32.mrb[0].mxu0
        %v1734 = vadd.f32 0.0, %v1733
        %v1735 = vpop.f32.mrb[0].mxu0
        %1736 = vmatprep.mubr.bf16.mxu0 0
        %1737 = vmatmul.mubr.bf16.gmra.mrb[0].mxu0 %v1594
        %v1738 = vpop.f32.mrb[0].mxu0
        %v1739 = vadd.f32 0.0, %v1738
        %v1740 = vpop.f32.mrb[0].mxu0
        %v1741 = vpop.f32.mrb[0].mxu0
        %v1742 = vadd.f32 0.0, %v1741
        %v1743 = vpop.f32.mrb[0].mxu0
        %1744 = vmatprep.mubr.bf16.mxu0 0
        %1745 = vmatmul.mubr.bf16.gmra.mrb[0].mxu0 %v1595
        %v1746 = vpop.f32.mrb[0].mxu0
        %v1747 = vadd.f32 0.0, %v1746
        %v1748 = vpop.f32.mrb[0].mxu0
        %v1749 = vpop.f32.mrb[0].mxu0
        %v1750 = vadd.f32 0.0, %v1749
        %v1751 = vpop.f32.mrb[0].mxu0
        %1752 = vmatprep.mubr.bf16.mxu0 0
        %1753 = vmatmul.mubr.bf16.gmra.mrb[0].mxu0 %v1596
        %v1754 = vpop.f32.mrb[0].mxu0
        %v1755 = vadd.f32 0.0, %v1754
        %v1756 = vpop.f32.mrb[0].mxu0
        %v1757 = vpop.f32.mrb[0].mxu0
        %v1758 = vadd.f32 0.0, %v1757
        %v1759 = vpop.f32.mrb[0].mxu0
        %1760 = vmatprep.mubr.bf16.mxu0 0
        %1761 = vmatmul.mubr.bf16.gmra.mrb[0].mxu0 %v1597
        %v1762 = vpop.f32.mrb[0].mxu0
        %v1763 = vadd.f32 0.0, %v1762
        %v1764 = vpop.f32.mrb[0].mxu0
        %v1765 = vpop.f32.mrb[0].mxu0
        %v1766 = vadd.f32 0.0, %v1765
        %v1767 = vpop.f32.mrb[0].mxu0
        %1768 = vmatprep.mubr.bf16.mxu0 0
        %1769 = vmatmul.mubr.bf16.gmra.mrb[0].mxu0 %v1598
        %v1770 = vpop.f32.mrb[0].mxu0
        %v1771 = vadd.f32 0.0, %v1770
        %v1772 = vpop.f32.mrb[0].mxu0
        %v1773 = vpop.f32.mrb[0].mxu0
        %v1774 = vadd.f32 0.0, %v1773
        %v1775 = vpop.f32.mrb[0].mxu0
        %1776 = vmatprep.mubr.bf16.mxu0 0
        %1777 = vmatmul.mubr.bf16.gmra.mrb[0].mxu0 %v1599
        %v1778 = vpop.f32.mrb[0].mxu0
        %v1779 = vadd.f32 0.0, %v1778
        %v1780 = vpop.f32.mrb[0].mxu0
        %v1781 = vpop.f32.mrb[0].mxu0
        %v1782 = vadd.f32 0.0, %v1781
        %v1783 = vpop.f32.mrb[0].mxu0
        %1784 = vmatprep.mubr.bf16.mxu0 0
        %1785 = vmatmul.mubr.bf16.gmra.mrb[0].mxu0 %v1600
        %v1786 = vpop.f32.mrb[0].mxu0
        %v1787 = vadd.f32 0.0, %v1786
        %v1788 = vpop.f32.mrb[0].mxu0
        %v1789 = vpop.f32.mrb[0].mxu0
        %v1790 = vadd.f32 0.0, %v1789
        %v1791 = vpop.f32.mrb[0].mxu0
        %1792 = vmatprep.mubr.bf16.mxu0 0
        %1793 = vmatmul.mubr.bf16.gmra.mrb[0].mxu0 %v1601
        %v1794 = vpop.f32.mrb[0].mxu0
        %v1795 = vadd.f32 0.0, %v1794
        %v1796 = vpop.f32.mrb[0].mxu0
        %v1797 = vpop.f32.mrb[0].mxu0
        %v1798 = vadd.f32 0.0, %v1797
        %v1799 = vpop.f32.mrb[0].mxu0
        %1800 = vmatprep.mubr.bf16.mxu0 0
        %1801 = vmatmul.mubr.bf16.gmra.mrb[0].mxu0 %v1602
        %v1802 = vpop.f32.mrb[0].mxu0
        %v1803 = vadd.f32 0.0, %v1802
        %v1804 = vpop.f32.mrb[0].mxu0
        %v1805 = vpop.f32.mrb[0].mxu0
        %v1806 = vadd.f32 0.0, %v1805
        %v1807 = vpop.f32.mrb[0].mxu0
        %1808 = vmatprep.mubr.bf16.mxu0 0
        %1809 = vmatmul.mubr.bf16.gmra.mrb[0].mxu0 %v1603
        %v1810 = vpop.f32.mrb[0].mxu0
        %v1811 = vadd.f32 0.0, %v1810
        %v1812 = vpop.f32.mrb[0].mxu0
        %v1813 = vpop.f32.mrb[0].mxu0
        %v1814 = vadd.f32 0.0, %v1813
        %v1815 = vpop.f32.mrb[0].mxu0
        %1816 = vmatprep.mubr.bf16.mxu0 0
        %1817 = vmatmul.mubr.bf16.gmra.mrb[0].mxu0 %v1604
        %v1818 = vpop.f32.mrb[0].mxu0
        %v1819 = vadd.f32 0.0, %v1818
        %v1820 = vpop.f32.mrb[0].mxu0
        %v1821 = vpop.f32.mrb[0].mxu0
        %v1822 = vadd.f32 0.0, %v1821
        %v1823 = vpop.f32.mrb[0].mxu0
        %1824 = vmatprep.mubr.bf16.mxu0 0
        %1825 = vmatmul.mubr.bf16.gmra.mrb[0].mxu0 %v1605
        %v1826 = vpop.f32.mrb[0].mxu0
        %v1827 = vadd.f32 0.0, %v1826
        %v1828 = vpop.f32.mrb[0].mxu0
        %v1829 = vpop.f32.mrb[0].mxu0
        %v1830 = vadd.f32 0.0, %v1829
        %v1831 = vpop.f32.mrb[0].mxu0
        %1832 = vmatprep.mubr.bf16.mxu0 0
        %1833 = vmatmul.mubr.bf16.gmra.mrb[0].mxu0 %v1606
        %v1834 = vpop.f32.mrb[0].mxu0
        %v1835 = vadd.f32 0.0, %v1834
        %v1836 = vpop.f32.mrb[0].mxu0
        %v1837 = vpop.f32.mrb[0].mxu0
        %v1838 = vadd.f32 0.0, %v1837
        %v1839 = vpop.f32.mrb[0].mxu0
        %1840 = vmatprep.mubr.bf16.mxu0 0
        %1841 = vmatmul.mubr.bf16.gmra.mrb[0].mxu0 %v1607
        %v1842 = vpop.f32.mrb[0].mxu0
        %v1843 = vadd.f32 0.0, %v1842
        %v1844 = vpop.f32.mrb[0].mxu0
        %v1845 = vpop.f32.mrb[0].mxu0
        %v1846 = vadd.f32 0.0, %v1845
        %v1847 = vpop.f32.mrb[0].mxu0
        %1848 = vdwg.mxu0
        %v1849 = vlaneseq
        %v1850 = vshrl.u32 %v1849, 7
        %v1851 = vadd.s32 %v1850, 8
        %v1852 = vadd.s32 %v1850, 16
        %v1853 = vadd.s32 %v1850, 24
        %v1854 = vadd.s32 %v1850, 32
        %v1855 = vadd.s32 %v1850, 40
        %v1856 = vadd.s32 %v1850, 48
        %v1857 = vadd.s32 %v1850, 56
        %v1858 = vadd.s32 %v1850, 64
        %v1859 = vadd.s32 %v1850, 72
        %v1860 = vadd.s32 %v1850, 80
        %v1861 = vadd.s32 %v1850, 88
        %v1862 = vadd.s32 %v1850, 96
        %v1863 = vadd.s32 %v1850, 104
        %v1864 = vadd.s32 %v1850, 112
        %v1865 = vadd.s32 %v1850, 120
        %v1866 = vlaneseq
        %v1867 = vand.u32 %v1866, 127
        %v1868 = vsub.s32 %v1867, %v1850
        %v1869 = vsub.s32 %v1867, %v1851
        %v1870 = vsub.s32 %v1867, %v1852
        %v1871 = vsub.s32 %v1867, %v1853
        %v1872 = vsub.s32 %v1867, %v1854
        %v1873 = vsub.s32 %v1867, %v1855
        %v1874 = vsub.s32 %v1867, %v1856
        %v1875 = vsub.s32 %v1867, %v1857
        %v1876 = vsub.s32 %v1867, %v1858
        %v1877 = vsub.s32 %v1867, %v1859
        %v1878 = vsub.s32 %v1867, %v1860
        %v1879 = vsub.s32 %v1867, %v1861
        %v1880 = vsub.s32 %v1867, %v1862
        %v1881 = vsub.s32 %v1867, %v1863
        %v1882 = vsub.s32 %v1867, %v1864
        %v1883 = vsub.s32 %v1867, %v1865
        %vm1884 = vcmp.lt.s32.totalorder %v1868, 0
        %v1885 = vsub.s32 0, %v1868
        %v1886 = vsel %vm1884, %v1885, %v1868
        %v1887 = vshrl.u32 %v1886, 4
        %v1888 = vand.u32 %v1886, 15
        %v1889 = vsub.s32 0, %v1888
        %v1890 = vsel %vm1884, %v1889, %v1888
        %vm1891 = vcmp.lt.s32.totalorder %v1869, 0
        %v1892 = vsub.s32 0, %v1869
        %v1893 = vsel %vm1891, %v1892, %v1869
        %v1894 = vshrl.u32 %v1893, 4
        %v1895 = vand.u32 %v1893, 15
        %v1896 = vsub.s32 0, %v1895
        %v1897 = vsel %vm1891, %v1896, %v1895
        %vm1898 = vcmp.lt.s32.totalorder %v1870, 0
        %v1899 = vsub.s32 0, %v1870
        %v1900 = vsel %vm1898, %v1899, %v1870
        %v1901 = vshrl.u32 %v1900, 4
        %v1902 = vand.u32 %v1900, 15
        %v1903 = vsub.s32 0, %v1902
        %v1904 = vsel %vm1898, %v1903, %v1902
        %vm1905 = vcmp.lt.s32.totalorder %v1871, 0
        %v1906 = vsub.s32 0, %v1871
        %v1907 = vsel %vm1905, %v1906, %v1871
        %v1908 = vshrl.u32 %v1907, 4
        %v1909 = vand.u32 %v1907, 15
        %v1910 = vsub.s32 0, %v1909
        %v1911 = vsel %vm1905, %v1910, %v1909
        %vm1912 = vcmp.lt.s32.totalorder %v1872, 0
        %v1913 = vsub.s32 0, %v1872
        %v1914 = vsel %vm1912, %v1913, %v1872
        %v1915 = vshrl.u32 %v1914, 4
        %v1916 = vand.u32 %v1914, 15
        %v1917 = vsub.s32 0, %v1916
        %v1918 = vsel %vm1912, %v1917, %v1916
        %vm1919 = vcmp.lt.s32.totalorder %v1873, 0
        %v1920 = vsub.s32 0, %v1873
        %v1921 = vsel %vm1919, %v1920, %v1873
        %v1922 = vshrl.u32 %v1921, 4
        %v1923 = vand.u32 %v1921, 15
        %v1924 = vsub.s32 0, %v1923
        %v1925 = vsel %vm1919, %v1924, %v1923
        %vm1926 = vcmp.lt.s32.totalorder %v1874, 0
        %v1927 = vsub.s32 0, %v1874
        %v1928 = vsel %vm1926, %v1927, %v1874
        %v1929 = vshrl.u32 %v1928, 4
        %v1930 = vand.u32 %v1928, 15
        %v1931 = vsub.s32 0, %v1930
        %v1932 = vsel %vm1926, %v1931, %v1930
        %vm1933 = vcmp.lt.s32.totalorder %v1875, 0
        %v1934 = vsub.s32 0, %v1875
        %v1935 = vsel %vm1933, %v1934, %v1875
        %v1936 = vshrl.u32 %v1935, 4
        %v1937 = vand.u32 %v1935, 15
        %v1938 = vsub.s32 0, %v1937
        %v1939 = vsel %vm1933, %v1938, %v1937
        %vm1940 = vcmp.lt.s32.totalorder %v1876, 0
        %v1941 = vsub.s32 0, %v1876
        %v1942 = vsel %vm1940, %v1941, %v1876
        %v1943 = vshrl.u32 %v1942, 4
        %v1944 = vand.u32 %v1942, 15
        %v1945 = vsub.s32 0, %v1944
        %v1946 = vsel %vm1940, %v1945, %v1944
        %vm1947 = vcmp.lt.s32.totalorder %v1877, 0
        %v1948 = vsub.s32 0, %v1877
        %v1949 = vsel %vm1947, %v1948, %v1877
        %v1950 = vshrl.u32 %v1949, 4
        %v1951 = vand.u32 %v1949, 15
        %v1952 = vsub.s32 0, %v1951
        %v1953 = vsel %vm1947, %v1952, %v1951
        %vm1954 = vcmp.lt.s32.totalorder %v1878, 0
        %v1955 = vsub.s32 0, %v1878
        %v1956 = vsel %vm1954, %v1955, %v1878
        %v1957 = vshrl.u32 %v1956, 4
        %v1958 = vand.u32 %v1956, 15
        %v1959 = vsub.s32 0, %v1958
        %v1960 = vsel %vm1954, %v1959, %v1958
        %vm1961 = vcmp.lt.s32.totalorder %v1879, 0
        %v1962 = vsub.s32 0, %v1879
        %v1963 = vsel %vm1961, %v1962, %v1879
        %v1964 = vshrl.u32 %v1963, 4
        %v1965 = vand.u32 %v1963, 15
        %v1966 = vsub.s32 0, %v1965
        %v1967 = vsel %vm1961, %v1966, %v1965
        %vm1968 = vcmp.lt.s32.totalorder %v1880, 0
        %v1969 = vsub.s32 0, %v1880
        %v1970 = vsel %vm1968, %v1969, %v1880
        %v1971 = vshrl.u32 %v1970, 4
        %v1972 = vand.u32 %v1970, 15
        %v1973 = vsub.s32 0, %v1972
        %v1974 = vsel %vm1968, %v1973, %v1972
        %vm1975 = vcmp.lt.s32.totalorder %v1881, 0
        %v1976 = vsub.s32 0, %v1881
        %v1977 = vsel %vm1975, %v1976, %v1881
        %v1978 = vshrl.u32 %v1977, 4
        %v1979 = vand.u32 %v1977, 15
        %v1980 = vsub.s32 0, %v1979
        %v1981 = vsel %vm1975, %v1980, %v1979
        %vm1982 = vcmp.lt.s32.totalorder %v1882, 0
        %v1983 = vsub.s32 0, %v1882
        %v1984 = vsel %vm1982, %v1983, %v1882
        %v1985 = vshrl.u32 %v1984, 4
        %v1986 = vand.u32 %v1984, 15
        %v1987 = vsub.s32 0, %v1986
        %v1988 = vsel %vm1982, %v1987, %v1986
        %vm1989 = vcmp.lt.s32.totalorder %v1883, 0
        %v1990 = vsub.s32 0, %v1883
        %v1991 = vsel %vm1989, %v1990, %v1883
        %v1992 = vshrl.u32 %v1991, 4
        %v1993 = vand.u32 %v1991, 15
        %v1994 = vsub.s32 0, %v1993
        %v1995 = vsel %vm1989, %v1994, %v1993
        %vm1996 = vcmp.ne.s32.totalorder %v1890, 0
        %vm1997 = vcmp.ne.s32.totalorder %v1897, 0
        %vm1998 = vcmp.ne.s32.totalorder %v1904, 0
        %vm1999 = vcmp.ne.s32.totalorder %v1911, 0
        %vm2000 = vcmp.ne.s32.totalorder %v1918, 0
        %vm2001 = vcmp.ne.s32.totalorder %v1925, 0
        %vm2002 = vcmp.ne.s32.totalorder %v1932, 0
        %vm2003 = vcmp.ne.s32.totalorder %v1939, 0
        %vm2004 = vcmp.ne.s32.totalorder %v1946, 0
        %vm2005 = vcmp.ne.s32.totalorder %v1953, 0
        %vm2006 = vcmp.ne.s32.totalorder %v1960, 0
        %vm2007 = vcmp.ne.s32.totalorder %v1967, 0
        %vm2008 = vcmp.ne.s32.totalorder %v1974, 0
        %vm2009 = vcmp.ne.s32.totalorder %v1981, 0
        %vm2010 = vcmp.ne.s32.totalorder %v1988, 0
        %vm2011 = vcmp.ne.s32.totalorder %v1995, 0
        %vm2012 = vcmp.lt.s32.totalorder %v1890, 0
        %vm2013 = vcmp.lt.s32.totalorder %v1897, 0
        %vm2014 = vcmp.lt.s32.totalorder %v1904, 0
        %vm2015 = vcmp.lt.s32.totalorder %v1911, 0
        %vm2016 = vcmp.lt.s32.totalorder %v1918, 0
        %vm2017 = vcmp.lt.s32.totalorder %v1925, 0
        %vm2018 = vcmp.lt.s32.totalorder %v1932, 0
        %vm2019 = vcmp.lt.s32.totalorder %v1939, 0
        %vm2020 = vcmp.lt.s32.totalorder %v1946, 0
        %vm2021 = vcmp.lt.s32.totalorder %v1953, 0
        %vm2022 = vcmp.lt.s32.totalorder %v1960, 0
        %vm2023 = vcmp.lt.s32.totalorder %v1967, 0
        %vm2024 = vcmp.lt.s32.totalorder %v1974, 0
        %vm2025 = vcmp.lt.s32.totalorder %v1981, 0
        %vm2026 = vcmp.lt.s32.totalorder %v1988, 0
        %vm2027 = vcmp.lt.s32.totalorder %v1995, 0
        %vm2028 = vmand %vm2012, %vm1996
        %vm2029 = vmand %vm2013, %vm1997
        %vm2030 = vmand %vm2014, %vm1998
        %vm2031 = vmand %vm2015, %vm1999
        %vm2032 = vmand %vm2016, %vm2000
        %vm2033 = vmand %vm2017, %vm2001
        %vm2034 = vmand %vm2018, %vm2002
        %vm2035 = vmand %vm2019, %vm2003
        %vm2036 = vmand %vm2020, %vm2004
        %vm2037 = vmand %vm2021, %vm2005
        %vm2038 = vmand %vm2022, %vm2006
        %vm2039 = vmand %vm2023, %vm2007
        %vm2040 = vmand %vm2024, %vm2008
        %vm2041 = vmand %vm2025, %vm2009
        %vm2042 = vmand %vm2026, %vm2010
        %vm2043 = vmand %vm2027, %vm2011
        %v2044 = vadd.s32 %v1890, 16
        %v2045 = vadd.s32 %v1897, 16
        %v2046 = vadd.s32 %v1904, 16
        %v2047 = vadd.s32 %v1911, 16
        %v2048 = vadd.s32 %v1918, 16
        %v2049 = vadd.s32 %v1925, 16
        %v2050 = vadd.s32 %v1932, 16
        %v2051 = vadd.s32 %v1939, 16
        %v2052 = vadd.s32 %v1946, 16
        %v2053 = vadd.s32 %v1953, 16
        %v2054 = vadd.s32 %v1960, 16
        %v2055 = vadd.s32 %v1967, 16
        %v2056 = vadd.s32 %v1974, 16
        %v2057 = vadd.s32 %v1981, 16
        %v2058 = vadd.s32 %v1988, 16
        %v2059 = vadd.s32 %v1995, 16
        %v2060 = vsel %vm2028, %v2044, %v1890
        %v2061 = vsel %vm2029, %v2045, %v1897
        %v2062 = vsel %vm2030, %v2046, %v1904
        %v2063 = vsel %vm2031, %v2047, %v1911
        %v2064 = vsel %vm2032, %v2048, %v1918
        %v2065 = vsel %vm2033, %v2049, %v1925
        %v2066 = vsel %vm2034, %v2050, %v1932
        %v2067 = vsel %vm2035, %v2051, %v1939
        %v2068 = vsel %vm2036, %v2052, %v1946
        %v2069 = vsel %vm2037, %v2053, %v1953
        %v2070 = vsel %vm2038, %v2054, %v1960
        %v2071 = vsel %vm2039, %v2055, %v1967
        %v2072 = vsel %vm2040, %v2056, %v1974
        %v2073 = vsel %vm2041, %v2057, %v1981
        %v2074 = vsel %vm2042, %v2058, %v1988
        %v2075 = vsel %vm2043, %v2059, %v1995
        %vm2076 = vcmp.eq.s32.totalorder %v2060, 0
        %vm2077 = vcmp.eq.s32.totalorder %v2061, 0
        %vm2078 = vcmp.eq.s32.totalorder %v2062, 0
        %vm2079 = vcmp.eq.s32.totalorder %v2063, 0
        %vm2080 = vcmp.eq.s32.totalorder %v2064, 0
        %vm2081 = vcmp.eq.s32.totalorder %v2065, 0
        %vm2082 = vcmp.eq.s32.totalorder %v2066, 0
        %vm2083 = vcmp.eq.s32.totalorder %v2067, 0
        %vm2084 = vcmp.eq.s32.totalorder %v2068, 0
        %vm2085 = vcmp.eq.s32.totalorder %v2069, 0
        %vm2086 = vcmp.eq.s32.totalorder %v2070, 0
        %vm2087 = vcmp.eq.s32.totalorder %v2071, 0
        %vm2088 = vcmp.eq.s32.totalorder %v2072, 0
        %vm2089 = vcmp.eq.s32.totalorder %v2073, 0
        %vm2090 = vcmp.eq.s32.totalorder %v2074, 0
        %vm2091 = vcmp.eq.s32.totalorder %v2075, 0
        %v2092 = vsel %vm2076, 1, 0
        %v2093 = vsel %vm2077, 1, 0
        %v2094 = vsel %vm2078, 1, 0
        %v2095 = vsel %vm2079, 1, 0
        %v2096 = vsel %vm2080, 1, 0
        %v2097 = vsel %vm2081, 1, 0
        %v2098 = vsel %vm2082, 1, 0
        %v2099 = vsel %vm2083, 1, 0
        %v2100 = vsel %vm2084, 1, 0
        %v2101 = vsel %vm2085, 1, 0
        %v2102 = vsel %vm2086, 1, 0
        %v2103 = vsel %vm2087, 1, 0
        %v2104 = vsel %vm2088, 1, 0
        %v2105 = vsel %vm2089, 1, 0
        %v2106 = vsel %vm2090, 1, 0
        %v2107 = vsel %vm2091, 1, 0
        %v2108 = vcvt.s32.f32 %v2092
        %v2109 = vcvt.s32.f32 %v2093
        %v2110 = vcvt.s32.f32 %v2094
        %v2111 = vcvt.s32.f32 %v2095
        %v2112 = vcvt.s32.f32 %v2096
        %v2113 = vcvt.s32.f32 %v2097
        %v2114 = vcvt.s32.f32 %v2098
        %v2115 = vcvt.s32.f32 %v2099
        %v2116 = vcvt.s32.f32 %v2100
        %v2117 = vcvt.s32.f32 %v2101
        %v2118 = vcvt.s32.f32 %v2102
        %v2119 = vcvt.s32.f32 %v2103
        %v2120 = vcvt.s32.f32 %v2104
        %v2121 = vcvt.s32.f32 %v2105
        %v2122 = vcvt.s32.f32 %v2106
        %v2123 = vcvt.s32.f32 %v2107
        %vm2124 = vcmp.eq.s32.totalorder %v2060, 1
        %vm2125 = vcmp.eq.s32.totalorder %v2061, 1
        %vm2126 = vcmp.eq.s32.totalorder %v2062, 1
        %vm2127 = vcmp.eq.s32.totalorder %v2063, 1
        %vm2128 = vcmp.eq.s32.totalorder %v2064, 1
        %vm2129 = vcmp.eq.s32.totalorder %v2065, 1
        %vm2130 = vcmp.eq.s32.totalorder %v2066, 1
        %vm2131 = vcmp.eq.s32.totalorder %v2067, 1
        %vm2132 = vcmp.eq.s32.totalorder %v2068, 1
        %vm2133 = vcmp.eq.s32.totalorder %v2069, 1
        %vm2134 = vcmp.eq.s32.totalorder %v2070, 1
        %vm2135 = vcmp.eq.s32.totalorder %v2071, 1
        %vm2136 = vcmp.eq.s32.totalorder %v2072, 1
        %vm2137 = vcmp.eq.s32.totalorder %v2073, 1
        %vm2138 = vcmp.eq.s32.totalorder %v2074, 1
        %vm2139 = vcmp.eq.s32.totalorder %v2075, 1
        %v2140 = vsel %vm2124, 1, 0
        %v2141 = vsel %vm2125, 1, 0
        %v2142 = vsel %vm2126, 1, 0
        %v2143 = vsel %vm2127, 1, 0
        %v2144 = vsel %vm2128, 1, 0
        %v2145 = vsel %vm2129, 1, 0
        %v2146 = vsel %vm2130, 1, 0
        %v2147 = vsel %vm2131, 1, 0
        %v2148 = vsel %vm2132, 1, 0
        %v2149 = vsel %vm2133, 1, 0
        %v2150 = vsel %vm2134, 1, 0
        %v2151 = vsel %vm2135, 1, 0
        %v2152 = vsel %vm2136, 1, 0
        %v2153 = vsel %vm2137, 1, 0
        %v2154 = vsel %vm2138, 1, 0
        %v2155 = vsel %vm2139, 1, 0
        %v2156 = vcvt.s32.f32 %v2140
        %v2157 = vcvt.s32.f32 %v2141
        %v2158 = vcvt.s32.f32 %v2142
        %v2159 = vcvt.s32.f32 %v2143
        %v2160 = vcvt.s32.f32 %v2144
        %v2161 = vcvt.s32.f32 %v2145
        %v2162 = vcvt.s32.f32 %v2146
        %v2163 = vcvt.s32.f32 %v2147
        %v2164 = vcvt.s32.f32 %v2148
        %v2165 = vcvt.s32.f32 %v2149
        %v2166 = vcvt.s32.f32 %v2150
        %v2167 = vcvt.s32.f32 %v2151
        %v2168 = vcvt.s32.f32 %v2152
        %v2169 = vcvt.s32.f32 %v2153
        %v2170 = vcvt.s32.f32 %v2154
        %v2171 = vcvt.s32.f32 %v2155
        %vm2172 = vcmp.eq.s32.totalorder %v2060, 2
        %vm2173 = vcmp.eq.s32.totalorder %v2061, 2
        %vm2174 = vcmp.eq.s32.totalorder %v2062, 2
        %vm2175 = vcmp.eq.s32.totalorder %v2063, 2
        %vm2176 = vcmp.eq.s32.totalorder %v2064, 2
        %vm2177 = vcmp.eq.s32.totalorder %v2065, 2
        %vm2178 = vcmp.eq.s32.totalorder %v2066, 2
        %vm2179 = vcmp.eq.s32.totalorder %v2067, 2
        %vm2180 = vcmp.eq.s32.totalorder %v2068, 2
        %vm2181 = vcmp.eq.s32.totalorder %v2069, 2
        %vm2182 = vcmp.eq.s32.totalorder %v2070, 2
        %vm2183 = vcmp.eq.s32.totalorder %v2071, 2
        %vm2184 = vcmp.eq.s32.totalorder %v2072, 2
        %vm2185 = vcmp.eq.s32.totalorder %v2073, 2
        %vm2186 = vcmp.eq.s32.totalorder %v2074, 2
        %vm2187 = vcmp.eq.s32.totalorder %v2075, 2
        %v2188 = vsel %vm2172, 1, 0
        %v2189 = vsel %vm2173, 1, 0
        %v2190 = vsel %vm2174, 1, 0
        %v2191 = vsel %vm2175, 1, 0
        %v2192 = vsel %vm2176, 1, 0
        %v2193 = vsel %vm2177, 1, 0
        %v2194 = vsel %vm2178, 1, 0
        %v2195 = vsel %vm2179, 1, 0
        %v2196 = vsel %vm2180, 1, 0
        %v2197 = vsel %vm2181, 1, 0
        %v2198 = vsel %vm2182, 1, 0
        %v2199 = vsel %vm2183, 1, 0
        %v2200 = vsel %vm2184, 1, 0
        %v2201 = vsel %vm2185, 1, 0
        %v2202 = vsel %vm2186, 1, 0
        %v2203 = vsel %vm2187, 1, 0
        %v2204 = vcvt.s32.f32 %v2188
        %v2205 = vcvt.s32.f32 %v2189
        %v2206 = vcvt.s32.f32 %v2190
        %v2207 = vcvt.s32.f32 %v2191
        %v2208 = vcvt.s32.f32 %v2192
        %v2209 = vcvt.s32.f32 %v2193
        %v2210 = vcvt.s32.f32 %v2194
        %v2211 = vcvt.s32.f32 %v2195
        %v2212 = vcvt.s32.f32 %v2196
        %v2213 = vcvt.s32.f32 %v2197
        %v2214 = vcvt.s32.f32 %v2198
        %v2215 = vcvt.s32.f32 %v2199
        %v2216 = vcvt.s32.f32 %v2200
        %v2217 = vcvt.s32.f32 %v2201
        %v2218 = vcvt.s32.f32 %v2202
        %v2219 = vcvt.s32.f32 %v2203
        %vm2220 = vcmp.eq.s32.totalorder %v2060, 3
        %vm2221 = vcmp.eq.s32.totalorder %v2061, 3
        %vm2222 = vcmp.eq.s32.totalorder %v2062, 3
        %vm2223 = vcmp.eq.s32.totalorder %v2063, 3
        %vm2224 = vcmp.eq.s32.totalorder %v2064, 3
        %vm2225 = vcmp.eq.s32.totalorder %v2065, 3
        %vm2226 = vcmp.eq.s32.totalorder %v2066, 3
        %vm2227 = vcmp.eq.s32.totalorder %v2067, 3
        %vm2228 = vcmp.eq.s32.totalorder %v2068, 3
        %vm2229 = vcmp.eq.s32.totalorder %v2069, 3
        %vm2230 = vcmp.eq.s32.totalorder %v2070, 3
        %vm2231 = vcmp.eq.s32.totalorder %v2071, 3
        %vm2232 = vcmp.eq.s32.totalorder %v2072, 3
        %vm2233 = vcmp.eq.s32.totalorder %v2073, 3
        %vm2234 = vcmp.eq.s32.totalorder %v2074, 3
        %vm2235 = vcmp.eq.s32.totalorder %v2075, 3
        %v2236 = vsel %vm2220, 1, 0
        %v2237 = vsel %vm2221, 1, 0
        %v2238 = vsel %vm2222, 1, 0
        %v2239 = vsel %vm2223, 1, 0
        %v2240 = vsel %vm2224, 1, 0
        %v2241 = vsel %vm2225, 1, 0
        %v2242 = vsel %vm2226, 1, 0
        %v2243 = vsel %vm2227, 1, 0
        %v2244 = vsel %vm2228, 1, 0
        %v2245 = vsel %vm2229, 1, 0
        %v2246 = vsel %vm2230, 1, 0
        %v2247 = vsel %vm2231, 1, 0
        %v2248 = vsel %vm2232, 1, 0
        %v2249 = vsel %vm2233, 1, 0
        %v2250 = vsel %vm2234, 1, 0
        %v2251 = vsel %vm2235, 1, 0
        %v2252 = vcvt.s32.f32 %v2236
        %v2253 = vcvt.s32.f32 %v2237
        %v2254 = vcvt.s32.f32 %v2238
        %v2255 = vcvt.s32.f32 %v2239
        %v2256 = vcvt.s32.f32 %v2240
        %v2257 = vcvt.s32.f32 %v2241
        %v2258 = vcvt.s32.f32 %v2242
        %v2259 = vcvt.s32.f32 %v2243
        %v2260 = vcvt.s32.f32 %v2244
        %v2261 = vcvt.s32.f32 %v2245
        %v2262 = vcvt.s32.f32 %v2246
        %v2263 = vcvt.s32.f32 %v2247
        %v2264 = vcvt.s32.f32 %v2248
        %v2265 = vcvt.s32.f32 %v2249
        %v2266 = vcvt.s32.f32 %v2250
        %v2267 = vcvt.s32.f32 %v2251
        %vm2268 = vcmp.eq.s32.totalorder %v2060, 4
        %vm2269 = vcmp.eq.s32.totalorder %v2061, 4
        %vm2270 = vcmp.eq.s32.totalorder %v2062, 4
        %vm2271 = vcmp.eq.s32.totalorder %v2063, 4
        %vm2272 = vcmp.eq.s32.totalorder %v2064, 4
        %vm2273 = vcmp.eq.s32.totalorder %v2065, 4
        %vm2274 = vcmp.eq.s32.totalorder %v2066, 4
        %vm2275 = vcmp.eq.s32.totalorder %v2067, 4
        %vm2276 = vcmp.eq.s32.totalorder %v2068, 4
        %vm2277 = vcmp.eq.s32.totalorder %v2069, 4
        %vm2278 = vcmp.eq.s32.totalorder %v2070, 4
        %vm2279 = vcmp.eq.s32.totalorder %v2071, 4
        %vm2280 = vcmp.eq.s32.totalorder %v2072, 4
        %vm2281 = vcmp.eq.s32.totalorder %v2073, 4
        %vm2282 = vcmp.eq.s32.totalorder %v2074, 4
        %vm2283 = vcmp.eq.s32.totalorder %v2075, 4
        %v2284 = vsel %vm2268, 1, 0
        %v2285 = vsel %vm2269, 1, 0
        %v2286 = vsel %vm2270, 1, 0
        %v2287 = vsel %vm2271, 1, 0
        %v2288 = vsel %vm2272, 1, 0
        %v2289 = vsel %vm2273, 1, 0
        %v2290 = vsel %vm2274, 1, 0
        %v2291 = vsel %vm2275, 1, 0
        %v2292 = vsel %vm2276, 1, 0
        %v2293 = vsel %vm2277, 1, 0
        %v2294 = vsel %vm2278, 1, 0
        %v2295 = vsel %vm2279, 1, 0
        %v2296 = vsel %vm2280, 1, 0
        %v2297 = vsel %vm2281, 1, 0
        %v2298 = vsel %vm2282, 1, 0
        %v2299 = vsel %vm2283, 1, 0
        %v2300 = vcvt.s32.f32 %v2284
        %v2301 = vcvt.s32.f32 %v2285
        %v2302 = vcvt.s32.f32 %v2286
        %v2303 = vcvt.s32.f32 %v2287
        %v2304 = vcvt.s32.f32 %v2288
        %v2305 = vcvt.s32.f32 %v2289
        %v2306 = vcvt.s32.f32 %v2290
        %v2307 = vcvt.s32.f32 %v2291
        %v2308 = vcvt.s32.f32 %v2292
        %v2309 = vcvt.s32.f32 %v2293
        %v2310 = vcvt.s32.f32 %v2294
        %v2311 = vcvt.s32.f32 %v2295
        %v2312 = vcvt.s32.f32 %v2296
        %v2313 = vcvt.s32.f32 %v2297
        %v2314 = vcvt.s32.f32 %v2298
        %v2315 = vcvt.s32.f32 %v2299
        %vm2316 = vcmp.eq.s32.totalorder %v2060, 5
        %vm2317 = vcmp.eq.s32.totalorder %v2061, 5
        %vm2318 = vcmp.eq.s32.totalorder %v2062, 5
        %vm2319 = vcmp.eq.s32.totalorder %v2063, 5
        %vm2320 = vcmp.eq.s32.totalorder %v2064, 5
        %vm2321 = vcmp.eq.s32.totalorder %v2065, 5
        %vm2322 = vcmp.eq.s32.totalorder %v2066, 5
        %vm2323 = vcmp.eq.s32.totalorder %v2067, 5
        %vm2324 = vcmp.eq.s32.totalorder %v2068, 5
        %vm2325 = vcmp.eq.s32.totalorder %v2069, 5
        %vm2326 = vcmp.eq.s32.totalorder %v2070, 5
        %vm2327 = vcmp.eq.s32.totalorder %v2071, 5
        %vm2328 = vcmp.eq.s32.totalorder %v2072, 5
        %vm2329 = vcmp.eq.s32.totalorder %v2073, 5
        %vm2330 = vcmp.eq.s32.totalorder %v2074, 5
        %vm2331 = vcmp.eq.s32.totalorder %v2075, 5
        %v2332 = vsel %vm2316, 1, 0
        %v2333 = vsel %vm2317, 1, 0
        %v2334 = vsel %vm2318, 1, 0
        %v2335 = vsel %vm2319, 1, 0
        %v2336 = vsel %vm2320, 1, 0
        %v2337 = vsel %vm2321, 1, 0
        %v2338 = vsel %vm2322, 1, 0
        %v2339 = vsel %vm2323, 1, 0
        %v2340 = vsel %vm2324, 1, 0
        %v2341 = vsel %vm2325, 1, 0
        %v2342 = vsel %vm2326, 1, 0
        %v2343 = vsel %vm2327, 1, 0
        %v2344 = vsel %vm2328, 1, 0
        %v2345 = vsel %vm2329, 1, 0
        %v2346 = vsel %vm2330, 1, 0
        %v2347 = vsel %vm2331, 1, 0
        %v2348 = vcvt.s32.f32 %v2332
        %v2349 = vcvt.s32.f32 %v2333
        %v2350 = vcvt.s32.f32 %v2334
        %v2351 = vcvt.s32.f32 %v2335
        %v2352 = vcvt.s32.f32 %v2336
        %v2353 = vcvt.s32.f32 %v2337
        %v2354 = vcvt.s32.f32 %v2338
        %v2355 = vcvt.s32.f32 %v2339
        %v2356 = vcvt.s32.f32 %v2340
        %v2357 = vcvt.s32.f32 %v2341
        %v2358 = vcvt.s32.f32 %v2342
        %v2359 = vcvt.s32.f32 %v2343
        %v2360 = vcvt.s32.f32 %v2344
        %v2361 = vcvt.s32.f32 %v2345
        %v2362 = vcvt.s32.f32 %v2346
        %v2363 = vcvt.s32.f32 %v2347
        %vm2364 = vcmp.eq.s32.totalorder %v2060, 6
        %vm2365 = vcmp.eq.s32.totalorder %v2061, 6
        %vm2366 = vcmp.eq.s32.totalorder %v2062, 6
        %vm2367 = vcmp.eq.s32.totalorder %v2063, 6
        %vm2368 = vcmp.eq.s32.totalorder %v2064, 6
        %vm2369 = vcmp.eq.s32.totalorder %v2065, 6
        %vm2370 = vcmp.eq.s32.totalorder %v2066, 6
        %vm2371 = vcmp.eq.s32.totalorder %v2067, 6
        %vm2372 = vcmp.eq.s32.totalorder %v2068, 6
        %vm2373 = vcmp.eq.s32.totalorder %v2069, 6
        %vm2374 = vcmp.eq.s32.totalorder %v2070, 6
        %vm2375 = vcmp.eq.s32.totalorder %v2071, 6
        %vm2376 = vcmp.eq.s32.totalorder %v2072, 6
        %vm2377 = vcmp.eq.s32.totalorder %v2073, 6
        %vm2378 = vcmp.eq.s32.totalorder %v2074, 6
        %vm2379 = vcmp.eq.s32.totalorder %v2075, 6
        %v2380 = vsel %vm2364, 1, 0
        %v2381 = vsel %vm2365, 1, 0
        %v2382 = vsel %vm2366, 1, 0
        %v2383 = vsel %vm2367, 1, 0
        %v2384 = vsel %vm2368, 1, 0
        %v2385 = vsel %vm2369, 1, 0
        %v2386 = vsel %vm2370, 1, 0
        %v2387 = vsel %vm2371, 1, 0
        %v2388 = vsel %vm2372, 1, 0
        %v2389 = vsel %vm2373, 1, 0
        %v2390 = vsel %vm2374, 1, 0
        %v2391 = vsel %vm2375, 1, 0
        %v2392 = vsel %vm2376, 1, 0
        %v2393 = vsel %vm2377, 1, 0
        %v2394 = vsel %vm2378, 1, 0
        %v2395 = vsel %vm2379, 1, 0
        %v2396 = vcvt.s32.f32 %v2380
        %v2397 = vcvt.s32.f32 %v2381
        %v2398 = vcvt.s32.f32 %v2382
        %v2399 = vcvt.s32.f32 %v2383
        %v2400 = vcvt.s32.f32 %v2384
        %v2401 = vcvt.s32.f32 %v2385
        %v2402 = vcvt.s32.f32 %v2386
        %v2403 = vcvt.s32.f32 %v2387
        %v2404 = vcvt.s32.f32 %v2388
        %v2405 = vcvt.s32.f32 %v2389
        %v2406 = vcvt.s32.f32 %v2390
        %v2407 = vcvt.s32.f32 %v2391
        %v2408 = vcvt.s32.f32 %v2392
        %v2409 = vcvt.s32.f32 %v2393
        %v2410 = vcvt.s32.f32 %v2394
        %v2411 = vcvt.s32.f32 %v2395
        %vm2412 = vcmp.eq.s32.totalorder %v2060, 7
        %vm2413 = vcmp.eq.s32.totalorder %v2061, 7
        %vm2414 = vcmp.eq.s32.totalorder %v2062, 7
        %vm2415 = vcmp.eq.s32.totalorder %v2063, 7
        %vm2416 = vcmp.eq.s32.totalorder %v2064, 7
        %vm2417 = vcmp.eq.s32.totalorder %v2065, 7
        %vm2418 = vcmp.eq.s32.totalorder %v2066, 7
        %vm2419 = vcmp.eq.s32.totalorder %v2067, 7
        %vm2420 = vcmp.eq.s32.totalorder %v2068, 7
        %vm2421 = vcmp.eq.s32.totalorder %v2069, 7
        %vm2422 = vcmp.eq.s32.totalorder %v2070, 7
        %vm2423 = vcmp.eq.s32.totalorder %v2071, 7
        %vm2424 = vcmp.eq.s32.totalorder %v2072, 7
        %vm2425 = vcmp.eq.s32.totalorder %v2073, 7
        %vm2426 = vcmp.eq.s32.totalorder %v2074, 7
        %vm2427 = vcmp.eq.s32.totalorder %v2075, 7
        %v2428 = vsel %vm2412, 1, 0
        %v2429 = vsel %vm2413, 1, 0
        %v2430 = vsel %vm2414, 1, 0
        %v2431 = vsel %vm2415, 1, 0
        %v2432 = vsel %vm2416, 1, 0
        %v2433 = vsel %vm2417, 1, 0
        %v2434 = vsel %vm2418, 1, 0
        %v2435 = vsel %vm2419, 1, 0
        %v2436 = vsel %vm2420, 1, 0
        %v2437 = vsel %vm2421, 1, 0
        %v2438 = vsel %vm2422, 1, 0
        %v2439 = vsel %vm2423, 1, 0
        %v2440 = vsel %vm2424, 1, 0
        %v2441 = vsel %vm2425, 1, 0
        %v2442 = vsel %vm2426, 1, 0
        %v2443 = vsel %vm2427, 1, 0
        %v2444 = vcvt.s32.f32 %v2428
        %v2445 = vcvt.s32.f32 %v2429
        %v2446 = vcvt.s32.f32 %v2430
        %v2447 = vcvt.s32.f32 %v2431
        %v2448 = vcvt.s32.f32 %v2432
        %v2449 = vcvt.s32.f32 %v2433
        %v2450 = vcvt.s32.f32 %v2434
        %v2451 = vcvt.s32.f32 %v2435
        %v2452 = vcvt.s32.f32 %v2436
        %v2453 = vcvt.s32.f32 %v2437
        %v2454 = vcvt.s32.f32 %v2438
        %v2455 = vcvt.s32.f32 %v2439
        %v2456 = vcvt.s32.f32 %v2440
        %v2457 = vcvt.s32.f32 %v2441
        %v2458 = vcvt.s32.f32 %v2442
        %v2459 = vcvt.s32.f32 %v2443
        %vm2460 = vcmp.eq.s32.totalorder %v2060, 8
        %vm2461 = vcmp.eq.s32.totalorder %v2061, 8
        %vm2462 = vcmp.eq.s32.totalorder %v2062, 8
        %vm2463 = vcmp.eq.s32.totalorder %v2063, 8
        %vm2464 = vcmp.eq.s32.totalorder %v2064, 8
        %vm2465 = vcmp.eq.s32.totalorder %v2065, 8
        %vm2466 = vcmp.eq.s32.totalorder %v2066, 8
        %vm2467 = vcmp.eq.s32.totalorder %v2067, 8
        %vm2468 = vcmp.eq.s32.totalorder %v2068, 8
        %vm2469 = vcmp.eq.s32.totalorder %v2069, 8
        %vm2470 = vcmp.eq.s32.totalorder %v2070, 8
        %vm2471 = vcmp.eq.s32.totalorder %v2071, 8
        %vm2472 = vcmp.eq.s32.totalorder %v2072, 8
        %vm2473 = vcmp.eq.s32.totalorder %v2073, 8
        %vm2474 = vcmp.eq.s32.totalorder %v2074, 8
        %vm2475 = vcmp.eq.s32.totalorder %v2075, 8
        %v2476 = vsel %vm2460, 1, 0
        %v2477 = vsel %vm2461, 1, 0
        %v2478 = vsel %vm2462, 1, 0
        %v2479 = vsel %vm2463, 1, 0
        %v2480 = vsel %vm2464, 1, 0
        %v2481 = vsel %vm2465, 1, 0
        %v2482 = vsel %vm2466, 1, 0
        %v2483 = vsel %vm2467, 1, 0
        %v2484 = vsel %vm2468, 1, 0
        %v2485 = vsel %vm2469, 1, 0
        %v2486 = vsel %vm2470, 1, 0
        %v2487 = vsel %vm2471, 1, 0
        %v2488 = vsel %vm2472, 1, 0
        %v2489 = vsel %vm2473, 1, 0
        %v2490 = vsel %vm2474, 1, 0
        %v2491 = vsel %vm2475, 1, 0
        %v2492 = vcvt.s32.f32 %v2476
        %v2493 = vcvt.s32.f32 %v2477
        %v2494 = vcvt.s32.f32 %v2478
        %v2495 = vcvt.s32.f32 %v2479
        %v2496 = vcvt.s32.f32 %v2480
        %v2497 = vcvt.s32.f32 %v2481
        %v2498 = vcvt.s32.f32 %v2482
        %v2499 = vcvt.s32.f32 %v2483
        %v2500 = vcvt.s32.f32 %v2484
        %v2501 = vcvt.s32.f32 %v2485
        %v2502 = vcvt.s32.f32 %v2486
        %v2503 = vcvt.s32.f32 %v2487
        %v2504 = vcvt.s32.f32 %v2488
        %v2505 = vcvt.s32.f32 %v2489
        %v2506 = vcvt.s32.f32 %v2490
        %v2507 = vcvt.s32.f32 %v2491
        %2509 = vset.pattern.permute.xlu0 0
        %2510 = vperm.xlu0 %2509, %v1723
        %v2511 = vpop.permute.xlu0 %2510
        %2514 = vset.pattern.permute.xlu0 0
        %2515 = vperm.xlu0 %2514, %v1726
        %v2516 = vpop.permute.xlu0 %2515
        %2519 = vset.pattern.permute.xlu0 0
        %2520 = vperm.xlu0 %2519, %v1731
        %v2521 = vpop.permute.xlu0 %2520
        %2524 = vset.pattern.permute.xlu0 0
        %2525 = vperm.xlu0 %2524, %v1734
        %v2526 = vpop.permute.xlu0 %2525
        %2529 = vset.pattern.permute.xlu0 0
        %2530 = vperm.xlu0 %2529, %v1739
        %v2531 = vpop.permute.xlu0 %2530
        %2534 = vset.pattern.permute.xlu0 0
        %2535 = vperm.xlu0 %2534, %v1742
        %v2536 = vpop.permute.xlu0 %2535
        %2539 = vset.pattern.permute.xlu0 0
        %2540 = vperm.xlu0 %2539, %v1747
        %v2541 = vpop.permute.xlu0 %2540
        %2544 = vset.pattern.permute.xlu0 0
        %2545 = vperm.xlu0 %2544, %v1750
        %v2546 = vpop.permute.xlu0 %2545
        %2549 = vset.pattern.permute.xlu0 0
        %2550 = vperm.xlu0 %2549, %v1755
        %v2551 = vpop.permute.xlu0 %2550
        %2554 = vset.pattern.permute.xlu0 0
        %2555 = vperm.xlu0 %2554, %v1758
        %v2556 = vpop.permute.xlu0 %2555
        %2559 = vset.pattern.permute.xlu0 0
        %2560 = vperm.xlu0 %2559, %v1763
        %v2561 = vpop.permute.xlu0 %2560
        %2564 = vset.pattern.permute.xlu0 0
        %2565 = vperm.xlu0 %2564, %v1766
        %v2566 = vpop.permute.xlu0 %2565
        %2569 = vset.pattern.permute.xlu0 0
        %2570 = vperm.xlu0 %2569, %v1771
        %v2571 = vpop.permute.xlu0 %2570
        %2574 = vset.pattern.permute.xlu0 0
        %2575 = vperm.xlu0 %2574, %v1774
        %v2576 = vpop.permute.xlu0 %2575
        %2579 = vset.pattern.permute.xlu0 0
        %2580 = vperm.xlu0 %2579, %v1779
        %v2581 = vpop.permute.xlu0 %2580
        %2584 = vset.pattern.permute.xlu0 0
        %2585 = vperm.xlu0 %2584, %v1782
        %v2586 = vpop.permute.xlu0 %2585
        %2589 = vset.pattern.permute.xlu0 0
        %2590 = vperm.xlu0 %2589, %v1787
        %v2591 = vpop.permute.xlu0 %2590
        %2594 = vset.pattern.permute.xlu0 0
        %2595 = vperm.xlu0 %2594, %v1790
        %v2596 = vpop.permute.xlu0 %2595
        %2599 = vset.pattern.permute.xlu0 0
        %2600 = vperm.xlu0 %2599, %v1795
        %v2601 = vpop.permute.xlu0 %2600
        %2604 = vset.pattern.permute.xlu0 0
        %2605 = vperm.xlu0 %2604, %v1798
        %v2606 = vpop.permute.xlu0 %2605
        %2609 = vset.pattern.permute.xlu0 0
        %2610 = vperm.xlu0 %2609, %v1803
        %v2611 = vpop.permute.xlu0 %2610
        %2614 = vset.pattern.permute.xlu0 0
        %2615 = vperm.xlu0 %2614, %v1806
        %v2616 = vpop.permute.xlu0 %2615
        %2619 = vset.pattern.permute.xlu0 0
        %2620 = vperm.xlu0 %2619, %v1811
        %v2621 = vpop.permute.xlu0 %2620
        %2624 = vset.pattern.permute.xlu0 0
        %2625 = vperm.xlu0 %2624, %v1814
        %v2626 = vpop.permute.xlu0 %2625
        %2629 = vset.pattern.permute.xlu0 0
        %2630 = vperm.xlu0 %2629, %v1819
        %v2631 = vpop.permute.xlu0 %2630
        %2634 = vset.pattern.permute.xlu0 0
        %2635 = vperm.xlu0 %2634, %v1822
        %v2636 = vpop.permute.xlu0 %2635
        %2639 = vset.pattern.permute.xlu0 0
        %2640 = vperm.xlu0 %2639, %v1827
        %v2641 = vpop.permute.xlu0 %2640
        %2644 = vset.pattern.permute.xlu0 0
        %2645 = vperm.xlu0 %2644, %v1830
        %v2646 = vpop.permute.xlu0 %2645
        %2649 = vset.pattern.permute.xlu0 0
        %2650 = vperm.xlu0 %2649, %v1835
        %v2651 = vpop.permute.xlu0 %2650
        %2654 = vset.pattern.permute.xlu0 0
        %2655 = vperm.xlu0 %2654, %v1838
        %v2656 = vpop.permute.xlu0 %2655
        %2659 = vset.pattern.permute.xlu0 0
        %2660 = vperm.xlu0 %2659, %v1843
        %v2661 = vpop.permute.xlu0 %2660
        %2664 = vset.pattern.permute.xlu0 0
        %2665 = vperm.xlu0 %2664, %v1846
        %v2666 = vpop.permute.xlu0 %2665
        %v2668 = vmul.f32 %v2108, %v2511
        %v2669 = vmul.f32 %v2109, %v2516
        %v2670 = vmul.f32 %v2110, %v2521
        %v2671 = vmul.f32 %v2111, %v2526
        %v2672 = vmul.f32 %v2112, %v2531
        %v2673 = vmul.f32 %v2113, %v2536
        %v2674 = vmul.f32 %v2114, %v2541
        %v2675 = vmul.f32 %v2115, %v2546
        %v2676 = vmul.f32 %v2116, %v2551
        %v2677 = vmul.f32 %v2117, %v2556
        %v2678 = vmul.f32 %v2118, %v2561
        %v2679 = vmul.f32 %v2119, %v2566
        %v2680 = vmul.f32 %v2120, %v2571
        %v2681 = vmul.f32 %v2121, %v2576
        %v2682 = vmul.f32 %v2122, %v2581
        %v2683 = vmul.f32 %v2123, %v2586
        %v2684 = vmul.f32 %v2108, %v2591
        %v2685 = vmul.f32 %v2109, %v2596
        %v2686 = vmul.f32 %v2110, %v2601
        %v2687 = vmul.f32 %v2111, %v2606
        %v2688 = vmul.f32 %v2112, %v2611
        %v2689 = vmul.f32 %v2113, %v2616
        %v2690 = vmul.f32 %v2114, %v2621
        %v2691 = vmul.f32 %v2115, %v2626
        %v2692 = vmul.f32 %v2116, %v2631
        %v2693 = vmul.f32 %v2117, %v2636
        %v2694 = vmul.f32 %v2118, %v2641
        %v2695 = vmul.f32 %v2119, %v2646
        %v2696 = vmul.f32 %v2120, %v2651
        %v2697 = vmul.f32 %v2121, %v2656
        %v2698 = vmul.f32 %v2122, %v2661
        %v2699 = vmul.f32 %v2123, %v2666
        %2700 = vset.pattern.permute.xlu0 1
        %2701 = vperm.xlu0 %2700, %v1723
        %v2702 = vpop.permute.xlu0 %2701
        %2704 = vset.pattern.permute.xlu0 1
        %2705 = vperm.xlu0 %2704, %v1726
        %v2706 = vpop.permute.xlu0 %2705
        %2708 = vset.pattern.permute.xlu0 1
        %2709 = vperm.xlu0 %2708, %v1731
        %v2710 = vpop.permute.xlu0 %2709
        %2712 = vset.pattern.permute.xlu0 1
        %2713 = vperm.xlu0 %2712, %v1734
        %v2714 = vpop.permute.xlu0 %2713
        %2716 = vset.pattern.permute.xlu0 1
        %2717 = vperm.xlu0 %2716, %v1739
        %v2718 = vpop.permute.xlu0 %2717
        %2720 = vset.pattern.permute.xlu0 1
        %2721 = vperm.xlu0 %2720, %v1742
        %v2722 = vpop.permute.xlu0 %2721
        %2724 = vset.pattern.permute.xlu0 1
        %2725 = vperm.xlu0 %2724, %v1747
        %v2726 = vpop.permute.xlu0 %2725
        %2728 = vset.pattern.permute.xlu0 1
        %2729 = vperm.xlu0 %2728, %v1750
        %v2730 = vpop.permute.xlu0 %2729
        %2732 = vset.pattern.permute.xlu0 1
        %2733 = vperm.xlu0 %2732, %v1755
        %v2734 = vpop.permute.xlu0 %2733
        %2736 = vset.pattern.permute.xlu0 1
        %2737 = vperm.xlu0 %2736, %v1758
        %v2738 = vpop.permute.xlu0 %2737
        %2740 = vset.pattern.permute.xlu0 1
        %2741 = vperm.xlu0 %2740, %v1763
        %v2742 = vpop.permute.xlu0 %2741
        %2744 = vset.pattern.permute.xlu0 1
        %2745 = vperm.xlu0 %2744, %v1766
        %v2746 = vpop.permute.xlu0 %2745
        %2748 = vset.pattern.permute.xlu0 1
        %2749 = vperm.xlu0 %2748, %v1771
        %v2750 = vpop.permute.xlu0 %2749
        %2752 = vset.pattern.permute.xlu0 1
        %2753 = vperm.xlu0 %2752, %v1774
        %v2754 = vpop.permute.xlu0 %2753
        %2756 = vset.pattern.permute.xlu0 1
        %2757 = vperm.xlu0 %2756, %v1779
        %v2758 = vpop.permute.xlu0 %2757
        %2760 = vset.pattern.permute.xlu0 1
        %2761 = vperm.xlu0 %2760, %v1782
        %v2762 = vpop.permute.xlu0 %2761
        %2764 = vset.pattern.permute.xlu0 1
        %2765 = vperm.xlu0 %2764, %v1787
        %v2766 = vpop.permute.xlu0 %2765
        %2768 = vset.pattern.permute.xlu0 1
        %2769 = vperm.xlu0 %2768, %v1790
        %v2770 = vpop.permute.xlu0 %2769
        %2772 = vset.pattern.permute.xlu0 1
        %2773 = vperm.xlu0 %2772, %v1795
        %v2774 = vpop.permute.xlu0 %2773
        %2776 = vset.pattern.permute.xlu0 1
        %2777 = vperm.xlu0 %2776, %v1798
        %v2778 = vpop.permute.xlu0 %2777
        %2780 = vset.pattern.permute.xlu0 1
        %2781 = vperm.xlu0 %2780, %v1803
        %v2782 = vpop.permute.xlu0 %2781
        %2784 = vset.pattern.permute.xlu0 1
        %2785 = vperm.xlu0 %2784, %v1806
        %v2786 = vpop.permute.xlu0 %2785
        %2788 = vset.pattern.permute.xlu0 1
        %2789 = vperm.xlu0 %2788, %v1811
        %v2790 = vpop.permute.xlu0 %2789
        %2792 = vset.pattern.permute.xlu0 1
        %2793 = vperm.xlu0 %2792, %v1814
        %v2794 = vpop.permute.xlu0 %2793
        %2796 = vset.pattern.permute.xlu0 1
        %2797 = vperm.xlu0 %2796, %v1819
        %v2798 = vpop.permute.xlu0 %2797
        %2800 = vset.pattern.permute.xlu0 1
        %2801 = vperm.xlu0 %2800, %v1822
        %v2802 = vpop.permute.xlu0 %2801
        %2804 = vset.pattern.permute.xlu0 1
        %2805 = vperm.xlu0 %2804, %v1827
        %v2806 = vpop.permute.xlu0 %2805
        %2808 = vset.pattern.permute.xlu0 1
        %2809 = vperm.xlu0 %2808, %v1830
        %v2810 = vpop.permute.xlu0 %2809
        %2812 = vset.pattern.permute.xlu0 1
        %2813 = vperm.xlu0 %2812, %v1835
        %v2814 = vpop.permute.xlu0 %2813
        %2816 = vset.pattern.permute.xlu0 1
        %2817 = vperm.xlu0 %2816, %v1838
        %v2818 = vpop.permute.xlu0 %2817
        %2820 = vset.pattern.permute.xlu0 1
        %2821 = vperm.xlu0 %2820, %v1843
        %v2822 = vpop.permute.xlu0 %2821
        %2824 = vset.pattern.permute.xlu0 1
        %2825 = vperm.xlu0 %2824, %v1846
        %v2826 = vpop.permute.xlu0 %2825
        %v2828 = vmul.f32 %v2156, %v2702
        %v2829 = vmul.f32 %v2157, %v2706
        %v2830 = vmul.f32 %v2158, %v2710
        %v2831 = vmul.f32 %v2159, %v2714
        %v2832 = vmul.f32 %v2160, %v2718
        %v2833 = vmul.f32 %v2161, %v2722
        %v2834 = vmul.f32 %v2162, %v2726
        %v2835 = vmul.f32 %v2163, %v2730
        %v2836 = vmul.f32 %v2164, %v2734
        %v2837 = vmul.f32 %v2165, %v2738
        %v2838 = vmul.f32 %v2166, %v2742
        %v2839 = vmul.f32 %v2167, %v2746
        %v2840 = vmul.f32 %v2168, %v2750
        %v2841 = vmul.f32 %v2169, %v2754
        %v2842 = vmul.f32 %v2170, %v2758
        %v2843 = vmul.f32 %v2171, %v2762
        %v2844 = vmul.f32 %v2156, %v2766
        %v2845 = vmul.f32 %v2157, %v2770
        %v2846 = vmul.f32 %v2158, %v2774
        %v2847 = vmul.f32 %v2159, %v2778
        %v2848 = vmul.f32 %v2160, %v2782
        %v2849 = vmul.f32 %v2161, %v2786
        %v2850 = vmul.f32 %v2162, %v2790
        %v2851 = vmul.f32 %v2163, %v2794
        %v2852 = vmul.f32 %v2164, %v2798
        %v2853 = vmul.f32 %v2165, %v2802
        %v2854 = vmul.f32 %v2166, %v2806
        %v2855 = vmul.f32 %v2167, %v2810
        %v2856 = vmul.f32 %v2168, %v2814
        %v2857 = vmul.f32 %v2169, %v2818
        %v2858 = vmul.f32 %v2170, %v2822
        %v2859 = vmul.f32 %v2171, %v2826
        %v2860 = vadd.f32 %v2668, %v2828
        %v2861 = vadd.f32 %v2669, %v2829
        %v2862 = vadd.f32 %v2670, %v2830
        %v2863 = vadd.f32 %v2671, %v2831
        %v2864 = vadd.f32 %v2672, %v2832
        %v2865 = vadd.f32 %v2673, %v2833
        %v2866 = vadd.f32 %v2674, %v2834
        %v2867 = vadd.f32 %v2675, %v2835
        %v2868 = vadd.f32 %v2676, %v2836
        %v2869 = vadd.f32 %v2677, %v2837
        %v2870 = vadd.f32 %v2678, %v2838
        %v2871 = vadd.f32 %v2679, %v2839
        %v2872 = vadd.f32 %v2680, %v2840
        %v2873 = vadd.f32 %v2681, %v2841
        %v2874 = vadd.f32 %v2682, %v2842
        %v2875 = vadd.f32 %v2683, %v2843
        %v2876 = vadd.f32 %v2684, %v2844
        %v2877 = vadd.f32 %v2685, %v2845
        %v2878 = vadd.f32 %v2686, %v2846
        %v2879 = vadd.f32 %v2687, %v2847
        %v2880 = vadd.f32 %v2688, %v2848
        %v2881 = vadd.f32 %v2689, %v2849
        %v2882 = vadd.f32 %v2690, %v2850
        %v2883 = vadd.f32 %v2691, %v2851
        %v2884 = vadd.f32 %v2692, %v2852
        %v2885 = vadd.f32 %v2693, %v2853
        %v2886 = vadd.f32 %v2694, %v2854
        %v2887 = vadd.f32 %v2695, %v2855
        %v2888 = vadd.f32 %v2696, %v2856
        %v2889 = vadd.f32 %v2697, %v2857
        %v2890 = vadd.f32 %v2698, %v2858
        %v2891 = vadd.f32 %v2699, %v2859
        %2892 = vset.pattern.permute.xlu0 2
        %2893 = vperm.xlu0 %2892, %v1723
        %v2894 = vpop.permute.xlu0 %2893
        %2896 = vset.pattern.permute.xlu0 2
        %2897 = vperm.xlu0 %2896, %v1726
        %v2898 = vpop.permute.xlu0 %2897
        %2900 = vset.pattern.permute.xlu0 2
        %2901 = vperm.xlu0 %2900, %v1731
        %v2902 = vpop.permute.xlu0 %2901
        %2904 = vset.pattern.permute.xlu0 2
        %2905 = vperm.xlu0 %2904, %v1734
        %v2906 = vpop.permute.xlu0 %2905
        %2908 = vset.pattern.permute.xlu0 2
        %2909 = vperm.xlu0 %2908, %v1739
        %v2910 = vpop.permute.xlu0 %2909
        %2912 = vset.pattern.permute.xlu0 2
        %2913 = vperm.xlu0 %2912, %v1742
        %v2914 = vpop.permute.xlu0 %2913
        %2916 = vset.pattern.permute.xlu0 2
        %2917 = vperm.xlu0 %2916, %v1747
        %v2918 = vpop.permute.xlu0 %2917
        %2920 = vset.pattern.permute.xlu0 2
        %2921 = vperm.xlu0 %2920, %v1750
        %v2922 = vpop.permute.xlu0 %2921
        %2924 = vset.pattern.permute.xlu0 2
        %2925 = vperm.xlu0 %2924, %v1755
        %v2926 = vpop.permute.xlu0 %2925
        %2928 = vset.pattern.permute.xlu0 2
        %2929 = vperm.xlu0 %2928, %v1758
        %v2930 = vpop.permute.xlu0 %2929
        %2932 = vset.pattern.permute.xlu0 2
        %2933 = vperm.xlu0 %2932, %v1763
        %v2934 = vpop.permute.xlu0 %2933
        %2936 = vset.pattern.permute.xlu0 2
        %2937 = vperm.xlu0 %2936, %v1766
        %v2938 = vpop.permute.xlu0 %2937
        %2940 = vset.pattern.permute.xlu0 2
        %2941 = vperm.xlu0 %2940, %v1771
        %v2942 = vpop.permute.xlu0 %2941
        %2944 = vset.pattern.permute.xlu0 2
        %2945 = vperm.xlu0 %2944, %v1774
        %v2946 = vpop.permute.xlu0 %2945
        %2948 = vset.pattern.permute.xlu0 2
        %2949 = vperm.xlu0 %2948, %v1779
        %v2950 = vpop.permute.xlu0 %2949
        %2952 = vset.pattern.permute.xlu0 2
        %2953 = vperm.xlu0 %2952, %v1782
        %v2954 = vpop.permute.xlu0 %2953
        %2956 = vset.pattern.permute.xlu0 2
        %2957 = vperm.xlu0 %2956, %v1787
        %v2958 = vpop.permute.xlu0 %2957
        %2960 = vset.pattern.permute.xlu0 2
        %2961 = vperm.xlu0 %2960, %v1790
        %v2962 = vpop.permute.xlu0 %2961
        %2964 = vset.pattern.permute.xlu0 2
        %2965 = vperm.xlu0 %2964, %v1795
        %v2966 = vpop.permute.xlu0 %2965
        %2968 = vset.pattern.permute.xlu0 2
        %2969 = vperm.xlu0 %2968, %v1798
        %v2970 = vpop.permute.xlu0 %2969
        %2972 = vset.pattern.permute.xlu0 2
        %2973 = vperm.xlu0 %2972, %v1803
        %v2974 = vpop.permute.xlu0 %2973
        %2976 = vset.pattern.permute.xlu0 2
        %2977 = vperm.xlu0 %2976, %v1806
        %v2978 = vpop.permute.xlu0 %2977
        %2980 = vset.pattern.permute.xlu0 2
        %2981 = vperm.xlu0 %2980, %v1811
        %v2982 = vpop.permute.xlu0 %2981
        %2984 = vset.pattern.permute.xlu0 2
        %2985 = vperm.xlu0 %2984, %v1814
        %v2986 = vpop.permute.xlu0 %2985
        %2988 = vset.pattern.permute.xlu0 2
        %2989 = vperm.xlu0 %2988, %v1819
        %v2990 = vpop.permute.xlu0 %2989
        %2992 = vset.pattern.permute.xlu0 2
        %2993 = vperm.xlu0 %2992, %v1822
        %v2994 = vpop.permute.xlu0 %2993
        %2996 = vset.pattern.permute.xlu0 2
        %2997 = vperm.xlu0 %2996, %v1827
        %v2998 = vpop.permute.xlu0 %2997
        %3000 = vset.pattern.permute.xlu0 2
        %3001 = vperm.xlu0 %3000, %v1830
        %v3002 = vpop.permute.xlu0 %3001
        %3004 = vset.pattern.permute.xlu0 2
        %3005 = vperm.xlu0 %3004, %v1835
        %v3006 = vpop.permute.xlu0 %3005
        %3008 = vset.pattern.permute.xlu0 2
        %3009 = vperm.xlu0 %3008, %v1838
        %v3010 = vpop.permute.xlu0 %3009
        %3012 = vset.pattern.permute.xlu0 2
        %3013 = vperm.xlu0 %3012, %v1843
        %v3014 = vpop.permute.xlu0 %3013
        %3016 = vset.pattern.permute.xlu0 2
        %3017 = vperm.xlu0 %3016, %v1846
        %v3018 = vpop.permute.xlu0 %3017
        %v3020 = vmul.f32 %v2204, %v2894
        %v3021 = vmul.f32 %v2205, %v2898
        %v3022 = vmul.f32 %v2206, %v2902
        %v3023 = vmul.f32 %v2207, %v2906
        %v3024 = vmul.f32 %v2208, %v2910
        %v3025 = vmul.f32 %v2209, %v2914
        %v3026 = vmul.f32 %v2210, %v2918
        %v3027 = vmul.f32 %v2211, %v2922
        %v3028 = vmul.f32 %v2212, %v2926
        %v3029 = vmul.f32 %v2213, %v2930
        %v3030 = vmul.f32 %v2214, %v2934
        %v3031 = vmul.f32 %v2215, %v2938
        %v3032 = vmul.f32 %v2216, %v2942
        %v3033 = vmul.f32 %v2217, %v2946
        %v3034 = vmul.f32 %v2218, %v2950
        %v3035 = vmul.f32 %v2219, %v2954
        %v3036 = vmul.f32 %v2204, %v2958
        %v3037 = vmul.f32 %v2205, %v2962
        %v3038 = vmul.f32 %v2206, %v2966
        %v3039 = vmul.f32 %v2207, %v2970
        %v3040 = vmul.f32 %v2208, %v2974
        %v3041 = vmul.f32 %v2209, %v2978
        %v3042 = vmul.f32 %v2210, %v2982
        %v3043 = vmul.f32 %v2211, %v2986
        %v3044 = vmul.f32 %v2212, %v2990
        %v3045 = vmul.f32 %v2213, %v2994
        %v3046 = vmul.f32 %v2214, %v2998
        %v3047 = vmul.f32 %v2215, %v3002
        %v3048 = vmul.f32 %v2216, %v3006
        %v3049 = vmul.f32 %v2217, %v3010
        %v3050 = vmul.f32 %v2218, %v3014
        %v3051 = vmul.f32 %v2219, %v3018
        %v3052 = vadd.f32 %v2860, %v3020
        %v3053 = vadd.f32 %v2861, %v3021
        %v3054 = vadd.f32 %v2862, %v3022
        %v3055 = vadd.f32 %v2863, %v3023
        %v3056 = vadd.f32 %v2864, %v3024
        %v3057 = vadd.f32 %v2865, %v3025
        %v3058 = vadd.f32 %v2866, %v3026
        %v3059 = vadd.f32 %v2867, %v3027
        %v3060 = vadd.f32 %v2868, %v3028
        %v3061 = vadd.f32 %v2869, %v3029
        %v3062 = vadd.f32 %v2870, %v3030
        %v3063 = vadd.f32 %v2871, %v3031
        %v3064 = vadd.f32 %v2872, %v3032
        %v3065 = vadd.f32 %v2873, %v3033
        %v3066 = vadd.f32 %v2874, %v3034
        %v3067 = vadd.f32 %v2875, %v3035
        %v3068 = vadd.f32 %v2876, %v3036
        %v3069 = vadd.f32 %v2877, %v3037
        %v3070 = vadd.f32 %v2878, %v3038
        %v3071 = vadd.f32 %v2879, %v3039
        %v3072 = vadd.f32 %v2880, %v3040
        %v3073 = vadd.f32 %v2881, %v3041
        %v3074 = vadd.f32 %v2882, %v3042
        %v3075 = vadd.f32 %v2883, %v3043
        %v3076 = vadd.f32 %v2884, %v3044
        %v3077 = vadd.f32 %v2885, %v3045
        %v3078 = vadd.f32 %v2886, %v3046
        %v3079 = vadd.f32 %v2887, %v3047
        %v3080 = vadd.f32 %v2888, %v3048
        %v3081 = vadd.f32 %v2889, %v3049
        %v3082 = vadd.f32 %v2890, %v3050
        %v3083 = vadd.f32 %v2891, %v3051
        %3084 = vset.pattern.permute.xlu0 3
        %3085 = vperm.xlu0 %3084, %v1723
        %v3086 = vpop.permute.xlu0 %3085
        %3088 = vset.pattern.permute.xlu0 3
        %3089 = vperm.xlu0 %3088, %v1726
        %v3090 = vpop.permute.xlu0 %3089
        %3092 = vset.pattern.permute.xlu0 3
        %3093 = vperm.xlu0 %3092, %v1731
        %v3094 = vpop.permute.xlu0 %3093
        %3096 = vset.pattern.permute.xlu0 3
        %3097 = vperm.xlu0 %3096, %v1734
        %v3098 = vpop.permute.xlu0 %3097
        %3100 = vset.pattern.permute.xlu0 3
        %3101 = vperm.xlu0 %3100, %v1739
        %v3102 = vpop.permute.xlu0 %3101
        %3104 = vset.pattern.permute.xlu0 3
        %3105 = vperm.xlu0 %3104, %v1742
        %v3106 = vpop.permute.xlu0 %3105
        %3108 = vset.pattern.permute.xlu0 3
        %3109 = vperm.xlu0 %3108, %v1747
        %v3110 = vpop.permute.xlu0 %3109
        %3112 = vset.pattern.permute.xlu0 3
        %3113 = vperm.xlu0 %3112, %v1750
        %v3114 = vpop.permute.xlu0 %3113
        %3116 = vset.pattern.permute.xlu0 3
        %3117 = vperm.xlu0 %3116, %v1755
        %v3118 = vpop.permute.xlu0 %3117
        %3120 = vset.pattern.permute.xlu0 3
        %3121 = vperm.xlu0 %3120, %v1758
        %v3122 = vpop.permute.xlu0 %3121
        %3124 = vset.pattern.permute.xlu0 3
        %3125 = vperm.xlu0 %3124, %v1763
        %v3126 = vpop.permute.xlu0 %3125
        %3128 = vset.pattern.permute.xlu0 3
        %3129 = vperm.xlu0 %3128, %v1766
        %v3130 = vpop.permute.xlu0 %3129
        %3132 = vset.pattern.permute.xlu0 3
        %3133 = vperm.xlu0 %3132, %v1771
        %v3134 = vpop.permute.xlu0 %3133
        %3136 = vset.pattern.permute.xlu0 3
        %3137 = vperm.xlu0 %3136, %v1774
        %v3138 = vpop.permute.xlu0 %3137
        %3140 = vset.pattern.permute.xlu0 3
        %3141 = vperm.xlu0 %3140, %v1779
        %v3142 = vpop.permute.xlu0 %3141
        %3144 = vset.pattern.permute.xlu0 3
        %3145 = vperm.xlu0 %3144, %v1782
        %v3146 = vpop.permute.xlu0 %3145
        %3148 = vset.pattern.permute.xlu0 3
        %3149 = vperm.xlu0 %3148, %v1787
        %v3150 = vpop.permute.xlu0 %3149
        %3152 = vset.pattern.permute.xlu0 3
        %3153 = vperm.xlu0 %3152, %v1790
        %v3154 = vpop.permute.xlu0 %3153
        %3156 = vset.pattern.permute.xlu0 3
        %3157 = vperm.xlu0 %3156, %v1795
        %v3158 = vpop.permute.xlu0 %3157
        %3160 = vset.pattern.permute.xlu0 3
        %3161 = vperm.xlu0 %3160, %v1798
        %v3162 = vpop.permute.xlu0 %3161
        %3164 = vset.pattern.permute.xlu0 3
        %3165 = vperm.xlu0 %3164, %v1803
        %v3166 = vpop.permute.xlu0 %3165
        %3168 = vset.pattern.permute.xlu0 3
        %3169 = vperm.xlu0 %3168, %v1806
        %v3170 = vpop.permute.xlu0 %3169
        %3172 = vset.pattern.permute.xlu0 3
        %3173 = vperm.xlu0 %3172, %v1811
        %v3174 = vpop.permute.xlu0 %3173
        %3176 = vset.pattern.permute.xlu0 3
        %3177 = vperm.xlu0 %3176, %v1814
        %v3178 = vpop.permute.xlu0 %3177
        %3180 = vset.pattern.permute.xlu0 3
        %3181 = vperm.xlu0 %3180, %v1819
        %v3182 = vpop.permute.xlu0 %3181
        %3184 = vset.pattern.permute.xlu0 3
        %3185 = vperm.xlu0 %3184, %v1822
        %v3186 = vpop.permute.xlu0 %3185
        %3188 = vset.pattern.permute.xlu0 3
        %3189 = vperm.xlu0 %3188, %v1827
        %v3190 = vpop.permute.xlu0 %3189
        %3192 = vset.pattern.permute.xlu0 3
        %3193 = vperm.xlu0 %3192, %v1830
        %v3194 = vpop.permute.xlu0 %3193
        %3196 = vset.pattern.permute.xlu0 3
        %3197 = vperm.xlu0 %3196, %v1835
        %v3198 = vpop.permute.xlu0 %3197
        %3200 = vset.pattern.permute.xlu0 3
        %3201 = vperm.xlu0 %3200, %v1838
        %v3202 = vpop.permute.xlu0 %3201
        %3204 = vset.pattern.permute.xlu0 3
        %3205 = vperm.xlu0 %3204, %v1843
        %v3206 = vpop.permute.xlu0 %3205
        %3208 = vset.pattern.permute.xlu0 3
        %3209 = vperm.xlu0 %3208, %v1846
        %v3210 = vpop.permute.xlu0 %3209
        %v3212 = vmul.f32 %v2252, %v3086
        %v3213 = vmul.f32 %v2253, %v3090
        %v3214 = vmul.f32 %v2254, %v3094
        %v3215 = vmul.f32 %v2255, %v3098
        %v3216 = vmul.f32 %v2256, %v3102
        %v3217 = vmul.f32 %v2257, %v3106
        %v3218 = vmul.f32 %v2258, %v3110
        %v3219 = vmul.f32 %v2259, %v3114
        %v3220 = vmul.f32 %v2260, %v3118
        %v3221 = vmul.f32 %v2261, %v3122
        %v3222 = vmul.f32 %v2262, %v3126
        %v3223 = vmul.f32 %v2263, %v3130
        %v3224 = vmul.f32 %v2264, %v3134
        %v3225 = vmul.f32 %v2265, %v3138
        %v3226 = vmul.f32 %v2266, %v3142
        %v3227 = vmul.f32 %v2267, %v3146
        %v3228 = vmul.f32 %v2252, %v3150
        %v3229 = vmul.f32 %v2253, %v3154
        %v3230 = vmul.f32 %v2254, %v3158
        %v3231 = vmul.f32 %v2255, %v3162
        %v3232 = vmul.f32 %v2256, %v3166
        %v3233 = vmul.f32 %v2257, %v3170
        %v3234 = vmul.f32 %v2258, %v3174
        %v3235 = vmul.f32 %v2259, %v3178
        %v3236 = vmul.f32 %v2260, %v3182
        %v3237 = vmul.f32 %v2261, %v3186
        %v3238 = vmul.f32 %v2262, %v3190
        %v3239 = vmul.f32 %v2263, %v3194
        %v3240 = vmul.f32 %v2264, %v3198
        %v3241 = vmul.f32 %v2265, %v3202
        %v3242 = vmul.f32 %v2266, %v3206
        %v3243 = vmul.f32 %v2267, %v3210
        %v3244 = vadd.f32 %v3052, %v3212
        %v3245 = vadd.f32 %v3053, %v3213
        %v3246 = vadd.f32 %v3054, %v3214
        %v3247 = vadd.f32 %v3055, %v3215
        %v3248 = vadd.f32 %v3056, %v3216
        %v3249 = vadd.f32 %v3057, %v3217
        %v3250 = vadd.f32 %v3058, %v3218
        %v3251 = vadd.f32 %v3059, %v3219
        %v3252 = vadd.f32 %v3060, %v3220
        %v3253 = vadd.f32 %v3061, %v3221
        %v3254 = vadd.f32 %v3062, %v3222
        %v3255 = vadd.f32 %v3063, %v3223
        %v3256 = vadd.f32 %v3064, %v3224
        %v3257 = vadd.f32 %v3065, %v3225
        %v3258 = vadd.f32 %v3066, %v3226
        %v3259 = vadd.f32 %v3067, %v3227
        %v3260 = vadd.f32 %v3068, %v3228
        %v3261 = vadd.f32 %v3069, %v3229
        %v3262 = vadd.f32 %v3070, %v3230
        %v3263 = vadd.f32 %v3071, %v3231
        %v3264 = vadd.f32 %v3072, %v3232
        %v3265 = vadd.f32 %v3073, %v3233
        %v3266 = vadd.f32 %v3074, %v3234
        %v3267 = vadd.f32 %v3075, %v3235
        %v3268 = vadd.f32 %v3076, %v3236
        %v3269 = vadd.f32 %v3077, %v3237
        %v3270 = vadd.f32 %v3078, %v3238
        %v3271 = vadd.f32 %v3079, %v3239
        %v3272 = vadd.f32 %v3080, %v3240
        %v3273 = vadd.f32 %v3081, %v3241
        %v3274 = vadd.f32 %v3082, %v3242
        %v3275 = vadd.f32 %v3083, %v3243
        %3276 = vset.pattern.permute.xlu0 4
        %3277 = vperm.xlu0 %3276, %v1723
        %v3278 = vpop.permute.xlu0 %3277
        %3280 = vset.pattern.permute.xlu0 4
        %3281 = vperm.xlu0 %3280, %v1726
        %v3282 = vpop.permute.xlu0 %3281
        %3284 = vset.pattern.permute.xlu0 4
        %3285 = vperm.xlu0 %3284, %v1731
        %v3286 = vpop.permute.xlu0 %3285
        %3288 = vset.pattern.permute.xlu0 4
        %3289 = vperm.xlu0 %3288, %v1734
        %v3290 = vpop.permute.xlu0 %3289
        %3292 = vset.pattern.permute.xlu0 4
        %3293 = vperm.xlu0 %3292, %v1739
        %v3294 = vpop.permute.xlu0 %3293
        %3296 = vset.pattern.permute.xlu0 4
        %3297 = vperm.xlu0 %3296, %v1742
        %v3298 = vpop.permute.xlu0 %3297
        %3300 = vset.pattern.permute.xlu0 4
        %3301 = vperm.xlu0 %3300, %v1747
        %v3302 = vpop.permute.xlu0 %3301
        %3304 = vset.pattern.permute.xlu0 4
        %3305 = vperm.xlu0 %3304, %v1750
        %v3306 = vpop.permute.xlu0 %3305
        %3308 = vset.pattern.permute.xlu0 4
        %3309 = vperm.xlu0 %3308, %v1755
        %v3310 = vpop.permute.xlu0 %3309
        %3312 = vset.pattern.permute.xlu0 4
        %3313 = vperm.xlu0 %3312, %v1758
        %v3314 = vpop.permute.xlu0 %3313
        %3316 = vset.pattern.permute.xlu0 4
        %3317 = vperm.xlu0 %3316, %v1763
        %v3318 = vpop.permute.xlu0 %3317
        %3320 = vset.pattern.permute.xlu0 4
        %3321 = vperm.xlu0 %3320, %v1766
        %v3322 = vpop.permute.xlu0 %3321
        %3324 = vset.pattern.permute.xlu0 4
        %3325 = vperm.xlu0 %3324, %v1771
        %v3326 = vpop.permute.xlu0 %3325
        %3328 = vset.pattern.permute.xlu0 4
        %3329 = vperm.xlu0 %3328, %v1774
        %v3330 = vpop.permute.xlu0 %3329
        %3332 = vset.pattern.permute.xlu0 4
        %3333 = vperm.xlu0 %3332, %v1779
        %v3334 = vpop.permute.xlu0 %3333
        %3336 = vset.pattern.permute.xlu0 4
        %3337 = vperm.xlu0 %3336, %v1782
        %v3338 = vpop.permute.xlu0 %3337
        %3340 = vset.pattern.permute.xlu0 4
        %3341 = vperm.xlu0 %3340, %v1787
        %v3342 = vpop.permute.xlu0 %3341
        %3344 = vset.pattern.permute.xlu0 4
        %3345 = vperm.xlu0 %3344, %v1790
        %v3346 = vpop.permute.xlu0 %3345
        %3348 = vset.pattern.permute.xlu0 4
        %3349 = vperm.xlu0 %3348, %v1795
        %v3350 = vpop.permute.xlu0 %3349
        %3352 = vset.pattern.permute.xlu0 4
        %3353 = vperm.xlu0 %3352, %v1798
        %v3354 = vpop.permute.xlu0 %3353
        %3356 = vset.pattern.permute.xlu0 4
        %3357 = vperm.xlu0 %3356, %v1803
        %v3358 = vpop.permute.xlu0 %3357
        %3360 = vset.pattern.permute.xlu0 4
        %3361 = vperm.xlu0 %3360, %v1806
        %v3362 = vpop.permute.xlu0 %3361
        %3364 = vset.pattern.permute.xlu0 4
        %3365 = vperm.xlu0 %3364, %v1811
        %v3366 = vpop.permute.xlu0 %3365
        %3368 = vset.pattern.permute.xlu0 4
        %3369 = vperm.xlu0 %3368, %v1814
        %v3370 = vpop.permute.xlu0 %3369
        %3372 = vset.pattern.permute.xlu0 4
        %3373 = vperm.xlu0 %3372, %v1819
        %v3374 = vpop.permute.xlu0 %3373
        %3376 = vset.pattern.permute.xlu0 4
        %3377 = vperm.xlu0 %3376, %v1822
        %v3378 = vpop.permute.xlu0 %3377
        %3380 = vset.pattern.permute.xlu0 4
        %3381 = vperm.xlu0 %3380, %v1827
        %v3382 = vpop.permute.xlu0 %3381
        %3384 = vset.pattern.permute.xlu0 4
        %3385 = vperm.xlu0 %3384, %v1830
        %v3386 = vpop.permute.xlu0 %3385
        %3388 = vset.pattern.permute.xlu0 4
        %3389 = vperm.xlu0 %3388, %v1835
        %v3390 = vpop.permute.xlu0 %3389
        %3392 = vset.pattern.permute.xlu0 4
        %3393 = vperm.xlu0 %3392, %v1838
        %v3394 = vpop.permute.xlu0 %3393
        %3396 = vset.pattern.permute.xlu0 4
        %3397 = vperm.xlu0 %3396, %v1843
        %v3398 = vpop.permute.xlu0 %3397
        %3400 = vset.pattern.permute.xlu0 4
        %3401 = vperm.xlu0 %3400, %v1846
        %v3402 = vpop.permute.xlu0 %3401
        %v3404 = vmul.f32 %v2300, %v3278
        %v3405 = vmul.f32 %v2301, %v3282
        %v3406 = vmul.f32 %v2302, %v3286
        %v3407 = vmul.f32 %v2303, %v3290
        %v3408 = vmul.f32 %v2304, %v3294
        %v3409 = vmul.f32 %v2305, %v3298
        %v3410 = vmul.f32 %v2306, %v3302
        %v3411 = vmul.f32 %v2307, %v3306
        %v3412 = vmul.f32 %v2308, %v3310
        %v3413 = vmul.f32 %v2309, %v3314
        %v3414 = vmul.f32 %v2310, %v3318
        %v3415 = vmul.f32 %v2311, %v3322
        %v3416 = vmul.f32 %v2312, %v3326
        %v3417 = vmul.f32 %v2313, %v3330
        %v3418 = vmul.f32 %v2314, %v3334
        %v3419 = vmul.f32 %v2315, %v3338
        %v3420 = vmul.f32 %v2300, %v3342
        %v3421 = vmul.f32 %v2301, %v3346
        %v3422 = vmul.f32 %v2302, %v3350
        %v3423 = vmul.f32 %v2303, %v3354
        %v3424 = vmul.f32 %v2304, %v3358
        %v3425 = vmul.f32 %v2305, %v3362
        %v3426 = vmul.f32 %v2306, %v3366
        %v3427 = vmul.f32 %v2307, %v3370
        %v3428 = vmul.f32 %v2308, %v3374
        %v3429 = vmul.f32 %v2309, %v3378
        %v3430 = vmul.f32 %v2310, %v3382
        %v3431 = vmul.f32 %v2311, %v3386
        %v3432 = vmul.f32 %v2312, %v3390
        %v3433 = vmul.f32 %v2313, %v3394
        %v3434 = vmul.f32 %v2314, %v3398
        %v3435 = vmul.f32 %v2315, %v3402
        %v3436 = vadd.f32 %v3244, %v3404
        %v3437 = vadd.f32 %v3245, %v3405
        %v3438 = vadd.f32 %v3246, %v3406
        %v3439 = vadd.f32 %v3247, %v3407
        %v3440 = vadd.f32 %v3248, %v3408
        %v3441 = vadd.f32 %v3249, %v3409
        %v3442 = vadd.f32 %v3250, %v3410
        %v3443 = vadd.f32 %v3251, %v3411
        %v3444 = vadd.f32 %v3252, %v3412
        %v3445 = vadd.f32 %v3253, %v3413
        %v3446 = vadd.f32 %v3254, %v3414
        %v3447 = vadd.f32 %v3255, %v3415
        %v3448 = vadd.f32 %v3256, %v3416
        %v3449 = vadd.f32 %v3257, %v3417
        %v3450 = vadd.f32 %v3258, %v3418
        %v3451 = vadd.f32 %v3259, %v3419
        %v3452 = vadd.f32 %v3260, %v3420
        %v3453 = vadd.f32 %v3261, %v3421
        %v3454 = vadd.f32 %v3262, %v3422
        %v3455 = vadd.f32 %v3263, %v3423
        %v3456 = vadd.f32 %v3264, %v3424
        %v3457 = vadd.f32 %v3265, %v3425
        %v3458 = vadd.f32 %v3266, %v3426
        %v3459 = vadd.f32 %v3267, %v3427
        %v3460 = vadd.f32 %v3268, %v3428
        %v3461 = vadd.f32 %v3269, %v3429
        %v3462 = vadd.f32 %v3270, %v3430
        %v3463 = vadd.f32 %v3271, %v3431
        %v3464 = vadd.f32 %v3272, %v3432
        %v3465 = vadd.f32 %v3273, %v3433
        %v3466 = vadd.f32 %v3274, %v3434
        %v3467 = vadd.f32 %v3275, %v3435
        %3468 = vset.pattern.permute.xlu0 5
        %3469 = vperm.xlu0 %3468, %v1723
        %v3470 = vpop.permute.xlu0 %3469
        %3472 = vset.pattern.permute.xlu0 5
        %3473 = vperm.xlu0 %3472, %v1726
        %v3474 = vpop.permute.xlu0 %3473
        %3476 = vset.pattern.permute.xlu0 5
        %3477 = vperm.xlu0 %3476, %v1731
        %v3478 = vpop.permute.xlu0 %3477
        %3480 = vset.pattern.permute.xlu0 5
        %3481 = vperm.xlu0 %3480, %v1734
        %v3482 = vpop.permute.xlu0 %3481
        %3484 = vset.pattern.permute.xlu0 5
        %3485 = vperm.xlu0 %3484, %v1739
        %v3486 = vpop.permute.xlu0 %3485
        %3488 = vset.pattern.permute.xlu0 5
        %3489 = vperm.xlu0 %3488, %v1742
        %v3490 = vpop.permute.xlu0 %3489
        %3492 = vset.pattern.permute.xlu0 5
        %3493 = vperm.xlu0 %3492, %v1747
        %v3494 = vpop.permute.xlu0 %3493
        %3496 = vset.pattern.permute.xlu0 5
        %3497 = vperm.xlu0 %3496, %v1750
        %v3498 = vpop.permute.xlu0 %3497
        %3500 = vset.pattern.permute.xlu0 5
        %3501 = vperm.xlu0 %3500, %v1755
        %v3502 = vpop.permute.xlu0 %3501
        %3504 = vset.pattern.permute.xlu0 5
        %3505 = vperm.xlu0 %3504, %v1758
        %v3506 = vpop.permute.xlu0 %3505
        %3508 = vset.pattern.permute.xlu0 5
        %3509 = vperm.xlu0 %3508, %v1763
        %v3510 = vpop.permute.xlu0 %3509
        %3512 = vset.pattern.permute.xlu0 5
        %3513 = vperm.xlu0 %3512, %v1766
        %v3514 = vpop.permute.xlu0 %3513
        %3516 = vset.pattern.permute.xlu0 5
        %3517 = vperm.xlu0 %3516, %v1771
        %v3518 = vpop.permute.xlu0 %3517
        %3520 = vset.pattern.permute.xlu0 5
        %3521 = vperm.xlu0 %3520, %v1774
        %v3522 = vpop.permute.xlu0 %3521
        %3524 = vset.pattern.permute.xlu0 5
        %3525 = vperm.xlu0 %3524, %v1779
        %v3526 = vpop.permute.xlu0 %3525
        %3528 = vset.pattern.permute.xlu0 5
        %3529 = vperm.xlu0 %3528, %v1782
        %v3530 = vpop.permute.xlu0 %3529
        %3532 = vset.pattern.permute.xlu0 5
        %3533 = vperm.xlu0 %3532, %v1787
        %v3534 = vpop.permute.xlu0 %3533
        %3536 = vset.pattern.permute.xlu0 5
        %3537 = vperm.xlu0 %3536, %v1790
        %v3538 = vpop.permute.xlu0 %3537
        %3540 = vset.pattern.permute.xlu0 5
        %3541 = vperm.xlu0 %3540, %v1795
        %v3542 = vpop.permute.xlu0 %3541
        %3544 = vset.pattern.permute.xlu0 5
        %3545 = vperm.xlu0 %3544, %v1798
        %v3546 = vpop.permute.xlu0 %3545
        %3548 = vset.pattern.permute.xlu0 5
        %3549 = vperm.xlu0 %3548, %v1803
        %v3550 = vpop.permute.xlu0 %3549
        %3552 = vset.pattern.permute.xlu0 5
        %3553 = vperm.xlu0 %3552, %v1806
        %v3554 = vpop.permute.xlu0 %3553
        %3556 = vset.pattern.permute.xlu0 5
        %3557 = vperm.xlu0 %3556, %v1811
        %v3558 = vpop.permute.xlu0 %3557
        %3560 = vset.pattern.permute.xlu0 5
        %3561 = vperm.xlu0 %3560, %v1814
        %v3562 = vpop.permute.xlu0 %3561
        %3564 = vset.pattern.permute.xlu0 5
        %3565 = vperm.xlu0 %3564, %v1819
        %v3566 = vpop.permute.xlu0 %3565
        %3568 = vset.pattern.permute.xlu0 5
        %3569 = vperm.xlu0 %3568, %v1822
        %v3570 = vpop.permute.xlu0 %3569
        %3572 = vset.pattern.permute.xlu0 5
        %3573 = vperm.xlu0 %3572, %v1827
        %v3574 = vpop.permute.xlu0 %3573
        %3576 = vset.pattern.permute.xlu0 5
        %3577 = vperm.xlu0 %3576, %v1830
        %v3578 = vpop.permute.xlu0 %3577
        %3580 = vset.pattern.permute.xlu0 5
        %3581 = vperm.xlu0 %3580, %v1835
        %v3582 = vpop.permute.xlu0 %3581
        %3584 = vset.pattern.permute.xlu0 5
        %3585 = vperm.xlu0 %3584, %v1838
        %v3586 = vpop.permute.xlu0 %3585
        %3588 = vset.pattern.permute.xlu0 5
        %3589 = vperm.xlu0 %3588, %v1843
        %v3590 = vpop.permute.xlu0 %3589
        %3592 = vset.pattern.permute.xlu0 5
        %3593 = vperm.xlu0 %3592, %v1846
        %v3594 = vpop.permute.xlu0 %3593
        %v3596 = vmul.f32 %v2348, %v3470
        %v3597 = vmul.f32 %v2349, %v3474
        %v3598 = vmul.f32 %v2350, %v3478
        %v3599 = vmul.f32 %v2351, %v3482
        %v3600 = vmul.f32 %v2352, %v3486
        %v3601 = vmul.f32 %v2353, %v3490
        %v3602 = vmul.f32 %v2354, %v3494
        %v3603 = vmul.f32 %v2355, %v3498
        %v3604 = vmul.f32 %v2356, %v3502
        %v3605 = vmul.f32 %v2357, %v3506
        %v3606 = vmul.f32 %v2358, %v3510
        %v3607 = vmul.f32 %v2359, %v3514
        %v3608 = vmul.f32 %v2360, %v3518
        %v3609 = vmul.f32 %v2361, %v3522
        %v3610 = vmul.f32 %v2362, %v3526
        %v3611 = vmul.f32 %v2363, %v3530
        %v3612 = vmul.f32 %v2348, %v3534
        %v3613 = vmul.f32 %v2349, %v3538
        %v3614 = vmul.f32 %v2350, %v3542
        %v3615 = vmul.f32 %v2351, %v3546
        %v3616 = vmul.f32 %v2352, %v3550
        %v3617 = vmul.f32 %v2353, %v3554
        %v3618 = vmul.f32 %v2354, %v3558
        %v3619 = vmul.f32 %v2355, %v3562
        %v3620 = vmul.f32 %v2356, %v3566
        %v3621 = vmul.f32 %v2357, %v3570
        %v3622 = vmul.f32 %v2358, %v3574
        %v3623 = vmul.f32 %v2359, %v3578
        %v3624 = vmul.f32 %v2360, %v3582
        %v3625 = vmul.f32 %v2361, %v3586
        %v3626 = vmul.f32 %v2362, %v3590
        %v3627 = vmul.f32 %v2363, %v3594
        %v3628 = vadd.f32 %v3436, %v3596
        %v3629 = vadd.f32 %v3437, %v3597
        %v3630 = vadd.f32 %v3438, %v3598
        %v3631 = vadd.f32 %v3439, %v3599
        %v3632 = vadd.f32 %v3440, %v3600
        %v3633 = vadd.f32 %v3441, %v3601
        %v3634 = vadd.f32 %v3442, %v3602
        %v3635 = vadd.f32 %v3443, %v3603
        %v3636 = vadd.f32 %v3444, %v3604
        %v3637 = vadd.f32 %v3445, %v3605
        %v3638 = vadd.f32 %v3446, %v3606
        %v3639 = vadd.f32 %v3447, %v3607
        %v3640 = vadd.f32 %v3448, %v3608
        %v3641 = vadd.f32 %v3449, %v3609
        %v3642 = vadd.f32 %v3450, %v3610
        %v3643 = vadd.f32 %v3451, %v3611
        %v3644 = vadd.f32 %v3452, %v3612
        %v3645 = vadd.f32 %v3453, %v3613
        %v3646 = vadd.f32 %v3454, %v3614
        %v3647 = vadd.f32 %v3455, %v3615
        %v3648 = vadd.f32 %v3456, %v3616
        %v3649 = vadd.f32 %v3457, %v3617
        %v3650 = vadd.f32 %v3458, %v3618
        %v3651 = vadd.f32 %v3459, %v3619
        %v3652 = vadd.f32 %v3460, %v3620
        %v3653 = vadd.f32 %v3461, %v3621
        %v3654 = vadd.f32 %v3462, %v3622
        %v3655 = vadd.f32 %v3463, %v3623
        %v3656 = vadd.f32 %v3464, %v3624
        %v3657 = vadd.f32 %v3465, %v3625
        %v3658 = vadd.f32 %v3466, %v3626
        %v3659 = vadd.f32 %v3467, %v3627
        %3660 = vset.pattern.permute.xlu0 6
        %3661 = vperm.xlu0 %3660, %v1723
        %v3662 = vpop.permute.xlu0 %3661
        %3664 = vset.pattern.permute.xlu0 6
        %3665 = vperm.xlu0 %3664, %v1726
        %v3666 = vpop.permute.xlu0 %3665
        %3668 = vset.pattern.permute.xlu0 6
        %3669 = vperm.xlu0 %3668, %v1731
        %v3670 = vpop.permute.xlu0 %3669
        %3672 = vset.pattern.permute.xlu0 6
        %3673 = vperm.xlu0 %3672, %v1734
        %v3674 = vpop.permute.xlu0 %3673
        %3676 = vset.pattern.permute.xlu0 6
        %3677 = vperm.xlu0 %3676, %v1739
        %v3678 = vpop.permute.xlu0 %3677
        %3680 = vset.pattern.permute.xlu0 6
        %3681 = vperm.xlu0 %3680, %v1742
        %v3682 = vpop.permute.xlu0 %3681
        %3684 = vset.pattern.permute.xlu0 6
        %3685 = vperm.xlu0 %3684, %v1747
        %v3686 = vpop.permute.xlu0 %3685
        %3688 = vset.pattern.permute.xlu0 6
        %3689 = vperm.xlu0 %3688, %v1750
        %v3690 = vpop.permute.xlu0 %3689
        %3692 = vset.pattern.permute.xlu0 6
        %3693 = vperm.xlu0 %3692, %v1755
        %v3694 = vpop.permute.xlu0 %3693
        %3696 = vset.pattern.permute.xlu0 6
        %3697 = vperm.xlu0 %3696, %v1758
        %v3698 = vpop.permute.xlu0 %3697
        %3700 = vset.pattern.permute.xlu0 6
        %3701 = vperm.xlu0 %3700, %v1763
        %v3702 = vpop.permute.xlu0 %3701
        %3704 = vset.pattern.permute.xlu0 6
        %3705 = vperm.xlu0 %3704, %v1766
        %v3706 = vpop.permute.xlu0 %3705
        %3708 = vset.pattern.permute.xlu0 6
        %3709 = vperm.xlu0 %3708, %v1771
        %v3710 = vpop.permute.xlu0 %3709
        %3712 = vset.pattern.permute.xlu0 6
        %3713 = vperm.xlu0 %3712, %v1774
        %v3714 = vpop.permute.xlu0 %3713
        %3716 = vset.pattern.permute.xlu0 6
        %3717 = vperm.xlu0 %3716, %v1779
        %v3718 = vpop.permute.xlu0 %3717
        %3720 = vset.pattern.permute.xlu0 6
        %3721 = vperm.xlu0 %3720, %v1782
        %v3722 = vpop.permute.xlu0 %3721
        %3724 = vset.pattern.permute.xlu0 6
        %3725 = vperm.xlu0 %3724, %v1787
        %v3726 = vpop.permute.xlu0 %3725
        %3728 = vset.pattern.permute.xlu0 6
        %3729 = vperm.xlu0 %3728, %v1790
        %v3730 = vpop.permute.xlu0 %3729
        %3732 = vset.pattern.permute.xlu0 6
        %3733 = vperm.xlu0 %3732, %v1795
        %v3734 = vpop.permute.xlu0 %3733
        %3736 = vset.pattern.permute.xlu0 6
        %3737 = vperm.xlu0 %3736, %v1798
        %v3738 = vpop.permute.xlu0 %3737
        %3740 = vset.pattern.permute.xlu0 6
        %3741 = vperm.xlu0 %3740, %v1803
        %v3742 = vpop.permute.xlu0 %3741
        %3744 = vset.pattern.permute.xlu0 6
        %3745 = vperm.xlu0 %3744, %v1806
        %v3746 = vpop.permute.xlu0 %3745
        %3748 = vset.pattern.permute.xlu0 6
        %3749 = vperm.xlu0 %3748, %v1811
        %v3750 = vpop.permute.xlu0 %3749
        %3752 = vset.pattern.permute.xlu0 6
        %3753 = vperm.xlu0 %3752, %v1814
        %v3754 = vpop.permute.xlu0 %3753
        %3756 = vset.pattern.permute.xlu0 6
        %3757 = vperm.xlu0 %3756, %v1819
        %v3758 = vpop.permute.xlu0 %3757
        %3760 = vset.pattern.permute.xlu0 6
        %3761 = vperm.xlu0 %3760, %v1822
        %v3762 = vpop.permute.xlu0 %3761
        %3764 = vset.pattern.permute.xlu0 6
        %3765 = vperm.xlu0 %3764, %v1827
        %v3766 = vpop.permute.xlu0 %3765
        %3768 = vset.pattern.permute.xlu0 6
        %3769 = vperm.xlu0 %3768, %v1830
        %v3770 = vpop.permute.xlu0 %3769
        %3772 = vset.pattern.permute.xlu0 6
        %3773 = vperm.xlu0 %3772, %v1835
        %v3774 = vpop.permute.xlu0 %3773
        %3776 = vset.pattern.permute.xlu0 6
        %3777 = vperm.xlu0 %3776, %v1838
        %v3778 = vpop.permute.xlu0 %3777
        %3780 = vset.pattern.permute.xlu0 6
        %3781 = vperm.xlu0 %3780, %v1843
        %v3782 = vpop.permute.xlu0 %3781
        %3784 = vset.pattern.permute.xlu0 6
        %3785 = vperm.xlu0 %3784, %v1846
        %v3786 = vpop.permute.xlu0 %3785
        %v3788 = vmul.f32 %v2396, %v3662
        %v3789 = vmul.f32 %v2397, %v3666
        %v3790 = vmul.f32 %v2398, %v3670
        %v3791 = vmul.f32 %v2399, %v3674
        %v3792 = vmul.f32 %v2400, %v3678
        %v3793 = vmul.f32 %v2401, %v3682
        %v3794 = vmul.f32 %v2402, %v3686
        %v3795 = vmul.f32 %v2403, %v3690
        %v3796 = vmul.f32 %v2404, %v3694
        %v3797 = vmul.f32 %v2405, %v3698
        %v3798 = vmul.f32 %v2406, %v3702
        %v3799 = vmul.f32 %v2407, %v3706
        %v3800 = vmul.f32 %v2408, %v3710
        %v3801 = vmul.f32 %v2409, %v3714
        %v3802 = vmul.f32 %v2410, %v3718
        %v3803 = vmul.f32 %v2411, %v3722
        %v3804 = vmul.f32 %v2396, %v3726
        %v3805 = vmul.f32 %v2397, %v3730
        %v3806 = vmul.f32 %v2398, %v3734
        %v3807 = vmul.f32 %v2399, %v3738
        %v3808 = vmul.f32 %v2400, %v3742
        %v3809 = vmul.f32 %v2401, %v3746
        %v3810 = vmul.f32 %v2402, %v3750
        %v3811 = vmul.f32 %v2403, %v3754
        %v3812 = vmul.f32 %v2404, %v3758
        %v3813 = vmul.f32 %v2405, %v3762
        %v3814 = vmul.f32 %v2406, %v3766
        %v3815 = vmul.f32 %v2407, %v3770
        %v3816 = vmul.f32 %v2408, %v3774
        %v3817 = vmul.f32 %v2409, %v3778
        %v3818 = vmul.f32 %v2410, %v3782
        %v3819 = vmul.f32 %v2411, %v3786
        %v3820 = vadd.f32 %v3628, %v3788
        %v3821 = vadd.f32 %v3629, %v3789
        %v3822 = vadd.f32 %v3630, %v3790
        %v3823 = vadd.f32 %v3631, %v3791
        %v3824 = vadd.f32 %v3632, %v3792
        %v3825 = vadd.f32 %v3633, %v3793
        %v3826 = vadd.f32 %v3634, %v3794
        %v3827 = vadd.f32 %v3635, %v3795
        %v3828 = vadd.f32 %v3636, %v3796
        %v3829 = vadd.f32 %v3637, %v3797
        %v3830 = vadd.f32 %v3638, %v3798
        %v3831 = vadd.f32 %v3639, %v3799
        %v3832 = vadd.f32 %v3640, %v3800
        %v3833 = vadd.f32 %v3641, %v3801
        %v3834 = vadd.f32 %v3642, %v3802
        %v3835 = vadd.f32 %v3643, %v3803
        %v3836 = vadd.f32 %v3644, %v3804
        %v3837 = vadd.f32 %v3645, %v3805
        %v3838 = vadd.f32 %v3646, %v3806
        %v3839 = vadd.f32 %v3647, %v3807
        %v3840 = vadd.f32 %v3648, %v3808
        %v3841 = vadd.f32 %v3649, %v3809
        %v3842 = vadd.f32 %v3650, %v3810
        %v3843 = vadd.f32 %v3651, %v3811
        %v3844 = vadd.f32 %v3652, %v3812
        %v3845 = vadd.f32 %v3653, %v3813
        %v3846 = vadd.f32 %v3654, %v3814
        %v3847 = vadd.f32 %v3655, %v3815
        %v3848 = vadd.f32 %v3656, %v3816
        %v3849 = vadd.f32 %v3657, %v3817
        %v3850 = vadd.f32 %v3658, %v3818
        %v3851 = vadd.f32 %v3659, %v3819
        %3852 = vset.pattern.permute.xlu0 7
        %3853 = vperm.xlu0 %3852, %v1723
        %v3854 = vpop.permute.xlu0 %3853
        %3856 = vset.pattern.permute.xlu0 7
        %3857 = vperm.xlu0 %3856, %v1726
        %v3858 = vpop.permute.xlu0 %3857
        %3860 = vset.pattern.permute.xlu0 7
        %3861 = vperm.xlu0 %3860, %v1731
        %v3862 = vpop.permute.xlu0 %3861
        %3864 = vset.pattern.permute.xlu0 7
        %3865 = vperm.xlu0 %3864, %v1734
        %v3866 = vpop.permute.xlu0 %3865
        %3868 = vset.pattern.permute.xlu0 7
        %3869 = vperm.xlu0 %3868, %v1739
        %v3870 = vpop.permute.xlu0 %3869
        %3872 = vset.pattern.permute.xlu0 7
        %3873 = vperm.xlu0 %3872, %v1742
        %v3874 = vpop.permute.xlu0 %3873
        %3876 = vset.pattern.permute.xlu0 7
        %3877 = vperm.xlu0 %3876, %v1747
        %v3878 = vpop.permute.xlu0 %3877
        %3880 = vset.pattern.permute.xlu0 7
        %3881 = vperm.xlu0 %3880, %v1750
        %v3882 = vpop.permute.xlu0 %3881
        %3884 = vset.pattern.permute.xlu0 7
        %3885 = vperm.xlu0 %3884, %v1755
        %v3886 = vpop.permute.xlu0 %3885
        %3888 = vset.pattern.permute.xlu0 7
        %3889 = vperm.xlu0 %3888, %v1758
        %v3890 = vpop.permute.xlu0 %3889
        %3892 = vset.pattern.permute.xlu0 7
        %3893 = vperm.xlu0 %3892, %v1763
        %v3894 = vpop.permute.xlu0 %3893
        %3896 = vset.pattern.permute.xlu0 7
        %3897 = vperm.xlu0 %3896, %v1766
        %v3898 = vpop.permute.xlu0 %3897
        %3900 = vset.pattern.permute.xlu0 7
        %3901 = vperm.xlu0 %3900, %v1771
        %v3902 = vpop.permute.xlu0 %3901
        %3904 = vset.pattern.permute.xlu0 7
        %3905 = vperm.xlu0 %3904, %v1774
        %v3906 = vpop.permute.xlu0 %3905
        %3908 = vset.pattern.permute.xlu0 7
        %3909 = vperm.xlu0 %3908, %v1779
        %v3910 = vpop.permute.xlu0 %3909
        %3912 = vset.pattern.permute.xlu0 7
        %3913 = vperm.xlu0 %3912, %v1782
        %v3914 = vpop.permute.xlu0 %3913
        %3916 = vset.pattern.permute.xlu0 7
        %3917 = vperm.xlu0 %3916, %v1787
        %v3918 = vpop.permute.xlu0 %3917
        %3920 = vset.pattern.permute.xlu0 7
        %3921 = vperm.xlu0 %3920, %v1790
        %v3922 = vpop.permute.xlu0 %3921
        %3924 = vset.pattern.permute.xlu0 7
        %3925 = vperm.xlu0 %3924, %v1795
        %v3926 = vpop.permute.xlu0 %3925
        %3928 = vset.pattern.permute.xlu0 7
        %3929 = vperm.xlu0 %3928, %v1798
        %v3930 = vpop.permute.xlu0 %3929
        %3932 = vset.pattern.permute.xlu0 7
        %3933 = vperm.xlu0 %3932, %v1803
        %v3934 = vpop.permute.xlu0 %3933
        %3936 = vset.pattern.permute.xlu0 7
        %3937 = vperm.xlu0 %3936, %v1806
        %v3938 = vpop.permute.xlu0 %3937
        %3940 = vset.pattern.permute.xlu0 7
        %3941 = vperm.xlu0 %3940, %v1811
        %v3942 = vpop.permute.xlu0 %3941
        %3944 = vset.pattern.permute.xlu0 7
        %3945 = vperm.xlu0 %3944, %v1814
        %v3946 = vpop.permute.xlu0 %3945
        %3948 = vset.pattern.permute.xlu0 7
        %3949 = vperm.xlu0 %3948, %v1819
        %v3950 = vpop.permute.xlu0 %3949
        %3952 = vset.pattern.permute.xlu0 7
        %3953 = vperm.xlu0 %3952, %v1822
        %v3954 = vpop.permute.xlu0 %3953
        %3956 = vset.pattern.permute.xlu0 7
        %3957 = vperm.xlu0 %3956, %v1827
        %v3958 = vpop.permute.xlu0 %3957
        %3960 = vset.pattern.permute.xlu0 7
        %3961 = vperm.xlu0 %3960, %v1830
        %v3962 = vpop.permute.xlu0 %3961
        %3964 = vset.pattern.permute.xlu0 7
        %3965 = vperm.xlu0 %3964, %v1835
        %v3966 = vpop.permute.xlu0 %3965
        %3968 = vset.pattern.permute.xlu0 7
        %3969 = vperm.xlu0 %3968, %v1838
        %v3970 = vpop.permute.xlu0 %3969
        %3972 = vset.pattern.permute.xlu0 7
        %3973 = vperm.xlu0 %3972, %v1843
        %v3974 = vpop.permute.xlu0 %3973
        %3976 = vset.pattern.permute.xlu0 7
        %3977 = vperm.xlu0 %3976, %v1846
        %v3978 = vpop.permute.xlu0 %3977
        %v3980 = vmul.f32 %v2444, %v3854
        %v3981 = vmul.f32 %v2445, %v3858
        %v3982 = vmul.f32 %v2446, %v3862
        %v3983 = vmul.f32 %v2447, %v3866
        %v3984 = vmul.f32 %v2448, %v3870
        %v3985 = vmul.f32 %v2449, %v3874
        %v3986 = vmul.f32 %v2450, %v3878
        %v3987 = vmul.f32 %v2451, %v3882
        %v3988 = vmul.f32 %v2452, %v3886
        %v3989 = vmul.f32 %v2453, %v3890
        %v3990 = vmul.f32 %v2454, %v3894
        %v3991 = vmul.f32 %v2455, %v3898
        %v3992 = vmul.f32 %v2456, %v3902
        %v3993 = vmul.f32 %v2457, %v3906
        %v3994 = vmul.f32 %v2458, %v3910
        %v3995 = vmul.f32 %v2459, %v3914
        %v3996 = vmul.f32 %v2444, %v3918
        %v3997 = vmul.f32 %v2445, %v3922
        %v3998 = vmul.f32 %v2446, %v3926
        %v3999 = vmul.f32 %v2447, %v3930
        %v4000 = vmul.f32 %v2448, %v3934
        %v4001 = vmul.f32 %v2449, %v3938
        %v4002 = vmul.f32 %v2450, %v3942
        %v4003 = vmul.f32 %v2451, %v3946
        %v4004 = vmul.f32 %v2452, %v3950
        %v4005 = vmul.f32 %v2453, %v3954
        %v4006 = vmul.f32 %v2454, %v3958
        %v4007 = vmul.f32 %v2455, %v3962
        %v4008 = vmul.f32 %v2456, %v3966
        %v4009 = vmul.f32 %v2457, %v3970
        %v4010 = vmul.f32 %v2458, %v3974
        %v4011 = vmul.f32 %v2459, %v3978
        %v4012 = vadd.f32 %v3820, %v3980
        %v4013 = vadd.f32 %v3821, %v3981
        %v4014 = vadd.f32 %v3822, %v3982
        %v4015 = vadd.f32 %v3823, %v3983
        %v4016 = vadd.f32 %v3824, %v3984
        %v4017 = vadd.f32 %v3825, %v3985
        %v4018 = vadd.f32 %v3826, %v3986
        %v4019 = vadd.f32 %v3827, %v3987
        %v4020 = vadd.f32 %v3828, %v3988
        %v4021 = vadd.f32 %v3829, %v3989
        %v4022 = vadd.f32 %v3830, %v3990
        %v4023 = vadd.f32 %v3831, %v3991
        %v4024 = vadd.f32 %v3832, %v3992
        %v4025 = vadd.f32 %v3833, %v3993
        %v4026 = vadd.f32 %v3834, %v3994
        %v4027 = vadd.f32 %v3835, %v3995
        %v4028 = vadd.f32 %v3836, %v3996
        %v4029 = vadd.f32 %v3837, %v3997
        %v4030 = vadd.f32 %v3838, %v3998
        %v4031 = vadd.f32 %v3839, %v3999
        %v4032 = vadd.f32 %v3840, %v4000
        %v4033 = vadd.f32 %v3841, %v4001
        %v4034 = vadd.f32 %v3842, %v4002
        %v4035 = vadd.f32 %v3843, %v4003
        %v4036 = vadd.f32 %v3844, %v4004
        %v4037 = vadd.f32 %v3845, %v4005
        %v4038 = vadd.f32 %v3846, %v4006
        %v4039 = vadd.f32 %v3847, %v4007
        %v4040 = vadd.f32 %v3848, %v4008
        %v4041 = vadd.f32 %v3849, %v4009
        %v4042 = vadd.f32 %v3850, %v4010
        %v4043 = vadd.f32 %v3851, %v4011
        %4044 = vset.pattern.permute.xlu0 8
        %4045 = vperm.xlu0 %4044, %v1723
        %v4046 = vpop.permute.xlu0 %4045
        %4048 = vset.pattern.permute.xlu0 8
        %4049 = vperm.xlu0 %4048, %v1726
        %v4050 = vpop.permute.xlu0 %4049
        %4052 = vset.pattern.permute.xlu0 8
        %4053 = vperm.xlu0 %4052, %v1731
        %v4054 = vpop.permute.xlu0 %4053
        %4056 = vset.pattern.permute.xlu0 8
        %4057 = vperm.xlu0 %4056, %v1734
        %v4058 = vpop.permute.xlu0 %4057
        %4060 = vset.pattern.permute.xlu0 8
        %4061 = vperm.xlu0 %4060, %v1739
        %v4062 = vpop.permute.xlu0 %4061
        %4064 = vset.pattern.permute.xlu0 8
        %4065 = vperm.xlu0 %4064, %v1742
        %v4066 = vpop.permute.xlu0 %4065
        %4068 = vset.pattern.permute.xlu0 8
        %4069 = vperm.xlu0 %4068, %v1747
        %v4070 = vpop.permute.xlu0 %4069
        %4072 = vset.pattern.permute.xlu0 8
        %4073 = vperm.xlu0 %4072, %v1750
        %v4074 = vpop.permute.xlu0 %4073
        %4076 = vset.pattern.permute.xlu0 8
        %4077 = vperm.xlu0 %4076, %v1755
        %v4078 = vpop.permute.xlu0 %4077
        %4080 = vset.pattern.permute.xlu0 8
        %4081 = vperm.xlu0 %4080, %v1758
        %v4082 = vpop.permute.xlu0 %4081
        %4084 = vset.pattern.permute.xlu0 8
        %4085 = vperm.xlu0 %4084, %v1763
        %v4086 = vpop.permute.xlu0 %4085
        %4088 = vset.pattern.permute.xlu0 8
        %4089 = vperm.xlu0 %4088, %v1766
        %v4090 = vpop.permute.xlu0 %4089
        %4092 = vset.pattern.permute.xlu0 8
        %4093 = vperm.xlu0 %4092, %v1771
        %v4094 = vpop.permute.xlu0 %4093
        %4096 = vset.pattern.permute.xlu0 8
        %4097 = vperm.xlu0 %4096, %v1774
        %v4098 = vpop.permute.xlu0 %4097
        %4100 = vset.pattern.permute.xlu0 8
        %4101 = vperm.xlu0 %4100, %v1779
        %v4102 = vpop.permute.xlu0 %4101
        %4104 = vset.pattern.permute.xlu0 8
        %4105 = vperm.xlu0 %4104, %v1782
        %v4106 = vpop.permute.xlu0 %4105
        %4108 = vset.pattern.permute.xlu0 8
        %4109 = vperm.xlu0 %4108, %v1787
        %v4110 = vpop.permute.xlu0 %4109
        %4112 = vset.pattern.permute.xlu0 8
        %4113 = vperm.xlu0 %4112, %v1790
        %v4114 = vpop.permute.xlu0 %4113
        %4116 = vset.pattern.permute.xlu0 8
        %4117 = vperm.xlu0 %4116, %v1795
        %v4118 = vpop.permute.xlu0 %4117
        %4120 = vset.pattern.permute.xlu0 8
        %4121 = vperm.xlu0 %4120, %v1798
        %v4122 = vpop.permute.xlu0 %4121
        %4124 = vset.pattern.permute.xlu0 8
        %4125 = vperm.xlu0 %4124, %v1803
        %v4126 = vpop.permute.xlu0 %4125
        %4128 = vset.pattern.permute.xlu0 8
        %4129 = vperm.xlu0 %4128, %v1806
        %v4130 = vpop.permute.xlu0 %4129
        %4132 = vset.pattern.permute.xlu0 8
        %4133 = vperm.xlu0 %4132, %v1811
        %v4134 = vpop.permute.xlu0 %4133
        %4136 = vset.pattern.permute.xlu0 8
        %4137 = vperm.xlu0 %4136, %v1814
        %v4138 = vpop.permute.xlu0 %4137
        %4140 = vset.pattern.permute.xlu0 8
        %4141 = vperm.xlu0 %4140, %v1819
        %v4142 = vpop.permute.xlu0 %4141
        %4144 = vset.pattern.permute.xlu0 8
        %4145 = vperm.xlu0 %4144, %v1822
        %v4146 = vpop.permute.xlu0 %4145
        %4148 = vset.pattern.permute.xlu0 8
        %4149 = vperm.xlu0 %4148, %v1827
        %v4150 = vpop.permute.xlu0 %4149
        %4152 = vset.pattern.permute.xlu0 8
        %4153 = vperm.xlu0 %4152, %v1830
        %v4154 = vpop.permute.xlu0 %4153
        %4156 = vset.pattern.permute.xlu0 8
        %4157 = vperm.xlu0 %4156, %v1835
        %v4158 = vpop.permute.xlu0 %4157
        %4160 = vset.pattern.permute.xlu0 8
        %4161 = vperm.xlu0 %4160, %v1838
        %v4162 = vpop.permute.xlu0 %4161
        %4164 = vset.pattern.permute.xlu0 8
        %4165 = vperm.xlu0 %4164, %v1843
        %v4166 = vpop.permute.xlu0 %4165
        %4168 = vset.pattern.permute.xlu0 8
        %4169 = vperm.xlu0 %4168, %v1846
        %v4170 = vpop.permute.xlu0 %4169
        %v4172 = vmul.f32 %v2492, %v4046
        %v4173 = vmul.f32 %v2493, %v4050
        %v4174 = vmul.f32 %v2494, %v4054
        %v4175 = vmul.f32 %v2495, %v4058
        %v4176 = vmul.f32 %v2496, %v4062
        %v4177 = vmul.f32 %v2497, %v4066
        %v4178 = vmul.f32 %v2498, %v4070
        %v4179 = vmul.f32 %v2499, %v4074
        %v4180 = vmul.f32 %v2500, %v4078
        %v4181 = vmul.f32 %v2501, %v4082
        %v4182 = vmul.f32 %v2502, %v4086
        %v4183 = vmul.f32 %v2503, %v4090
        %v4184 = vmul.f32 %v2504, %v4094
        %v4185 = vmul.f32 %v2505, %v4098
        %v4186 = vmul.f32 %v2506, %v4102
        %v4187 = vmul.f32 %v2507, %v4106
        %v4188 = vmul.f32 %v2492, %v4110
        %v4189 = vmul.f32 %v2493, %v4114
        %v4190 = vmul.f32 %v2494, %v4118
        %v4191 = vmul.f32 %v2495, %v4122
        %v4192 = vmul.f32 %v2496, %v4126
        %v4193 = vmul.f32 %v2497, %v4130
        %v4194 = vmul.f32 %v2498, %v4134
        %v4195 = vmul.f32 %v2499, %v4138
        %v4196 = vmul.f32 %v2500, %v4142
        %v4197 = vmul.f32 %v2501, %v4146
        %v4198 = vmul.f32 %v2502, %v4150
        %v4199 = vmul.f32 %v2503, %v4154
        %v4200 = vmul.f32 %v2504, %v4158
        %v4201 = vmul.f32 %v2505, %v4162
        %v4202 = vmul.f32 %v2506, %v4166
        %v4203 = vmul.f32 %v2507, %v4170
        %v4204 = vadd.f32 %v4012, %v4172
        %v4205 = vadd.f32 %v4013, %v4173
        %v4206 = vadd.f32 %v4014, %v4174
        %v4207 = vadd.f32 %v4015, %v4175
        %v4208 = vadd.f32 %v4016, %v4176
        %v4209 = vadd.f32 %v4017, %v4177
        %v4210 = vadd.f32 %v4018, %v4178
        %v4211 = vadd.f32 %v4019, %v4179
        %v4212 = vadd.f32 %v4020, %v4180
        %v4213 = vadd.f32 %v4021, %v4181
        %v4214 = vadd.f32 %v4022, %v4182
        %v4215 = vadd.f32 %v4023, %v4183
        %v4216 = vadd.f32 %v4024, %v4184
        %v4217 = vadd.f32 %v4025, %v4185
        %v4218 = vadd.f32 %v4026, %v4186
        %v4219 = vadd.f32 %v4027, %v4187
        %v4220 = vadd.f32 %v4028, %v4188
        %v4221 = vadd.f32 %v4029, %v4189
        %v4222 = vadd.f32 %v4030, %v4190
        %v4223 = vadd.f32 %v4031, %v4191
        %v4224 = vadd.f32 %v4032, %v4192
        %v4225 = vadd.f32 %v4033, %v4193
        %v4226 = vadd.f32 %v4034, %v4194
        %v4227 = vadd.f32 %v4035, %v4195
        %v4228 = vadd.f32 %v4036, %v4196
        %v4229 = vadd.f32 %v4037, %v4197
        %v4230 = vadd.f32 %v4038, %v4198
        %v4231 = vadd.f32 %v4039, %v4199
        %v4232 = vadd.f32 %v4040, %v4200
        %v4233 = vadd.f32 %v4041, %v4201
        %v4234 = vadd.f32 %v4042, %v4202
        %v4235 = vadd.f32 %v4043, %v4203
        %v4236 = vadd.s32 %v1867, 4
        %vm4237 = vcmp.lt.s32.totalorder %v4236, 0
        %v4238 = vsub.s32 0, %v4236
        %v4239 = vsel %vm4237, %v4238, %v4236
        %v4240 = vshrl.u32 %v4239, 4
        %v4241 = vand.u32 %v4239, 15
        %v4242 = vsub.s32 0, %v4241
        %v4243 = vsel %vm4237, %v4242, %v4241
        %vm4244 = vcmp.ne.s32.totalorder %v4243, 0
        %vm4245 = vcmp.lt.s32.totalorder %v4243, 0
        %vm4246 = vmand %vm4245, %vm4244
        %v4247 = vadd.s32 %v4243, 16
        %v4248 = vsel %vm4246, %v4247, %v4243
        %vm4249 = vcmp.eq.s32.totalorder %v4248, %v1850
        %vm4250 = vcmp.eq.s32.totalorder %v4248, %v1851
        %v4251 = vsel %vm4249, 1, 0
        %v4252 = vsel %vm4250, 1, 0
        %v4253 = vcvt.s32.f32 %v4251
        %v4254 = vcvt.s32.f32 %v4252
        %v4255 = vpack.c.bf16 %v4254, %v4253
        %v4256 = vpack.c.bf16 %v4205, %v4204
        %v4257 = vpack.c.bf16 %v4207, %v4206
        %v4258 = vpack.c.bf16 %v4209, %v4208
        %v4259 = vpack.c.bf16 %v4211, %v4210
        %v4260 = vpack.c.bf16 %v4213, %v4212
        %v4261 = vpack.c.bf16 %v4215, %v4214
        %v4262 = vpack.c.bf16 %v4217, %v4216
        %v4263 = vpack.c.bf16 %v4219, %v4218
        %v4264 = vpack.c.bf16 %v4221, %v4220
        %v4265 = vpack.c.bf16 %v4223, %v4222
        %v4266 = vpack.c.bf16 %v4225, %v4224
        %v4267 = vpack.c.bf16 %v4227, %v4226
        %v4268 = vpack.c.bf16 %v4229, %v4228
        %v4269 = vpack.c.bf16 %v4231, %v4230
        %v4270 = vpack.c.bf16 %v4233, %v4232
        %v4271 = vpack.c.bf16 %v4235, %v4234
        %vm4272 = vcmask 130048
        %v4274 = vsel %vm4272, %v4256, 0
        %v4277 = vsel %vm4272, %v4257, 0
        %v4280 = vsel %vm4272, %v4258, 0
        %v4283 = vsel %vm4272, %v4259, 0
        %v4286 = vsel %vm4272, %v4260, 0
        %v4289 = vsel %vm4272, %v4261, 0
        %v4292 = vsel %vm4272, %v4262, 0
        %v4295 = vsel %vm4272, %v4263, 0
        %v4298 = vsel %vm4272, %v4264, 0
        %v4301 = vsel %vm4272, %v4265, 0
        %v4304 = vsel %vm4272, %v4266, 0
        %v4307 = vsel %vm4272, %v4267, 0
        %v4310 = vsel %vm4272, %v4268, 0
        %v4313 = vsel %vm4272, %v4269, 0
        %v4316 = vsel %vm4272, %v4270, 0
        %v4319 = vsel %vm4272, %v4271, 0
        %4321 = vmatprep.subr.bf16.mxu0 0
        %4322 = vmatpush1.bf16.msra.mxu0 %v4255
        %4323 = vmatprep.subr.bf16.mxu0 0
        %4324 = vmatpush1.bf16.msra.mxu0 0
        %4325 = vmatprep.subr.bf16.mxu0 0
        %4326 = vmatpush1.bf16.msra.mxu0 0
        %4327 = vmatprep.subr.bf16.mxu0 0
        %4328 = vmatpush1.bf16.msra.mxu0 0
        %4329 = vmatprep.subr.bf16.mxu0 0
        %4330 = vmatpush1.bf16.msra.mxu0 0
        %4331 = vmatprep.subr.bf16.mxu0 0
        %4332 = vmatpush1.bf16.msra.mxu0 0
        %4333 = vmatprep.subr.bf16.mxu0 0
        %4334 = vmatpush1.bf16.msra.mxu0 0
        %4335 = vmatprep.subr.bf16.mxu0 0
        %4336 = vmatpush1.bf16.msra.mxu0 0
        %4337 = vmatprep.subr.bf16.mxu0 0
        %4338 = vmatpush1.bf16.msra.mxu0 0
        %4339 = vmatprep.subr.bf16.mxu0 0
        %4340 = vmatpush1.bf16.msra.mxu0 0
        %4341 = vmatprep.subr.bf16.mxu0 0
        %4342 = vmatpush1.bf16.msra.mxu0 0
        %4343 = vmatprep.subr.bf16.mxu0 0
        %4344 = vmatpush1.bf16.msra.mxu0 0
        %4345 = vmatprep.subr.bf16.mxu0 0
        %4346 = vmatpush1.bf16.msra.mxu0 0
        %4347 = vmatprep.subr.bf16.mxu0 0
        %4348 = vmatpush1.bf16.msra.mxu0 0
        %4349 = vmatprep.subr.bf16.mxu0 0
        %4350 = vmatpush1.bf16.msra.mxu0 0
        %4351 = vmatprep.subr.bf16.mxu0 0
        %4352 = vmatpush1.bf16.msra.mxu0 0
        %4353 = vmatprep.mubr.bf16.mxu0 0
        %4354 = vmatmul.mubr.bf16.gmra.mrb[0].mxu0 %v4274
        %v4355 = vpop.f32.mrb[0].mxu0
        %v4356 = vadd.f32 0.0, %v4355
        %v4357 = vpop.f32.mrb[0].mxu0
        %v4358 = vpop.f32.mrb[0].mxu0
        %v4359 = vadd.f32 0.0, %v4358
        %v4360 = vpop.f32.mrb[0].mxu0
        %4361 = vmatprep.mubr.bf16.mxu0 0
        %4362 = vmatmul.mubr.bf16.gmra.mrb[0].mxu0 %v4277
        %v4363 = vpop.f32.mrb[0].mxu0
        %v4364 = vadd.f32 0.0, %v4363
        %v4365 = vpop.f32.mrb[0].mxu0
        %v4366 = vpop.f32.mrb[0].mxu0
        %v4367 = vadd.f32 0.0, %v4366
        %v4368 = vpop.f32.mrb[0].mxu0
        %4369 = vmatprep.mubr.bf16.mxu0 0
        %4370 = vmatmul.mubr.bf16.gmra.mrb[0].mxu0 %v4280
        %v4371 = vpop.f32.mrb[0].mxu0
        %v4372 = vadd.f32 0.0, %v4371
        %v4373 = vpop.f32.mrb[0].mxu0
        %v4374 = vpop.f32.mrb[0].mxu0
        %v4375 = vadd.f32 0.0, %v4374
        %v4376 = vpop.f32.mrb[0].mxu0
        %4377 = vmatprep.mubr.bf16.mxu0 0
        %4378 = vmatmul.mubr.bf16.gmra.mrb[0].mxu0 %v4283
        %v4379 = vpop.f32.mrb[0].mxu0
        %v4380 = vadd.f32 0.0, %v4379
        %v4381 = vpop.f32.mrb[0].mxu0
        %v4382 = vpop.f32.mrb[0].mxu0
        %v4383 = vadd.f32 0.0, %v4382
        %v4384 = vpop.f32.mrb[0].mxu0
        %4385 = vmatprep.mubr.bf16.mxu0 0
        %4386 = vmatmul.mubr.bf16.gmra.mrb[0].mxu0 %v4286
        %v4387 = vpop.f32.mrb[0].mxu0
        %v4388 = vadd.f32 0.0, %v4387
        %v4389 = vpop.f32.mrb[0].mxu0
        %v4390 = vpop.f32.mrb[0].mxu0
        %v4391 = vadd.f32 0.0, %v4390
        %v4392 = vpop.f32.mrb[0].mxu0
        %4393 = vmatprep.mubr.bf16.mxu0 0
        %4394 = vmatmul.mubr.bf16.gmra.mrb[0].mxu0 %v4289
        %v4395 = vpop.f32.mrb[0].mxu0
        %v4396 = vadd.f32 0.0, %v4395
        %v4397 = vpop.f32.mrb[0].mxu0
        %v4398 = vpop.f32.mrb[0].mxu0
        %v4399 = vadd.f32 0.0, %v4398
        %v4400 = vpop.f32.mrb[0].mxu0
        %4401 = vmatprep.mubr.bf16.mxu0 0
        %4402 = vmatmul.mubr.bf16.gmra.mrb[0].mxu0 %v4292
        %v4403 = vpop.f32.mrb[0].mxu0
        %v4404 = vadd.f32 0.0, %v4403
        %v4405 = vpop.f32.mrb[0].mxu0
        %v4406 = vpop.f32.mrb[0].mxu0
        %v4407 = vadd.f32 0.0, %v4406
        %v4408 = vpop.f32.mrb[0].mxu0
        %4409 = vmatprep.mubr.bf16.mxu0 0
        %4410 = vmatmul.mubr.bf16.gmra.mrb[0].mxu0 %v4295
        %v4411 = vpop.f32.mrb[0].mxu0
        %v4412 = vadd.f32 0.0, %v4411
        %v4413 = vpop.f32.mrb[0].mxu0
        %v4414 = vpop.f32.mrb[0].mxu0
        %v4415 = vadd.f32 0.0, %v4414
        %v4416 = vpop.f32.mrb[0].mxu0
        %4417 = vmatprep.mubr.bf16.mxu0 0
        %4418 = vmatmul.mubr.bf16.gmra.mrb[0].mxu0 %v4298
        %v4419 = vpop.f32.mrb[0].mxu0
        %v4420 = vadd.f32 0.0, %v4419
        %v4421 = vpop.f32.mrb[0].mxu0
        %v4422 = vpop.f32.mrb[0].mxu0
        %v4423 = vadd.f32 0.0, %v4422
        %v4424 = vpop.f32.mrb[0].mxu0
        %4425 = vmatprep.mubr.bf16.mxu0 0
        %4426 = vmatmul.mubr.bf16.gmra.mrb[0].mxu0 %v4301
        %v4427 = vpop.f32.mrb[0].mxu0
        %v4428 = vadd.f32 0.0, %v4427
        %v4429 = vpop.f32.mrb[0].mxu0
        %v4430 = vpop.f32.mrb[0].mxu0
        %v4431 = vadd.f32 0.0, %v4430
        %v4432 = vpop.f32.mrb[0].mxu0
        %4433 = vmatprep.mubr.bf16.mxu0 0
        %4434 = vmatmul.mubr.bf16.gmra.mrb[0].mxu0 %v4304
        %v4435 = vpop.f32.mrb[0].mxu0
        %v4436 = vadd.f32 0.0, %v4435
        %v4437 = vpop.f32.mrb[0].mxu0
        %v4438 = vpop.f32.mrb[0].mxu0
        %v4439 = vadd.f32 0.0, %v4438
        %v4440 = vpop.f32.mrb[0].mxu0
        %4441 = vmatprep.mubr.bf16.mxu0 0
        %4442 = vmatmul.mubr.bf16.gmra.mrb[0].mxu0 %v4307
        %v4443 = vpop.f32.mrb[0].mxu0
        %v4444 = vadd.f32 0.0, %v4443
        %v4445 = vpop.f32.mrb[0].mxu0
        %v4446 = vpop.f32.mrb[0].mxu0
        %v4447 = vadd.f32 0.0, %v4446
        %v4448 = vpop.f32.mrb[0].mxu0
        %4449 = vmatprep.mubr.bf16.mxu0 0
        %4450 = vmatmul.mubr.bf16.gmra.mrb[0].mxu0 %v4310
        %v4451 = vpop.f32.mrb[0].mxu0
        %v4452 = vadd.f32 0.0, %v4451
        %v4453 = vpop.f32.mrb[0].mxu0
        %v4454 = vpop.f32.mrb[0].mxu0
        %v4455 = vadd.f32 0.0, %v4454
        %v4456 = vpop.f32.mrb[0].mxu0
        %4457 = vmatprep.mubr.bf16.mxu0 0
        %4458 = vmatmul.mubr.bf16.gmra.mrb[0].mxu0 %v4313
        %v4459 = vpop.f32.mrb[0].mxu0
        %v4460 = vadd.f32 0.0, %v4459
        %v4461 = vpop.f32.mrb[0].mxu0
        %v4462 = vpop.f32.mrb[0].mxu0
        %v4463 = vadd.f32 0.0, %v4462
        %v4464 = vpop.f32.mrb[0].mxu0
        %4465 = vmatprep.mubr.bf16.mxu0 0
        %4466 = vmatmul.mubr.bf16.gmra.mrb[0].mxu0 %v4316
        %v4467 = vpop.f32.mrb[0].mxu0
        %v4468 = vadd.f32 0.0, %v4467
        %v4469 = vpop.f32.mrb[0].mxu0
        %v4470 = vpop.f32.mrb[0].mxu0
        %v4471 = vadd.f32 0.0, %v4470
        %v4472 = vpop.f32.mrb[0].mxu0
        %4473 = vmatprep.mubr.bf16.mxu0 0
        %4474 = vmatmul.mubr.bf16.gmra.mrb[0].mxu0 %v4319
        %v4475 = vpop.f32.mrb[0].mxu0
        %v4476 = vadd.f32 0.0, %v4475
        %v4477 = vpop.f32.mrb[0].mxu0
        %v4478 = vpop.f32.mrb[0].mxu0
        %v4479 = vadd.f32 0.0, %v4478
        %v4480 = vpop.f32.mrb[0].mxu0
        %4481 = vdwg.mxu0
        %v4482 = vmul.f32 %v4356, %v1068
        %v4483 = vmul.f32 %v4359, %v1069
        %v4484 = vmul.f32 %v4364, %v1070
        %v4485 = vmul.f32 %v4367, %v1071
        %v4486 = vmul.f32 %v4372, %v1072
        %v4487 = vmul.f32 %v4375, %v1073
        %v4488 = vmul.f32 %v4380, %v1074
        %v4489 = vmul.f32 %v4383, %v1075
        %v4490 = vmul.f32 %v4388, %v1076
        %v4491 = vmul.f32 %v4391, %v1077
        %v4492 = vmul.f32 %v4396, %v1078
        %v4493 = vmul.f32 %v4399, %v1079
        %v4494 = vmul.f32 %v4404, %v1080
        %v4495 = vmul.f32 %v4407, %v1081
        %v4496 = vmul.f32 %v4412, %v1082
        %v4497 = vmul.f32 %v4415, %v1083
        %v4498 = vmul.f32 %v4420, %v1068
        %v4499 = vmul.f32 %v4423, %v1069
        %v4500 = vmul.f32 %v4428, %v1070
        %v4501 = vmul.f32 %v4431, %v1071
        %v4502 = vmul.f32 %v4436, %v1072
        %v4503 = vmul.f32 %v4439, %v1073
        %v4504 = vmul.f32 %v4444, %v1074
        %v4505 = vmul.f32 %v4447, %v1075
        %v4506 = vmul.f32 %v4452, %v1076
        %v4507 = vmul.f32 %v4455, %v1077
        %v4508 = vmul.f32 %v4460, %v1078
        %v4509 = vmul.f32 %v4463, %v1079
        %v4510 = vmul.f32 %v4468, %v1080
        %v4511 = vmul.f32 %v4471, %v1081
        %v4512 = vmul.f32 %v4476, %v1082
        %v4513 = vmul.f32 %v4479, %v1083
        %4514 = vmatprep.subr.bf16.mxu0 0
        %4515 = vmatpush1.bf16.xpose.msra.mxu0 %v1608
        %4516 = vmatprep.subr.bf16.mxu0 0
        %4517 = vmatpush1.bf16.xpose.msra.mxu0 %v1609
        %4518 = vmatprep.subr.bf16.mxu0 0
        %4519 = vmatpush1.bf16.xpose.msra.mxu0 %v1610
        %4520 = vmatprep.subr.bf16.mxu0 0
        %4521 = vmatpush1.bf16.xpose.msra.mxu0 %v1611
        %4522 = vmatprep.subr.bf16.mxu0 0
        %4523 = vmatpush1.bf16.xpose.msra.mxu0 %v1612
        %4524 = vmatprep.subr.bf16.mxu0 0
        %4525 = vmatpush1.bf16.xpose.msra.mxu0 %v1613
        %4526 = vmatprep.subr.bf16.mxu0 0
        %4527 = vmatpush1.bf16.xpose.msra.mxu0 %v1614
        %4528 = vmatprep.subr.bf16.mxu0 0
        %4529 = vmatpush1.bf16.xpose.msra.mxu0 %v1615
        %4530 = vmatprep.subr.bf16.mxu0 0
        %4531 = vmatpush1.bf16.xpose.msra.mxu0 0
        %4532 = vmatprep.subr.bf16.mxu0 0
        %4533 = vmatpush1.bf16.xpose.msra.mxu0 0
        %4534 = vmatprep.subr.bf16.mxu0 0
        %4535 = vmatpush1.bf16.xpose.msra.mxu0 0
        %4536 = vmatprep.subr.bf16.mxu0 0
        %4537 = vmatpush1.bf16.xpose.msra.mxu0 0
        %4538 = vmatprep.subr.bf16.mxu0 0
        %4539 = vmatpush1.bf16.xpose.msra.mxu0 0
        %4540 = vmatprep.subr.bf16.mxu0 0
        %4541 = vmatpush1.bf16.xpose.msra.mxu0 0
        %4542 = vmatprep.subr.bf16.mxu0 0
        %4543 = vmatpush1.bf16.xpose.msra.mxu0 0
        %4544 = vmatprep.subr.bf16.mxu0 0
        %4545 = vmatpush1.bf16.xpose.msra.mxu0 0
        %4546 = vmatprep.mubr.bf16.mxu0 0
        %4547 = vmatmul.mubr.bf16.gmra.mrb[0].mxu0 %v1592
        %v4548 = vpop.f32.mrb[0].mxu0
        %v4549 = vadd.f32 %v4482, %v4548
        %v4550 = vpop.f32.mrb[0].mxu0
        %v4551 = vpop.f32.mrb[0].mxu0
        %v4552 = vadd.f32 %v4483, %v4551
        %v4553 = vpop.f32.mrb[0].mxu0
        %4554 = vmatprep.mubr.bf16.mxu0 0
        %4555 = vmatmul.mubr.bf16.gmra.mrb[0].mxu0 %v1593
        %v4556 = vpop.f32.mrb[0].mxu0
        %v4557 = vadd.f32 %v4484, %v4556
        %v4558 = vpop.f32.mrb[0].mxu0
        %v4559 = vpop.f32.mrb[0].mxu0
        %v4560 = vadd.f32 %v4485, %v4559
        %v4561 = vpop.f32.mrb[0].mxu0
        %4562 = vmatprep.mubr.bf16.mxu0 0
        %4563 = vmatmul.mubr.bf16.gmra.mrb[0].mxu0 %v1594
        %v4564 = vpop.f32.mrb[0].mxu0
        %v4565 = vadd.f32 %v4486, %v4564
        %v4566 = vpop.f32.mrb[0].mxu0
        %v4567 = vpop.f32.mrb[0].mxu0
        %v4568 = vadd.f32 %v4487, %v4567
        %v4569 = vpop.f32.mrb[0].mxu0
        %4570 = vmatprep.mubr.bf16.mxu0 0
        %4571 = vmatmul.mubr.bf16.gmra.mrb[0].mxu0 %v1595
        %v4572 = vpop.f32.mrb[0].mxu0
        %v4573 = vadd.f32 %v4488, %v4572
        %v4574 = vpop.f32.mrb[0].mxu0
        %v4575 = vpop.f32.mrb[0].mxu0
        %v4576 = vadd.f32 %v4489, %v4575
        %v4577 = vpop.f32.mrb[0].mxu0
        %4578 = vmatprep.mubr.bf16.mxu0 0
        %4579 = vmatmul.mubr.bf16.gmra.mrb[0].mxu0 %v1596
        %v4580 = vpop.f32.mrb[0].mxu0
        %v4581 = vadd.f32 %v4490, %v4580
        %v4582 = vpop.f32.mrb[0].mxu0
        %v4583 = vpop.f32.mrb[0].mxu0
        %v4584 = vadd.f32 %v4491, %v4583
        %v4585 = vpop.f32.mrb[0].mxu0
        %4586 = vmatprep.mubr.bf16.mxu0 0
        %4587 = vmatmul.mubr.bf16.gmra.mrb[0].mxu0 %v1597
        %v4588 = vpop.f32.mrb[0].mxu0
        %v4589 = vadd.f32 %v4492, %v4588
        %v4590 = vpop.f32.mrb[0].mxu0
        %v4591 = vpop.f32.mrb[0].mxu0
        %v4592 = vadd.f32 %v4493, %v4591
        %v4593 = vpop.f32.mrb[0].mxu0
        %4594 = vmatprep.mubr.bf16.mxu0 0
        %4595 = vmatmul.mubr.bf16.gmra.mrb[0].mxu0 %v1598
        %v4596 = vpop.f32.mrb[0].mxu0
        %v4597 = vadd.f32 %v4494, %v4596
        %v4598 = vpop.f32.mrb[0].mxu0
        %v4599 = vpop.f32.mrb[0].mxu0
        %v4600 = vadd.f32 %v4495, %v4599
        %v4601 = vpop.f32.mrb[0].mxu0
        %4602 = vmatprep.mubr.bf16.mxu0 0
        %4603 = vmatmul.mubr.bf16.gmra.mrb[0].mxu0 %v1599
        %v4604 = vpop.f32.mrb[0].mxu0
        %v4605 = vadd.f32 %v4496, %v4604
        %v4606 = vpop.f32.mrb[0].mxu0
        %v4607 = vpop.f32.mrb[0].mxu0
        %v4608 = vadd.f32 %v4497, %v4607
        %v4609 = vpop.f32.mrb[0].mxu0
        %4610 = vdwg.mxu0
        %4611 = vmatprep.subr.bf16.mxu0 0
        %4612 = vmatpush1.bf16.xpose.msra.mxu0 %v1616
        %4613 = vmatprep.subr.bf16.mxu0 0
        %4614 = vmatpush1.bf16.xpose.msra.mxu0 %v1617
        %4615 = vmatprep.subr.bf16.mxu0 0
        %4616 = vmatpush1.bf16.xpose.msra.mxu0 %v1618
        %4617 = vmatprep.subr.bf16.mxu0 0
        %4618 = vmatpush1.bf16.xpose.msra.mxu0 %v1619
        %4619 = vmatprep.subr.bf16.mxu0 0
        %4620 = vmatpush1.bf16.xpose.msra.mxu0 %v1620
        %4621 = vmatprep.subr.bf16.mxu0 0
        %4622 = vmatpush1.bf16.xpose.msra.mxu0 %v1621
        %4623 = vmatprep.subr.bf16.mxu0 0
        %4624 = vmatpush1.bf16.xpose.msra.mxu0 %v1622
        %4625 = vmatprep.subr.bf16.mxu0 0
        %4626 = vmatpush1.bf16.xpose.msra.mxu0 %v1623
        %4627 = vmatprep.subr.bf16.mxu0 0
        %4628 = vmatpush1.bf16.xpose.msra.mxu0 0
        %4629 = vmatprep.subr.bf16.mxu0 0
        %4630 = vmatpush1.bf16.xpose.msra.mxu0 0
        %4631 = vmatprep.subr.bf16.mxu0 0
        %4632 = vmatpush1.bf16.xpose.msra.mxu0 0
        %4633 = vmatprep.subr.bf16.mxu0 0
        %4634 = vmatpush1.bf16.xpose.msra.mxu0 0
        %4635 = vmatprep.subr.bf16.mxu0 0
        %4636 = vmatpush1.bf16.xpose.msra.mxu0 0
        %4637 = vmatprep.subr.bf16.mxu0 0
        %4638 = vmatpush1.bf16.xpose.msra.mxu0 0
        %4639 = vmatprep.subr.bf16.mxu0 0
        %4640 = vmatpush1.bf16.xpose.msra.mxu0 0
        %4641 = vmatprep.subr.bf16.mxu0 0
        %4642 = vmatpush1.bf16.xpose.msra.mxu0 0
        %4643 = vmatprep.mubr.bf16.mxu0 0
        %4644 = vmatmul.mubr.bf16.gmra.mrb[0].mxu0 %v1600
        %v4645 = vpop.f32.mrb[0].mxu0
        %v4646 = vadd.f32 %v4498, %v4645
        %v4647 = vpop.f32.mrb[0].mxu0
        %v4648 = vpop.f32.mrb[0].mxu0
        %v4649 = vadd.f32 %v4499, %v4648
        %v4650 = vpop.f32.mrb[0].mxu0
        %4651 = vmatprep.mubr.bf16.mxu0 0
        %4652 = vmatmul.mubr.bf16.gmra.mrb[0].mxu0 %v1601
        %v4653 = vpop.f32.mrb[0].mxu0
        %v4654 = vadd.f32 %v4500, %v4653
        %v4655 = vpop.f32.mrb[0].mxu0
        %v4656 = vpop.f32.mrb[0].mxu0
        %v4657 = vadd.f32 %v4501, %v4656
        %v4658 = vpop.f32.mrb[0].mxu0
        %4659 = vmatprep.mubr.bf16.mxu0 0
        %4660 = vmatmul.mubr.bf16.gmra.mrb[0].mxu0 %v1602
        %v4661 = vpop.f32.mrb[0].mxu0
        %v4662 = vadd.f32 %v4502, %v4661
        %v4663 = vpop.f32.mrb[0].mxu0
        %v4664 = vpop.f32.mrb[0].mxu0
        %v4665 = vadd.f32 %v4503, %v4664
        %v4666 = vpop.f32.mrb[0].mxu0
        %4667 = vmatprep.mubr.bf16.mxu0 0
        %4668 = vmatmul.mubr.bf16.gmra.mrb[0].mxu0 %v1603
        %v4669 = vpop.f32.mrb[0].mxu0
        %v4670 = vadd.f32 %v4504, %v4669
        %v4671 = vpop.f32.mrb[0].mxu0
        %v4672 = vpop.f32.mrb[0].mxu0
        %v4673 = vadd.f32 %v4505, %v4672
        %v4674 = vpop.f32.mrb[0].mxu0
        %4675 = vmatprep.mubr.bf16.mxu0 0
        %4676 = vmatmul.mubr.bf16.gmra.mrb[0].mxu0 %v1604
        %v4677 = vpop.f32.mrb[0].mxu0
        %v4678 = vadd.f32 %v4506, %v4677
        %v4679 = vpop.f32.mrb[0].mxu0
        %v4680 = vpop.f32.mrb[0].mxu0
        %v4681 = vadd.f32 %v4507, %v4680
        %v4682 = vpop.f32.mrb[0].mxu0
        %4683 = vmatprep.mubr.bf16.mxu0 0
        %4684 = vmatmul.mubr.bf16.gmra.mrb[0].mxu0 %v1605
        %v4685 = vpop.f32.mrb[0].mxu0
        %v4686 = vadd.f32 %v4508, %v4685
        %v4687 = vpop.f32.mrb[0].mxu0
        %v4688 = vpop.f32.mrb[0].mxu0
        %v4689 = vadd.f32 %v4509, %v4688
        %v4690 = vpop.f32.mrb[0].mxu0
        %4691 = vmatprep.mubr.bf16.mxu0 0
        %4692 = vmatmul.mubr.bf16.gmra.mrb[0].mxu0 %v1606
        %v4693 = vpop.f32.mrb[0].mxu0
        %v4694 = vadd.f32 %v4510, %v4693
        %v4695 = vpop.f32.mrb[0].mxu0
        %v4696 = vpop.f32.mrb[0].mxu0
        %v4697 = vadd.f32 %v4511, %v4696
        %v4698 = vpop.f32.mrb[0].mxu0
        %4699 = vmatprep.mubr.bf16.mxu0 0
        %4700 = vmatmul.mubr.bf16.gmra.mrb[0].mxu0 %v1607
        %v4701 = vpop.f32.mrb[0].mxu0
        %v4702 = vadd.f32 %v4512, %v4701
        %v4703 = vpop.f32.mrb[0].mxu0
        %v4704 = vpop.f32.mrb[0].mxu0
        %v4705 = vadd.f32 %v4513, %v4704
        %v4706 = vpop.f32.mrb[0].mxu0
        %4707 = vdwg.mxu0
        %vm4708 = vcmp.gt.f32.partialorder %v1067, 0.0
        %v4709 = vsel %vm4708, 1, 0
        %v4710 = vlaneseq
        %v4711 = vshrl.u32 %v4710, 7
        %v4712 = vsub.s32 0, %v4711
        %v4713 = vrot.slane %v4709, %v4712
        %vm4714 = vcmp.eq.s32.totalorder %v4713, 1
        %v4715 = vsel %vm4714, %v4549, -10000.0
        %v4716 = vsel %vm4714, %v4552, -10000.0
        %v4717 = vsel %vm4714, %v4557, -10000.0
        %v4718 = vsel %vm4714, %v4560, -10000.0
        %v4719 = vsel %vm4714, %v4565, -10000.0
        %v4720 = vsel %vm4714, %v4568, -10000.0
        %v4721 = vsel %vm4714, %v4573, -10000.0
        %v4722 = vsel %vm4714, %v4576, -10000.0
        %v4723 = vsel %vm4714, %v4581, -10000.0
        %v4724 = vsel %vm4714, %v4584, -10000.0
        %v4725 = vsel %vm4714, %v4589, -10000.0
        %v4726 = vsel %vm4714, %v4592, -10000.0
        %v4727 = vsel %vm4714, %v4597, -10000.0
        %v4728 = vsel %vm4714, %v4600, -10000.0
        %v4729 = vsel %vm4714, %v4605, -10000.0
        %v4730 = vsel %vm4714, %v4608, -10000.0
        %v4731 = vsel %vm4714, %v4646, -10000.0
        %v4732 = vsel %vm4714, %v4649, -10000.0
        %v4733 = vsel %vm4714, %v4654, -10000.0
        %v4734 = vsel %vm4714, %v4657, -10000.0
        %v4735 = vsel %vm4714, %v4662, -10000.0
        %v4736 = vsel %vm4714, %v4665, -10000.0
        %v4737 = vsel %vm4714, %v4670, -10000.0
        %v4738 = vsel %vm4714, %v4673, -10000.0
        %v4739 = vsel %vm4714, %v4678, -10000.0
        %v4740 = vsel %vm4714, %v4681, -10000.0
        %v4741 = vsel %vm4714, %v4686, -10000.0
        %v4742 = vsel %vm4714, %v4689, -10000.0
        %v4743 = vsel %vm4714, %v4694, -10000.0
        %v4744 = vsel %vm4714, %v4697, -10000.0
        %v4745 = vsel %vm4714, %v4702, -10000.0
        %v4746 = vsel %vm4714, %v4705, -10000.0
        %4747 = vmax.xlane.f32.xlu0 %v4715
        %v4748 = vpop.xlane.xlu0 %4747
        %4749 = vmax.xlane.f32.xlu0 %v4716
        %v4750 = vpop.xlane.xlu0 %4749
        %4751 = vmax.xlane.f32.xlu0 %v4717
        %v4752 = vpop.xlane.xlu0 %4751
        %4753 = vmax.xlane.f32.xlu0 %v4718
        %v4754 = vpop.xlane.xlu0 %4753
        %4755 = vmax.xlane.f32.xlu0 %v4719
        %v4756 = vpop.xlane.xlu0 %4755
        %4757 = vmax.xlane.f32.xlu0 %v4720
        %v4758 = vpop.xlane.xlu0 %4757
        %4759 = vmax.xlane.f32.xlu0 %v4721
        %v4760 = vpop.xlane.xlu0 %4759
        %4761 = vmax.xlane.f32.xlu0 %v4722
        %v4762 = vpop.xlane.xlu0 %4761
        %4763 = vmax.xlane.f32.xlu0 %v4723
        %v4764 = vpop.xlane.xlu0 %4763
        %4765 = vmax.xlane.f32.xlu0 %v4724
        %v4766 = vpop.xlane.xlu0 %4765
        %4767 = vmax.xlane.f32.xlu0 %v4725
        %v4768 = vpop.xlane.xlu0 %4767
        %4769 = vmax.xlane.f32.xlu0 %v4726
        %v4770 = vpop.xlane.xlu0 %4769
        %4771 = vmax.xlane.f32.xlu0 %v4727
        %v4772 = vpop.xlane.xlu0 %4771
        %4773 = vmax.xlane.f32.xlu0 %v4728
        %v4774 = vpop.xlane.xlu0 %4773
        %4775 = vmax.xlane.f32.xlu0 %v4729
        %v4776 = vpop.xlane.xlu0 %4775
        %4777 = vmax.xlane.f32.xlu0 %v4730
        %v4778 = vpop.xlane.xlu0 %4777
        %4779 = vmax.xlane.f32.xlu0 %v4731
        %v4780 = vpop.xlane.xlu0 %4779
        %4781 = vmax.xlane.f32.xlu0 %v4732
        %v4782 = vpop.xlane.xlu0 %4781
        %4783 = vmax.xlane.f32.xlu0 %v4733
        %v4784 = vpop.xlane.xlu0 %4783
        %4785 = vmax.xlane.f32.xlu0 %v4734
        %v4786 = vpop.xlane.xlu0 %4785
        %4787 = vmax.xlane.f32.xlu0 %v4735
        %v4788 = vpop.xlane.xlu0 %4787
        %4789 = vmax.xlane.f32.xlu0 %v4736
        %v4790 = vpop.xlane.xlu0 %4789
        %4791 = vmax.xlane.f32.xlu0 %v4737
        %v4792 = vpop.xlane.xlu0 %4791
        %4793 = vmax.xlane.f32.xlu0 %v4738
        %v4794 = vpop.xlane.xlu0 %4793
        %4795 = vmax.xlane.f32.xlu0 %v4739
        %v4796 = vpop.xlane.xlu0 %4795
        %4797 = vmax.xlane.f32.xlu0 %v4740
        %v4798 = vpop.xlane.xlu0 %4797
        %4799 = vmax.xlane.f32.xlu0 %v4741
        %v4800 = vpop.xlane.xlu0 %4799
        %4801 = vmax.xlane.f32.xlu0 %v4742
        %v4802 = vpop.xlane.xlu0 %4801
        %4803 = vmax.xlane.f32.xlu0 %v4743
        %v4804 = vpop.xlane.xlu0 %4803
        %4805 = vmax.xlane.f32.xlu0 %v4744
        %v4806 = vpop.xlane.xlu0 %4805
        %4807 = vmax.xlane.f32.xlu0 %v4745
        %v4808 = vpop.xlane.xlu0 %4807
        %4809 = vmax.xlane.f32.xlu0 %v4746
        %v4810 = vpop.xlane.xlu0 %4809
        %v4811 = vsub.f32 %v4715, %v4748
        %v4812 = vsub.f32 %v4716, %v4750
        %v4813 = vsub.f32 %v4717, %v4752
        %v4814 = vsub.f32 %v4718, %v4754
        %v4815 = vsub.f32 %v4719, %v4756
        %v4816 = vsub.f32 %v4720, %v4758
        %v4817 = vsub.f32 %v4721, %v4760
        %v4818 = vsub.f32 %v4722, %v4762
        %v4819 = vsub.f32 %v4723, %v4764
        %v4820 = vsub.f32 %v4724, %v4766
        %v4821 = vsub.f32 %v4725, %v4768
        %v4822 = vsub.f32 %v4726, %v4770
        %v4823 = vsub.f32 %v4727, %v4772
        %v4824 = vsub.f32 %v4728, %v4774
        %v4825 = vsub.f32 %v4729, %v4776
        %v4826 = vsub.f32 %v4730, %v4778
        %v4827 = vsub.f32 %v4731, %v4780
        %v4828 = vsub.f32 %v4732, %v4782
        %v4829 = vsub.f32 %v4733, %v4784
        %v4830 = vsub.f32 %v4734, %v4786
        %v4831 = vsub.f32 %v4735, %v4788
        %v4832 = vsub.f32 %v4736, %v4790
        %v4833 = vsub.f32 %v4737, %v4792
        %v4834 = vsub.f32 %v4738, %v4794
        %v4835 = vsub.f32 %v4739, %v4796
        %v4836 = vsub.f32 %v4740, %v4798
        %v4837 = vsub.f32 %v4741, %v4800
        %v4838 = vsub.f32 %v4742, %v4802
        %v4839 = vsub.f32 %v4743, %v4804
        %v4840 = vsub.f32 %v4744, %v4806
        %v4841 = vsub.f32 %v4745, %v4808
        %v4842 = vsub.f32 %v4746, %v4810
        %v4843 = vmul.f32 %v4811, 1.442695
        %v4844 = vpow.pop %v4843
        %v4845 = vmul.f32 %v4812, 1.442695
        %v4846 = vpow.pop %v4845
        %v4847 = vmul.f32 %v4813, 1.442695
        %v4848 = vpow.pop %v4847
        %v4849 = vmul.f32 %v4814, 1.442695
        %v4850 = vpow.pop %v4849
        %v4851 = vmul.f32 %v4815, 1.442695
        %v4852 = vpow.pop %v4851
        %v4853 = vmul.f32 %v4816, 1.442695
        %v4854 = vpow.pop %v4853
        %v4855 = vmul.f32 %v4817, 1.442695
        %v4856 = vpow.pop %v4855
        %v4857 = vmul.f32 %v4818, 1.442695
        %v4858 = vpow.pop %v4857
        %v4859 = vmul.f32 %v4819, 1.442695
        %v4860 = vpow.pop %v4859
        %v4861 = vmul.f32 %v4820, 1.442695
        %v4862 = vpow.pop %v4861
        %v4863 = vmul.f32 %v4821, 1.442695
        %v4864 = vpow.pop %v4863
        %v4865 = vmul.f32 %v4822, 1.442695
        %v4866 = vpow.pop %v4865
        %v4867 = vmul.f32 %v4823, 1.442695
        %v4868 = vpow.pop %v4867
        %v4869 = vmul.f32 %v4824, 1.442695
        %v4870 = vpow.pop %v4869
        %v4871 = vmul.f32 %v4825, 1.442695
        %v4872 = vpow.pop %v4871
        %v4873 = vmul.f32 %v4826, 1.442695
        %v4874 = vpow.pop %v4873
        %v4875 = vmul.f32 %v4827, 1.442695
        %v4876 = vpow.pop %v4875
        %v4877 = vmul.f32 %v4828, 1.442695
        %v4878 = vpow.pop %v4877
        %v4879 = vmul.f32 %v4829, 1.442695
        %v4880 = vpow.pop %v4879
        %v4881 = vmul.f32 %v4830, 1.442695
        %v4882 = vpow.pop %v4881
        %v4883 = vmul.f32 %v4831, 1.442695
        %v4884 = vpow.pop %v4883
        %v4885 = vmul.f32 %v4832, 1.442695
        %v4886 = vpow.pop %v4885
        %v4887 = vmul.f32 %v4833, 1.442695
        %v4888 = vpow.pop %v4887
        %v4889 = vmul.f32 %v4834, 1.442695
        %v4890 = vpow.pop %v4889
        %v4891 = vmul.f32 %v4835, 1.442695
        %v4892 = vpow.pop %v4891
        %v4893 = vmul.f32 %v4836, 1.442695
        %v4894 = vpow.pop %v4893
        %v4895 = vmul.f32 %v4837, 1.442695
        %v4896 = vpow.pop %v4895
        %v4897 = vmul.f32 %v4838, 1.442695
        %v4898 = vpow.pop %v4897
        %v4899 = vmul.f32 %v4839, 1.442695
        %v4900 = vpow.pop %v4899
        %v4901 = vmul.f32 %v4840, 1.442695
        %v4902 = vpow.pop %v4901
        %v4903 = vmul.f32 %v4841, 1.442695
        %v4904 = vpow.pop %v4903
        %v4905 = vmul.f32 %v4842, 1.442695
        %v4906 = vpow.pop %v4905
        %4907 = vadd.xlane.f32.xlu0 %v4844
        %v4908 = vpop.xlane.xlu0 %4907
        %4909 = vadd.xlane.f32.xlu0 %v4846
        %v4910 = vpop.xlane.xlu0 %4909
        %4911 = vadd.xlane.f32.xlu0 %v4848
        %v4912 = vpop.xlane.xlu0 %4911
        %4913 = vadd.xlane.f32.xlu0 %v4850
        %v4914 = vpop.xlane.xlu0 %4913
        %4915 = vadd.xlane.f32.xlu0 %v4852
        %v4916 = vpop.xlane.xlu0 %4915
        %4917 = vadd.xlane.f32.xlu0 %v4854
        %v4918 = vpop.xlane.xlu0 %4917
        %4919 = vadd.xlane.f32.xlu0 %v4856
        %v4920 = vpop.xlane.xlu0 %4919
        %4921 = vadd.xlane.f32.xlu0 %v4858
        %v4922 = vpop.xlane.xlu0 %4921
        %4923 = vadd.xlane.f32.xlu0 %v4860
        %v4924 = vpop.xlane.xlu0 %4923
        %4925 = vadd.xlane.f32.xlu0 %v4862
        %v4926 = vpop.xlane.xlu0 %4925
        %4927 = vadd.xlane.f32.xlu0 %v4864
        %v4928 = vpop.xlane.xlu0 %4927
        %4929 = vadd.xlane.f32.xlu0 %v4866
        %v4930 = vpop.xlane.xlu0 %4929
        %4931 = vadd.xlane.f32.xlu0 %v4868
        %v4932 = vpop.xlane.xlu0 %4931
        %4933 = vadd.xlane.f32.xlu0 %v4870
        %v4934 = vpop.xlane.xlu0 %4933
        %4935 = vadd.xlane.f32.xlu0 %v4872
        %v4936 = vpop.xlane.xlu0 %4935
        %4937 = vadd.xlane.f32.xlu0 %v4874
        %v4938 = vpop.xlane.xlu0 %4937
        %4939 = vadd.xlane.f32.xlu0 %v4876
        %v4940 = vpop.xlane.xlu0 %4939
        %4941 = vadd.xlane.f32.xlu0 %v4878
        %v4942 = vpop.xlane.xlu0 %4941
        %4943 = vadd.xlane.f32.xlu0 %v4880
        %v4944 = vpop.xlane.xlu0 %4943
        %4945 = vadd.xlane.f32.xlu0 %v4882
        %v4946 = vpop.xlane.xlu0 %4945
        %4947 = vadd.xlane.f32.xlu0 %v4884
        %v4948 = vpop.xlane.xlu0 %4947
        %4949 = vadd.xlane.f32.xlu0 %v4886
        %v4950 = vpop.xlane.xlu0 %4949
        %4951 = vadd.xlane.f32.xlu0 %v4888
        %v4952 = vpop.xlane.xlu0 %4951
        %4953 = vadd.xlane.f32.xlu0 %v4890
        %v4954 = vpop.xlane.xlu0 %4953
        %4955 = vadd.xlane.f32.xlu0 %v4892
        %v4956 = vpop.xlane.xlu0 %4955
        %4957 = vadd.xlane.f32.xlu0 %v4894
        %v4958 = vpop.xlane.xlu0 %4957
        %4959 = vadd.xlane.f32.xlu0 %v4896
        %v4960 = vpop.xlane.xlu0 %4959
        %4961 = vadd.xlane.f32.xlu0 %v4898
        %v4962 = vpop.xlane.xlu0 %4961
        %4963 = vadd.xlane.f32.xlu0 %v4900
        %v4964 = vpop.xlane.xlu0 %4963
        %4965 = vadd.xlane.f32.xlu0 %v4902
        %v4966 = vpop.xlane.xlu0 %4965
        %4967 = vadd.xlane.f32.xlu0 %v4904
        %v4968 = vpop.xlane.xlu0 %4967
        %4969 = vadd.xlane.f32.xlu0 %v4906
        %v4970 = vpop.xlane.xlu0 %4969
        %v4971 = vrcp.pop %v4908
        %v4972 = vrcp.pop %v4910
        %v4973 = vrcp.pop %v4912
        %v4974 = vrcp.pop %v4914
        %v4975 = vrcp.pop %v4916
        %v4976 = vrcp.pop %v4918
        %v4977 = vrcp.pop %v4920
        %v4978 = vrcp.pop %v4922
        %v4979 = vrcp.pop %v4924
        %v4980 = vrcp.pop %v4926
        %v4981 = vrcp.pop %v4928
        %v4982 = vrcp.pop %v4930
        %v4983 = vrcp.pop %v4932
        %v4984 = vrcp.pop %v4934
        %v4985 = vrcp.pop %v4936
        %v4986 = vrcp.pop %v4938
        %v4987 = vrcp.pop %v4940
        %v4988 = vrcp.pop %v4942
        %v4989 = vrcp.pop %v4944
        %v4990 = vrcp.pop %v4946
        %v4991 = vrcp.pop %v4948
        %v4992 = vrcp.pop %v4950
        %v4993 = vrcp.pop %v4952
        %v4994 = vrcp.pop %v4954
        %v4995 = vrcp.pop %v4956
        %v4996 = vrcp.pop %v4958
        %v4997 = vrcp.pop %v4960
        %v4998 = vrcp.pop %v4962
        %v4999 = vrcp.pop %v4964
        %v5000 = vrcp.pop %v4966
        %v5001 = vrcp.pop %v4968
        %v5002 = vrcp.pop %v4970
        %v5003 = vmul.f32 %v4844, %v4971
        %v5004 = vmul.f32 %v4846, %v4972
        %v5005 = vmul.f32 %v4848, %v4973
        %v5006 = vmul.f32 %v4850, %v4974
        %v5007 = vmul.f32 %v4852, %v4975
        %v5008 = vmul.f32 %v4854, %v4976
        %v5009 = vmul.f32 %v4856, %v4977
        %v5010 = vmul.f32 %v4858, %v4978
        %v5011 = vmul.f32 %v4860, %v4979
        %v5012 = vmul.f32 %v4862, %v4980
        %v5013 = vmul.f32 %v4864, %v4981
        %v5014 = vmul.f32 %v4866, %v4982
        %v5015 = vmul.f32 %v4868, %v4983
        %v5016 = vmul.f32 %v4870, %v4984
        %v5017 = vmul.f32 %v4872, %v4985
        %v5018 = vmul.f32 %v4874, %v4986
        %v5019 = vmul.f32 %v4876, %v4987
        %v5020 = vmul.f32 %v4878, %v4988
        %v5021 = vmul.f32 %v4880, %v4989
        %v5022 = vmul.f32 %v4882, %v4990
        %v5023 = vmul.f32 %v4884, %v4991
        %v5024 = vmul.f32 %v4886, %v4992
        %v5025 = vmul.f32 %v4888, %v4993
        %v5026 = vmul.f32 %v4890, %v4994
        %v5027 = vmul.f32 %v4892, %v4995
        %v5028 = vmul.f32 %v4894, %v4996
        %v5029 = vmul.f32 %v4896, %v4997
        %v5030 = vmul.f32 %v4898, %v4998
        %v5031 = vmul.f32 %v4900, %v4999
        %v5032 = vmul.f32 %v4902, %v5000
        %v5033 = vmul.f32 %v4904, %v5001
        %v5034 = vmul.f32 %v4906, %v5002
        %v5035 = vpack.c.bf16 %v5004, %v5003
        %v5036 = vpack.c.bf16 %v5006, %v5005
        %v5037 = vpack.c.bf16 %v5008, %v5007
        %v5038 = vpack.c.bf16 %v5010, %v5009
        %v5039 = vpack.c.bf16 %v5012, %v5011
        %v5040 = vpack.c.bf16 %v5014, %v5013
        %v5041 = vpack.c.bf16 %v5016, %v5015
        %v5042 = vpack.c.bf16 %v5018, %v5017
        %v5043 = vpack.c.bf16 %v5020, %v5019
        %v5044 = vpack.c.bf16 %v5022, %v5021
        %v5045 = vpack.c.bf16 %v5024, %v5023
        %v5046 = vpack.c.bf16 %v5026, %v5025
        %v5047 = vpack.c.bf16 %v5028, %v5027
        %v5048 = vpack.c.bf16 %v5030, %v5029
        %v5049 = vpack.c.bf16 %v5032, %v5031
        %v5050 = vpack.c.bf16 %v5034, %v5033
        %v5051 = vpack.c.bf16 %v1486, %v1482
        %v5052 = vpack.c.bf16 %v1496, %v1492
        %v5053 = vpack.c.bf16 %v1506, %v1502
        %v5054 = vpack.c.bf16 %v1516, %v1512
        %v5055 = vpack.c.bf16 %v1526, %v1522
        %v5056 = vpack.c.bf16 %v1536, %v1532
        %v5057 = vpack.c.bf16 %v1546, %v1542
        %v5058 = vpack.c.bf16 %v1556, %v1552
        %v5059 = vpack.c.bf16 %v1488, %v1484
        %v5060 = vpack.c.bf16 %v1498, %v1494
        %v5061 = vpack.c.bf16 %v1508, %v1504
        %v5062 = vpack.c.bf16 %v1518, %v1514
        %v5063 = vpack.c.bf16 %v1528, %v1524
        %v5064 = vpack.c.bf16 %v1538, %v1534
        %v5065 = vpack.c.bf16 %v1548, %v1544
        %v5066 = vpack.c.bf16 %v1558, %v1554
        %v5067 = vadd.s32 %v1850, 4
        %v5068 = vadd.s32 %v1851, 4
        %v5069 = vadd.s32 %v1852, 4
        %v5070 = vadd.s32 %v1853, 4
        %v5071 = vadd.s32 %v1854, 4
        %v5072 = vadd.s32 %v1855, 4
        %v5073 = vadd.s32 %v1856, 4
        %v5074 = vadd.s32 %v1857, 4
        %v5075 = vadd.s32 %v1858, 4
        %v5076 = vadd.s32 %v1859, 4
        %v5077 = vadd.s32 %v1860, 4
        %v5078 = vadd.s32 %v1861, 4
        %v5079 = vadd.s32 %v1862, 4
        %v5080 = vadd.s32 %v1863, 4
        %v5081 = vadd.s32 %v1864, 4
        %v5082 = vadd.s32 %v1865, 4
        %vm5083 = vcmp.lt.s32.totalorder %v5067, 0
        %v5084 = vsub.s32 0, %v5067
        %v5085 = vsel %vm5083, %v5084, %v5067
        %v5086 = vshrl.u32 %v5085, 4
        %v5087 = vand.u32 %v5085, 15
        %v5088 = vsub.s32 0, %v5087
        %v5089 = vsel %vm5083, %v5088, %v5087
        %vm5090 = vcmp.lt.s32.totalorder %v5068, 0
        %v5091 = vsub.s32 0, %v5068
        %v5092 = vsel %vm5090, %v5091, %v5068
        %v5093 = vshrl.u32 %v5092, 4
        %v5094 = vand.u32 %v5092, 15
        %v5095 = vsub.s32 0, %v5094
        %v5096 = vsel %vm5090, %v5095, %v5094
        %vm5097 = vcmp.lt.s32.totalorder %v5069, 0
        %v5098 = vsub.s32 0, %v5069
        %v5099 = vsel %vm5097, %v5098, %v5069
        %v5100 = vshrl.u32 %v5099, 4
        %v5101 = vand.u32 %v5099, 15
        %v5102 = vsub.s32 0, %v5101
        %v5103 = vsel %vm5097, %v5102, %v5101
        %vm5104 = vcmp.lt.s32.totalorder %v5070, 0
        %v5105 = vsub.s32 0, %v5070
        %v5106 = vsel %vm5104, %v5105, %v5070
        %v5107 = vshrl.u32 %v5106, 4
        %v5108 = vand.u32 %v5106, 15
        %v5109 = vsub.s32 0, %v5108
        %v5110 = vsel %vm5104, %v5109, %v5108
        %vm5111 = vcmp.lt.s32.totalorder %v5071, 0
        %v5112 = vsub.s32 0, %v5071
        %v5113 = vsel %vm5111, %v5112, %v5071
        %v5114 = vshrl.u32 %v5113, 4
        %v5115 = vand.u32 %v5113, 15
        %v5116 = vsub.s32 0, %v5115
        %v5117 = vsel %vm5111, %v5116, %v5115
        %vm5118 = vcmp.lt.s32.totalorder %v5072, 0
        %v5119 = vsub.s32 0, %v5072
        %v5120 = vsel %vm5118, %v5119, %v5072
        %v5121 = vshrl.u32 %v5120, 4
        %v5122 = vand.u32 %v5120, 15
        %v5123 = vsub.s32 0, %v5122
        %v5124 = vsel %vm5118, %v5123, %v5122
        %vm5125 = vcmp.lt.s32.totalorder %v5073, 0
        %v5126 = vsub.s32 0, %v5073
        %v5127 = vsel %vm5125, %v5126, %v5073
        %v5128 = vshrl.u32 %v5127, 4
        %v5129 = vand.u32 %v5127, 15
        %v5130 = vsub.s32 0, %v5129
        %v5131 = vsel %vm5125, %v5130, %v5129
        %vm5132 = vcmp.lt.s32.totalorder %v5074, 0
        %v5133 = vsub.s32 0, %v5074
        %v5134 = vsel %vm5132, %v5133, %v5074
        %v5135 = vshrl.u32 %v5134, 4
        %v5136 = vand.u32 %v5134, 15
        %v5137 = vsub.s32 0, %v5136
        %v5138 = vsel %vm5132, %v5137, %v5136
        %vm5139 = vcmp.lt.s32.totalorder %v5075, 0
        %v5140 = vsub.s32 0, %v5075
        %v5141 = vsel %vm5139, %v5140, %v5075
        %v5142 = vshrl.u32 %v5141, 4
        %v5143 = vand.u32 %v5141, 15
        %v5144 = vsub.s32 0, %v5143
        %v5145 = vsel %vm5139, %v5144, %v5143
        %vm5146 = vcmp.lt.s32.totalorder %v5076, 0
        %v5147 = vsub.s32 0, %v5076
        %v5148 = vsel %vm5146, %v5147, %v5076
        %v5149 = vshrl.u32 %v5148, 4
        %v5150 = vand.u32 %v5148, 15
        %v5151 = vsub.s32 0, %v5150
        %v5152 = vsel %vm5146, %v5151, %v5150
        %vm5153 = vcmp.lt.s32.totalorder %v5077, 0
        %v5154 = vsub.s32 0, %v5077
        %v5155 = vsel %vm5153, %v5154, %v5077
        %v5156 = vshrl.u32 %v5155, 4
        %v5157 = vand.u32 %v5155, 15
        %v5158 = vsub.s32 0, %v5157
        %v5159 = vsel %vm5153, %v5158, %v5157
        %vm5160 = vcmp.lt.s32.totalorder %v5078, 0
        %v5161 = vsub.s32 0, %v5078
        %v5162 = vsel %vm5160, %v5161, %v5078
        %v5163 = vshrl.u32 %v5162, 4
        %v5164 = vand.u32 %v5162, 15
        %v5165 = vsub.s32 0, %v5164
        %v5166 = vsel %vm5160, %v5165, %v5164
        %vm5167 = vcmp.lt.s32.totalorder %v5079, 0
        %v5168 = vsub.s32 0, %v5079
        %v5169 = vsel %vm5167, %v5168, %v5079
        %v5170 = vshrl.u32 %v5169, 4
        %v5171 = vand.u32 %v5169, 15
        %v5172 = vsub.s32 0, %v5171
        %v5173 = vsel %vm5167, %v5172, %v5171
        %vm5174 = vcmp.lt.s32.totalorder %v5080, 0
        %v5175 = vsub.s32 0, %v5080
        %v5176 = vsel %vm5174, %v5175, %v5080
        %v5177 = vshrl.u32 %v5176, 4
        %v5178 = vand.u32 %v5176, 15
        %v5179 = vsub.s32 0, %v5178
        %v5180 = vsel %vm5174, %v5179, %v5178
        %vm5181 = vcmp.lt.s32.totalorder %v5081, 0
        %v5182 = vsub.s32 0, %v5081
        %v5183 = vsel %vm5181, %v5182, %v5081
        %v5184 = vshrl.u32 %v5183, 4
        %v5185 = vand.u32 %v5183, 15
        %v5186 = vsub.s32 0, %v5185
        %v5187 = vsel %vm5181, %v5186, %v5185
        %vm5188 = vcmp.lt.s32.totalorder %v5082, 0
        %v5189 = vsub.s32 0, %v5082
        %v5190 = vsel %vm5188, %v5189, %v5082
        %v5191 = vshrl.u32 %v5190, 4
        %v5192 = vand.u32 %v5190, 15
        %v5193 = vsub.s32 0, %v5192
        %v5194 = vsel %vm5188, %v5193, %v5192
        %vm5195 = vcmp.ne.s32.totalorder %v5089, 0
        %vm5196 = vcmp.ne.s32.totalorder %v5096, 0
        %vm5197 = vcmp.ne.s32.totalorder %v5103, 0
        %vm5198 = vcmp.ne.s32.totalorder %v5110, 0
        %vm5199 = vcmp.ne.s32.totalorder %v5117, 0
        %vm5200 = vcmp.ne.s32.totalorder %v5124, 0
        %vm5201 = vcmp.ne.s32.totalorder %v5131, 0
        %vm5202 = vcmp.ne.s32.totalorder %v5138, 0
        %vm5203 = vcmp.ne.s32.totalorder %v5145, 0
        %vm5204 = vcmp.ne.s32.totalorder %v5152, 0
        %vm5205 = vcmp.ne.s32.totalorder %v5159, 0
        %vm5206 = vcmp.ne.s32.totalorder %v5166, 0
        %vm5207 = vcmp.ne.s32.totalorder %v5173, 0
        %vm5208 = vcmp.ne.s32.totalorder %v5180, 0
        %vm5209 = vcmp.ne.s32.totalorder %v5187, 0
        %vm5210 = vcmp.ne.s32.totalorder %v5194, 0
        %vm5211 = vcmp.lt.s32.totalorder %v5089, 0
        %vm5212 = vcmp.lt.s32.totalorder %v5096, 0
        %vm5213 = vcmp.lt.s32.totalorder %v5103, 0
        %vm5214 = vcmp.lt.s32.totalorder %v5110, 0
        %vm5215 = vcmp.lt.s32.totalorder %v5117, 0
        %vm5216 = vcmp.lt.s32.totalorder %v5124, 0
        %vm5217 = vcmp.lt.s32.totalorder %v5131, 0
        %vm5218 = vcmp.lt.s32.totalorder %v5138, 0
        %vm5219 = vcmp.lt.s32.totalorder %v5145, 0
        %vm5220 = vcmp.lt.s32.totalorder %v5152, 0
        %vm5221 = vcmp.lt.s32.totalorder %v5159, 0
        %vm5222 = vcmp.lt.s32.totalorder %v5166, 0
        %vm5223 = vcmp.lt.s32.totalorder %v5173, 0
        %vm5224 = vcmp.lt.s32.totalorder %v5180, 0
        %vm5225 = vcmp.lt.s32.totalorder %v5187, 0
        %vm5226 = vcmp.lt.s32.totalorder %v5194, 0
        %vm5227 = vmand %vm5211, %vm5195
        %vm5228 = vmand %vm5212, %vm5196
        %vm5229 = vmand %vm5213, %vm5197
        %vm5230 = vmand %vm5214, %vm5198
        %vm5231 = vmand %vm5215, %vm5199
        %vm5232 = vmand %vm5216, %vm5200
        %vm5233 = vmand %vm5217, %vm5201
        %vm5234 = vmand %vm5218, %vm5202
        %vm5235 = vmand %vm5219, %vm5203
        %vm5236 = vmand %vm5220, %vm5204
        %vm5237 = vmand %vm5221, %vm5205
        %vm5238 = vmand %vm5222, %vm5206
        %vm5239 = vmand %vm5223, %vm5207
        %vm5240 = vmand %vm5224, %vm5208
        %vm5241 = vmand %vm5225, %vm5209
        %vm5242 = vmand %vm5226, %vm5210
        %v5243 = vadd.s32 %v5089, 16
        %v5244 = vadd.s32 %v5096, 16
        %v5245 = vadd.s32 %v5103, 16
        %v5246 = vadd.s32 %v5110, 16
        %v5247 = vadd.s32 %v5117, 16
        %v5248 = vadd.s32 %v5124, 16
        %v5249 = vadd.s32 %v5131, 16
        %v5250 = vadd.s32 %v5138, 16
        %v5251 = vadd.s32 %v5145, 16
        %v5252 = vadd.s32 %v5152, 16
        %v5253 = vadd.s32 %v5159, 16
        %v5254 = vadd.s32 %v5166, 16
        %v5255 = vadd.s32 %v5173, 16
        %v5256 = vadd.s32 %v5180, 16
        %v5257 = vadd.s32 %v5187, 16
        %v5258 = vadd.s32 %v5194, 16
        %v5259 = vsel %vm5227, %v5243, %v5089
        %v5260 = vsel %vm5228, %v5244, %v5096
        %v5261 = vsel %vm5229, %v5245, %v5103
        %v5262 = vsel %vm5230, %v5246, %v5110
        %v5263 = vsel %vm5231, %v5247, %v5117
        %v5264 = vsel %vm5232, %v5248, %v5124
        %v5265 = vsel %vm5233, %v5249, %v5131
        %v5266 = vsel %vm5234, %v5250, %v5138
        %v5267 = vsel %vm5235, %v5251, %v5145
        %v5268 = vsel %vm5236, %v5252, %v5152
        %v5269 = vsel %vm5237, %v5253, %v5159
        %v5270 = vsel %vm5238, %v5254, %v5166
        %v5271 = vsel %vm5239, %v5255, %v5173
        %v5272 = vsel %vm5240, %v5256, %v5180
        %v5273 = vsel %vm5241, %v5257, %v5187
        %v5274 = vsel %vm5242, %v5258, %v5194
        %vm5275 = vcmp.eq.s32.totalorder %v5259, %v1867
        %vm5276 = vcmp.eq.s32.totalorder %v5260, %v1867
        %vm5277 = vcmp.eq.s32.totalorder %v5261, %v1867
        %vm5278 = vcmp.eq.s32.totalorder %v5262, %v1867
        %vm5279 = vcmp.eq.s32.totalorder %v5263, %v1867
        %vm5280 = vcmp.eq.s32.totalorder %v5264, %v1867
        %vm5281 = vcmp.eq.s32.totalorder %v5265, %v1867
        %vm5282 = vcmp.eq.s32.totalorder %v5266, %v1867
        %vm5283 = vcmp.eq.s32.totalorder %v5267, %v1867
        %vm5284 = vcmp.eq.s32.totalorder %v5268, %v1867
        %vm5285 = vcmp.eq.s32.totalorder %v5269, %v1867
        %vm5286 = vcmp.eq.s32.totalorder %v5270, %v1867
        %vm5287 = vcmp.eq.s32.totalorder %v5271, %v1867
        %vm5288 = vcmp.eq.s32.totalorder %v5272, %v1867
        %vm5289 = vcmp.eq.s32.totalorder %v5273, %v1867
        %vm5290 = vcmp.eq.s32.totalorder %v5274, %v1867
        %v5291 = vsel %vm5275, 1, 0
        %v5292 = vsel %vm5276, 1, 0
        %v5293 = vsel %vm5277, 1, 0
        %v5294 = vsel %vm5278, 1, 0
        %v5295 = vsel %vm5279, 1, 0
        %v5296 = vsel %vm5280, 1, 0
        %v5297 = vsel %vm5281, 1, 0
        %v5298 = vsel %vm5282, 1, 0
        %v5299 = vsel %vm5283, 1, 0
        %v5300 = vsel %vm5284, 1, 0
        %v5301 = vsel %vm5285, 1, 0
        %v5302 = vsel %vm5286, 1, 0
        %v5303 = vsel %vm5287, 1, 0
        %v5304 = vsel %vm5288, 1, 0
        %v5305 = vsel %vm5289, 1, 0
        %v5306 = vsel %vm5290, 1, 0
        %v5307 = vcvt.s32.f32 %v5291
        %v5308 = vcvt.s32.f32 %v5292
        %v5309 = vcvt.s32.f32 %v5293
        %v5310 = vcvt.s32.f32 %v5294
        %v5311 = vcvt.s32.f32 %v5295
        %v5312 = vcvt.s32.f32 %v5296
        %v5313 = vcvt.s32.f32 %v5297
        %v5314 = vcvt.s32.f32 %v5298
        %v5315 = vcvt.s32.f32 %v5299
        %v5316 = vcvt.s32.f32 %v5300
        %v5317 = vcvt.s32.f32 %v5301
        %v5318 = vcvt.s32.f32 %v5302
        %v5319 = vcvt.s32.f32 %v5303
        %v5320 = vcvt.s32.f32 %v5304
        %v5321 = vcvt.s32.f32 %v5305
        %v5322 = vcvt.s32.f32 %v5306
        %v5323 = vpack.c.bf16 %v5308, %v5307
        %v5324 = vpack.c.bf16 %v5310, %v5309
        %v5325 = vpack.c.bf16 %v5312, %v5311
        %v5326 = vpack.c.bf16 %v5314, %v5313
        %v5327 = vpack.c.bf16 %v5316, %v5315
        %v5328 = vpack.c.bf16 %v5318, %v5317
        %v5329 = vpack.c.bf16 %v5320, %v5319
        %v5330 = vpack.c.bf16 %v5322, %v5321
        %v5331 = vmul.f32 %v5003, %v1068
        %v5332 = vmul.f32 %v5004, %v1069
        %v5333 = vmul.f32 %v5005, %v1070
        %v5334 = vmul.f32 %v5006, %v1071
        %v5335 = vmul.f32 %v5007, %v1072
        %v5336 = vmul.f32 %v5008, %v1073
        %v5337 = vmul.f32 %v5009, %v1074
        %v5338 = vmul.f32 %v5010, %v1075
        %v5339 = vmul.f32 %v5011, %v1076
        %v5340 = vmul.f32 %v5012, %v1077
        %v5341 = vmul.f32 %v5013, %v1078
        %v5342 = vmul.f32 %v5014, %v1079
        %v5343 = vmul.f32 %v5015, %v1080
        %v5344 = vmul.f32 %v5016, %v1081
        %v5345 = vmul.f32 %v5017, %v1082
        %v5346 = vmul.f32 %v5018, %v1083
        %v5347 = vmul.f32 %v5019, %v1068
        %v5348 = vmul.f32 %v5020, %v1069
        %v5349 = vmul.f32 %v5021, %v1070
        %v5350 = vmul.f32 %v5022, %v1071
        %v5351 = vmul.f32 %v5023, %v1072
        %v5352 = vmul.f32 %v5024, %v1073
        %v5353 = vmul.f32 %v5025, %v1074
        %v5354 = vmul.f32 %v5026, %v1075
        %v5355 = vmul.f32 %v5027, %v1076
        %v5356 = vmul.f32 %v5028, %v1077
        %v5357 = vmul.f32 %v5029, %v1078
        %v5358 = vmul.f32 %v5030, %v1079
        %v5359 = vmul.f32 %v5031, %v1080
        %v5360 = vmul.f32 %v5032, %v1081
        %v5361 = vmul.f32 %v5033, %v1082
        %v5362 = vmul.f32 %v5034, %v1083
        %v5363 = vpack.c.bf16 %v5332, %v5331
        %v5364 = vpack.c.bf16 %v5334, %v5333
        %v5365 = vpack.c.bf16 %v5336, %v5335
        %v5366 = vpack.c.bf16 %v5338, %v5337
        %v5367 = vpack.c.bf16 %v5340, %v5339
        %v5368 = vpack.c.bf16 %v5342, %v5341
        %v5369 = vpack.c.bf16 %v5344, %v5343
        %v5370 = vpack.c.bf16 %v5346, %v5345
        %v5371 = vpack.c.bf16 %v5348, %v5347
        %v5372 = vpack.c.bf16 %v5350, %v5349
        %v5373 = vpack.c.bf16 %v5352, %v5351
        %v5374 = vpack.c.bf16 %v5354, %v5353
        %v5375 = vpack.c.bf16 %v5356, %v5355
        %v5376 = vpack.c.bf16 %v5358, %v5357
        %v5377 = vpack.c.bf16 %v5360, %v5359
        %v5378 = vpack.c.bf16 %v5362, %v5361
        %5379 = vmatprep.subr.bf16.mxu0 0
        %5380 = vmatpush1.bf16.msra.mxu0 %v5323
        %5381 = vmatprep.subr.bf16.mxu0 0
        %5382 = vmatpush1.bf16.msra.mxu0 %v5324
        %5383 = vmatprep.subr.bf16.mxu0 0
        %5384 = vmatpush1.bf16.msra.mxu0 %v5325
        %5385 = vmatprep.subr.bf16.mxu0 0
        %5386 = vmatpush1.bf16.msra.mxu0 %v5326
        %5387 = vmatprep.subr.bf16.mxu0 0
        %5388 = vmatpush1.bf16.msra.mxu0 %v5327
        %5389 = vmatprep.subr.bf16.mxu0 0
        %5390 = vmatpush1.bf16.msra.mxu0 %v5328
        %5391 = vmatprep.subr.bf16.mxu0 0
        %5392 = vmatpush1.bf16.msra.mxu0 %v5329
        %5393 = vmatprep.subr.bf16.mxu0 0
        %5394 = vmatpush1.bf16.msra.mxu0 %v5330
        %5395 = vmatprep.subr.bf16.mxu0 0
        %5396 = vmatpush1.bf16.msra.mxu0 0
        %5397 = vmatprep.subr.bf16.mxu0 0
        %5398 = vmatpush1.bf16.msra.mxu0 0
        %5399 = vmatprep.subr.bf16.mxu0 0
        %5400 = vmatpush1.bf16.msra.mxu0 0
        %5401 = vmatprep.subr.bf16.mxu0 0
        %5402 = vmatpush1.bf16.msra.mxu0 0
        %5403 = vmatprep.subr.bf16.mxu0 0
        %5404 = vmatpush1.bf16.msra.mxu0 0
        %5405 = vmatprep.subr.bf16.mxu0 0
        %5406 = vmatpush1.bf16.msra.mxu0 0
        %5407 = vmatprep.subr.bf16.mxu0 0
        %5408 = vmatpush1.bf16.msra.mxu0 0
        %5409 = vmatprep.subr.bf16.mxu0 0
        %5410 = vmatpush1.bf16.msra.mxu0 0
        %5411 = vmatprep.mubr.bf16.mxu0 0
        %5412 = vmatmul.mubr.bf16.gmra.mrb[0].mxu0 %v5363
        %v5413 = vpop.f32.mrb[0].mxu0
        %v5414 = vadd.f32 0.0, %v5413
        %v5415 = vpop.f32.mrb[0].mxu0
        %v5416 = vpop.f32.mrb[0].mxu0
        %v5417 = vadd.f32 0.0, %v5416
        %v5418 = vpop.f32.mrb[0].mxu0
        %5419 = vmatprep.mubr.bf16.mxu0 0
        %5420 = vmatmul.mubr.bf16.gmra.mrb[0].mxu0 %v5364
        %v5421 = vpop.f32.mrb[0].mxu0
        %v5422 = vadd.f32 0.0, %v5421
        %v5423 = vpop.f32.mrb[0].mxu0
        %v5424 = vpop.f32.mrb[0].mxu0
        %v5425 = vadd.f32 0.0, %v5424
        %v5426 = vpop.f32.mrb[0].mxu0
        %5427 = vmatprep.mubr.bf16.mxu0 0
        %5428 = vmatmul.mubr.bf16.gmra.mrb[0].mxu0 %v5365
        %v5429 = vpop.f32.mrb[0].mxu0
        %v5430 = vadd.f32 0.0, %v5429
        %v5431 = vpop.f32.mrb[0].mxu0
        %v5432 = vpop.f32.mrb[0].mxu0
        %v5433 = vadd.f32 0.0, %v5432
        %v5434 = vpop.f32.mrb[0].mxu0
        %5435 = vmatprep.mubr.bf16.mxu0 0
        %5436 = vmatmul.mubr.bf16.gmra.mrb[0].mxu0 %v5366
        %v5437 = vpop.f32.mrb[0].mxu0
        %v5438 = vadd.f32 0.0, %v5437
        %v5439 = vpop.f32.mrb[0].mxu0
        %v5440 = vpop.f32.mrb[0].mxu0
        %v5441 = vadd.f32 0.0, %v5440
        %v5442 = vpop.f32.mrb[0].mxu0
        %5443 = vmatprep.mubr.bf16.mxu0 0
        %5444 = vmatmul.mubr.bf16.gmra.mrb[0].mxu0 %v5367
        %v5445 = vpop.f32.mrb[0].mxu0
        %v5446 = vadd.f32 0.0, %v5445
        %v5447 = vpop.f32.mrb[0].mxu0
        %v5448 = vpop.f32.mrb[0].mxu0
        %v5449 = vadd.f32 0.0, %v5448
        %v5450 = vpop.f32.mrb[0].mxu0
        %5451 = vmatprep.mubr.bf16.mxu0 0
        %5452 = vmatmul.mubr.bf16.gmra.mrb[0].mxu0 %v5368
        %v5453 = vpop.f32.mrb[0].mxu0
        %v5454 = vadd.f32 0.0, %v5453
        %v5455 = vpop.f32.mrb[0].mxu0
        %v5456 = vpop.f32.mrb[0].mxu0
        %v5457 = vadd.f32 0.0, %v5456
        %v5458 = vpop.f32.mrb[0].mxu0
        %5459 = vmatprep.mubr.bf16.mxu0 0
        %5460 = vmatmul.mubr.bf16.gmra.mrb[0].mxu0 %v5369
        %v5461 = vpop.f32.mrb[0].mxu0
        %v5462 = vadd.f32 0.0, %v5461
        %v5463 = vpop.f32.mrb[0].mxu0
        %v5464 = vpop.f32.mrb[0].mxu0
        %v5465 = vadd.f32 0.0, %v5464
        %v5466 = vpop.f32.mrb[0].mxu0
        %5467 = vmatprep.mubr.bf16.mxu0 0
        %5468 = vmatmul.mubr.bf16.gmra.mrb[0].mxu0 %v5370
        %v5469 = vpop.f32.mrb[0].mxu0
        %v5470 = vadd.f32 0.0, %v5469
        %v5471 = vpop.f32.mrb[0].mxu0
        %v5472 = vpop.f32.mrb[0].mxu0
        %v5473 = vadd.f32 0.0, %v5472
        %v5474 = vpop.f32.mrb[0].mxu0
        %5475 = vmatprep.mubr.bf16.mxu0 0
        %5476 = vmatmul.mubr.bf16.gmra.mrb[0].mxu0 %v5371
        %v5477 = vpop.f32.mrb[0].mxu0
        %v5478 = vadd.f32 0.0, %v5477
        %v5479 = vpop.f32.mrb[0].mxu0
        %v5480 = vpop.f32.mrb[0].mxu0
        %v5481 = vadd.f32 0.0, %v5480
        %v5482 = vpop.f32.mrb[0].mxu0
        %5483 = vmatprep.mubr.bf16.mxu0 0
        %5484 = vmatmul.mubr.bf16.gmra.mrb[0].mxu0 %v5372
        %v5485 = vpop.f32.mrb[0].mxu0
        %v5486 = vadd.f32 0.0, %v5485
        %v5487 = vpop.f32.mrb[0].mxu0
        %v5488 = vpop.f32.mrb[0].mxu0
        %v5489 = vadd.f32 0.0, %v5488
        %v5490 = vpop.f32.mrb[0].mxu0
        %5491 = vmatprep.mubr.bf16.mxu0 0
        %5492 = vmatmul.mubr.bf16.gmra.mrb[0].mxu0 %v5373
        %v5493 = vpop.f32.mrb[0].mxu0
        %v5494 = vadd.f32 0.0, %v5493
        %v5495 = vpop.f32.mrb[0].mxu0
        %v5496 = vpop.f32.mrb[0].mxu0
        %v5497 = vadd.f32 0.0, %v5496
        %v5498 = vpop.f32.mrb[0].mxu0
        %5499 = vmatprep.mubr.bf16.mxu0 0
        %5500 = vmatmul.mubr.bf16.gmra.mrb[0].mxu0 %v5374
        %v5501 = vpop.f32.mrb[0].mxu0
        %v5502 = vadd.f32 0.0, %v5501
        %v5503 = vpop.f32.mrb[0].mxu0
        %v5504 = vpop.f32.mrb[0].mxu0
        %v5505 = vadd.f32 0.0, %v5504
        %v5506 = vpop.f32.mrb[0].mxu0
        %5507 = vmatprep.mubr.bf16.mxu0 0
        %5508 = vmatmul.mubr.bf16.gmra.mrb[0].mxu0 %v5375
        %v5509 = vpop.f32.mrb[0].mxu0
        %v5510 = vadd.f32 0.0, %v5509
        %v5511 = vpop.f32.mrb[0].mxu0
        %v5512 = vpop.f32.mrb[0].mxu0
        %v5513 = vadd.f32 0.0, %v5512
        %v5514 = vpop.f32.mrb[0].mxu0
        %5515 = vmatprep.mubr.bf16.mxu0 0
        %5516 = vmatmul.mubr.bf16.gmra.mrb[0].mxu0 %v5376
        %v5517 = vpop.f32.mrb[0].mxu0
        %v5518 = vadd.f32 0.0, %v5517
        %v5519 = vpop.f32.mrb[0].mxu0
        %v5520 = vpop.f32.mrb[0].mxu0
        %v5521 = vadd.f32 0.0, %v5520
        %v5522 = vpop.f32.mrb[0].mxu0
        %5523 = vmatprep.mubr.bf16.mxu0 0
        %5524 = vmatmul.mubr.bf16.gmra.mrb[0].mxu0 %v5377
        %v5525 = vpop.f32.mrb[0].mxu0
        %v5526 = vadd.f32 0.0, %v5525
        %v5527 = vpop.f32.mrb[0].mxu0
        %v5528 = vpop.f32.mrb[0].mxu0
        %v5529 = vadd.f32 0.0, %v5528
        %v5530 = vpop.f32.mrb[0].mxu0
        %5531 = vmatprep.mubr.bf16.mxu0 0
        %5532 = vmatmul.mubr.bf16.gmra.mrb[0].mxu0 %v5378
        %v5533 = vpop.f32.mrb[0].mxu0
        %v5534 = vadd.f32 0.0, %v5533
        %v5535 = vpop.f32.mrb[0].mxu0
        %v5536 = vpop.f32.mrb[0].mxu0
        %v5537 = vadd.f32 0.0, %v5536
        %v5538 = vpop.f32.mrb[0].mxu0
        %5539 = vdwg.mxu0
        %v5540 = vmul.f32 %v5414, %v2108
        %v5541 = vmul.f32 %v5417, %v2109
        %v5542 = vmul.f32 %v5422, %v2110
        %v5543 = vmul.f32 %v5425, %v2111
        %v5544 = vmul.f32 %v5430, %v2112
        %v5545 = vmul.f32 %v5433, %v2113
        %v5546 = vmul.f32 %v5438, %v2114
        %v5547 = vmul.f32 %v5441, %v2115
        %v5548 = vmul.f32 %v5446, %v2116
        %v5549 = vmul.f32 %v5449, %v2117
        %v5550 = vmul.f32 %v5454, %v2118
        %v5551 = vmul.f32 %v5457, %v2119
        %v5552 = vmul.f32 %v5462, %v2120
        %v5553 = vmul.f32 %v5465, %v2121
        %v5554 = vmul.f32 %v5470, %v2122
        %v5555 = vmul.f32 %v5473, %v2123
        %v5556 = vmul.f32 %v5478, %v2108
        %v5557 = vmul.f32 %v5481, %v2109
        %v5558 = vmul.f32 %v5486, %v2110
        %v5559 = vmul.f32 %v5489, %v2111
        %v5560 = vmul.f32 %v5494, %v2112
        %v5561 = vmul.f32 %v5497, %v2113
        %v5562 = vmul.f32 %v5502, %v2114
        %v5563 = vmul.f32 %v5505, %v2115
        %v5564 = vmul.f32 %v5510, %v2116
        %v5565 = vmul.f32 %v5513, %v2117
        %v5566 = vmul.f32 %v5518, %v2118
        %v5567 = vmul.f32 %v5521, %v2119
        %v5568 = vmul.f32 %v5526, %v2120
        %v5569 = vmul.f32 %v5529, %v2121
        %v5570 = vmul.f32 %v5534, %v2122
        %v5571 = vmul.f32 %v5537, %v2123
        %v5572 = vsel %vm4272, %v5540, 0.0
        %5573 = vadd.xlane.f32.xlu0 %v5572
        %v5574 = vpop.xlane.xlu0 %5573
        %v5575 = vsel %vm4272, %v5541, 0.0
        %5576 = vadd.xlane.f32.xlu0 %v5575
        %v5577 = vpop.xlane.xlu0 %5576
        %v5578 = vsel %vm4272, %v5542, 0.0
        %5579 = vadd.xlane.f32.xlu0 %v5578
        %v5580 = vpop.xlane.xlu0 %5579
        %v5581 = vsel %vm4272, %v5543, 0.0
        %5582 = vadd.xlane.f32.xlu0 %v5581
        %v5583 = vpop.xlane.xlu0 %5582
        %v5584 = vsel %vm4272, %v5544, 0.0
        %5585 = vadd.xlane.f32.xlu0 %v5584
        %v5586 = vpop.xlane.xlu0 %5585
        %v5587 = vsel %vm4272, %v5545, 0.0
        %5588 = vadd.xlane.f32.xlu0 %v5587
        %v5589 = vpop.xlane.xlu0 %5588
        %v5590 = vsel %vm4272, %v5546, 0.0
        %5591 = vadd.xlane.f32.xlu0 %v5590
        %v5592 = vpop.xlane.xlu0 %5591
        %v5593 = vsel %vm4272, %v5547, 0.0
        %5594 = vadd.xlane.f32.xlu0 %v5593
        %v5595 = vpop.xlane.xlu0 %5594
        %v5596 = vsel %vm4272, %v5548, 0.0
        %5597 = vadd.xlane.f32.xlu0 %v5596
        %v5598 = vpop.xlane.xlu0 %5597
        %v5599 = vsel %vm4272, %v5549, 0.0
        %5600 = vadd.xlane.f32.xlu0 %v5599
        %v5601 = vpop.xlane.xlu0 %5600
        %v5602 = vsel %vm4272, %v5550, 0.0
        %5603 = vadd.xlane.f32.xlu0 %v5602
        %v5604 = vpop.xlane.xlu0 %5603
        %v5605 = vsel %vm4272, %v5551, 0.0
        %5606 = vadd.xlane.f32.xlu0 %v5605
        %v5607 = vpop.xlane.xlu0 %5606
        %v5608 = vsel %vm4272, %v5552, 0.0
        %5609 = vadd.xlane.f32.xlu0 %v5608
        %v5610 = vpop.xlane.xlu0 %5609
        %v5611 = vsel %vm4272, %v5553, 0.0
        %5612 = vadd.xlane.f32.xlu0 %v5611
        %v5613 = vpop.xlane.xlu0 %5612
        %v5614 = vsel %vm4272, %v5554, 0.0
        %5615 = vadd.xlane.f32.xlu0 %v5614
        %v5616 = vpop.xlane.xlu0 %5615
        %v5617 = vsel %vm4272, %v5555, 0.0
        %5618 = vadd.xlane.f32.xlu0 %v5617
        %v5619 = vpop.xlane.xlu0 %5618
        %v5620 = vsel %vm4272, %v5556, 0.0
        %5621 = vadd.xlane.f32.xlu0 %v5620
        %v5622 = vpop.xlane.xlu0 %5621
        %v5623 = vsel %vm4272, %v5557, 0.0
        %5624 = vadd.xlane.f32.xlu0 %v5623
        %v5625 = vpop.xlane.xlu0 %5624
        %v5626 = vsel %vm4272, %v5558, 0.0
        %5627 = vadd.xlane.f32.xlu0 %v5626
        %v5628 = vpop.xlane.xlu0 %5627
        %v5629 = vsel %vm4272, %v5559, 0.0
        %5630 = vadd.xlane.f32.xlu0 %v5629
        %v5631 = vpop.xlane.xlu0 %5630
        %v5632 = vsel %vm4272, %v5560, 0.0
        %5633 = vadd.xlane.f32.xlu0 %v5632
        %v5634 = vpop.xlane.xlu0 %5633
        %v5635 = vsel %vm4272, %v5561, 0.0
        %5636 = vadd.xlane.f32.xlu0 %v5635
        %v5637 = vpop.xlane.xlu0 %5636
        %v5638 = vsel %vm4272, %v5562, 0.0
        %5639 = vadd.xlane.f32.xlu0 %v5638
        %v5640 = vpop.xlane.xlu0 %5639
        %v5641 = vsel %vm4272, %v5563, 0.0
        %5642 = vadd.xlane.f32.xlu0 %v5641
        %v5643 = vpop.xlane.xlu0 %5642
        %v5644 = vsel %vm4272, %v5564, 0.0
        %5645 = vadd.xlane.f32.xlu0 %v5644
        %v5646 = vpop.xlane.xlu0 %5645
        %v5647 = vsel %vm4272, %v5565, 0.0
        %5648 = vadd.xlane.f32.xlu0 %v5647
        %v5649 = vpop.xlane.xlu0 %5648
        %v5650 = vsel %vm4272, %v5566, 0.0
        %5651 = vadd.xlane.f32.xlu0 %v5650
        %v5652 = vpop.xlane.xlu0 %5651
        %v5653 = vsel %vm4272, %v5567, 0.0
        %5654 = vadd.xlane.f32.xlu0 %v5653
        %v5655 = vpop.xlane.xlu0 %5654
        %v5656 = vsel %vm4272, %v5568, 0.0
        %5657 = vadd.xlane.f32.xlu0 %v5656
        %v5658 = vpop.xlane.xlu0 %5657
        %v5659 = vsel %vm4272, %v5569, 0.0
        %5660 = vadd.xlane.f32.xlu0 %v5659
        %v5661 = vpop.xlane.xlu0 %5660
        %v5662 = vsel %vm4272, %v5570, 0.0
        %5663 = vadd.xlane.f32.xlu0 %v5662
        %v5664 = vpop.xlane.xlu0 %5663
        %v5665 = vsel %vm4272, %v5571, 0.0
        %5666 = vadd.xlane.f32.xlu0 %v5665
        %v5667 = vpop.xlane.xlu0 %5666
        %v5668 = vmul.f32 %v5414, %v2156
        %v5669 = vmul.f32 %v5417, %v2157
        %v5670 = vmul.f32 %v5422, %v2158
        %v5671 = vmul.f32 %v5425, %v2159
        %v5672 = vmul.f32 %v5430, %v2160
        %v5673 = vmul.f32 %v5433, %v2161
        %v5674 = vmul.f32 %v5438, %v2162
        %v5675 = vmul.f32 %v5441, %v2163
        %v5676 = vmul.f32 %v5446, %v2164
        %v5677 = vmul.f32 %v5449, %v2165
        %v5678 = vmul.f32 %v5454, %v2166
        %v5679 = vmul.f32 %v5457, %v2167
        %v5680 = vmul.f32 %v5462, %v2168
        %v5681 = vmul.f32 %v5465, %v2169
        %v5682 = vmul.f32 %v5470, %v2170
        %v5683 = vmul.f32 %v5473, %v2171
        %v5684 = vmul.f32 %v5478, %v2156
        %v5685 = vmul.f32 %v5481, %v2157
        %v5686 = vmul.f32 %v5486, %v2158
        %v5687 = vmul.f32 %v5489, %v2159
        %v5688 = vmul.f32 %v5494, %v2160
        %v5689 = vmul.f32 %v5497, %v2161
        %v5690 = vmul.f32 %v5502, %v2162
        %v5691 = vmul.f32 %v5505, %v2163
        %v5692 = vmul.f32 %v5510, %v2164
        %v5693 = vmul.f32 %v5513, %v2165
        %v5694 = vmul.f32 %v5518, %v2166
        %v5695 = vmul.f32 %v5521, %v2167
        %v5696 = vmul.f32 %v5526, %v2168
        %v5697 = vmul.f32 %v5529, %v2169
        %v5698 = vmul.f32 %v5534, %v2170
        %v5699 = vmul.f32 %v5537, %v2171
        %v5700 = vsel %vm4272, %v5668, 0.0
        %5701 = vadd.xlane.f32.xlu0 %v5700
        %v5702 = vpop.xlane.xlu0 %5701
        %v5703 = vsel %vm4272, %v5669, 0.0
        %5704 = vadd.xlane.f32.xlu0 %v5703
        %v5705 = vpop.xlane.xlu0 %5704
        %v5706 = vsel %vm4272, %v5670, 0.0
        %5707 = vadd.xlane.f32.xlu0 %v5706
        %v5708 = vpop.xlane.xlu0 %5707
        %v5709 = vsel %vm4272, %v5671, 0.0
        %5710 = vadd.xlane.f32.xlu0 %v5709
        %v5711 = vpop.xlane.xlu0 %5710
        %v5712 = vsel %vm4272, %v5672, 0.0
        %5713 = vadd.xlane.f32.xlu0 %v5712
        %v5714 = vpop.xlane.xlu0 %5713
        %v5715 = vsel %vm4272, %v5673, 0.0
        %5716 = vadd.xlane.f32.xlu0 %v5715
        %v5717 = vpop.xlane.xlu0 %5716
        %v5718 = vsel %vm4272, %v5674, 0.0
        %5719 = vadd.xlane.f32.xlu0 %v5718
        %v5720 = vpop.xlane.xlu0 %5719
        %v5721 = vsel %vm4272, %v5675, 0.0
        %5722 = vadd.xlane.f32.xlu0 %v5721
        %v5723 = vpop.xlane.xlu0 %5722
        %v5724 = vsel %vm4272, %v5676, 0.0
        %5725 = vadd.xlane.f32.xlu0 %v5724
        %v5726 = vpop.xlane.xlu0 %5725
        %v5727 = vsel %vm4272, %v5677, 0.0
        %5728 = vadd.xlane.f32.xlu0 %v5727
        %v5729 = vpop.xlane.xlu0 %5728
        %v5730 = vsel %vm4272, %v5678, 0.0
        %5731 = vadd.xlane.f32.xlu0 %v5730
        %v5732 = vpop.xlane.xlu0 %5731
        %v5733 = vsel %vm4272, %v5679, 0.0
        %5734 = vadd.xlane.f32.xlu0 %v5733
        %v5735 = vpop.xlane.xlu0 %5734
        %v5736 = vsel %vm4272, %v5680, 0.0
        %5737 = vadd.xlane.f32.xlu0 %v5736
        %v5738 = vpop.xlane.xlu0 %5737
        %v5739 = vsel %vm4272, %v5681, 0.0
        %5740 = vadd.xlane.f32.xlu0 %v5739
        %v5741 = vpop.xlane.xlu0 %5740
        %v5742 = vsel %vm4272, %v5682, 0.0
        %5743 = vadd.xlane.f32.xlu0 %v5742
        %v5744 = vpop.xlane.xlu0 %5743
        %v5745 = vsel %vm4272, %v5683, 0.0
        %5746 = vadd.xlane.f32.xlu0 %v5745
        %v5747 = vpop.xlane.xlu0 %5746
        %v5748 = vsel %vm4272, %v5684, 0.0
        %5749 = vadd.xlane.f32.xlu0 %v5748
        %v5750 = vpop.xlane.xlu0 %5749
        %v5751 = vsel %vm4272, %v5685, 0.0
        %5752 = vadd.xlane.f32.xlu0 %v5751
        %v5753 = vpop.xlane.xlu0 %5752
        %v5754 = vsel %vm4272, %v5686, 0.0
        %5755 = vadd.xlane.f32.xlu0 %v5754
        %v5756 = vpop.xlane.xlu0 %5755
        %v5757 = vsel %vm4272, %v5687, 0.0
        %5758 = vadd.xlane.f32.xlu0 %v5757
        %v5759 = vpop.xlane.xlu0 %5758
        %v5760 = vsel %vm4272, %v5688, 0.0
        %5761 = vadd.xlane.f32.xlu0 %v5760
        %v5762 = vpop.xlane.xlu0 %5761
        %v5763 = vsel %vm4272, %v5689, 0.0
        %5764 = vadd.xlane.f32.xlu0 %v5763
        %v5765 = vpop.xlane.xlu0 %5764
        %v5766 = vsel %vm4272, %v5690, 0.0
        %5767 = vadd.xlane.f32.xlu0 %v5766
        %v5768 = vpop.xlane.xlu0 %5767
        %v5769 = vsel %vm4272, %v5691, 0.0
        %5770 = vadd.xlane.f32.xlu0 %v5769
        %v5771 = vpop.xlane.xlu0 %5770
        %v5772 = vsel %vm4272, %v5692, 0.0
        %5773 = vadd.xlane.f32.xlu0 %v5772
        %v5774 = vpop.xlane.xlu0 %5773
        %v5775 = vsel %vm4272, %v5693, 0.0
        %5776 = vadd.xlane.f32.xlu0 %v5775
        %v5777 = vpop.xlane.xlu0 %5776
        %v5778 = vsel %vm4272, %v5694, 0.0
        %5779 = vadd.xlane.f32.xlu0 %v5778
        %v5780 = vpop.xlane.xlu0 %5779
        %v5781 = vsel %vm4272, %v5695, 0.0
        %5782 = vadd.xlane.f32.xlu0 %v5781
        %v5783 = vpop.xlane.xlu0 %5782
        %v5784 = vsel %vm4272, %v5696, 0.0
        %5785 = vadd.xlane.f32.xlu0 %v5784
        %v5786 = vpop.xlane.xlu0 %5785
        %v5787 = vsel %vm4272, %v5697, 0.0
        %5788 = vadd.xlane.f32.xlu0 %v5787
        %v5789 = vpop.xlane.xlu0 %5788
        %v5790 = vsel %vm4272, %v5698, 0.0
        %5791 = vadd.xlane.f32.xlu0 %v5790
        %v5792 = vpop.xlane.xlu0 %5791
        %v5793 = vsel %vm4272, %v5699, 0.0
        %5794 = vadd.xlane.f32.xlu0 %v5793
        %v5795 = vpop.xlane.xlu0 %5794
        %v5796 = vmul.f32 %v5414, %v2204
        %v5797 = vmul.f32 %v5417, %v2205
        %v5798 = vmul.f32 %v5422, %v2206
        %v5799 = vmul.f32 %v5425, %v2207
        %v5800 = vmul.f32 %v5430, %v2208
        %v5801 = vmul.f32 %v5433, %v2209
        %v5802 = vmul.f32 %v5438, %v2210
        %v5803 = vmul.f32 %v5441, %v2211
        %v5804 = vmul.f32 %v5446, %v2212
        %v5805 = vmul.f32 %v5449, %v2213
        %v5806 = vmul.f32 %v5454, %v2214
        %v5807 = vmul.f32 %v5457, %v2215
        %v5808 = vmul.f32 %v5462, %v2216
        %v5809 = vmul.f32 %v5465, %v2217
        %v5810 = vmul.f32 %v5470, %v2218
        %v5811 = vmul.f32 %v5473, %v2219
        %v5812 = vmul.f32 %v5478, %v2204
        %v5813 = vmul.f32 %v5481, %v2205
        %v5814 = vmul.f32 %v5486, %v2206
        %v5815 = vmul.f32 %v5489, %v2207
        %v5816 = vmul.f32 %v5494, %v2208
        %v5817 = vmul.f32 %v5497, %v2209
        %v5818 = vmul.f32 %v5502, %v2210
        %v5819 = vmul.f32 %v5505, %v2211
        %v5820 = vmul.f32 %v5510, %v2212
        %v5821 = vmul.f32 %v5513, %v2213
        %v5822 = vmul.f32 %v5518, %v2214
        %v5823 = vmul.f32 %v5521, %v2215
        %v5824 = vmul.f32 %v5526, %v2216
        %v5825 = vmul.f32 %v5529, %v2217
        %v5826 = vmul.f32 %v5534, %v2218
        %v5827 = vmul.f32 %v5537, %v2219
        %v5828 = vsel %vm4272, %v5796, 0.0
        %5829 = vadd.xlane.f32.xlu0 %v5828
        %v5830 = vpop.xlane.xlu0 %5829
        %v5831 = vsel %vm4272, %v5797, 0.0
        %5832 = vadd.xlane.f32.xlu0 %v5831
        %v5833 = vpop.xlane.xlu0 %5832
        %v5834 = vsel %vm4272, %v5798, 0.0
        %5835 = vadd.xlane.f32.xlu0 %v5834
        %v5836 = vpop.xlane.xlu0 %5835
        %v5837 = vsel %vm4272, %v5799, 0.0
        %5838 = vadd.xlane.f32.xlu0 %v5837
        %v5839 = vpop.xlane.xlu0 %5838
        %v5840 = vsel %vm4272, %v5800, 0.0
        %5841 = vadd.xlane.f32.xlu0 %v5840
        %v5842 = vpop.xlane.xlu0 %5841
        %v5843 = vsel %vm4272, %v5801, 0.0
        %5844 = vadd.xlane.f32.xlu0 %v5843
        %v5845 = vpop.xlane.xlu0 %5844
        %v5846 = vsel %vm4272, %v5802, 0.0
        %5847 = vadd.xlane.f32.xlu0 %v5846
        %v5848 = vpop.xlane.xlu0 %5847
        %v5849 = vsel %vm4272, %v5803, 0.0
        %5850 = vadd.xlane.f32.xlu0 %v5849
        %v5851 = vpop.xlane.xlu0 %5850
        %v5852 = vsel %vm4272, %v5804, 0.0
        %5853 = vadd.xlane.f32.xlu0 %v5852
        %v5854 = vpop.xlane.xlu0 %5853
        %v5855 = vsel %vm4272, %v5805, 0.0
        %5856 = vadd.xlane.f32.xlu0 %v5855
        %v5857 = vpop.xlane.xlu0 %5856
        %v5858 = vsel %vm4272, %v5806, 0.0
        %5859 = vadd.xlane.f32.xlu0 %v5858
        %v5860 = vpop.xlane.xlu0 %5859
        %v5861 = vsel %vm4272, %v5807, 0.0
        %5862 = vadd.xlane.f32.xlu0 %v5861
        %v5863 = vpop.xlane.xlu0 %5862
        %v5864 = vsel %vm4272, %v5808, 0.0
        %5865 = vadd.xlane.f32.xlu0 %v5864
        %v5866 = vpop.xlane.xlu0 %5865
        %v5867 = vsel %vm4272, %v5809, 0.0
        %5868 = vadd.xlane.f32.xlu0 %v5867
        %v5869 = vpop.xlane.xlu0 %5868
        %v5870 = vsel %vm4272, %v5810, 0.0
        %5871 = vadd.xlane.f32.xlu0 %v5870
        %v5872 = vpop.xlane.xlu0 %5871
        %v5873 = vsel %vm4272, %v5811, 0.0
        %5874 = vadd.xlane.f32.xlu0 %v5873
        %v5875 = vpop.xlane.xlu0 %5874
        %v5876 = vsel %vm4272, %v5812, 0.0
        %5877 = vadd.xlane.f32.xlu0 %v5876
        %v5878 = vpop.xlane.xlu0 %5877
        %v5879 = vsel %vm4272, %v5813, 0.0
        %5880 = vadd.xlane.f32.xlu0 %v5879
        %v5881 = vpop.xlane.xlu0 %5880
        %v5882 = vsel %vm4272, %v5814, 0.0
        %5883 = vadd.xlane.f32.xlu0 %v5882
        %v5884 = vpop.xlane.xlu0 %5883
        %v5885 = vsel %vm4272, %v5815, 0.0
        %5886 = vadd.xlane.f32.xlu0 %v5885
        %v5887 = vpop.xlane.xlu0 %5886
        %v5888 = vsel %vm4272, %v5816, 0.0
        %5889 = vadd.xlane.f32.xlu0 %v5888
        %v5890 = vpop.xlane.xlu0 %5889
        %v5891 = vsel %vm4272, %v5817, 0.0
        %5892 = vadd.xlane.f32.xlu0 %v5891
        %v5893 = vpop.xlane.xlu0 %5892
        %v5894 = vsel %vm4272, %v5818, 0.0
        %5895 = vadd.xlane.f32.xlu0 %v5894
        %v5896 = vpop.xlane.xlu0 %5895
        %v5897 = vsel %vm4272, %v5819, 0.0
        %5898 = vadd.xlane.f32.xlu0 %v5897
        %v5899 = vpop.xlane.xlu0 %5898
        %v5900 = vsel %vm4272, %v5820, 0.0
        %5901 = vadd.xlane.f32.xlu0 %v5900
        %v5902 = vpop.xlane.xlu0 %5901
        %v5903 = vsel %vm4272, %v5821, 0.0
        %5904 = vadd.xlane.f32.xlu0 %v5903
        %v5905 = vpop.xlane.xlu0 %5904
        %v5906 = vsel %vm4272, %v5822, 0.0
        %5907 = vadd.xlane.f32.xlu0 %v5906
        %v5908 = vpop.xlane.xlu0 %5907
        %v5909 = vsel %vm4272, %v5823, 0.0
        %5910 = vadd.xlane.f32.xlu0 %v5909
        %v5911 = vpop.xlane.xlu0 %5910
        %v5912 = vsel %vm4272, %v5824, 0.0
        %5913 = vadd.xlane.f32.xlu0 %v5912
        %v5914 = vpop.xlane.xlu0 %5913
        %v5915 = vsel %vm4272, %v5825, 0.0
        %5916 = vadd.xlane.f32.xlu0 %v5915
        %v5917 = vpop.xlane.xlu0 %5916
        %v5918 = vsel %vm4272, %v5826, 0.0
        %5919 = vadd.xlane.f32.xlu0 %v5918
        %v5920 = vpop.xlane.xlu0 %5919
        %v5921 = vsel %vm4272, %v5827, 0.0
        %5922 = vadd.xlane.f32.xlu0 %v5921
        %v5923 = vpop.xlane.xlu0 %5922
        %v5924 = vmul.f32 %v5414, %v2252
        %v5925 = vmul.f32 %v5417, %v2253
        %v5926 = vmul.f32 %v5422, %v2254
        %v5927 = vmul.f32 %v5425, %v2255
        %v5928 = vmul.f32 %v5430, %v2256
        %v5929 = vmul.f32 %v5433, %v2257
        %v5930 = vmul.f32 %v5438, %v2258
        %v5931 = vmul.f32 %v5441, %v2259
        %v5932 = vmul.f32 %v5446, %v2260
        %v5933 = vmul.f32 %v5449, %v2261
        %v5934 = vmul.f32 %v5454, %v2262
        %v5935 = vmul.f32 %v5457, %v2263
        %v5936 = vmul.f32 %v5462, %v2264
        %v5937 = vmul.f32 %v5465, %v2265
        %v5938 = vmul.f32 %v5470, %v2266
        %v5939 = vmul.f32 %v5473, %v2267
        %v5940 = vmul.f32 %v5478, %v2252
        %v5941 = vmul.f32 %v5481, %v2253
        %v5942 = vmul.f32 %v5486, %v2254
        %v5943 = vmul.f32 %v5489, %v2255
        %v5944 = vmul.f32 %v5494, %v2256
        %v5945 = vmul.f32 %v5497, %v2257
        %v5946 = vmul.f32 %v5502, %v2258
        %v5947 = vmul.f32 %v5505, %v2259
        %v5948 = vmul.f32 %v5510, %v2260
        %v5949 = vmul.f32 %v5513, %v2261
        %v5950 = vmul.f32 %v5518, %v2262
        %v5951 = vmul.f32 %v5521, %v2263
        %v5952 = vmul.f32 %v5526, %v2264
        %v5953 = vmul.f32 %v5529, %v2265
        %v5954 = vmul.f32 %v5534, %v2266
        %v5955 = vmul.f32 %v5537, %v2267
        %v5956 = vsel %vm4272, %v5924, 0.0
        %5957 = vadd.xlane.f32.xlu0 %v5956
        %v5958 = vpop.xlane.xlu0 %5957
        %v5959 = vsel %vm4272, %v5925, 0.0
        %5960 = vadd.xlane.f32.xlu0 %v5959
        %v5961 = vpop.xlane.xlu0 %5960
        %v5962 = vsel %vm4272, %v5926, 0.0
        %5963 = vadd.xlane.f32.xlu0 %v5962
        %v5964 = vpop.xlane.xlu0 %5963
        %v5965 = vsel %vm4272, %v5927, 0.0
        %5966 = vadd.xlane.f32.xlu0 %v5965
        %v5967 = vpop.xlane.xlu0 %5966
        %v5968 = vsel %vm4272, %v5928, 0.0
        %5969 = vadd.xlane.f32.xlu0 %v5968
        %v5970 = vpop.xlane.xlu0 %5969
        %v5971 = vsel %vm4272, %v5929, 0.0
        %5972 = vadd.xlane.f32.xlu0 %v5971
        %v5973 = vpop.xlane.xlu0 %5972
        %v5974 = vsel %vm4272, %v5930, 0.0
        %5975 = vadd.xlane.f32.xlu0 %v5974
        %v5976 = vpop.xlane.xlu0 %5975
        %v5977 = vsel %vm4272, %v5931, 0.0
        %5978 = vadd.xlane.f32.xlu0 %v5977
        %v5979 = vpop.xlane.xlu0 %5978
        %v5980 = vsel %vm4272, %v5932, 0.0
        %5981 = vadd.xlane.f32.xlu0 %v5980
        %v5982 = vpop.xlane.xlu0 %5981
        %v5983 = vsel %vm4272, %v5933, 0.0
        %5984 = vadd.xlane.f32.xlu0 %v5983
        %v5985 = vpop.xlane.xlu0 %5984
        %v5986 = vsel %vm4272, %v5934, 0.0
        %5987 = vadd.xlane.f32.xlu0 %v5986
        %v5988 = vpop.xlane.xlu0 %5987
        %v5989 = vsel %vm4272, %v5935, 0.0
        %5990 = vadd.xlane.f32.xlu0 %v5989
        %v5991 = vpop.xlane.xlu0 %5990
        %v5992 = vsel %vm4272, %v5936, 0.0
        %5993 = vadd.xlane.f32.xlu0 %v5992
        %v5994 = vpop.xlane.xlu0 %5993
        %v5995 = vsel %vm4272, %v5937, 0.0
        %5996 = vadd.xlane.f32.xlu0 %v5995
        %v5997 = vpop.xlane.xlu0 %5996
        %v5998 = vsel %vm4272, %v5938, 0.0
        %5999 = vadd.xlane.f32.xlu0 %v5998
        %v6000 = vpop.xlane.xlu0 %5999
        %v6001 = vsel %vm4272, %v5939, 0.0
        %6002 = vadd.xlane.f32.xlu0 %v6001
        %v6003 = vpop.xlane.xlu0 %6002
        %v6004 = vsel %vm4272, %v5940, 0.0
        %6005 = vadd.xlane.f32.xlu0 %v6004
        %v6006 = vpop.xlane.xlu0 %6005
        %v6007 = vsel %vm4272, %v5941, 0.0
        %6008 = vadd.xlane.f32.xlu0 %v6007
        %v6009 = vpop.xlane.xlu0 %6008
        %v6010 = vsel %vm4272, %v5942, 0.0
        %6011 = vadd.xlane.f32.xlu0 %v6010
        %v6012 = vpop.xlane.xlu0 %6011
        %v6013 = vsel %vm4272, %v5943, 0.0
        %6014 = vadd.xlane.f32.xlu0 %v6013
        %v6015 = vpop.xlane.xlu0 %6014
        %v6016 = vsel %vm4272, %v5944, 0.0
        %6017 = vadd.xlane.f32.xlu0 %v6016
        %v6018 = vpop.xlane.xlu0 %6017
        %v6019 = vsel %vm4272, %v5945, 0.0
        %6020 = vadd.xlane.f32.xlu0 %v6019
        %v6021 = vpop.xlane.xlu0 %6020
        %v6022 = vsel %vm4272, %v5946, 0.0
        %6023 = vadd.xlane.f32.xlu0 %v6022
        %v6024 = vpop.xlane.xlu0 %6023
        %v6025 = vsel %vm4272, %v5947, 0.0
        %6026 = vadd.xlane.f32.xlu0 %v6025
        %v6027 = vpop.xlane.xlu0 %6026
        %v6028 = vsel %vm4272, %v5948, 0.0
        %6029 = vadd.xlane.f32.xlu0 %v6028
        %v6030 = vpop.xlane.xlu0 %6029
        %v6031 = vsel %vm4272, %v5949, 0.0
        %6032 = vadd.xlane.f32.xlu0 %v6031
        %v6033 = vpop.xlane.xlu0 %6032
        %v6034 = vsel %vm4272, %v5950, 0.0
        %6035 = vadd.xlane.f32.xlu0 %v6034
        %v6036 = vpop.xlane.xlu0 %6035
        %v6037 = vsel %vm4272, %v5951, 0.0
        %6038 = vadd.xlane.f32.xlu0 %v6037
        %v6039 = vpop.xlane.xlu0 %6038
        %v6040 = vsel %vm4272, %v5952, 0.0
        %6041 = vadd.xlane.f32.xlu0 %v6040
        %v6042 = vpop.xlane.xlu0 %6041
        %v6043 = vsel %vm4272, %v5953, 0.0
        %6044 = vadd.xlane.f32.xlu0 %v6043
        %v6045 = vpop.xlane.xlu0 %6044
        %v6046 = vsel %vm4272, %v5954, 0.0
        %6047 = vadd.xlane.f32.xlu0 %v6046
        %v6048 = vpop.xlane.xlu0 %6047
        %v6049 = vsel %vm4272, %v5955, 0.0
        %6050 = vadd.xlane.f32.xlu0 %v6049
        %v6051 = vpop.xlane.xlu0 %6050
        %v6052 = vmul.f32 %v5414, %v2300
        %v6053 = vmul.f32 %v5417, %v2301
        %v6054 = vmul.f32 %v5422, %v2302
        %v6055 = vmul.f32 %v5425, %v2303
        %v6056 = vmul.f32 %v5430, %v2304
        %v6057 = vmul.f32 %v5433, %v2305
        %v6058 = vmul.f32 %v5438, %v2306
        %v6059 = vmul.f32 %v5441, %v2307
        %v6060 = vmul.f32 %v5446, %v2308
        %v6061 = vmul.f32 %v5449, %v2309
        %v6062 = vmul.f32 %v5454, %v2310
        %v6063 = vmul.f32 %v5457, %v2311
        %v6064 = vmul.f32 %v5462, %v2312
        %v6065 = vmul.f32 %v5465, %v2313
        %v6066 = vmul.f32 %v5470, %v2314
        %v6067 = vmul.f32 %v5473, %v2315
        %v6068 = vmul.f32 %v5478, %v2300
        %v6069 = vmul.f32 %v5481, %v2301
        %v6070 = vmul.f32 %v5486, %v2302
        %v6071 = vmul.f32 %v5489, %v2303
        %v6072 = vmul.f32 %v5494, %v2304
        %v6073 = vmul.f32 %v5497, %v2305
        %v6074 = vmul.f32 %v5502, %v2306
        %v6075 = vmul.f32 %v5505, %v2307
        %v6076 = vmul.f32 %v5510, %v2308
        %v6077 = vmul.f32 %v5513, %v2309
        %v6078 = vmul.f32 %v5518, %v2310
        %v6079 = vmul.f32 %v5521, %v2311
        %v6080 = vmul.f32 %v5526, %v2312
        %v6081 = vmul.f32 %v5529, %v2313
        %v6082 = vmul.f32 %v5534, %v2314
        %v6083 = vmul.f32 %v5537, %v2315
        %v6084 = vsel %vm4272, %v6052, 0.0
        %6085 = vadd.xlane.f32.xlu0 %v6084
        %v6086 = vpop.xlane.xlu0 %6085
        %v6087 = vsel %vm4272, %v6053, 0.0
        %6088 = vadd.xlane.f32.xlu0 %v6087
        %v6089 = vpop.xlane.xlu0 %6088
        %v6090 = vsel %vm4272, %v6054, 0.0
        %6091 = vadd.xlane.f32.xlu0 %v6090
        %v6092 = vpop.xlane.xlu0 %6091
        %v6093 = vsel %vm4272, %v6055, 0.0
        %6094 = vadd.xlane.f32.xlu0 %v6093
        %v6095 = vpop.xlane.xlu0 %6094
        %v6096 = vsel %vm4272, %v6056, 0.0
        %6097 = vadd.xlane.f32.xlu0 %v6096
        %v6098 = vpop.xlane.xlu0 %6097
        %v6099 = vsel %vm4272, %v6057, 0.0
        %6100 = vadd.xlane.f32.xlu0 %v6099
        %v6101 = vpop.xlane.xlu0 %6100
        %v6102 = vsel %vm4272, %v6058, 0.0
        %6103 = vadd.xlane.f32.xlu0 %v6102
        %v6104 = vpop.xlane.xlu0 %6103
        %v6105 = vsel %vm4272, %v6059, 0.0
        %6106 = vadd.xlane.f32.xlu0 %v6105
        %v6107 = vpop.xlane.xlu0 %6106
        %v6108 = vsel %vm4272, %v6060, 0.0
        %6109 = vadd.xlane.f32.xlu0 %v6108
        %v6110 = vpop.xlane.xlu0 %6109
        %v6111 = vsel %vm4272, %v6061, 0.0
        %6112 = vadd.xlane.f32.xlu0 %v6111
        %v6113 = vpop.xlane.xlu0 %6112
        %v6114 = vsel %vm4272, %v6062, 0.0
        %6115 = vadd.xlane.f32.xlu0 %v6114
        %v6116 = vpop.xlane.xlu0 %6115
        %v6117 = vsel %vm4272, %v6063, 0.0
        %6118 = vadd.xlane.f32.xlu0 %v6117
        %v6119 = vpop.xlane.xlu0 %6118
        %v6120 = vsel %vm4272, %v6064, 0.0
        %6121 = vadd.xlane.f32.xlu0 %v6120
        %v6122 = vpop.xlane.xlu0 %6121
        %v6123 = vsel %vm4272, %v6065, 0.0
        %6124 = vadd.xlane.f32.xlu0 %v6123
        %v6125 = vpop.xlane.xlu0 %6124
        %v6126 = vsel %vm4272, %v6066, 0.0
        %6127 = vadd.xlane.f32.xlu0 %v6126
        %v6128 = vpop.xlane.xlu0 %6127
        %v6129 = vsel %vm4272, %v6067, 0.0
        %6130 = vadd.xlane.f32.xlu0 %v6129
        %v6131 = vpop.xlane.xlu0 %6130
        %v6132 = vsel %vm4272, %v6068, 0.0
        %6133 = vadd.xlane.f32.xlu0 %v6132
        %v6134 = vpop.xlane.xlu0 %6133
        %v6135 = vsel %vm4272, %v6069, 0.0
        %6136 = vadd.xlane.f32.xlu0 %v6135
        %v6137 = vpop.xlane.xlu0 %6136
        %v6138 = vsel %vm4272, %v6070, 0.0
        %6139 = vadd.xlane.f32.xlu0 %v6138
        %v6140 = vpop.xlane.xlu0 %6139
        %v6141 = vsel %vm4272, %v6071, 0.0
        %6142 = vadd.xlane.f32.xlu0 %v6141
        %v6143 = vpop.xlane.xlu0 %6142
        %v6144 = vsel %vm4272, %v6072, 0.0
        %6145 = vadd.xlane.f32.xlu0 %v6144
        %v6146 = vpop.xlane.xlu0 %6145
        %v6147 = vsel %vm4272, %v6073, 0.0
        %6148 = vadd.xlane.f32.xlu0 %v6147
        %v6149 = vpop.xlane.xlu0 %6148
        %v6150 = vsel %vm4272, %v6074, 0.0
        %6151 = vadd.xlane.f32.xlu0 %v6150
        %v6152 = vpop.xlane.xlu0 %6151
        %v6153 = vsel %vm4272, %v6075, 0.0
        %6154 = vadd.xlane.f32.xlu0 %v6153
        %v6155 = vpop.xlane.xlu0 %6154
        %v6156 = vsel %vm4272, %v6076, 0.0
        %6157 = vadd.xlane.f32.xlu0 %v6156
        %v6158 = vpop.xlane.xlu0 %6157
        %v6159 = vsel %vm4272, %v6077, 0.0
        %6160 = vadd.xlane.f32.xlu0 %v6159
        %v6161 = vpop.xlane.xlu0 %6160
        %v6162 = vsel %vm4272, %v6078, 0.0
        %6163 = vadd.xlane.f32.xlu0 %v6162
        %v6164 = vpop.xlane.xlu0 %6163
        %v6165 = vsel %vm4272, %v6079, 0.0
        %6166 = vadd.xlane.f32.xlu0 %v6165
        %v6167 = vpop.xlane.xlu0 %6166
        %v6168 = vsel %vm4272, %v6080, 0.0
        %6169 = vadd.xlane.f32.xlu0 %v6168
        %v6170 = vpop.xlane.xlu0 %6169
        %v6171 = vsel %vm4272, %v6081, 0.0
        %6172 = vadd.xlane.f32.xlu0 %v6171
        %v6173 = vpop.xlane.xlu0 %6172
        %v6174 = vsel %vm4272, %v6082, 0.0
        %6175 = vadd.xlane.f32.xlu0 %v6174
        %v6176 = vpop.xlane.xlu0 %6175
        %v6177 = vsel %vm4272, %v6083, 0.0
        %6178 = vadd.xlane.f32.xlu0 %v6177
        %v6179 = vpop.xlane.xlu0 %6178
        %v6180 = vmul.f32 %v5414, %v2348
        %v6181 = vmul.f32 %v5417, %v2349
        %v6182 = vmul.f32 %v5422, %v2350
        %v6183 = vmul.f32 %v5425, %v2351
        %v6184 = vmul.f32 %v5430, %v2352
        %v6185 = vmul.f32 %v5433, %v2353
        %v6186 = vmul.f32 %v5438, %v2354
        %v6187 = vmul.f32 %v5441, %v2355
        %v6188 = vmul.f32 %v5446, %v2356
        %v6189 = vmul.f32 %v5449, %v2357
        %v6190 = vmul.f32 %v5454, %v2358
        %v6191 = vmul.f32 %v5457, %v2359
        %v6192 = vmul.f32 %v5462, %v2360
        %v6193 = vmul.f32 %v5465, %v2361
        %v6194 = vmul.f32 %v5470, %v2362
        %v6195 = vmul.f32 %v5473, %v2363
        %v6196 = vmul.f32 %v5478, %v2348
        %v6197 = vmul.f32 %v5481, %v2349
        %v6198 = vmul.f32 %v5486, %v2350
        %v6199 = vmul.f32 %v5489, %v2351
        %v6200 = vmul.f32 %v5494, %v2352
        %v6201 = vmul.f32 %v5497, %v2353
        %v6202 = vmul.f32 %v5502, %v2354
        %v6203 = vmul.f32 %v5505, %v2355
        %v6204 = vmul.f32 %v5510, %v2356
        %v6205 = vmul.f32 %v5513, %v2357
        %v6206 = vmul.f32 %v5518, %v2358
        %v6207 = vmul.f32 %v5521, %v2359
        %v6208 = vmul.f32 %v5526, %v2360
        %v6209 = vmul.f32 %v5529, %v2361
        %v6210 = vmul.f32 %v5534, %v2362
        %v6211 = vmul.f32 %v5537, %v2363
        %v6212 = vsel %vm4272, %v6180, 0.0
        %6213 = vadd.xlane.f32.xlu0 %v6212
        %v6214 = vpop.xlane.xlu0 %6213
        %v6215 = vsel %vm4272, %v6181, 0.0
        %6216 = vadd.xlane.f32.xlu0 %v6215
        %v6217 = vpop.xlane.xlu0 %6216
        %v6218 = vsel %vm4272, %v6182, 0.0
        %6219 = vadd.xlane.f32.xlu0 %v6218
        %v6220 = vpop.xlane.xlu0 %6219
        %v6221 = vsel %vm4272, %v6183, 0.0
        %6222 = vadd.xlane.f32.xlu0 %v6221
        %v6223 = vpop.xlane.xlu0 %6222
        %v6224 = vsel %vm4272, %v6184, 0.0
        %6225 = vadd.xlane.f32.xlu0 %v6224
        %v6226 = vpop.xlane.xlu0 %6225
        %v6227 = vsel %vm4272, %v6185, 0.0
        %6228 = vadd.xlane.f32.xlu0 %v6227
        %v6229 = vpop.xlane.xlu0 %6228
        %v6230 = vsel %vm4272, %v6186, 0.0
        %6231 = vadd.xlane.f32.xlu0 %v6230
        %v6232 = vpop.xlane.xlu0 %6231
        %v6233 = vsel %vm4272, %v6187, 0.0
        %6234 = vadd.xlane.f32.xlu0 %v6233
        %v6235 = vpop.xlane.xlu0 %6234
        %v6236 = vsel %vm4272, %v6188, 0.0
        %6237 = vadd.xlane.f32.xlu0 %v6236
        %v6238 = vpop.xlane.xlu0 %6237
        %v6239 = vsel %vm4272, %v6189, 0.0
        %6240 = vadd.xlane.f32.xlu0 %v6239
        %v6241 = vpop.xlane.xlu0 %6240
        %v6242 = vsel %vm4272, %v6190, 0.0
        %6243 = vadd.xlane.f32.xlu0 %v6242
        %v6244 = vpop.xlane.xlu0 %6243
        %v6245 = vsel %vm4272, %v6191, 0.0
        %6246 = vadd.xlane.f32.xlu0 %v6245
        %v6247 = vpop.xlane.xlu0 %6246
        %v6248 = vsel %vm4272, %v6192, 0.0
        %6249 = vadd.xlane.f32.xlu0 %v6248
        %v6250 = vpop.xlane.xlu0 %6249
        %v6251 = vsel %vm4272, %v6193, 0.0
        %6252 = vadd.xlane.f32.xlu0 %v6251
        %v6253 = vpop.xlane.xlu0 %6252
        %v6254 = vsel %vm4272, %v6194, 0.0
        %6255 = vadd.xlane.f32.xlu0 %v6254
        %v6256 = vpop.xlane.xlu0 %6255
        %v6257 = vsel %vm4272, %v6195, 0.0
        %6258 = vadd.xlane.f32.xlu0 %v6257
        %v6259 = vpop.xlane.xlu0 %6258
        %v6260 = vsel %vm4272, %v6196, 0.0
        %6261 = vadd.xlane.f32.xlu0 %v6260
        %v6262 = vpop.xlane.xlu0 %6261
        %v6263 = vsel %vm4272, %v6197, 0.0
        %6264 = vadd.xlane.f32.xlu0 %v6263
        %v6265 = vpop.xlane.xlu0 %6264
        %v6266 = vsel %vm4272, %v6198, 0.0
        %6267 = vadd.xlane.f32.xlu0 %v6266
        %v6268 = vpop.xlane.xlu0 %6267
        %v6269 = vsel %vm4272, %v6199, 0.0
        %6270 = vadd.xlane.f32.xlu0 %v6269
        %v6271 = vpop.xlane.xlu0 %6270
        %v6272 = vsel %vm4272, %v6200, 0.0
        %6273 = vadd.xlane.f32.xlu0 %v6272
        %v6274 = vpop.xlane.xlu0 %6273
        %v6275 = vsel %vm4272, %v6201, 0.0
        %6276 = vadd.xlane.f32.xlu0 %v6275
        %v6277 = vpop.xlane.xlu0 %6276
        %v6278 = vsel %vm4272, %v6202, 0.0
        %6279 = vadd.xlane.f32.xlu0 %v6278
        %v6280 = vpop.xlane.xlu0 %6279
        %v6281 = vsel %vm4272, %v6203, 0.0
        %6282 = vadd.xlane.f32.xlu0 %v6281
        %v6283 = vpop.xlane.xlu0 %6282
        %v6284 = vsel %vm4272, %v6204, 0.0
        %6285 = vadd.xlane.f32.xlu0 %v6284
        %v6286 = vpop.xlane.xlu0 %6285
        %v6287 = vsel %vm4272, %v6205, 0.0
        %6288 = vadd.xlane.f32.xlu0 %v6287
        %v6289 = vpop.xlane.xlu0 %6288
        %v6290 = vsel %vm4272, %v6206, 0.0
        %6291 = vadd.xlane.f32.xlu0 %v6290
        %v6292 = vpop.xlane.xlu0 %6291
        %v6293 = vsel %vm4272, %v6207, 0.0
        %6294 = vadd.xlane.f32.xlu0 %v6293
        %v6295 = vpop.xlane.xlu0 %6294
        %v6296 = vsel %vm4272, %v6208, 0.0
        %6297 = vadd.xlane.f32.xlu0 %v6296
        %v6298 = vpop.xlane.xlu0 %6297
        %v6299 = vsel %vm4272, %v6209, 0.0
        %6300 = vadd.xlane.f32.xlu0 %v6299
        %v6301 = vpop.xlane.xlu0 %6300
        %v6302 = vsel %vm4272, %v6210, 0.0
        %6303 = vadd.xlane.f32.xlu0 %v6302
        %v6304 = vpop.xlane.xlu0 %6303
        %v6305 = vsel %vm4272, %v6211, 0.0
        %6306 = vadd.xlane.f32.xlu0 %v6305
        %v6307 = vpop.xlane.xlu0 %6306
        %v6308 = vmul.f32 %v5414, %v2396
        %v6309 = vmul.f32 %v5417, %v2397
        %v6310 = vmul.f32 %v5422, %v2398
        %v6311 = vmul.f32 %v5425, %v2399
        %v6312 = vmul.f32 %v5430, %v2400
        %v6313 = vmul.f32 %v5433, %v2401
        %v6314 = vmul.f32 %v5438, %v2402
        %v6315 = vmul.f32 %v5441, %v2403
        %v6316 = vmul.f32 %v5446, %v2404
        %v6317 = vmul.f32 %v5449, %v2405
        %v6318 = vmul.f32 %v5454, %v2406
        %v6319 = vmul.f32 %v5457, %v2407
        %v6320 = vmul.f32 %v5462, %v2408
        %v6321 = vmul.f32 %v5465, %v2409
        %v6322 = vmul.f32 %v5470, %v2410
        %v6323 = vmul.f32 %v5473, %v2411
        %v6324 = vmul.f32 %v5478, %v2396
        %v6325 = vmul.f32 %v5481, %v2397
        %v6326 = vmul.f32 %v5486, %v2398
        %v6327 = vmul.f32 %v5489, %v2399
        %v6328 = vmul.f32 %v5494, %v2400
        %v6329 = vmul.f32 %v5497, %v2401
        %v6330 = vmul.f32 %v5502, %v2402
        %v6331 = vmul.f32 %v5505, %v2403
        %v6332 = vmul.f32 %v5510, %v2404
        %v6333 = vmul.f32 %v5513, %v2405
        %v6334 = vmul.f32 %v5518, %v2406
        %v6335 = vmul.f32 %v5521, %v2407
        %v6336 = vmul.f32 %v5526, %v2408
        %v6337 = vmul.f32 %v5529, %v2409
        %v6338 = vmul.f32 %v5534, %v2410
        %v6339 = vmul.f32 %v5537, %v2411
        %v6340 = vsel %vm4272, %v6308, 0.0
        %6341 = vadd.xlane.f32.xlu0 %v6340
        %v6342 = vpop.xlane.xlu0 %6341
        %v6343 = vsel %vm4272, %v6309, 0.0
        %6344 = vadd.xlane.f32.xlu0 %v6343
        %v6345 = vpop.xlane.xlu0 %6344
        %v6346 = vsel %vm4272, %v6310, 0.0
        %6347 = vadd.xlane.f32.xlu0 %v6346
        %v6348 = vpop.xlane.xlu0 %6347
        %v6349 = vsel %vm4272, %v6311, 0.0
        %6350 = vadd.xlane.f32.xlu0 %v6349
        %v6351 = vpop.xlane.xlu0 %6350
        %v6352 = vsel %vm4272, %v6312, 0.0
        %6353 = vadd.xlane.f32.xlu0 %v6352
        %v6354 = vpop.xlane.xlu0 %6353
        %v6355 = vsel %vm4272, %v6313, 0.0
        %6356 = vadd.xlane.f32.xlu0 %v6355
        %v6357 = vpop.xlane.xlu0 %6356
        %v6358 = vsel %vm4272, %v6314, 0.0
        %6359 = vadd.xlane.f32.xlu0 %v6358
        %v6360 = vpop.xlane.xlu0 %6359
        %v6361 = vsel %vm4272, %v6315, 0.0
        %6362 = vadd.xlane.f32.xlu0 %v6361
        %v6363 = vpop.xlane.xlu0 %6362
        %v6364 = vsel %vm4272, %v6316, 0.0
        %6365 = vadd.xlane.f32.xlu0 %v6364
        %v6366 = vpop.xlane.xlu0 %6365
        %v6367 = vsel %vm4272, %v6317, 0.0
        %6368 = vadd.xlane.f32.xlu0 %v6367
        %v6369 = vpop.xlane.xlu0 %6368
        %v6370 = vsel %vm4272, %v6318, 0.0
        %6371 = vadd.xlane.f32.xlu0 %v6370
        %v6372 = vpop.xlane.xlu0 %6371
        %v6373 = vsel %vm4272, %v6319, 0.0
        %6374 = vadd.xlane.f32.xlu0 %v6373
        %v6375 = vpop.xlane.xlu0 %6374
        %v6376 = vsel %vm4272, %v6320, 0.0
        %6377 = vadd.xlane.f32.xlu0 %v6376
        %v6378 = vpop.xlane.xlu0 %6377
        %v6379 = vsel %vm4272, %v6321, 0.0
        %6380 = vadd.xlane.f32.xlu0 %v6379
        %v6381 = vpop.xlane.xlu0 %6380
        %v6382 = vsel %vm4272, %v6322, 0.0
        %6383 = vadd.xlane.f32.xlu0 %v6382
        %v6384 = vpop.xlane.xlu0 %6383
        %v6385 = vsel %vm4272, %v6323, 0.0
        %6386 = vadd.xlane.f32.xlu0 %v6385
        %v6387 = vpop.xlane.xlu0 %6386
        %v6388 = vsel %vm4272, %v6324, 0.0
        %6389 = vadd.xlane.f32.xlu0 %v6388
        %v6390 = vpop.xlane.xlu0 %6389
        %v6391 = vsel %vm4272, %v6325, 0.0
        %6392 = vadd.xlane.f32.xlu0 %v6391
        %v6393 = vpop.xlane.xlu0 %6392
        %v6394 = vsel %vm4272, %v6326, 0.0
        %6395 = vadd.xlane.f32.xlu0 %v6394
        %v6396 = vpop.xlane.xlu0 %6395
        %v6397 = vsel %vm4272, %v6327, 0.0
        %6398 = vadd.xlane.f32.xlu0 %v6397
        %v6399 = vpop.xlane.xlu0 %6398
        %v6400 = vsel %vm4272, %v6328, 0.0
        %6401 = vadd.xlane.f32.xlu0 %v6400
        %v6402 = vpop.xlane.xlu0 %6401
        %v6403 = vsel %vm4272, %v6329, 0.0
        %6404 = vadd.xlane.f32.xlu0 %v6403
        %v6405 = vpop.xlane.xlu0 %6404
        %v6406 = vsel %vm4272, %v6330, 0.0
        %6407 = vadd.xlane.f32.xlu0 %v6406
        %v6408 = vpop.xlane.xlu0 %6407
        %v6409 = vsel %vm4272, %v6331, 0.0
        %6410 = vadd.xlane.f32.xlu0 %v6409
        %v6411 = vpop.xlane.xlu0 %6410
        %v6412 = vsel %vm4272, %v6332, 0.0
        %6413 = vadd.xlane.f32.xlu0 %v6412
        %v6414 = vpop.xlane.xlu0 %6413
        %v6415 = vsel %vm4272, %v6333, 0.0
        %6416 = vadd.xlane.f32.xlu0 %v6415
        %v6417 = vpop.xlane.xlu0 %6416
        %v6418 = vsel %vm4272, %v6334, 0.0
        %6419 = vadd.xlane.f32.xlu0 %v6418
        %v6420 = vpop.xlane.xlu0 %6419
        %v6421 = vsel %vm4272, %v6335, 0.0
        %6422 = vadd.xlane.f32.xlu0 %v6421
        %v6423 = vpop.xlane.xlu0 %6422
        %v6424 = vsel %vm4272, %v6336, 0.0
        %6425 = vadd.xlane.f32.xlu0 %v6424
        %v6426 = vpop.xlane.xlu0 %6425
        %v6427 = vsel %vm4272, %v6337, 0.0
        %6428 = vadd.xlane.f32.xlu0 %v6427
        %v6429 = vpop.xlane.xlu0 %6428
        %v6430 = vsel %vm4272, %v6338, 0.0
        %6431 = vadd.xlane.f32.xlu0 %v6430
        %v6432 = vpop.xlane.xlu0 %6431
        %v6433 = vsel %vm4272, %v6339, 0.0
        %6434 = vadd.xlane.f32.xlu0 %v6433
        %v6435 = vpop.xlane.xlu0 %6434
        %v6436 = vmul.f32 %v5414, %v2444
        %v6437 = vmul.f32 %v5417, %v2445
        %v6438 = vmul.f32 %v5422, %v2446
        %v6439 = vmul.f32 %v5425, %v2447
        %v6440 = vmul.f32 %v5430, %v2448
        %v6441 = vmul.f32 %v5433, %v2449
        %v6442 = vmul.f32 %v5438, %v2450
        %v6443 = vmul.f32 %v5441, %v2451
        %v6444 = vmul.f32 %v5446, %v2452
        %v6445 = vmul.f32 %v5449, %v2453
        %v6446 = vmul.f32 %v5454, %v2454
        %v6447 = vmul.f32 %v5457, %v2455
        %v6448 = vmul.f32 %v5462, %v2456
        %v6449 = vmul.f32 %v5465, %v2457
        %v6450 = vmul.f32 %v5470, %v2458
        %v6451 = vmul.f32 %v5473, %v2459
        %v6452 = vmul.f32 %v5478, %v2444
        %v6453 = vmul.f32 %v5481, %v2445
        %v6454 = vmul.f32 %v5486, %v2446
        %v6455 = vmul.f32 %v5489, %v2447
        %v6456 = vmul.f32 %v5494, %v2448
        %v6457 = vmul.f32 %v5497, %v2449
        %v6458 = vmul.f32 %v5502, %v2450
        %v6459 = vmul.f32 %v5505, %v2451
        %v6460 = vmul.f32 %v5510, %v2452
        %v6461 = vmul.f32 %v5513, %v2453
        %v6462 = vmul.f32 %v5518, %v2454
        %v6463 = vmul.f32 %v5521, %v2455
        %v6464 = vmul.f32 %v5526, %v2456
        %v6465 = vmul.f32 %v5529, %v2457
        %v6466 = vmul.f32 %v5534, %v2458
        %v6467 = vmul.f32 %v5537, %v2459
        %v6468 = vsel %vm4272, %v6436, 0.0
        %6469 = vadd.xlane.f32.xlu0 %v6468
        %v6470 = vpop.xlane.xlu0 %6469
        %v6471 = vsel %vm4272, %v6437, 0.0
        %6472 = vadd.xlane.f32.xlu0 %v6471
        %v6473 = vpop.xlane.xlu0 %6472
        %v6474 = vsel %vm4272, %v6438, 0.0
        %6475 = vadd.xlane.f32.xlu0 %v6474
        %v6476 = vpop.xlane.xlu0 %6475
        %v6477 = vsel %vm4272, %v6439, 0.0
        %6478 = vadd.xlane.f32.xlu0 %v6477
        %v6479 = vpop.xlane.xlu0 %6478
        %v6480 = vsel %vm4272, %v6440, 0.0
        %6481 = vadd.xlane.f32.xlu0 %v6480
        %v6482 = vpop.xlane.xlu0 %6481
        %v6483 = vsel %vm4272, %v6441, 0.0
        %6484 = vadd.xlane.f32.xlu0 %v6483
        %v6485 = vpop.xlane.xlu0 %6484
        %v6486 = vsel %vm4272, %v6442, 0.0
        %6487 = vadd.xlane.f32.xlu0 %v6486
        %v6488 = vpop.xlane.xlu0 %6487
        %v6489 = vsel %vm4272, %v6443, 0.0
        %6490 = vadd.xlane.f32.xlu0 %v6489
        %v6491 = vpop.xlane.xlu0 %6490
        %v6492 = vsel %vm4272, %v6444, 0.0
        %6493 = vadd.xlane.f32.xlu0 %v6492
        %v6494 = vpop.xlane.xlu0 %6493
        %v6495 = vsel %vm4272, %v6445, 0.0
        %6496 = vadd.xlane.f32.xlu0 %v6495
        %v6497 = vpop.xlane.xlu0 %6496
        %v6498 = vsel %vm4272, %v6446, 0.0
        %6499 = vadd.xlane.f32.xlu0 %v6498
        %v6500 = vpop.xlane.xlu0 %6499
        %v6501 = vsel %vm4272, %v6447, 0.0
        %6502 = vadd.xlane.f32.xlu0 %v6501
        %v6503 = vpop.xlane.xlu0 %6502
        %v6504 = vsel %vm4272, %v6448, 0.0
        %6505 = vadd.xlane.f32.xlu0 %v6504
        %v6506 = vpop.xlane.xlu0 %6505
        %v6507 = vsel %vm4272, %v6449, 0.0
        %6508 = vadd.xlane.f32.xlu0 %v6507
        %v6509 = vpop.xlane.xlu0 %6508
        %v6510 = vsel %vm4272, %v6450, 0.0
        %6511 = vadd.xlane.f32.xlu0 %v6510
        %v6512 = vpop.xlane.xlu0 %6511
        %v6513 = vsel %vm4272, %v6451, 0.0
        %6514 = vadd.xlane.f32.xlu0 %v6513
        %v6515 = vpop.xlane.xlu0 %6514
        %v6516 = vsel %vm4272, %v6452, 0.0
        %6517 = vadd.xlane.f32.xlu0 %v6516
        %v6518 = vpop.xlane.xlu0 %6517
        %v6519 = vsel %vm4272, %v6453, 0.0
        %6520 = vadd.xlane.f32.xlu0 %v6519
        %v6521 = vpop.xlane.xlu0 %6520
        %v6522 = vsel %vm4272, %v6454, 0.0
        %6523 = vadd.xlane.f32.xlu0 %v6522
        %v6524 = vpop.xlane.xlu0 %6523
        %v6525 = vsel %vm4272, %v6455, 0.0
        %6526 = vadd.xlane.f32.xlu0 %v6525
        %v6527 = vpop.xlane.xlu0 %6526
        %v6528 = vsel %vm4272, %v6456, 0.0
        %6529 = vadd.xlane.f32.xlu0 %v6528
        %v6530 = vpop.xlane.xlu0 %6529
        %v6531 = vsel %vm4272, %v6457, 0.0
        %6532 = vadd.xlane.f32.xlu0 %v6531
        %v6533 = vpop.xlane.xlu0 %6532
        %v6534 = vsel %vm4272, %v6458, 0.0
        %6535 = vadd.xlane.f32.xlu0 %v6534
        %v6536 = vpop.xlane.xlu0 %6535
        %v6537 = vsel %vm4272, %v6459, 0.0
        %6538 = vadd.xlane.f32.xlu0 %v6537
        %v6539 = vpop.xlane.xlu0 %6538
        %v6540 = vsel %vm4272, %v6460, 0.0
        %6541 = vadd.xlane.f32.xlu0 %v6540
        %v6542 = vpop.xlane.xlu0 %6541
        %v6543 = vsel %vm4272, %v6461, 0.0
        %6544 = vadd.xlane.f32.xlu0 %v6543
        %v6545 = vpop.xlane.xlu0 %6544
        %v6546 = vsel %vm4272, %v6462, 0.0
        %6547 = vadd.xlane.f32.xlu0 %v6546
        %v6548 = vpop.xlane.xlu0 %6547
        %v6549 = vsel %vm4272, %v6463, 0.0
        %6550 = vadd.xlane.f32.xlu0 %v6549
        %v6551 = vpop.xlane.xlu0 %6550
        %v6552 = vsel %vm4272, %v6464, 0.0
        %6553 = vadd.xlane.f32.xlu0 %v6552
        %v6554 = vpop.xlane.xlu0 %6553
        %v6555 = vsel %vm4272, %v6465, 0.0
        %6556 = vadd.xlane.f32.xlu0 %v6555
        %v6557 = vpop.xlane.xlu0 %6556
        %v6558 = vsel %vm4272, %v6466, 0.0
        %6559 = vadd.xlane.f32.xlu0 %v6558
        %v6560 = vpop.xlane.xlu0 %6559
        %v6561 = vsel %vm4272, %v6467, 0.0
        %6562 = vadd.xlane.f32.xlu0 %v6561
        %v6563 = vpop.xlane.xlu0 %6562
        %v6564 = vmul.f32 %v5414, %v2492
        %v6565 = vmul.f32 %v5417, %v2493
        %v6566 = vmul.f32 %v5422, %v2494
        %v6567 = vmul.f32 %v5425, %v2495
        %v6568 = vmul.f32 %v5430, %v2496
        %v6569 = vmul.f32 %v5433, %v2497
        %v6570 = vmul.f32 %v5438, %v2498
        %v6571 = vmul.f32 %v5441, %v2499
        %v6572 = vmul.f32 %v5446, %v2500
        %v6573 = vmul.f32 %v5449, %v2501
        %v6574 = vmul.f32 %v5454, %v2502
        %v6575 = vmul.f32 %v5457, %v2503
        %v6576 = vmul.f32 %v5462, %v2504
        %v6577 = vmul.f32 %v5465, %v2505
        %v6578 = vmul.f32 %v5470, %v2506
        %v6579 = vmul.f32 %v5473, %v2507
        %v6580 = vmul.f32 %v5478, %v2492
        %v6581 = vmul.f32 %v5481, %v2493
        %v6582 = vmul.f32 %v5486, %v2494
        %v6583 = vmul.f32 %v5489, %v2495
        %v6584 = vmul.f32 %v5494, %v2496
        %v6585 = vmul.f32 %v5497, %v2497
        %v6586 = vmul.f32 %v5502, %v2498
        %v6587 = vmul.f32 %v5505, %v2499
        %v6588 = vmul.f32 %v5510, %v2500
        %v6589 = vmul.f32 %v5513, %v2501
        %v6590 = vmul.f32 %v5518, %v2502
        %v6591 = vmul.f32 %v5521, %v2503
        %v6592 = vmul.f32 %v5526, %v2504
        %v6593 = vmul.f32 %v5529, %v2505
        %v6594 = vmul.f32 %v5534, %v2506
        %v6595 = vmul.f32 %v5537, %v2507
        %v6596 = vsel %vm4272, %v6564, 0.0
        %6597 = vadd.xlane.f32.xlu0 %v6596
        %v6598 = vpop.xlane.xlu0 %6597
        %v6599 = vsel %vm4272, %v6565, 0.0
        %6600 = vadd.xlane.f32.xlu0 %v6599
        %v6601 = vpop.xlane.xlu0 %6600
        %v6602 = vsel %vm4272, %v6566, 0.0
        %6603 = vadd.xlane.f32.xlu0 %v6602
        %v6604 = vpop.xlane.xlu0 %6603
        %v6605 = vsel %vm4272, %v6567, 0.0
        %6606 = vadd.xlane.f32.xlu0 %v6605
        %v6607 = vpop.xlane.xlu0 %6606
        %v6608 = vsel %vm4272, %v6568, 0.0
        %6609 = vadd.xlane.f32.xlu0 %v6608
        %v6610 = vpop.xlane.xlu0 %6609
        %v6611 = vsel %vm4272, %v6569, 0.0
        %6612 = vadd.xlane.f32.xlu0 %v6611
        %v6613 = vpop.xlane.xlu0 %6612
        %v6614 = vsel %vm4272, %v6570, 0.0
        %6615 = vadd.xlane.f32.xlu0 %v6614
        %v6616 = vpop.xlane.xlu0 %6615
        %v6617 = vsel %vm4272, %v6571, 0.0
        %6618 = vadd.xlane.f32.xlu0 %v6617
        %v6619 = vpop.xlane.xlu0 %6618
        %v6620 = vsel %vm4272, %v6572, 0.0
        %6621 = vadd.xlane.f32.xlu0 %v6620
        %v6622 = vpop.xlane.xlu0 %6621
        %v6623 = vsel %vm4272, %v6573, 0.0
        %6624 = vadd.xlane.f32.xlu0 %v6623
        %v6625 = vpop.xlane.xlu0 %6624
        %v6626 = vsel %vm4272, %v6574, 0.0
        %6627 = vadd.xlane.f32.xlu0 %v6626
        %v6628 = vpop.xlane.xlu0 %6627
        %v6629 = vsel %vm4272, %v6575, 0.0
        %6630 = vadd.xlane.f32.xlu0 %v6629
        %v6631 = vpop.xlane.xlu0 %6630
        %v6632 = vsel %vm4272, %v6576, 0.0
        %6633 = vadd.xlane.f32.xlu0 %v6632
        %v6634 = vpop.xlane.xlu0 %6633
        %v6635 = vsel %vm4272, %v6577, 0.0
        %6636 = vadd.xlane.f32.xlu0 %v6635
        %v6637 = vpop.xlane.xlu0 %6636
        %v6638 = vsel %vm4272, %v6578, 0.0
        %6639 = vadd.xlane.f32.xlu0 %v6638
        %v6640 = vpop.xlane.xlu0 %6639
        %v6641 = vsel %vm4272, %v6579, 0.0
        %6642 = vadd.xlane.f32.xlu0 %v6641
        %v6643 = vpop.xlane.xlu0 %6642
        %v6644 = vsel %vm4272, %v6580, 0.0
        %6645 = vadd.xlane.f32.xlu0 %v6644
        %v6646 = vpop.xlane.xlu0 %6645
        %v6647 = vsel %vm4272, %v6581, 0.0
        %6648 = vadd.xlane.f32.xlu0 %v6647
        %v6649 = vpop.xlane.xlu0 %6648
        %v6650 = vsel %vm4272, %v6582, 0.0
        %6651 = vadd.xlane.f32.xlu0 %v6650
        %v6652 = vpop.xlane.xlu0 %6651
        %v6653 = vsel %vm4272, %v6583, 0.0
        %6654 = vadd.xlane.f32.xlu0 %v6653
        %v6655 = vpop.xlane.xlu0 %6654
        %v6656 = vsel %vm4272, %v6584, 0.0
        %6657 = vadd.xlane.f32.xlu0 %v6656
        %v6658 = vpop.xlane.xlu0 %6657
        %v6659 = vsel %vm4272, %v6585, 0.0
        %6660 = vadd.xlane.f32.xlu0 %v6659
        %v6661 = vpop.xlane.xlu0 %6660
        %v6662 = vsel %vm4272, %v6586, 0.0
        %6663 = vadd.xlane.f32.xlu0 %v6662
        %v6664 = vpop.xlane.xlu0 %6663
        %v6665 = vsel %vm4272, %v6587, 0.0
        %6666 = vadd.xlane.f32.xlu0 %v6665
        %v6667 = vpop.xlane.xlu0 %6666
        %v6668 = vsel %vm4272, %v6588, 0.0
        %6669 = vadd.xlane.f32.xlu0 %v6668
        %v6670 = vpop.xlane.xlu0 %6669
        %v6671 = vsel %vm4272, %v6589, 0.0
        %6672 = vadd.xlane.f32.xlu0 %v6671
        %v6673 = vpop.xlane.xlu0 %6672
        %v6674 = vsel %vm4272, %v6590, 0.0
        %6675 = vadd.xlane.f32.xlu0 %v6674
        %v6676 = vpop.xlane.xlu0 %6675
        %v6677 = vsel %vm4272, %v6591, 0.0
        %6678 = vadd.xlane.f32.xlu0 %v6677
        %v6679 = vpop.xlane.xlu0 %6678
        %v6680 = vsel %vm4272, %v6592, 0.0
        %6681 = vadd.xlane.f32.xlu0 %v6680
        %v6682 = vpop.xlane.xlu0 %6681
        %v6683 = vsel %vm4272, %v6593, 0.0
        %6684 = vadd.xlane.f32.xlu0 %v6683
        %v6685 = vpop.xlane.xlu0 %6684
        %v6686 = vsel %vm4272, %v6594, 0.0
        %6687 = vadd.xlane.f32.xlu0 %v6686
        %v6688 = vpop.xlane.xlu0 %6687
        %v6689 = vsel %vm4272, %v6595, 0.0
        %6690 = vadd.xlane.f32.xlu0 %v6689
        %v6691 = vpop.xlane.xlu0 %6690
        %vm6692 = vcmask 7168
        %v6693 = vsel %vm6692, %v5574, %v5702
        %v6694 = vsel %vm6692, %v5577, %v5705
        %v6695 = vsel %vm6692, %v5580, %v5708
        %v6696 = vsel %vm6692, %v5583, %v5711
        %v6697 = vsel %vm6692, %v5586, %v5714
        %v6698 = vsel %vm6692, %v5589, %v5717
        %v6699 = vsel %vm6692, %v5592, %v5720
        %v6700 = vsel %vm6692, %v5595, %v5723
        %v6701 = vsel %vm6692, %v5598, %v5726
        %v6702 = vsel %vm6692, %v5601, %v5729
        %v6703 = vsel %vm6692, %v5604, %v5732
        %v6704 = vsel %vm6692, %v5607, %v5735
        %v6705 = vsel %vm6692, %v5610, %v5738
        %v6706 = vsel %vm6692, %v5613, %v5741
        %v6707 = vsel %vm6692, %v5616, %v5744
        %v6708 = vsel %vm6692, %v5619, %v5747
        %v6709 = vsel %vm6692, %v5622, %v5750
        %v6710 = vsel %vm6692, %v5625, %v5753
        %v6711 = vsel %vm6692, %v5628, %v5756
        %v6712 = vsel %vm6692, %v5631, %v5759
        %v6713 = vsel %vm6692, %v5634, %v5762
        %v6714 = vsel %vm6692, %v5637, %v5765
        %v6715 = vsel %vm6692, %v5640, %v5768
        %v6716 = vsel %vm6692, %v5643, %v5771
        %v6717 = vsel %vm6692, %v5646, %v5774
        %v6718 = vsel %vm6692, %v5649, %v5777
        %v6719 = vsel %vm6692, %v5652, %v5780
        %v6720 = vsel %vm6692, %v5655, %v5783
        %v6721 = vsel %vm6692, %v5658, %v5786
        %v6722 = vsel %vm6692, %v5661, %v5789
        %v6723 = vsel %vm6692, %v5664, %v5792
        %v6724 = vsel %vm6692, %v5667, %v5795
        %vm6725 = vcmask 15360
        %v6726 = vsel %vm6725, %v6693, %v5830
        %v6727 = vsel %vm6725, %v6694, %v5833
        %v6728 = vsel %vm6725, %v6695, %v5836
        %v6729 = vsel %vm6725, %v6696, %v5839
        %v6730 = vsel %vm6725, %v6697, %v5842
        %v6731 = vsel %vm6725, %v6698, %v5845
        %v6732 = vsel %vm6725, %v6699, %v5848
        %v6733 = vsel %vm6725, %v6700, %v5851
        %v6734 = vsel %vm6725, %v6701, %v5854
        %v6735 = vsel %vm6725, %v6702, %v5857
        %v6736 = vsel %vm6725, %v6703, %v5860
        %v6737 = vsel %vm6725, %v6704, %v5863
        %v6738 = vsel %vm6725, %v6705, %v5866
        %v6739 = vsel %vm6725, %v6706, %v5869
        %v6740 = vsel %vm6725, %v6707, %v5872
        %v6741 = vsel %vm6725, %v6708, %v5875
        %v6742 = vsel %vm6725, %v6709, %v5878
        %v6743 = vsel %vm6725, %v6710, %v5881
        %v6744 = vsel %vm6725, %v6711, %v5884
        %v6745 = vsel %vm6725, %v6712, %v5887
        %v6746 = vsel %vm6725, %v6713, %v5890
        %v6747 = vsel %vm6725, %v6714, %v5893
        %v6748 = vsel %vm6725, %v6715, %v5896
        %v6749 = vsel %vm6725, %v6716, %v5899
        %v6750 = vsel %vm6725, %v6717, %v5902
        %v6751 = vsel %vm6725, %v6718, %v5905
        %v6752 = vsel %vm6725, %v6719, %v5908
        %v6753 = vsel %vm6725, %v6720, %v5911
        %v6754 = vsel %vm6725, %v6721, %v5914
        %v6755 = vsel %vm6725, %v6722, %v5917
        %v6756 = vsel %vm6725, %v6723, %v5920
        %v6757 = vsel %vm6725, %v6724, %v5923
        %vm6758 = vcmask 23552
        %v6759 = vsel %vm6758, %v6726, %v5958
        %v6760 = vsel %vm6758, %v6727, %v5961
        %v6761 = vsel %vm6758, %v6728, %v5964
        %v6762 = vsel %vm6758, %v6729, %v5967
        %v6763 = vsel %vm6758, %v6730, %v5970
        %v6764 = vsel %vm6758, %v6731, %v5973
        %v6765 = vsel %vm6758, %v6732, %v5976
        %v6766 = vsel %vm6758, %v6733, %v5979
        %v6767 = vsel %vm6758, %v6734, %v5982
        %v6768 = vsel %vm6758, %v6735, %v5985
        %v6769 = vsel %vm6758, %v6736, %v5988
        %v6770 = vsel %vm6758, %v6737, %v5991
        %v6771 = vsel %vm6758, %v6738, %v5994
        %v6772 = vsel %vm6758, %v6739, %v5997
        %v6773 = vsel %vm6758, %v6740, %v6000
        %v6774 = vsel %vm6758, %v6741, %v6003
        %v6775 = vsel %vm6758, %v6742, %v6006
        %v6776 = vsel %vm6758, %v6743, %v6009
        %v6777 = vsel %vm6758, %v6744, %v6012
        %v6778 = vsel %vm6758, %v6745, %v6015
        %v6779 = vsel %vm6758, %v6746, %v6018
        %v6780 = vsel %vm6758, %v6747, %v6021
        %v6781 = vsel %vm6758, %v6748, %v6024
        %v6782 = vsel %vm6758, %v6749, %v6027
        %v6783 = vsel %vm6758, %v6750, %v6030
        %v6784 = vsel %vm6758, %v6751, %v6033
        %v6785 = vsel %vm6758, %v6752, %v6036
        %v6786 = vsel %vm6758, %v6753, %v6039
        %v6787 = vsel %vm6758, %v6754, %v6042
        %v6788 = vsel %vm6758, %v6755, %v6045
        %v6789 = vsel %vm6758, %v6756, %v6048
        %v6790 = vsel %vm6758, %v6757, %v6051
        %vm6791 = vcmask 31744
        %v6792 = vsel %vm6791, %v6759, %v6086
        %v6793 = vsel %vm6791, %v6760, %v6089
        %v6794 = vsel %vm6791, %v6761, %v6092
        %v6795 = vsel %vm6791, %v6762, %v6095
        %v6796 = vsel %vm6791, %v6763, %v6098
        %v6797 = vsel %vm6791, %v6764, %v6101
        %v6798 = vsel %vm6791, %v6765, %v6104
        %v6799 = vsel %vm6791, %v6766, %v6107
        %v6800 = vsel %vm6791, %v6767, %v6110
        %v6801 = vsel %vm6791, %v6768, %v6113
        %v6802 = vsel %vm6791, %v6769, %v6116
        %v6803 = vsel %vm6791, %v6770, %v6119
        %v6804 = vsel %vm6791, %v6771, %v6122
        %v6805 = vsel %vm6791, %v6772, %v6125
        %v6806 = vsel %vm6791, %v6773, %v6128
        %v6807 = vsel %vm6791, %v6774, %v6131
        %v6808 = vsel %vm6791, %v6775, %v6134
        %v6809 = vsel %vm6791, %v6776, %v6137
        %v6810 = vsel %vm6791, %v6777, %v6140
        %v6811 = vsel %vm6791, %v6778, %v6143
        %v6812 = vsel %vm6791, %v6779, %v6146
        %v6813 = vsel %vm6791, %v6780, %v6149
        %v6814 = vsel %vm6791, %v6781, %v6152
        %v6815 = vsel %vm6791, %v6782, %v6155
        %v6816 = vsel %vm6791, %v6783, %v6158
        %v6817 = vsel %vm6791, %v6784, %v6161
        %v6818 = vsel %vm6791, %v6785, %v6164
        %v6819 = vsel %vm6791, %v6786, %v6167
        %v6820 = vsel %vm6791, %v6787, %v6170
        %v6821 = vsel %vm6791, %v6788, %v6173
        %v6822 = vsel %vm6791, %v6789, %v6176
        %v6823 = vsel %vm6791, %v6790, %v6179
        %vm6824 = vcmask 39936
        %v6825 = vsel %vm6824, %v6792, %v6214
        %v6826 = vsel %vm6824, %v6793, %v6217
        %v6827 = vsel %vm6824, %v6794, %v6220
        %v6828 = vsel %vm6824, %v6795, %v6223
        %v6829 = vsel %vm6824, %v6796, %v6226
        %v6830 = vsel %vm6824, %v6797, %v6229
        %v6831 = vsel %vm6824, %v6798, %v6232
        %v6832 = vsel %vm6824, %v6799, %v6235
        %v6833 = vsel %vm6824, %v6800, %v6238
        %v6834 = vsel %vm6824, %v6801, %v6241
        %v6835 = vsel %vm6824, %v6802, %v6244
        %v6836 = vsel %vm6824, %v6803, %v6247
        %v6837 = vsel %vm6824, %v6804, %v6250
        %v6838 = vsel %vm6824, %v6805, %v6253
        %v6839 = vsel %vm6824, %v6806, %v6256
        %v6840 = vsel %vm6824, %v6807, %v6259
        %v6841 = vsel %vm6824, %v6808, %v6262
        %v6842 = vsel %vm6824, %v6809, %v6265
        %v6843 = vsel %vm6824, %v6810, %v6268
        %v6844 = vsel %vm6824, %v6811, %v6271
        %v6845 = vsel %vm6824, %v6812, %v6274
        %v6846 = vsel %vm6824, %v6813, %v6277
        %v6847 = vsel %vm6824, %v6814, %v6280
        %v6848 = vsel %vm6824, %v6815, %v6283
        %v6849 = vsel %vm6824, %v6816, %v6286
        %v6850 = vsel %vm6824, %v6817, %v6289
        %v6851 = vsel %vm6824, %v6818, %v6292
        %v6852 = vsel %vm6824, %v6819, %v6295
        %v6853 = vsel %vm6824, %v6820, %v6298
        %v6854 = vsel %vm6824, %v6821, %v6301
        %v6855 = vsel %vm6824, %v6822, %v6304
        %v6856 = vsel %vm6824, %v6823, %v6307
        %vm6857 = vcmask 48128
        %v6858 = vsel %vm6857, %v6825, %v6342
        %v6859 = vsel %vm6857, %v6826, %v6345
        %v6860 = vsel %vm6857, %v6827, %v6348
        %v6861 = vsel %vm6857, %v6828, %v6351
        %v6862 = vsel %vm6857, %v6829, %v6354
        %v6863 = vsel %vm6857, %v6830, %v6357
        %v6864 = vsel %vm6857, %v6831, %v6360
        %v6865 = vsel %vm6857, %v6832, %v6363
        %v6866 = vsel %vm6857, %v6833, %v6366
        %v6867 = vsel %vm6857, %v6834, %v6369
        %v6868 = vsel %vm6857, %v6835, %v6372
        %v6869 = vsel %vm6857, %v6836, %v6375
        %v6870 = vsel %vm6857, %v6837, %v6378
        %v6871 = vsel %vm6857, %v6838, %v6381
        %v6872 = vsel %vm6857, %v6839, %v6384
        %v6873 = vsel %vm6857, %v6840, %v6387
        %v6874 = vsel %vm6857, %v6841, %v6390
        %v6875 = vsel %vm6857, %v6842, %v6393
        %v6876 = vsel %vm6857, %v6843, %v6396
        %v6877 = vsel %vm6857, %v6844, %v6399
        %v6878 = vsel %vm6857, %v6845, %v6402
        %v6879 = vsel %vm6857, %v6846, %v6405
        %v6880 = vsel %vm6857, %v6847, %v6408
        %v6881 = vsel %vm6857, %v6848, %v6411
        %v6882 = vsel %vm6857, %v6849, %v6414
        %v6883 = vsel %vm6857, %v6850, %v6417
        %v6884 = vsel %vm6857, %v6851, %v6420
        %v6885 = vsel %vm6857, %v6852, %v6423
        %v6886 = vsel %vm6857, %v6853, %v6426
        %v6887 = vsel %vm6857, %v6854, %v6429
        %v6888 = vsel %vm6857, %v6855, %v6432
        %v6889 = vsel %vm6857, %v6856, %v6435
        %vm6890 = vcmask 56320
        %v6891 = vsel %vm6890, %v6858, %v6470
        %v6892 = vsel %vm6890, %v6859, %v6473
        %v6893 = vsel %vm6890, %v6860, %v6476
        %v6894 = vsel %vm6890, %v6861, %v6479
        %v6895 = vsel %vm6890, %v6862, %v6482
        %v6896 = vsel %vm6890, %v6863, %v6485
        %v6897 = vsel %vm6890, %v6864, %v6488
        %v6898 = vsel %vm6890, %v6865, %v6491
        %v6899 = vsel %vm6890, %v6866, %v6494
        %v6900 = vsel %vm6890, %v6867, %v6497
        %v6901 = vsel %vm6890, %v6868, %v6500
        %v6902 = vsel %vm6890, %v6869, %v6503
        %v6903 = vsel %vm6890, %v6870, %v6506
        %v6904 = vsel %vm6890, %v6871, %v6509
        %v6905 = vsel %vm6890, %v6872, %v6512
        %v6906 = vsel %vm6890, %v6873, %v6515
        %v6907 = vsel %vm6890, %v6874, %v6518
        %v6908 = vsel %vm6890, %v6875, %v6521
        %v6909 = vsel %vm6890, %v6876, %v6524
        %v6910 = vsel %vm6890, %v6877, %v6527
        %v6911 = vsel %vm6890, %v6878, %v6530
        %v6912 = vsel %vm6890, %v6879, %v6533
        %v6913 = vsel %vm6890, %v6880, %v6536
        %v6914 = vsel %vm6890, %v6881, %v6539
        %v6915 = vsel %vm6890, %v6882, %v6542
        %v6916 = vsel %vm6890, %v6883, %v6545
        %v6917 = vsel %vm6890, %v6884, %v6548
        %v6918 = vsel %vm6890, %v6885, %v6551
        %v6919 = vsel %vm6890, %v6886, %v6554
        %v6920 = vsel %vm6890, %v6887, %v6557
        %v6921 = vsel %vm6890, %v6888, %v6560
        %v6922 = vsel %vm6890, %v6889, %v6563
        %vm6923 = vcmask 64512
        %v6924 = vsel %vm6923, %v6891, %v6598
        %v6925 = vsel %vm6923, %v6892, %v6601
        %v6926 = vsel %vm6923, %v6893, %v6604
        %v6927 = vsel %vm6923, %v6894, %v6607
        %v6928 = vsel %vm6923, %v6895, %v6610
        %v6929 = vsel %vm6923, %v6896, %v6613
        %v6930 = vsel %vm6923, %v6897, %v6616
        %v6931 = vsel %vm6923, %v6898, %v6619
        %v6932 = vsel %vm6923, %v6899, %v6622
        %v6933 = vsel %vm6923, %v6900, %v6625
        %v6934 = vsel %vm6923, %v6901, %v6628
        %v6935 = vsel %vm6923, %v6902, %v6631
        %v6936 = vsel %vm6923, %v6903, %v6634
        %v6937 = vsel %vm6923, %v6904, %v6637
        %v6938 = vsel %vm6923, %v6905, %v6640
        %v6939 = vsel %vm6923, %v6906, %v6643
        %v6940 = vsel %vm6923, %v6907, %v6646
        %v6941 = vsel %vm6923, %v6908, %v6649
        %v6942 = vsel %vm6923, %v6909, %v6652
        %v6943 = vsel %vm6923, %v6910, %v6655
        %v6944 = vsel %vm6923, %v6911, %v6658
        %v6945 = vsel %vm6923, %v6912, %v6661
        %v6946 = vsel %vm6923, %v6913, %v6664
        %v6947 = vsel %vm6923, %v6914, %v6667
        %v6948 = vsel %vm6923, %v6915, %v6670
        %v6949 = vsel %vm6923, %v6916, %v6673
        %v6950 = vsel %vm6923, %v6917, %v6676
        %v6951 = vsel %vm6923, %v6918, %v6679
        %v6952 = vsel %vm6923, %v6919, %v6682
        %v6953 = vsel %vm6923, %v6920, %v6685
        %v6954 = vsel %vm6923, %v6921, %v6688
        %v6955 = vsel %vm6923, %v6922, %v6691
        %v6956 = vpack.c.bf16 %v6925, %v6924
        %v6957 = vpack.c.bf16 %v6927, %v6926
        %v6958 = vpack.c.bf16 %v6929, %v6928
        %v6959 = vpack.c.bf16 %v6931, %v6930
        %v6960 = vpack.c.bf16 %v6933, %v6932
        %v6961 = vpack.c.bf16 %v6935, %v6934
        %v6962 = vpack.c.bf16 %v6937, %v6936
        %v6963 = vpack.c.bf16 %v6939, %v6938
        %v6964 = vpack.c.bf16 %v6941, %v6940
        %v6965 = vpack.c.bf16 %v6943, %v6942
        %v6966 = vpack.c.bf16 %v6945, %v6944
        %v6967 = vpack.c.bf16 %v6947, %v6946
        %v6968 = vpack.c.bf16 %v6949, %v6948
        %v6969 = vpack.c.bf16 %v6951, %v6950
        %v6970 = vpack.c.bf16 %v6953, %v6952
        %v6971 = vpack.c.bf16 %v6955, %v6954
        %v6972 = vld [vmem:[%s856] sm:$0xf]
        %v6973 = vld [vmem:[%s856 + $0x4] sm:$0x1]
        %v6976 = vunpack.c.l.b16 %v6972
        %v6977 = vunpack.c.l.b16 %v6973
        %v6978 = vpack.c.b16 %v6977, %v6976
        %vm6979 = vcmask 72704
        %v6981 = vsel %vm6979, %v6956, 0
        %v6984 = vsel %vm6979, %v6957, 0
        %v6987 = vsel %vm6979, %v6958, 0
        %v6990 = vsel %vm6979, %v6959, 0
        %v6993 = vsel %vm6979, %v6960, 0
        %v6996 = vsel %vm6979, %v6961, 0
        %v6999 = vsel %vm6979, %v6962, 0
        %v7002 = vsel %vm6979, %v6963, 0
        %v7005 = vsel %vm6979, %v6964, 0
        %v7008 = vsel %vm6979, %v6965, 0
        %v7011 = vsel %vm6979, %v6966, 0
        %v7014 = vsel %vm6979, %v6967, 0
        %v7017 = vsel %vm6979, %v6968, 0
        %v7020 = vsel %vm6979, %v6969, 0
        %v7023 = vsel %vm6979, %v6970, 0
        %v7026 = vsel %vm6979, %v6971, 0
        %vm7028 = vcmask 1043456
        %vm7029 = vcmask 1044480
        %v7030 = vsel %vm7028, 4294967295, 65535
        %v7031 = vsel %vm7029, %v7030, 0
        %v7033 = vand.u32 %v6978, %v7031
        %7035 = vmatprep.subr.bf16.mxu0 0
        %7036 = vmatpush1.bf16.msra.mxu0 %v7033
        %7037 = vmatprep.subr.bf16.mxu0 0
        %7038 = vmatpush1.bf16.msra.mxu0 0
        %7039 = vmatprep.subr.bf16.mxu0 0
        %7040 = vmatpush1.bf16.msra.mxu0 0
        %7041 = vmatprep.subr.bf16.mxu0 0
        %7042 = vmatpush1.bf16.msra.mxu0 0
        %7043 = vmatprep.subr.bf16.mxu0 0
        %7044 = vmatpush1.bf16.msra.mxu0 0
        %7045 = vmatprep.subr.bf16.mxu0 0
        %7046 = vmatpush1.bf16.msra.mxu0 0
        %7047 = vmatprep.subr.bf16.mxu0 0
        %7048 = vmatpush1.bf16.msra.mxu0 0
        %7049 = vmatprep.subr.bf16.mxu0 0
        %7050 = vmatpush1.bf16.msra.mxu0 0
        %7051 = vmatprep.subr.bf16.mxu0 0
        %7052 = vmatpush1.bf16.msra.mxu0 0
        %7053 = vmatprep.subr.bf16.mxu0 0
        %7054 = vmatpush1.bf16.msra.mxu0 0
        %7055 = vmatprep.subr.bf16.mxu0 0
        %7056 = vmatpush1.bf16.msra.mxu0 0
        %7057 = vmatprep.subr.bf16.mxu0 0
        %7058 = vmatpush1.bf16.msra.mxu0 0
        %7059 = vmatprep.subr.bf16.mxu0 0
        %7060 = vmatpush1.bf16.msra.mxu0 0
        %7061 = vmatprep.subr.bf16.mxu0 0
        %7062 = vmatpush1.bf16.msra.mxu0 0
        %7063 = vmatprep.subr.bf16.mxu0 0
        %7064 = vmatpush1.bf16.msra.mxu0 0
        %7065 = vmatprep.subr.bf16.mxu0 0
        %7066 = vmatpush1.bf16.msra.mxu0 0
        %7067 = vmatprep.mubr.bf16.mxu0 0
        %7068 = vmatmul.mubr.bf16.gmra.mrb[0].mxu0 %v6981
        %v7069 = vpop.f32.mrb[0].mxu0
        %v7070 = vadd.f32 0.0, %v7069
        %v7071 = vpop.f32.mrb[0].mxu0
        %v7072 = vpop.f32.mrb[0].mxu0
        %v7073 = vadd.f32 0.0, %v7072
        %v7074 = vpop.f32.mrb[0].mxu0
        %7075 = vmatprep.mubr.bf16.mxu0 0
        %7076 = vmatmul.mubr.bf16.gmra.mrb[0].mxu0 %v6984
        %v7077 = vpop.f32.mrb[0].mxu0
        %v7078 = vadd.f32 0.0, %v7077
        %v7079 = vpop.f32.mrb[0].mxu0
        %v7080 = vpop.f32.mrb[0].mxu0
        %v7081 = vadd.f32 0.0, %v7080
        %v7082 = vpop.f32.mrb[0].mxu0
        %7083 = vmatprep.mubr.bf16.mxu0 0
        %7084 = vmatmul.mubr.bf16.gmra.mrb[0].mxu0 %v6987
        %v7085 = vpop.f32.mrb[0].mxu0
        %v7086 = vadd.f32 0.0, %v7085
        %v7087 = vpop.f32.mrb[0].mxu0
        %v7088 = vpop.f32.mrb[0].mxu0
        %v7089 = vadd.f32 0.0, %v7088
        %v7090 = vpop.f32.mrb[0].mxu0
        %7091 = vmatprep.mubr.bf16.mxu0 0
        %7092 = vmatmul.mubr.bf16.gmra.mrb[0].mxu0 %v6990
        %v7093 = vpop.f32.mrb[0].mxu0
        %v7094 = vadd.f32 0.0, %v7093
        %v7095 = vpop.f32.mrb[0].mxu0
        %v7096 = vpop.f32.mrb[0].mxu0
        %v7097 = vadd.f32 0.0, %v7096
        %v7098 = vpop.f32.mrb[0].mxu0
        %7099 = vmatprep.mubr.bf16.mxu0 0
        %7100 = vmatmul.mubr.bf16.gmra.mrb[0].mxu0 %v6993
        %v7101 = vpop.f32.mrb[0].mxu0
        %v7102 = vadd.f32 0.0, %v7101
        %v7103 = vpop.f32.mrb[0].mxu0
        %v7104 = vpop.f32.mrb[0].mxu0
        %v7105 = vadd.f32 0.0, %v7104
        %v7106 = vpop.f32.mrb[0].mxu0
        %7107 = vmatprep.mubr.bf16.mxu0 0
        %7108 = vmatmul.mubr.bf16.gmra.mrb[0].mxu0 %v6996
        %v7109 = vpop.f32.mrb[0].mxu0
        %v7110 = vadd.f32 0.0, %v7109
        %v7111 = vpop.f32.mrb[0].mxu0
        %v7112 = vpop.f32.mrb[0].mxu0
        %v7113 = vadd.f32 0.0, %v7112
        %v7114 = vpop.f32.mrb[0].mxu0
        %7115 = vmatprep.mubr.bf16.mxu0 0
        %7116 = vmatmul.mubr.bf16.gmra.mrb[0].mxu0 %v6999
        %v7117 = vpop.f32.mrb[0].mxu0
        %v7118 = vadd.f32 0.0, %v7117
        %v7119 = vpop.f32.mrb[0].mxu0
        %v7120 = vpop.f32.mrb[0].mxu0
        %v7121 = vadd.f32 0.0, %v7120
        %v7122 = vpop.f32.mrb[0].mxu0
        %7123 = vmatprep.mubr.bf16.mxu0 0
        %7124 = vmatmul.mubr.bf16.gmra.mrb[0].mxu0 %v7002
        %v7125 = vpop.f32.mrb[0].mxu0
        %v7126 = vadd.f32 0.0, %v7125
        %v7127 = vpop.f32.mrb[0].mxu0
        %v7128 = vpop.f32.mrb[0].mxu0
        %v7129 = vadd.f32 0.0, %v7128
        %v7130 = vpop.f32.mrb[0].mxu0
        %7131 = vmatprep.mubr.bf16.mxu0 0
        %7132 = vmatmul.mubr.bf16.gmra.mrb[0].mxu0 %v7005
        %v7133 = vpop.f32.mrb[0].mxu0
        %v7134 = vadd.f32 0.0, %v7133
        %v7135 = vpop.f32.mrb[0].mxu0
        %v7136 = vpop.f32.mrb[0].mxu0
        %v7137 = vadd.f32 0.0, %v7136
        %v7138 = vpop.f32.mrb[0].mxu0
        %7139 = vmatprep.mubr.bf16.mxu0 0
        %7140 = vmatmul.mubr.bf16.gmra.mrb[0].mxu0 %v7008
        %v7141 = vpop.f32.mrb[0].mxu0
        %v7142 = vadd.f32 0.0, %v7141
        %v7143 = vpop.f32.mrb[0].mxu0
        %v7144 = vpop.f32.mrb[0].mxu0
        %v7145 = vadd.f32 0.0, %v7144
        %v7146 = vpop.f32.mrb[0].mxu0
        %7147 = vmatprep.mubr.bf16.mxu0 0
        %7148 = vmatmul.mubr.bf16.gmra.mrb[0].mxu0 %v7011
        %v7149 = vpop.f32.mrb[0].mxu0
        %v7150 = vadd.f32 0.0, %v7149
        %v7151 = vpop.f32.mrb[0].mxu0
        %v7152 = vpop.f32.mrb[0].mxu0
        %v7153 = vadd.f32 0.0, %v7152
        %v7154 = vpop.f32.mrb[0].mxu0
        %7155 = vmatprep.mubr.bf16.mxu0 0
        %7156 = vmatmul.mubr.bf16.gmra.mrb[0].mxu0 %v7014
        %v7157 = vpop.f32.mrb[0].mxu0
        %v7158 = vadd.f32 0.0, %v7157
        %v7159 = vpop.f32.mrb[0].mxu0
        %v7160 = vpop.f32.mrb[0].mxu0
        %v7161 = vadd.f32 0.0, %v7160
        %v7162 = vpop.f32.mrb[0].mxu0
        %7163 = vmatprep.mubr.bf16.mxu0 0
        %7164 = vmatmul.mubr.bf16.gmra.mrb[0].mxu0 %v7017
        %v7165 = vpop.f32.mrb[0].mxu0
        %v7166 = vadd.f32 0.0, %v7165
        %v7167 = vpop.f32.mrb[0].mxu0
        %v7168 = vpop.f32.mrb[0].mxu0
        %v7169 = vadd.f32 0.0, %v7168
        %v7170 = vpop.f32.mrb[0].mxu0
        %7171 = vmatprep.mubr.bf16.mxu0 0
        %7172 = vmatmul.mubr.bf16.gmra.mrb[0].mxu0 %v7020
        %v7173 = vpop.f32.mrb[0].mxu0
        %v7174 = vadd.f32 0.0, %v7173
        %v7175 = vpop.f32.mrb[0].mxu0
        %v7176 = vpop.f32.mrb[0].mxu0
        %v7177 = vadd.f32 0.0, %v7176
        %v7178 = vpop.f32.mrb[0].mxu0
        %7179 = vmatprep.mubr.bf16.mxu0 0
        %7180 = vmatmul.mubr.bf16.gmra.mrb[0].mxu0 %v7023
        %v7181 = vpop.f32.mrb[0].mxu0
        %v7182 = vadd.f32 0.0, %v7181
        %v7183 = vpop.f32.mrb[0].mxu0
        %v7184 = vpop.f32.mrb[0].mxu0
        %v7185 = vadd.f32 0.0, %v7184
        %v7186 = vpop.f32.mrb[0].mxu0
        %7187 = vmatprep.mubr.bf16.mxu0 0
        %7188 = vmatmul.mubr.bf16.gmra.mrb[0].mxu0 %v7026
        %v7189 = vpop.f32.mrb[0].mxu0
        %v7190 = vadd.f32 0.0, %v7189
        %v7191 = vpop.f32.mrb[0].mxu0
        %v7192 = vpop.f32.mrb[0].mxu0
        %v7193 = vadd.f32 0.0, %v7192
        %v7194 = vpop.f32.mrb[0].mxu0
        %7195 = vdwg.mxu0
        %7196 = vmatprep.subr.bf16.mxu0 0
        %7197 = vmatpush1.bf16.msra.mxu0 %v5051
        %7198 = vmatprep.subr.bf16.mxu0 0
        %7199 = vmatpush1.bf16.msra.mxu0 %v5052
        %7200 = vmatprep.subr.bf16.mxu0 0
        %7201 = vmatpush1.bf16.msra.mxu0 %v5053
        %7202 = vmatprep.subr.bf16.mxu0 0
        %7203 = vmatpush1.bf16.msra.mxu0 %v5054
        %7204 = vmatprep.subr.bf16.mxu0 0
        %7205 = vmatpush1.bf16.msra.mxu0 %v5055
        %7206 = vmatprep.subr.bf16.mxu0 0
        %7207 = vmatpush1.bf16.msra.mxu0 %v5056
        %7208 = vmatprep.subr.bf16.mxu0 0
        %7209 = vmatpush1.bf16.msra.mxu0 %v5057
        %7210 = vmatprep.subr.bf16.mxu0 0
        %7211 = vmatpush1.bf16.msra.mxu0 %v5058
        %7212 = vmatprep.subr.bf16.mxu0 0
        %7213 = vmatpush1.bf16.msra.mxu0 0
        %7214 = vmatprep.subr.bf16.mxu0 0
        %7215 = vmatpush1.bf16.msra.mxu0 0
        %7216 = vmatprep.subr.bf16.mxu0 0
        %7217 = vmatpush1.bf16.msra.mxu0 0
        %7218 = vmatprep.subr.bf16.mxu0 0
        %7219 = vmatpush1.bf16.msra.mxu0 0
        %7220 = vmatprep.subr.bf16.mxu0 0
        %7221 = vmatpush1.bf16.msra.mxu0 0
        %7222 = vmatprep.subr.bf16.mxu0 0
        %7223 = vmatpush1.bf16.msra.mxu0 0
        %7224 = vmatprep.subr.bf16.mxu0 0
        %7225 = vmatpush1.bf16.msra.mxu0 0
        %7226 = vmatprep.subr.bf16.mxu0 0
        %7227 = vmatpush1.bf16.msra.mxu0 0
        %7228 = vmatprep.mubr.bf16.mxu0 0
        %7229 = vmatmul.mubr.bf16.gmra.mrb[0].mxu0 %v5035
        %v7230 = vpop.f32.mrb[0].mxu0
        %v7231 = vadd.f32 %v7070, %v7230
        %v7232 = vpop.f32.mrb[0].mxu0
        %v7233 = vpop.f32.mrb[0].mxu0
        %v7234 = vadd.f32 %v7073, %v7233
        %v7235 = vpop.f32.mrb[0].mxu0
        %7236 = vmatprep.mubr.bf16.mxu0 0
        %7237 = vmatmul.mubr.bf16.gmra.mrb[0].mxu0 %v5036
        %v7238 = vpop.f32.mrb[0].mxu0
        %v7239 = vadd.f32 %v7078, %v7238
        %v7240 = vpop.f32.mrb[0].mxu0
        %v7241 = vpop.f32.mrb[0].mxu0
        %v7242 = vadd.f32 %v7081, %v7241
        %v7243 = vpop.f32.mrb[0].mxu0
        %7244 = vmatprep.mubr.bf16.mxu0 0
        %7245 = vmatmul.mubr.bf16.gmra.mrb[0].mxu0 %v5037
        %v7246 = vpop.f32.mrb[0].mxu0
        %v7247 = vadd.f32 %v7086, %v7246
        %v7248 = vpop.f32.mrb[0].mxu0
        %v7249 = vpop.f32.mrb[0].mxu0
        %v7250 = vadd.f32 %v7089, %v7249
        %v7251 = vpop.f32.mrb[0].mxu0
        %7252 = vmatprep.mubr.bf16.mxu0 0
        %7253 = vmatmul.mubr.bf16.gmra.mrb[0].mxu0 %v5038
        %v7254 = vpop.f32.mrb[0].mxu0
        %v7255 = vadd.f32 %v7094, %v7254
        %v7256 = vpop.f32.mrb[0].mxu0
        %v7257 = vpop.f32.mrb[0].mxu0
        %v7258 = vadd.f32 %v7097, %v7257
        %v7259 = vpop.f32.mrb[0].mxu0
        %7260 = vmatprep.mubr.bf16.mxu0 0
        %7261 = vmatmul.mubr.bf16.gmra.mrb[0].mxu0 %v5039
        %v7262 = vpop.f32.mrb[0].mxu0
        %v7263 = vadd.f32 %v7102, %v7262
        %v7264 = vpop.f32.mrb[0].mxu0
        %v7265 = vpop.f32.mrb[0].mxu0
        %v7266 = vadd.f32 %v7105, %v7265
        %v7267 = vpop.f32.mrb[0].mxu0
        %7268 = vmatprep.mubr.bf16.mxu0 0
        %7269 = vmatmul.mubr.bf16.gmra.mrb[0].mxu0 %v5040
        %v7270 = vpop.f32.mrb[0].mxu0
        %v7271 = vadd.f32 %v7110, %v7270
        %v7272 = vpop.f32.mrb[0].mxu0
        %v7273 = vpop.f32.mrb[0].mxu0
        %v7274 = vadd.f32 %v7113, %v7273
        %v7275 = vpop.f32.mrb[0].mxu0
        %7276 = vmatprep.mubr.bf16.mxu0 0
        %7277 = vmatmul.mubr.bf16.gmra.mrb[0].mxu0 %v5041
        %v7278 = vpop.f32.mrb[0].mxu0
        %v7279 = vadd.f32 %v7118, %v7278
        %v7280 = vpop.f32.mrb[0].mxu0
        %v7281 = vpop.f32.mrb[0].mxu0
        %v7282 = vadd.f32 %v7121, %v7281
        %v7283 = vpop.f32.mrb[0].mxu0
        %7284 = vmatprep.mubr.bf16.mxu0 0
        %7285 = vmatmul.mubr.bf16.gmra.mrb[0].mxu0 %v5042
        %v7286 = vpop.f32.mrb[0].mxu0
        %v7287 = vadd.f32 %v7126, %v7286
        %v7288 = vpop.f32.mrb[0].mxu0
        %v7289 = vpop.f32.mrb[0].mxu0
        %v7290 = vadd.f32 %v7129, %v7289
        %v7291 = vpop.f32.mrb[0].mxu0
        %7292 = vdwg.mxu0
        %7293 = vmatprep.subr.bf16.mxu0 0
        %7294 = vmatpush1.bf16.msra.mxu0 %v5059
        %7295 = vmatprep.subr.bf16.mxu0 0
        %7296 = vmatpush1.bf16.msra.mxu0 %v5060
        %7297 = vmatprep.subr.bf16.mxu0 0
        %7298 = vmatpush1.bf16.msra.mxu0 %v5061
        %7299 = vmatprep.subr.bf16.mxu0 0
        %7300 = vmatpush1.bf16.msra.mxu0 %v5062
        %7301 = vmatprep.subr.bf16.mxu0 0
        %7302 = vmatpush1.bf16.msra.mxu0 %v5063
        %7303 = vmatprep.subr.bf16.mxu0 0
        %7304 = vmatpush1.bf16.msra.mxu0 %v5064
        %7305 = vmatprep.subr.bf16.mxu0 0
        %7306 = vmatpush1.bf16.msra.mxu0 %v5065
        %7307 = vmatprep.subr.bf16.mxu0 0
        %7308 = vmatpush1.bf16.msra.mxu0 %v5066
        %7309 = vmatprep.subr.bf16.mxu0 0
        %7310 = vmatpush1.bf16.msra.mxu0 0
        %7311 = vmatprep.subr.bf16.mxu0 0
        %7312 = vmatpush1.bf16.msra.mxu0 0
        %7313 = vmatprep.subr.bf16.mxu0 0
        %7314 = vmatpush1.bf16.msra.mxu0 0
        %7315 = vmatprep.subr.bf16.mxu0 0
        %7316 = vmatpush1.bf16.msra.mxu0 0
        %7317 = vmatprep.subr.bf16.mxu0 0
        %7318 = vmatpush1.bf16.msra.mxu0 0
        %7319 = vmatprep.subr.bf16.mxu0 0
        %7320 = vmatpush1.bf16.msra.mxu0 0
        %7321 = vmatprep.subr.bf16.mxu0 0
        %7322 = vmatpush1.bf16.msra.mxu0 0
        %7323 = vmatprep.subr.bf16.mxu0 0
        %7324 = vmatpush1.bf16.msra.mxu0 0
        %7325 = vmatprep.mubr.bf16.mxu0 0
        %7326 = vmatmul.mubr.bf16.gmra.mrb[0].mxu0 %v5043
        %v7327 = vpop.f32.mrb[0].mxu0
        %v7328 = vadd.f32 %v7134, %v7327
        %v7329 = vpop.f32.mrb[0].mxu0
        %v7330 = vpop.f32.mrb[0].mxu0
        %v7331 = vadd.f32 %v7137, %v7330
        %v7332 = vpop.f32.mrb[0].mxu0
        %7333 = vmatprep.mubr.bf16.mxu0 0
        %7334 = vmatmul.mubr.bf16.gmra.mrb[0].mxu0 %v5044
        %v7335 = vpop.f32.mrb[0].mxu0
        %v7336 = vadd.f32 %v7142, %v7335
        %v7337 = vpop.f32.mrb[0].mxu0
        %v7338 = vpop.f32.mrb[0].mxu0
        %v7339 = vadd.f32 %v7145, %v7338
        %v7340 = vpop.f32.mrb[0].mxu0
        %7341 = vmatprep.mubr.bf16.mxu0 0
        %7342 = vmatmul.mubr.bf16.gmra.mrb[0].mxu0 %v5045
        %v7343 = vpop.f32.mrb[0].mxu0
        %v7344 = vadd.f32 %v7150, %v7343
        %v7345 = vpop.f32.mrb[0].mxu0
        %v7346 = vpop.f32.mrb[0].mxu0
        %v7347 = vadd.f32 %v7153, %v7346
        %v7348 = vpop.f32.mrb[0].mxu0
        %7349 = vmatprep.mubr.bf16.mxu0 0
        %7350 = vmatmul.mubr.bf16.gmra.mrb[0].mxu0 %v5046
        %v7351 = vpop.f32.mrb[0].mxu0
        %v7352 = vadd.f32 %v7158, %v7351
        %v7353 = vpop.f32.mrb[0].mxu0
        %v7354 = vpop.f32.mrb[0].mxu0
        %v7355 = vadd.f32 %v7161, %v7354
        %v7356 = vpop.f32.mrb[0].mxu0
        %7357 = vmatprep.mubr.bf16.mxu0 0
        %7358 = vmatmul.mubr.bf16.gmra.mrb[0].mxu0 %v5047
        %v7359 = vpop.f32.mrb[0].mxu0
        %v7360 = vadd.f32 %v7166, %v7359
        %v7361 = vpop.f32.mrb[0].mxu0
        %v7362 = vpop.f32.mrb[0].mxu0
        %v7363 = vadd.f32 %v7169, %v7362
        %v7364 = vpop.f32.mrb[0].mxu0
        %7365 = vmatprep.mubr.bf16.mxu0 0
        %7366 = vmatmul.mubr.bf16.gmra.mrb[0].mxu0 %v5048
        %v7367 = vpop.f32.mrb[0].mxu0
        %v7368 = vadd.f32 %v7174, %v7367
        %v7369 = vpop.f32.mrb[0].mxu0
        %v7370 = vpop.f32.mrb[0].mxu0
        %v7371 = vadd.f32 %v7177, %v7370
        %v7372 = vpop.f32.mrb[0].mxu0
        %7373 = vmatprep.mubr.bf16.mxu0 0
        %7374 = vmatmul.mubr.bf16.gmra.mrb[0].mxu0 %v5049
        %v7375 = vpop.f32.mrb[0].mxu0
        %v7376 = vadd.f32 %v7182, %v7375
        %v7377 = vpop.f32.mrb[0].mxu0
        %v7378 = vpop.f32.mrb[0].mxu0
        %v7379 = vadd.f32 %v7185, %v7378
        %v7380 = vpop.f32.mrb[0].mxu0
        %7381 = vmatprep.mubr.bf16.mxu0 0
        %7382 = vmatmul.mubr.bf16.gmra.mrb[0].mxu0 %v5050
        %v7383 = vpop.f32.mrb[0].mxu0
        %v7384 = vadd.f32 %v7190, %v7383
        %v7385 = vpop.f32.mrb[0].mxu0
        %v7386 = vpop.f32.mrb[0].mxu0
        %v7387 = vadd.f32 %v7193, %v7386
        %v7388 = vpop.f32.mrb[0].mxu0
        %7389 = vdwg.mxu0
        %v7390 = vpack.c.bf16 %v7234, %v7231
        %v7391 = vpack.c.bf16 %v7242, %v7239
        %v7392 = vpack.c.bf16 %v7250, %v7247
        %v7393 = vpack.c.bf16 %v7258, %v7255
        %v7394 = vpack.c.bf16 %v7266, %v7263
        %v7395 = vpack.c.bf16 %v7274, %v7271
        %v7396 = vpack.c.bf16 %v7282, %v7279
        %v7397 = vpack.c.bf16 %v7290, %v7287
        %v7398 = vld [vmem:[%s829] sm:$0xf]
        %v7399 = vld [vmem:[%s829 + $0x4] sm:$0xf]
        %v7400 = vld [vmem:[%s829 + $0x8] sm:$0xf]
        %v7401 = vld [vmem:[%s829 + $0xc] sm:$0xf]
        %v7402 = vld [vmem:[%s829 + $0x10] sm:$0xf]
        %v7403 = vld [vmem:[%s829 + $0x14] sm:$0xf]
        %v7404 = vld [vmem:[%s829 + $0x18] sm:$0xf]
        %v7405 = vld [vmem:[%s829 + $0x1c] sm:$0xf]
        %v7406 = vld [vmem:[%s829 + $0x20] sm:$0xf]
        %v7407 = vld [vmem:[%s829 + $0x24] sm:$0xf]
        %v7408 = vld [vmem:[%s829 + $0x28] sm:$0xf]
        %v7409 = vld [vmem:[%s829 + $0x2c] sm:$0xf]
        %v7410 = vld [vmem:[%s829 + $0x30] sm:$0xf]
        %v7411 = vld [vmem:[%s829 + $0x34] sm:$0xf]
        %v7412 = vld [vmem:[%s829 + $0x38] sm:$0xf]
        %v7413 = vld [vmem:[%s829 + $0x3c] sm:$0xf]
        %v7414 = vpack.c.bf16 %v7331, %v7328
        %v7415 = vpack.c.bf16 %v7339, %v7336
        %v7416 = vpack.c.bf16 %v7347, %v7344
        %v7417 = vpack.c.bf16 %v7355, %v7352
        %v7418 = vpack.c.bf16 %v7363, %v7360
        %v7419 = vpack.c.bf16 %v7371, %v7368
        %v7420 = vpack.c.bf16 %v7379, %v7376
        %v7421 = vpack.c.bf16 %v7387, %v7384
        %s7422 = scalar_lea.vmem %s829, 64 [#allocation13]
        %v7423 = vld [vmem:[%s7422] sm:$0xf]
        %v7424 = vld [vmem:[%s7422 + $0x4] sm:$0xf]
        %v7425 = vld [vmem:[%s7422 + $0x8] sm:$0xf]
        %v7426 = vld [vmem:[%s7422 + $0xc] sm:$0xf]
        %v7427 = vld [vmem:[%s7422 + $0x10] sm:$0xf]
        %v7428 = vld [vmem:[%s7422 + $0x14] sm:$0xf]
        %v7429 = vld [vmem:[%s7422 + $0x18] sm:$0xf]
        %v7430 = vld [vmem:[%s7422 + $0x1c] sm:$0xf]
        %v7431 = vld [vmem:[%s7422 + $0x20] sm:$0xf]
        %v7432 = vld [vmem:[%s7422 + $0x24] sm:$0xf]
        %v7433 = vld [vmem:[%s7422 + $0x28] sm:$0xf]
        %v7434 = vld [vmem:[%s7422 + $0x2c] sm:$0xf]
        %v7435 = vld [vmem:[%s7422 + $0x30] sm:$0xf]
        %v7436 = vld [vmem:[%s7422 + $0x34] sm:$0xf]
        %v7437 = vld [vmem:[%s7422 + $0x38] sm:$0xf]
        %v7438 = vld [vmem:[%s7422 + $0x3c] sm:$0xf]
        %v7455 = vunpack.c.l.b16 %v7423
        %v7456 = vunpack.c.l.b16 %v7424
        %v7457 = vunpack.c.l.b16 %v7425
        %v7458 = vunpack.c.l.b16 %v7426
        %v7459 = vunpack.c.l.b16 %v7427
        %v7460 = vunpack.c.l.b16 %v7428
        %v7461 = vunpack.c.l.b16 %v7429
        %v7462 = vunpack.c.l.b16 %v7430
        %v7463 = vunpack.c.l.b16 %v7431
        %v7464 = vunpack.c.l.b16 %v7432
        %v7465 = vunpack.c.l.b16 %v7433
        %v7466 = vunpack.c.l.b16 %v7434
        %v7467 = vunpack.c.l.b16 %v7435
        %v7468 = vunpack.c.l.b16 %v7436
        %v7469 = vunpack.c.l.b16 %v7437
        %v7470 = vunpack.c.l.b16 %v7438
        %v7471 = vpack.c.b16 %v7456, %v7455
        %v7472 = vpack.c.b16 %v7458, %v7457
        %v7473 = vpack.c.b16 %v7460, %v7459
        %v7474 = vpack.c.b16 %v7462, %v7461
        %v7475 = vpack.c.b16 %v7464, %v7463
        %v7476 = vpack.c.b16 %v7466, %v7465
        %v7477 = vpack.c.b16 %v7468, %v7467
        %v7478 = vpack.c.b16 %v7470, %v7469
        %7487 = vmatprep.subr.bf16.mxu0 0
        %7488 = vmatpush1.bf16.msra.mxu0 %v7471
        %7489 = vmatprep.subr.bf16.mxu0 0
        %7490 = vmatpush1.bf16.msra.mxu0 %v7472
        %7491 = vmatprep.subr.bf16.mxu0 0
        %7492 = vmatpush1.bf16.msra.mxu0 %v7473
        %7493 = vmatprep.subr.bf16.mxu0 0
        %7494 = vmatpush1.bf16.msra.mxu0 %v7474
        %7495 = vmatprep.subr.bf16.mxu0 0
        %7496 = vmatpush1.bf16.msra.mxu0 %v7475
        %7497 = vmatprep.subr.bf16.mxu0 0
        %7498 = vmatpush1.bf16.msra.mxu0 %v7476
        %7499 = vmatprep.subr.bf16.mxu0 0
        %7500 = vmatpush1.bf16.msra.mxu0 %v7477
        %7501 = vmatprep.subr.bf16.mxu0 0
        %7502 = vmatpush1.bf16.msra.mxu0 %v7478
        %7503 = vmatprep.subr.bf16.mxu0 0
        %7504 = vmatpush1.bf16.msra.mxu0 0
        %7505 = vmatprep.subr.bf16.mxu0 0
        %7506 = vmatpush1.bf16.msra.mxu0 0
        %7507 = vmatprep.subr.bf16.mxu0 0
        %7508 = vmatpush1.bf16.msra.mxu0 0
        %7509 = vmatprep.subr.bf16.mxu0 0
        %7510 = vmatpush1.bf16.msra.mxu0 0
        %7511 = vmatprep.subr.bf16.mxu0 0
        %7512 = vmatpush1.bf16.msra.mxu0 0
        %7513 = vmatprep.subr.bf16.mxu0 0
        %7514 = vmatpush1.bf16.msra.mxu0 0
        %7515 = vmatprep.subr.bf16.mxu0 0
        %7516 = vmatpush1.bf16.msra.mxu0 0
        %7517 = vmatprep.subr.bf16.mxu0 0
        %7518 = vmatpush1.bf16.msra.mxu0 0
        %7519 = vmatprep.mubr.bf16.mxu0 0
        %7520 = vmatmul.mubr.bf16.gmra.mrb[0].mxu0 %v7414
        %v7521 = vpop.f32.mrb[0].mxu0
        %v7522 = vadd.f32 0.0, %v7521
        %v7523 = vpop.f32.mrb[0].mxu0
        %v7524 = vpop.f32.mrb[0].mxu0
        %v7525 = vadd.f32 0.0, %v7524
        %v7526 = vpop.f32.mrb[0].mxu0
        %7527 = vmatprep.mubr.bf16.mxu0 0
        %7528 = vmatmul.mubr.bf16.gmra.mrb[0].mxu0 %v7415
        %v7529 = vpop.f32.mrb[0].mxu0
        %v7530 = vadd.f32 0.0, %v7529
        %v7531 = vpop.f32.mrb[0].mxu0
        %v7532 = vpop.f32.mrb[0].mxu0
        %v7533 = vadd.f32 0.0, %v7532
        %v7534 = vpop.f32.mrb[0].mxu0
        %7535 = vmatprep.mubr.bf16.mxu0 0
        %7536 = vmatmul.mubr.bf16.gmra.mrb[0].mxu0 %v7416
        %v7537 = vpop.f32.mrb[0].mxu0
        %v7538 = vadd.f32 0.0, %v7537
        %v7539 = vpop.f32.mrb[0].mxu0
        %v7540 = vpop.f32.mrb[0].mxu0
        %v7541 = vadd.f32 0.0, %v7540
        %v7542 = vpop.f32.mrb[0].mxu0
        %7543 = vmatprep.mubr.bf16.mxu0 0
        %7544 = vmatmul.mubr.bf16.gmra.mrb[0].mxu0 %v7417
        %v7545 = vpop.f32.mrb[0].mxu0
        %v7546 = vadd.f32 0.0, %v7545
        %v7547 = vpop.f32.mrb[0].mxu0
        %v7548 = vpop.f32.mrb[0].mxu0
        %v7549 = vadd.f32 0.0, %v7548
        %v7550 = vpop.f32.mrb[0].mxu0
        %7551 = vmatprep.mubr.bf16.mxu0 0
        %7552 = vmatmul.mubr.bf16.gmra.mrb[0].mxu0 %v7418
        %v7553 = vpop.f32.mrb[0].mxu0
        %v7554 = vadd.f32 0.0, %v7553
        %v7555 = vpop.f32.mrb[0].mxu0
        %v7556 = vpop.f32.mrb[0].mxu0
        %v7557 = vadd.f32 0.0, %v7556
        %v7558 = vpop.f32.mrb[0].mxu0
        %7559 = vmatprep.mubr.bf16.mxu0 0
        %7560 = vmatmul.mubr.bf16.gmra.mrb[0].mxu0 %v7419
        %v7561 = vpop.f32.mrb[0].mxu0
        %v7562 = vadd.f32 0.0, %v7561
        %v7563 = vpop.f32.mrb[0].mxu0
        %v7564 = vpop.f32.mrb[0].mxu0
        %v7565 = vadd.f32 0.0, %v7564
        %v7566 = vpop.f32.mrb[0].mxu0
        %7567 = vmatprep.mubr.bf16.mxu0 0
        %7568 = vmatmul.mubr.bf16.gmra.mrb[0].mxu0 %v7420
        %v7569 = vpop.f32.mrb[0].mxu0
        %v7570 = vadd.f32 0.0, %v7569
        %v7571 = vpop.f32.mrb[0].mxu0
        %v7572 = vpop.f32.mrb[0].mxu0
        %v7573 = vadd.f32 0.0, %v7572
        %v7574 = vpop.f32.mrb[0].mxu0
        %7575 = vmatprep.mubr.bf16.mxu0 0
        %7576 = vmatmul.mubr.bf16.gmra.mrb[0].mxu0 %v7421
        %v7577 = vpop.f32.mrb[0].mxu0
        %v7578 = vadd.f32 0.0, %v7577
        %v7579 = vpop.f32.mrb[0].mxu0
        %v7580 = vpop.f32.mrb[0].mxu0
        %v7581 = vadd.f32 0.0, %v7580
        %v7582 = vpop.f32.mrb[0].mxu0
        %7583 = vdwg.mxu0
        %v7600 = vunpack.c.l.b16 %v7398
        %v7601 = vunpack.c.l.b16 %v7399
        %v7602 = vunpack.c.l.b16 %v7400
        %v7603 = vunpack.c.l.b16 %v7401
        %v7604 = vunpack.c.l.b16 %v7402
        %v7605 = vunpack.c.l.b16 %v7403
        %v7606 = vunpack.c.l.b16 %v7404
        %v7607 = vunpack.c.l.b16 %v7405
        %v7608 = vunpack.c.l.b16 %v7406
        %v7609 = vunpack.c.l.b16 %v7407
        %v7610 = vunpack.c.l.b16 %v7408
        %v7611 = vunpack.c.l.b16 %v7409
        %v7612 = vunpack.c.l.b16 %v7410
        %v7613 = vunpack.c.l.b16 %v7411
        %v7614 = vunpack.c.l.b16 %v7412
        %v7615 = vunpack.c.l.b16 %v7413
        %v7616 = vpack.c.b16 %v7601, %v7600
        %v7617 = vpack.c.b16 %v7603, %v7602
        %v7618 = vpack.c.b16 %v7605, %v7604
        %v7619 = vpack.c.b16 %v7607, %v7606
        %v7620 = vpack.c.b16 %v7609, %v7608
        %v7621 = vpack.c.b16 %v7611, %v7610
        %v7622 = vpack.c.b16 %v7613, %v7612
        %v7623 = vpack.c.b16 %v7615, %v7614
        %7632 = vmatprep.subr.bf16.mxu0 0
        %7633 = vmatpush1.bf16.msra.mxu0 %v7616
        %7634 = vmatprep.subr.bf16.mxu0 0
        %7635 = vmatpush1.bf16.msra.mxu0 %v7617
        %7636 = vmatprep.subr.bf16.mxu0 0
        %7637 = vmatpush1.bf16.msra.mxu0 %v7618
        %7638 = vmatprep.subr.bf16.mxu0 0
        %7639 = vmatpush1.bf16.msra.mxu0 %v7619
        %7640 = vmatprep.subr.bf16.mxu0 0
        %7641 = vmatpush1.bf16.msra.mxu0 %v7620
        %7642 = vmatprep.subr.bf16.mxu0 0
        %7643 = vmatpush1.bf16.msra.mxu0 %v7621
        %7644 = vmatprep.subr.bf16.mxu0 0
        %7645 = vmatpush1.bf16.msra.mxu0 %v7622
        %7646 = vmatprep.subr.bf16.mxu0 0
        %7647 = vmatpush1.bf16.msra.mxu0 %v7623
        %7648 = vmatprep.subr.bf16.mxu0 0
        %7649 = vmatpush1.bf16.msra.mxu0 0
        %7650 = vmatprep.subr.bf16.mxu0 0
        %7651 = vmatpush1.bf16.msra.mxu0 0
        %7652 = vmatprep.subr.bf16.mxu0 0
        %7653 = vmatpush1.bf16.msra.mxu0 0
        %7654 = vmatprep.subr.bf16.mxu0 0
        %7655 = vmatpush1.bf16.msra.mxu0 0
        %7656 = vmatprep.subr.bf16.mxu0 0
        %7657 = vmatpush1.bf16.msra.mxu0 0
        %7658 = vmatprep.subr.bf16.mxu0 0
        %7659 = vmatpush1.bf16.msra.mxu0 0
        %7660 = vmatprep.subr.bf16.mxu0 0
        %7661 = vmatpush1.bf16.msra.mxu0 0
        %7662 = vmatprep.subr.bf16.mxu0 0
        %7663 = vmatpush1.bf16.msra.mxu0 0
        %7664 = vmatprep.mubr.bf16.mxu0 0
        %7665 = vmatmul.mubr.bf16.gmra.mrb[0].mxu0 %v7390
        %v7666 = vpop.f32.mrb[0].mxu0
        %v7667 = vadd.f32 %v7522, %v7666
        %v7668 = vpop.f32.mrb[0].mxu0
        %v7669 = vpop.f32.mrb[0].mxu0
        %v7670 = vadd.f32 %v7525, %v7669
        %v7671 = vpop.f32.mrb[0].mxu0
        %7672 = vmatprep.mubr.bf16.mxu0 0
        %7673 = vmatmul.mubr.bf16.gmra.mrb[0].mxu0 %v7391
        %v7674 = vpop.f32.mrb[0].mxu0
        %v7675 = vadd.f32 %v7530, %v7674
        %v7676 = vpop.f32.mrb[0].mxu0
        %v7677 = vpop.f32.mrb[0].mxu0
        %v7678 = vadd.f32 %v7533, %v7677
        %v7679 = vpop.f32.mrb[0].mxu0
        %7680 = vmatprep.mubr.bf16.mxu0 0
        %7681 = vmatmul.mubr.bf16.gmra.mrb[0].mxu0 %v7392
        %v7682 = vpop.f32.mrb[0].mxu0
        %v7683 = vadd.f32 %v7538, %v7682
        %v7684 = vpop.f32.mrb[0].mxu0
        %v7685 = vpop.f32.mrb[0].mxu0
        %v7686 = vadd.f32 %v7541, %v7685
        %v7687 = vpop.f32.mrb[0].mxu0
        %7688 = vmatprep.mubr.bf16.mxu0 0
        %7689 = vmatmul.mubr.bf16.gmra.mrb[0].mxu0 %v7393
        %v7690 = vpop.f32.mrb[0].mxu0
        %v7691 = vadd.f32 %v7546, %v7690
        %v7692 = vpop.f32.mrb[0].mxu0
        %v7693 = vpop.f32.mrb[0].mxu0
        %v7694 = vadd.f32 %v7549, %v7693
        %v7695 = vpop.f32.mrb[0].mxu0
        %7696 = vmatprep.mubr.bf16.mxu0 0
        %7697 = vmatmul.mubr.bf16.gmra.mrb[0].mxu0 %v7394
        %v7698 = vpop.f32.mrb[0].mxu0
        %v7699 = vadd.f32 %v7554, %v7698
        %v7700 = vpop.f32.mrb[0].mxu0
        %v7701 = vpop.f32.mrb[0].mxu0
        %v7702 = vadd.f32 %v7557, %v7701
        %v7703 = vpop.f32.mrb[0].mxu0
        %7704 = vmatprep.mubr.bf16.mxu0 0
        %7705 = vmatmul.mubr.bf16.gmra.mrb[0].mxu0 %v7395
        %v7706 = vpop.f32.mrb[0].mxu0
        %v7707 = vadd.f32 %v7562, %v7706
        %v7708 = vpop.f32.mrb[0].mxu0
        %v7709 = vpop.f32.mrb[0].mxu0
        %v7710 = vadd.f32 %v7565, %v7709
        %v7711 = vpop.f32.mrb[0].mxu0
        %7712 = vmatprep.mubr.bf16.mxu0 0
        %7713 = vmatmul.mubr.bf16.gmra.mrb[0].mxu0 %v7396
        %v7714 = vpop.f32.mrb[0].mxu0
        %v7715 = vadd.f32 %v7570, %v7714
        %v7716 = vpop.f32.mrb[0].mxu0
        %v7717 = vpop.f32.mrb[0].mxu0
        %v7718 = vadd.f32 %v7573, %v7717
        %v7719 = vpop.f32.mrb[0].mxu0
        %7720 = vmatprep.mubr.bf16.mxu0 0
        %7721 = vmatmul.mubr.bf16.gmra.mrb[0].mxu0 %v7397
        %v7722 = vpop.f32.mrb[0].mxu0
        %v7723 = vadd.f32 %v7578, %v7722
        %v7724 = vpop.f32.mrb[0].mxu0
        %v7725 = vpop.f32.mrb[0].mxu0
        %v7726 = vadd.f32 %v7581, %v7725
        %v7727 = vpop.f32.mrb[0].mxu0
        %7728 = vdwg.mxu0
        %v7729 = vld [vmem:[%s838] sm:$0x1]
        %v7730 = vlaneseq
        %v7731 = vshrl.u32 %v7730, 7
        %v7732 = vsub.s32 0, %v7731
        %v7733 = vrot.slane %v7729, %v7732
        %v7734 = vadd.f32 %v7667, %v7733
        %v7735 = vadd.f32 %v7670, %v7733
        %v7736 = vadd.f32 %v7675, %v7733
        %v7737 = vadd.f32 %v7678, %v7733
        %v7738 = vadd.f32 %v7683, %v7733
        %v7739 = vadd.f32 %v7686, %v7733
        %v7740 = vadd.f32 %v7691, %v7733
        %v7741 = vadd.f32 %v7694, %v7733
        %v7742 = vadd.f32 %v7699, %v7733
        %v7743 = vadd.f32 %v7702, %v7733
        %v7744 = vadd.f32 %v7707, %v7733
        %v7745 = vadd.f32 %v7710, %v7733
        %v7746 = vadd.f32 %v7715, %v7733
        %v7747 = vadd.f32 %v7718, %v7733
        %v7748 = vadd.f32 %v7723, %v7733
        %v7749 = vadd.f32 %v7726, %v7733
        %v7750 = vadd.f32 %v1035, %v7734
        %v7751 = vadd.f32 %v1036, %v7735
        %v7752 = vadd.f32 %v1037, %v7736
        %v7753 = vadd.f32 %v1038, %v7737
        %v7754 = vadd.f32 %v1039, %v7738
        %v7755 = vadd.f32 %v1040, %v7739
        %v7756 = vadd.f32 %v1041, %v7740
        %v7757 = vadd.f32 %v1042, %v7741
        %v7758 = vadd.f32 %v1043, %v7742
        %v7759 = vadd.f32 %v1044, %v7743
        %v7760 = vadd.f32 %v1045, %v7744
        %v7761 = vadd.f32 %v1046, %v7745
        %v7762 = vadd.f32 %v1047, %v7746
        %v7763 = vadd.f32 %v1048, %v7747
        %v7764 = vadd.f32 %v1049, %v7748
        %v7765 = vadd.f32 %v1050, %v7749
        %v7766 = vld [vmem:[%s838 + $0x1] sm:$0x1]
        %v7767 = vld [vmem:[%s838 + $0x2] sm:$0x1]
        %v7768 = vsel %vm1196, %v7750, 0.0
        %7769 = vadd.xlane.f32.xlu0 %v7768
        %v7770 = vpop.xlane.xlu0 %7769
        %v7771 = vsel %vm1196, %v7751, 0.0
        %7772 = vadd.xlane.f32.xlu0 %v7771
        %v7773 = vpop.xlane.xlu0 %7772
        %v7774 = vsel %vm1196, %v7752, 0.0
        %7775 = vadd.xlane.f32.xlu0 %v7774
        %v7776 = vpop.xlane.xlu0 %7775
        %v7777 = vsel %vm1196, %v7753, 0.0
        %7778 = vadd.xlane.f32.xlu0 %v7777
        %v7779 = vpop.xlane.xlu0 %7778
        %v7780 = vsel %vm1196, %v7754, 0.0
        %7781 = vadd.xlane.f32.xlu0 %v7780
        %v7782 = vpop.xlane.xlu0 %7781
        %v7783 = vsel %vm1196, %v7755, 0.0
        %7784 = vadd.xlane.f32.xlu0 %v7783
        %v7785 = vpop.xlane.xlu0 %7784
        %v7786 = vsel %vm1196, %v7756, 0.0
        %7787 = vadd.xlane.f32.xlu0 %v7786
        %v7788 = vpop.xlane.xlu0 %7787
        %v7789 = vsel %vm1196, %v7757, 0.0
        %7790 = vadd.xlane.f32.xlu0 %v7789
        %v7791 = vpop.xlane.xlu0 %7790
        %v7792 = vsel %vm1196, %v7758, 0.0
        %7793 = vadd.xlane.f32.xlu0 %v7792
        %v7794 = vpop.xlane.xlu0 %7793
        %v7795 = vsel %vm1196, %v7759, 0.0
        %7796 = vadd.xlane.f32.xlu0 %v7795
        %v7797 = vpop.xlane.xlu0 %7796
        %v7798 = vsel %vm1196, %v7760, 0.0
        %7799 = vadd.xlane.f32.xlu0 %v7798
        %v7800 = vpop.xlane.xlu0 %7799
        %v7801 = vsel %vm1196, %v7761, 0.0
        %7802 = vadd.xlane.f32.xlu0 %v7801
        %v7803 = vpop.xlane.xlu0 %7802
        %v7804 = vsel %vm1196, %v7762, 0.0
        %7805 = vadd.xlane.f32.xlu0 %v7804
        %v7806 = vpop.xlane.xlu0 %7805
        %v7807 = vsel %vm1196, %v7763, 0.0
        %7808 = vadd.xlane.f32.xlu0 %v7807
        %v7809 = vpop.xlane.xlu0 %7808
        %v7810 = vsel %vm1196, %v7764, 0.0
        %7811 = vadd.xlane.f32.xlu0 %v7810
        %v7812 = vpop.xlane.xlu0 %7811
        %v7813 = vsel %vm1196, %v7765, 0.0
        %7814 = vadd.xlane.f32.xlu0 %v7813
        %v7815 = vpop.xlane.xlu0 %7814
        %v7816 = vrcp.pop 32.0
        %v7817 = vmul.f32 %v7770, %v7816
        %v7818 = vmul.f32 %v7773, %v7816
        %v7819 = vmul.f32 %v7776, %v7816
        %v7820 = vmul.f32 %v7779, %v7816
        %v7821 = vmul.f32 %v7782, %v7816
        %v7822 = vmul.f32 %v7785, %v7816
        %v7823 = vmul.f32 %v7788, %v7816
        %v7824 = vmul.f32 %v7791, %v7816
        %v7825 = vmul.f32 %v7794, %v7816
        %v7826 = vmul.f32 %v7797, %v7816
        %v7827 = vmul.f32 %v7800, %v7816
        %v7828 = vmul.f32 %v7803, %v7816
        %v7829 = vmul.f32 %v7806, %v7816
        %v7830 = vmul.f32 %v7809, %v7816
        %v7831 = vmul.f32 %v7812, %v7816
        %v7832 = vmul.f32 %v7815, %v7816
        %v7833 = vsub.f32 %v7750, %v7817
        %v7834 = vsub.f32 %v7751, %v7818
        %v7835 = vsub.f32 %v7752, %v7819
        %v7836 = vsub.f32 %v7753, %v7820
        %v7837 = vsub.f32 %v7754, %v7821
        %v7838 = vsub.f32 %v7755, %v7822
        %v7839 = vsub.f32 %v7756, %v7823
        %v7840 = vsub.f32 %v7757, %v7824
        %v7841 = vsub.f32 %v7758, %v7825
        %v7842 = vsub.f32 %v7759, %v7826
        %v7843 = vsub.f32 %v7760, %v7827
        %v7844 = vsub.f32 %v7761, %v7828
        %v7845 = vsub.f32 %v7762, %v7829
        %v7846 = vsub.f32 %v7763, %v7830
        %v7847 = vsub.f32 %v7764, %v7831
        %v7848 = vsub.f32 %v7765, %v7832
        %v7849 = vmul.f32 %v7833, %v7833
        %v7850 = vmul.f32 %v7834, %v7834
        %v7851 = vmul.f32 %v7835, %v7835
        %v7852 = vmul.f32 %v7836, %v7836
        %v7853 = vmul.f32 %v7837, %v7837
        %v7854 = vmul.f32 %v7838, %v7838
        %v7855 = vmul.f32 %v7839, %v7839
        %v7856 = vmul.f32 %v7840, %v7840
        %v7857 = vmul.f32 %v7841, %v7841
        %v7858 = vmul.f32 %v7842, %v7842
        %v7859 = vmul.f32 %v7843, %v7843
        %v7860 = vmul.f32 %v7844, %v7844
        %v7861 = vmul.f32 %v7845, %v7845
        %v7862 = vmul.f32 %v7846, %v7846
        %v7863 = vmul.f32 %v7847, %v7847
        %v7864 = vmul.f32 %v7848, %v7848
        %v7865 = vsel %vm1196, %v7849, 0.0
        %7866 = vadd.xlane.f32.xlu0 %v7865
        %v7867 = vpop.xlane.xlu0 %7866
        %v7868 = vsel %vm1196, %v7850, 0.0
        %7869 = vadd.xlane.f32.xlu0 %v7868
        %v7870 = vpop.xlane.xlu0 %7869
        %v7871 = vsel %vm1196, %v7851, 0.0
        %7872 = vadd.xlane.f32.xlu0 %v7871
        %v7873 = vpop.xlane.xlu0 %7872
        %v7874 = vsel %vm1196, %v7852, 0.0
        %7875 = vadd.xlane.f32.xlu0 %v7874
        %v7876 = vpop.xlane.xlu0 %7875
        %v7877 = vsel %vm1196, %v7853, 0.0
        %7878 = vadd.xlane.f32.xlu0 %v7877
        %v7879 = vpop.xlane.xlu0 %7878
        %v7880 = vsel %vm1196, %v7854, 0.0
        %7881 = vadd.xlane.f32.xlu0 %v7880
        %v7882 = vpop.xlane.xlu0 %7881
        %v7883 = vsel %vm1196, %v7855, 0.0
        %7884 = vadd.xlane.f32.xlu0 %v7883
        %v7885 = vpop.xlane.xlu0 %7884
        %v7886 = vsel %vm1196, %v7856, 0.0
        %7887 = vadd.xlane.f32.xlu0 %v7886
        %v7888 = vpop.xlane.xlu0 %7887
        %v7889 = vsel %vm1196, %v7857, 0.0
        %7890 = vadd.xlane.f32.xlu0 %v7889
        %v7891 = vpop.xlane.xlu0 %7890
        %v7892 = vsel %vm1196, %v7858, 0.0
        %7893 = vadd.xlane.f32.xlu0 %v7892
        %v7894 = vpop.xlane.xlu0 %7893
        %v7895 = vsel %vm1196, %v7859, 0.0
        %7896 = vadd.xlane.f32.xlu0 %v7895
        %v7897 = vpop.xlane.xlu0 %7896
        %v7898 = vsel %vm1196, %v7860, 0.0
        %7899 = vadd.xlane.f32.xlu0 %v7898
        %v7900 = vpop.xlane.xlu0 %7899
        %v7901 = vsel %vm1196, %v7861, 0.0
        %7902 = vadd.xlane.f32.xlu0 %v7901
        %v7903 = vpop.xlane.xlu0 %7902
        %v7904 = vsel %vm1196, %v7862, 0.0
        %7905 = vadd.xlane.f32.xlu0 %v7904
        %v7906 = vpop.xlane.xlu0 %7905
        %v7907 = vsel %vm1196, %v7863, 0.0
        %7908 = vadd.xlane.f32.xlu0 %v7907
        %v7909 = vpop.xlane.xlu0 %7908
        %v7910 = vsel %vm1196, %v7864, 0.0
        %7911 = vadd.xlane.f32.xlu0 %v7910
        %v7912 = vpop.xlane.xlu0 %7911
        %v7913 = vmul.f32 %v7867, %v7816
        %v7914 = vmul.f32 %v7870, %v7816
        %v7915 = vmul.f32 %v7873, %v7816
        %v7916 = vmul.f32 %v7876, %v7816
        %v7917 = vmul.f32 %v7879, %v7816
        %v7918 = vmul.f32 %v7882, %v7816
        %v7919 = vmul.f32 %v7885, %v7816
        %v7920 = vmul.f32 %v7888, %v7816
        %v7921 = vmul.f32 %v7891, %v7816
        %v7922 = vmul.f32 %v7894, %v7816
        %v7923 = vmul.f32 %v7897, %v7816
        %v7924 = vmul.f32 %v7900, %v7816
        %v7925 = vmul.f32 %v7903, %v7816
        %v7926 = vmul.f32 %v7906, %v7816
        %v7927 = vmul.f32 %v7909, %v7816
        %v7928 = vmul.f32 %v7912, %v7816
        %v7929 = vadd.f32 %v7913, 1e-05
        %v7930 = vadd.f32 %v7914, 1e-05
        %v7931 = vadd.f32 %v7915, 1e-05
        %v7932 = vadd.f32 %v7916, 1e-05
        %v7933 = vadd.f32 %v7917, 1e-05
        %v7934 = vadd.f32 %v7918, 1e-05
        %v7935 = vadd.f32 %v7919, 1e-05
        %v7936 = vadd.f32 %v7920, 1e-05
        %v7937 = vadd.f32 %v7921, 1e-05
        %v7938 = vadd.f32 %v7922, 1e-05
        %v7939 = vadd.f32 %v7923, 1e-05
        %v7940 = vadd.f32 %v7924, 1e-05
        %v7941 = vadd.f32 %v7925, 1e-05
        %v7942 = vadd.f32 %v7926, 1e-05
        %v7943 = vadd.f32 %v7927, 1e-05
        %v7944 = vadd.f32 %v7928, 1e-05
        %v7945 = vrsqrt.pop %v7929
        %v7946 = vrsqrt.pop %v7930
        %v7947 = vrsqrt.pop %v7931
        %v7948 = vrsqrt.pop %v7932
        %v7949 = vrsqrt.pop %v7933
        %v7950 = vrsqrt.pop %v7934
        %v7951 = vrsqrt.pop %v7935
        %v7952 = vrsqrt.pop %v7936
        %v7953 = vrsqrt.pop %v7937
        %v7954 = vrsqrt.pop %v7938
        %v7955 = vrsqrt.pop %v7939
        %v7956 = vrsqrt.pop %v7940
        %v7957 = vrsqrt.pop %v7941
        %v7958 = vrsqrt.pop %v7942
        %v7959 = vrsqrt.pop %v7943
        %v7960 = vrsqrt.pop %v7944
        %v7961 = vmul.f32 %v7833, %v7945
        %v7962 = vmul.f32 %v7834, %v7946
        %v7963 = vmul.f32 %v7835, %v7947
        %v7964 = vmul.f32 %v7836, %v7948
        %v7965 = vmul.f32 %v7837, %v7949
        %v7966 = vmul.f32 %v7838, %v7950
        %v7967 = vmul.f32 %v7839, %v7951
        %v7968 = vmul.f32 %v7840, %v7952
        %v7969 = vmul.f32 %v7841, %v7953
        %v7970 = vmul.f32 %v7842, %v7954
        %v7971 = vmul.f32 %v7843, %v7955
        %v7972 = vmul.f32 %v7844, %v7956
        %v7973 = vmul.f32 %v7845, %v7957
        %v7974 = vmul.f32 %v7846, %v7958
        %v7975 = vmul.f32 %v7847, %v7959
        %v7976 = vmul.f32 %v7848, %v7960
        %v7977 = vlaneseq
        %v7978 = vshrl.u32 %v7977, 7
        %v7979 = vsub.s32 0, %v7978
        %v7980 = vrot.slane %v7766, %v7979
        %v7981 = vmul.f32 %v7961, %v7980
        %v7982 = vmul.f32 %v7962, %v7980
        %v7983 = vmul.f32 %v7963, %v7980
        %v7984 = vmul.f32 %v7964, %v7980
        %v7985 = vmul.f32 %v7965, %v7980
        %v7986 = vmul.f32 %v7966, %v7980
        %v7987 = vmul.f32 %v7967, %v7980
        %v7988 = vmul.f32 %v7968, %v7980
        %v7989 = vmul.f32 %v7969, %v7980
        %v7990 = vmul.f32 %v7970, %v7980
        %v7991 = vmul.f32 %v7971, %v7980
        %v7992 = vmul.f32 %v7972, %v7980
        %v7993 = vmul.f32 %v7973, %v7980
        %v7994 = vmul.f32 %v7974, %v7980
        %v7995 = vmul.f32 %v7975, %v7980
        %v7996 = vmul.f32 %v7976, %v7980
        %v7997 = vlaneseq
        %v7998 = vshrl.u32 %v7997, 7
        %v7999 = vsub.s32 0, %v7998
        %v8000 = vrot.slane %v7767, %v7999
        %v8001 = vadd.f32 %v7981, %v8000
        %v8002 = vadd.f32 %v7982, %v8000
        %v8003 = vadd.f32 %v7983, %v8000
        %v8004 = vadd.f32 %v7984, %v8000
        %v8005 = vadd.f32 %v7985, %v8000
        %v8006 = vadd.f32 %v7986, %v8000
        %v8007 = vadd.f32 %v7987, %v8000
        %v8008 = vadd.f32 %v7988, %v8000
        %v8009 = vadd.f32 %v7989, %v8000
        %v8010 = vadd.f32 %v7990, %v8000
        %v8011 = vadd.f32 %v7991, %v8000
        %v8012 = vadd.f32 %v7992, %v8000
        %v8013 = vadd.f32 %v7993, %v8000
        %v8014 = vadd.f32 %v7994, %v8000
        %v8015 = vadd.f32 %v7995, %v8000
        %v8016 = vadd.f32 %v7996, %v8000
        %8018 = vset.pattern.permute.xlu0 0
        %8019 = vperm.xlu0 %8018, %v1051
        %v8020 = vpop.permute.xlu0 %8019
        %8023 = vset.pattern.permute.xlu0 0
        %8024 = vperm.xlu0 %8023, %v1052
        %v8025 = vpop.permute.xlu0 %8024
        %8028 = vset.pattern.permute.xlu0 0
        %8029 = vperm.xlu0 %8028, %v1053
        %v8030 = vpop.permute.xlu0 %8029
        %8033 = vset.pattern.permute.xlu0 0
        %8034 = vperm.xlu0 %8033, %v1054
        %v8035 = vpop.permute.xlu0 %8034
        %8038 = vset.pattern.permute.xlu0 0
        %8039 = vperm.xlu0 %8038, %v1055
        %v8040 = vpop.permute.xlu0 %8039
        %8043 = vset.pattern.permute.xlu0 0
        %8044 = vperm.xlu0 %8043, %v1056
        %v8045 = vpop.permute.xlu0 %8044
        %8048 = vset.pattern.permute.xlu0 0
        %8049 = vperm.xlu0 %8048, %v1057
        %v8050 = vpop.permute.xlu0 %8049
        %8053 = vset.pattern.permute.xlu0 0
        %8054 = vperm.xlu0 %8053, %v1058
        %v8055 = vpop.permute.xlu0 %8054
        %8058 = vset.pattern.permute.xlu0 0
        %8059 = vperm.xlu0 %8058, %v1059
        %v8060 = vpop.permute.xlu0 %8059
        %8063 = vset.pattern.permute.xlu0 0
        %8064 = vperm.xlu0 %8063, %v1060
        %v8065 = vpop.permute.xlu0 %8064
        %8068 = vset.pattern.permute.xlu0 0
        %8069 = vperm.xlu0 %8068, %v1061
        %v8070 = vpop.permute.xlu0 %8069
        %8073 = vset.pattern.permute.xlu0 0
        %8074 = vperm.xlu0 %8073, %v1062
        %v8075 = vpop.permute.xlu0 %8074
        %8078 = vset.pattern.permute.xlu0 0
        %8079 = vperm.xlu0 %8078, %v1063
        %v8080 = vpop.permute.xlu0 %8079
        %8083 = vset.pattern.permute.xlu0 0
        %8084 = vperm.xlu0 %8083, %v1064
        %v8085 = vpop.permute.xlu0 %8084
        %8088 = vset.pattern.permute.xlu0 0
        %8089 = vperm.xlu0 %8088, %v1065
        %v8090 = vpop.permute.xlu0 %8089
        %8093 = vset.pattern.permute.xlu0 0
        %8094 = vperm.xlu0 %8093, %v1066
        %v8095 = vpop.permute.xlu0 %8094
        %v8097 = vmul.f32 %v8001, %v8020
        %v8098 = vmul.f32 %v8002, %v8025
        %v8099 = vmul.f32 %v8003, %v8030
        %v8100 = vmul.f32 %v8004, %v8035
        %v8101 = vmul.f32 %v8005, %v8040
        %v8102 = vmul.f32 %v8006, %v8045
        %v8103 = vmul.f32 %v8007, %v8050
        %v8104 = vmul.f32 %v8008, %v8055
        %v8105 = vmul.f32 %v8009, %v8060
        %v8106 = vmul.f32 %v8010, %v8065
        %v8107 = vmul.f32 %v8011, %v8070
        %v8108 = vmul.f32 %v8012, %v8075
        %v8109 = vmul.f32 %v8013, %v8080
        %v8110 = vmul.f32 %v8014, %v8085
        %v8111 = vmul.f32 %v8015, %v8090
        %v8112 = vmul.f32 %v8016, %v8095
        %v8113 = vpack.c.bf16 %v8098, %v8097
        %v8114 = vpack.c.bf16 %v8100, %v8099
        %v8115 = vpack.c.bf16 %v8102, %v8101
        %v8116 = vpack.c.bf16 %v8104, %v8103
        %v8117 = vpack.c.bf16 %v8106, %v8105
        %v8118 = vpack.c.bf16 %v8108, %v8107
        %v8119 = vpack.c.bf16 %v8110, %v8109
        %v8120 = vpack.c.bf16 %v8112, %v8111
        %vm8121 = vsmask.f32 256
        %v8123 = vshrl.u32 %v8113, 16
        %v8125 = vrot.slane %v8123, 7
        %v8126 = vshll.u32 %v8113, 16
        %v8128 = vor.u32 %v8125, %v8126
        %v8130 = vshrl.u32 %v8114, 16
        %v8132 = vrot.slane %v8130, 7
        %v8133 = vshll.u32 %v8114, 16
        %v8135 = vor.u32 %v8132, %v8133
        %v8136 = vsel %vm8121, %v8125, %v8135
        %v8138 = vshrl.u32 %v8115, 16
        %v8140 = vrot.slane %v8138, 7
        %v8141 = vshll.u32 %v8115, 16
        %v8143 = vor.u32 %v8140, %v8141
        %v8144 = vsel %vm8121, %v8132, %v8143
        %v8146 = vshrl.u32 %v8116, 16
        %v8148 = vrot.slane %v8146, 7
        %v8149 = vshll.u32 %v8116, 16
        %v8151 = vor.u32 %v8148, %v8149
        %v8152 = vsel %vm8121, %v8140, %v8151
        %v8154 = vshrl.u32 %v8117, 16
        %v8156 = vrot.slane %v8154, 7
        %v8157 = vshll.u32 %v8117, 16
        %v8159 = vor.u32 %v8156, %v8157
        %v8160 = vsel %vm8121, %v8148, %v8159
        %v8162 = vshrl.u32 %v8118, 16
        %v8164 = vrot.slane %v8162, 7
        %v8165 = vshll.u32 %v8118, 16
        %v8167 = vor.u32 %v8164, %v8165
        %v8168 = vsel %vm8121, %v8156, %v8167
        %v8170 = vshrl.u32 %v8119, 16
        %v8172 = vrot.slane %v8170, 7
        %v8173 = vshll.u32 %v8119, 16
        %v8175 = vor.u32 %v8172, %v8173
        %v8176 = vsel %vm8121, %v8164, %v8175
        %v8178 = vshrl.u32 %v8120, 16
        %v8180 = vrot.slane %v8178, 7
        %v8181 = vshll.u32 %v8120, 16
        %v8183 = vor.u32 %v8180, %v8181
        %v8184 = vsel %vm8121, %v8172, %v8183
        %vm8186 = vcmask 1040384
        %vm8187 = vmand %vm8186, %vm8121
        %v8188 = vsel %vm8187, 0, %v8128
        %v8189 = vld [vmem:[%s865] sm:$0xf]
        %v8190 = vld [vmem:[%s865 + $0x4] sm:$0xf]
        %v8191 = vld [vmem:[%s865 + $0x8] sm:$0xf]
        %v8192 = vld [vmem:[%s865 + $0xc] sm:$0xf]
        %s8193 = scalar_lea.vmem %s865, 16 [#allocation17]
        %v8194 = vld [vmem:[%s8193] sm:$0xf]
        %v8195 = vld [vmem:[%s8193 + $0x4] sm:$0xf]
        %v8196 = vld [vmem:[%s8193 + $0x8] sm:$0xf]
        %v8197 = vld [vmem:[%s8193 + $0xc] sm:$0xf]
        %v8202 = vunpack.c.l.b16 %v8194
        %v8203 = vunpack.c.l.b16 %v8195
        %v8204 = vunpack.c.l.b16 %v8196
        %v8205 = vunpack.c.l.b16 %v8197
        %v8206 = vpack.c.b16 %v8203, %v8202
        %v8207 = vpack.c.b16 %v8205, %v8204
        %v8210 = vsel %vm1196, %v8113, 0
        %v8212 = vsel %vm1196, %v8114, 0
        %v8214 = vsel %vm1196, %v8115, 0
        %v8216 = vsel %vm1196, %v8116, 0
        %v8218 = vsel %vm1196, %v8117, 0
        %v8220 = vsel %vm1196, %v8118, 0
        %v8222 = vsel %vm1196, %v8119, 0
        %v8224 = vsel %vm1196, %v8120, 0
        %8226 = vmatprep.subr.bf16.mxu0 0
        %8227 = vmatpush1.bf16.msra.mxu0 %v8206
        %8228 = vmatprep.subr.bf16.mxu0 0
        %8229 = vmatpush1.bf16.msra.mxu0 %v8207
        %8230 = vmatprep.subr.bf16.mxu0 0
        %8231 = vmatpush1.bf16.msra.mxu0 0
        %8232 = vmatprep.subr.bf16.mxu0 0
        %8233 = vmatpush1.bf16.msra.mxu0 0
        %8234 = vmatprep.subr.bf16.mxu0 0
        %8235 = vmatpush1.bf16.msra.mxu0 0
        %8236 = vmatprep.subr.bf16.mxu0 0
        %8237 = vmatpush1.bf16.msra.mxu0 0
        %8238 = vmatprep.subr.bf16.mxu0 0
        %8239 = vmatpush1.bf16.msra.mxu0 0
        %8240 = vmatprep.subr.bf16.mxu0 0
        %8241 = vmatpush1.bf16.msra.mxu0 0
        %8242 = vmatprep.subr.bf16.mxu0 0
        %8243 = vmatpush1.bf16.msra.mxu0 0
        %8244 = vmatprep.subr.bf16.mxu0 0
        %8245 = vmatpush1.bf16.msra.mxu0 0
        %8246 = vmatprep.subr.bf16.mxu0 0
        %8247 = vmatpush1.bf16.msra.mxu0 0
        %8248 = vmatprep.subr.bf16.mxu0 0
        %8249 = vmatpush1.bf16.msra.mxu0 0
        %8250 = vmatprep.subr.bf16.mxu0 0
        %8251 = vmatpush1.bf16.msra.mxu0 0
        %8252 = vmatprep.subr.bf16.mxu0 0
        %8253 = vmatpush1.bf16.msra.mxu0 0
        %8254 = vmatprep.subr.bf16.mxu0 0
        %8255 = vmatpush1.bf16.msra.mxu0 0
        %8256 = vmatprep.subr.bf16.mxu0 0
        %8257 = vmatpush1.bf16.msra.mxu0 0
        %8258 = vmatprep.mubr.bf16.mxu0 0
        %8259 = vmatmul.mubr.bf16.gmra.mrb[0].mxu0 %v8210
        %v8260 = vpop.f32.mrb[0].mxu0
        %v8261 = vadd.f32 0.0, %v8260
        %v8262 = vpop.f32.mrb[0].mxu0
        %v8263 = vpop.f32.mrb[0].mxu0
        %v8264 = vadd.f32 0.0, %v8263
        %v8265 = vpop.f32.mrb[0].mxu0
        %8266 = vmatprep.mubr.bf16.mxu0 0
        %8267 = vmatmul.mubr.bf16.gmra.mrb[0].mxu0 %v8212
        %v8268 = vpop.f32.mrb[0].mxu0
        %v8269 = vadd.f32 0.0, %v8268
        %v8270 = vpop.f32.mrb[0].mxu0
        %v8271 = vpop.f32.mrb[0].mxu0
        %v8272 = vadd.f32 0.0, %v8271
        %v8273 = vpop.f32.mrb[0].mxu0
        %8274 = vmatprep.mubr.bf16.mxu0 0
        %8275 = vmatmul.mubr.bf16.gmra.mrb[0].mxu0 %v8214
        %v8276 = vpop.f32.mrb[0].mxu0
        %v8277 = vadd.f32 0.0, %v8276
        %v8278 = vpop.f32.mrb[0].mxu0
        %v8279 = vpop.f32.mrb[0].mxu0
        %v8280 = vadd.f32 0.0, %v8279
        %v8281 = vpop.f32.mrb[0].mxu0
        %8282 = vmatprep.mubr.bf16.mxu0 0
        %8283 = vmatmul.mubr.bf16.gmra.mrb[0].mxu0 %v8216
        %v8284 = vpop.f32.mrb[0].mxu0
        %v8285 = vadd.f32 0.0, %v8284
        %v8286 = vpop.f32.mrb[0].mxu0
        %v8287 = vpop.f32.mrb[0].mxu0
        %v8288 = vadd.f32 0.0, %v8287
        %v8289 = vpop.f32.mrb[0].mxu0
        %8290 = vmatprep.mubr.bf16.mxu0 0
        %8291 = vmatmul.mubr.bf16.gmra.mrb[0].mxu0 %v8218
        %v8292 = vpop.f32.mrb[0].mxu0
        %v8293 = vadd.f32 0.0, %v8292
        %v8294 = vpop.f32.mrb[0].mxu0
        %v8295 = vpop.f32.mrb[0].mxu0
        %v8296 = vadd.f32 0.0, %v8295
        %v8297 = vpop.f32.mrb[0].mxu0
        %8298 = vmatprep.mubr.bf16.mxu0 0
        %8299 = vmatmul.mubr.bf16.gmra.mrb[0].mxu0 %v8220
        %v8300 = vpop.f32.mrb[0].mxu0
        %v8301 = vadd.f32 0.0, %v8300
        %v8302 = vpop.f32.mrb[0].mxu0
        %v8303 = vpop.f32.mrb[0].mxu0
        %v8304 = vadd.f32 0.0, %v8303
        %v8305 = vpop.f32.mrb[0].mxu0
        %8306 = vmatprep.mubr.bf16.mxu0 0
        %8307 = vmatmul.mubr.bf16.gmra.mrb[0].mxu0 %v8222
        %v8308 = vpop.f32.mrb[0].mxu0
        %v8309 = vadd.f32 0.0, %v8308
        %v8310 = vpop.f32.mrb[0].mxu0
        %v8311 = vpop.f32.mrb[0].mxu0
        %v8312 = vadd.f32 0.0, %v8311
        %v8313 = vpop.f32.mrb[0].mxu0
        %8314 = vmatprep.mubr.bf16.mxu0 0
        %8315 = vmatmul.mubr.bf16.gmra.mrb[0].mxu0 %v8224
        %v8316 = vpop.f32.mrb[0].mxu0
        %v8317 = vadd.f32 0.0, %v8316
        %v8318 = vpop.f32.mrb[0].mxu0
        %v8319 = vpop.f32.mrb[0].mxu0
        %v8320 = vadd.f32 0.0, %v8319
        %v8321 = vpop.f32.mrb[0].mxu0
        %8322 = vdwg.mxu0
        %v8327 = vunpack.c.l.b16 %v8189
        %v8328 = vunpack.c.l.b16 %v8190
        %v8329 = vunpack.c.l.b16 %v8191
        %v8330 = vunpack.c.l.b16 %v8192
        %v8331 = vpack.c.b16 %v8328, %v8327
        %v8332 = vpack.c.b16 %v8330, %v8329
        %v8336 = vsel %vm1196, %v8188, 0
        %v8339 = vsel %vm1196, %v8136, 0
        %v8342 = vsel %vm1196, %v8144, 0
        %v8345 = vsel %vm1196, %v8152, 0
        %v8348 = vsel %vm1196, %v8160, 0
        %v8351 = vsel %vm1196, %v8168, 0
        %v8354 = vsel %vm1196, %v8176, 0
        %v8357 = vsel %vm1196, %v8184, 0
        %8359 = vmatprep.subr.bf16.mxu0 0
        %8360 = vmatpush1.bf16.msra.mxu0 %v8331
        %8361 = vmatprep.subr.bf16.mxu0 0
        %8362 = vmatpush1.bf16.msra.mxu0 %v8332
        %8363 = vmatprep.subr.bf16.mxu0 0
        %8364 = vmatpush1.bf16.msra.mxu0 0
        %8365 = vmatprep.subr.bf16.mxu0 0
        %8366 = vmatpush1.bf16.msra.mxu0 0
        %8367 = vmatprep.subr.bf16.mxu0 0
        %8368 = vmatpush1.bf16.msra.mxu0 0
        %8369 = vmatprep.subr.bf16.mxu0 0
        %8370 = vmatpush1.bf16.msra.mxu0 0
        %8371 = vmatprep.subr.bf16.mxu0 0
        %8372 = vmatpush1.bf16.msra.mxu0 0
        %8373 = vmatprep.subr.bf16.mxu0 0
        %8374 = vmatpush1.bf16.msra.mxu0 0
        %8375 = vmatprep.subr.bf16.mxu0 0
        %8376 = vmatpush1.bf16.msra.mxu0 0
        %8377 = vmatprep.subr.bf16.mxu0 0
        %8378 = vmatpush1.bf16.msra.mxu0 0
        %8379 = vmatprep.subr.bf16.mxu0 0
        %8380 = vmatpush1.bf16.msra.mxu0 0
        %8381 = vmatprep.subr.bf16.mxu0 0
        %8382 = vmatpush1.bf16.msra.mxu0 0
        %8383 = vmatprep.subr.bf16.mxu0 0
        %8384 = vmatpush1.bf16.msra.mxu0 0
        %8385 = vmatprep.subr.bf16.mxu0 0
        %8386 = vmatpush1.bf16.msra.mxu0 0
        %8387 = vmatprep.subr.bf16.mxu0 0
        %8388 = vmatpush1.bf16.msra.mxu0 0
        %8389 = vmatprep.subr.bf16.mxu0 0
        %8390 = vmatpush1.bf16.msra.mxu0 0
        %8391 = vmatprep.mubr.bf16.mxu0 0
        %8392 = vmatmul.mubr.bf16.gmra.mrb[0].mxu0 %v8336
        %v8393 = vpop.f32.mrb[0].mxu0
        %v8394 = vadd.f32 %v8261, %v8393
        %v8395 = vpop.f32.mrb[0].mxu0
        %v8396 = vpop.f32.mrb[0].mxu0
        %v8397 = vadd.f32 %v8264, %v8396
        %v8398 = vpop.f32.mrb[0].mxu0
        %8399 = vmatprep.mubr.bf16.mxu0 0
        %8400 = vmatmul.mubr.bf16.gmra.mrb[0].mxu0 %v8339
        %v8401 = vpop.f32.mrb[0].mxu0
        %v8402 = vadd.f32 %v8269, %v8401
        %v8403 = vpop.f32.mrb[0].mxu0
        %v8404 = vpop.f32.mrb[0].mxu0
        %v8405 = vadd.f32 %v8272, %v8404
        %v8406 = vpop.f32.mrb[0].mxu0
        %8407 = vmatprep.mubr.bf16.mxu0 0
        %8408 = vmatmul.mubr.bf16.gmra.mrb[0].mxu0 %v8342
        %v8409 = vpop.f32.mrb[0].mxu0
        %v8410 = vadd.f32 %v8277, %v8409
        %v8411 = vpop.f32.mrb[0].mxu0
        %v8412 = vpop.f32.mrb[0].mxu0
        %v8413 = vadd.f32 %v8280, %v8412
        %v8414 = vpop.f32.mrb[0].mxu0
        %8415 = vmatprep.mubr.bf16.mxu0 0
        %8416 = vmatmul.mubr.bf16.gmra.mrb[0].mxu0 %v8345
        %v8417 = vpop.f32.mrb[0].mxu0
        %v8418 = vadd.f32 %v8285, %v8417
        %v8419 = vpop.f32.mrb[0].mxu0
        %v8420 = vpop.f32.mrb[0].mxu0
        %v8421 = vadd.f32 %v8288, %v8420
        %v8422 = vpop.f32.mrb[0].mxu0
        %8423 = vmatprep.mubr.bf16.mxu0 0
        %8424 = vmatmul.mubr.bf16.gmra.mrb[0].mxu0 %v8348
        %v8425 = vpop.f32.mrb[0].mxu0
        %v8426 = vadd.f32 %v8293, %v8425
        %v8427 = vpop.f32.mrb[0].mxu0
        %v8428 = vpop.f32.mrb[0].mxu0
        %v8429 = vadd.f32 %v8296, %v8428
        %v8430 = vpop.f32.mrb[0].mxu0
        %8431 = vmatprep.mubr.bf16.mxu0 0
        %8432 = vmatmul.mubr.bf16.gmra.mrb[0].mxu0 %v8351
        %v8433 = vpop.f32.mrb[0].mxu0
        %v8434 = vadd.f32 %v8301, %v8433
        %v8435 = vpop.f32.mrb[0].mxu0
        %v8436 = vpop.f32.mrb[0].mxu0
        %v8437 = vadd.f32 %v8304, %v8436
        %v8438 = vpop.f32.mrb[0].mxu0
        %8439 = vmatprep.mubr.bf16.mxu0 0
        %8440 = vmatmul.mubr.bf16.gmra.mrb[0].mxu0 %v8354
        %v8441 = vpop.f32.mrb[0].mxu0
        %v8442 = vadd.f32 %v8309, %v8441
        %v8443 = vpop.f32.mrb[0].mxu0
        %v8444 = vpop.f32.mrb[0].mxu0
        %v8445 = vadd.f32 %v8312, %v8444
        %v8446 = vpop.f32.mrb[0].mxu0
        %8447 = vmatprep.mubr.bf16.mxu0 0
        %8448 = vmatmul.mubr.bf16.gmra.mrb[0].mxu0 %v8357
        %v8449 = vpop.f32.mrb[0].mxu0
        %v8450 = vadd.f32 %v8317, %v8449
        %v8451 = vpop.f32.mrb[0].mxu0
        %v8452 = vpop.f32.mrb[0].mxu0
        %v8453 = vadd.f32 %v8320, %v8452
        %v8454 = vpop.f32.mrb[0].mxu0
        %8455 = vdwg.mxu0
        %vm8456 = vsmask.f32 7424
        %v8457 = vrot.slane %v8126, 1
        %v8458 = vor.u32 %v8123, %v8457
        %v8459 = vrot.slane %v8133, 1
        %v8460 = vsel %vm8456, %v8458, %v8459
        %v8461 = vor.u32 %v8130, %v8459
        %v8462 = vrot.slane %v8141, 1
        %v8463 = vsel %vm8456, %v8461, %v8462
        %v8464 = vor.u32 %v8138, %v8462
        %v8465 = vrot.slane %v8149, 1
        %v8466 = vsel %vm8456, %v8464, %v8465
        %v8467 = vor.u32 %v8146, %v8465
        %v8468 = vrot.slane %v8157, 1
        %v8469 = vsel %vm8456, %v8467, %v8468
        %v8470 = vor.u32 %v8154, %v8468
        %v8471 = vrot.slane %v8165, 1
        %v8472 = vsel %vm8456, %v8470, %v8471
        %v8473 = vor.u32 %v8162, %v8471
        %v8474 = vrot.slane %v8173, 1
        %v8475 = vsel %vm8456, %v8473, %v8474
        %v8476 = vor.u32 %v8170, %v8474
        %v8477 = vrot.slane %v8181, 1
        %v8478 = vsel %vm8456, %v8476, %v8477
        %v8479 = vor.u32 %v8178, %v8477
        %vm8481 = vcmask 1047552
        %vm8482 = vmand %vm8481, %vm8456
        %v8483 = vsel %vm8482, %v8479, 0
        %s8484 = scalar_lea.vmem %s865, 32 [#allocation17]
        %v8485 = vld [vmem:[%s8484] sm:$0xf]
        %v8486 = vld [vmem:[%s8484 + $0x4] sm:$0xf]
        %v8487 = vld [vmem:[%s8484 + $0x8] sm:$0xf]
        %v8488 = vld [vmem:[%s8484 + $0xc] sm:$0xf]
        %v8493 = vunpack.c.l.b16 %v8485
        %v8494 = vunpack.c.l.b16 %v8486
        %v8495 = vunpack.c.l.b16 %v8487
        %v8496 = vunpack.c.l.b16 %v8488
        %v8497 = vpack.c.b16 %v8494, %v8493
        %v8498 = vpack.c.b16 %v8496, %v8495
        %v8502 = vsel %vm1196, %v8460, 0
        %v8505 = vsel %vm1196, %v8463, 0
        %v8508 = vsel %vm1196, %v8466, 0
        %v8511 = vsel %vm1196, %v8469, 0
        %v8514 = vsel %vm1196, %v8472, 0
        %v8517 = vsel %vm1196, %v8475, 0
        %v8520 = vsel %vm1196, %v8478, 0
        %v8523 = vsel %vm1196, %v8483, 0
        %8525 = vmatprep.subr.bf16.mxu0 0
        %8526 = vmatpush1.bf16.msra.mxu0 %v8497
        %8527 = vmatprep.subr.bf16.mxu0 0
        %8528 = vmatpush1.bf16.msra.mxu0 %v8498
        %8529 = vmatprep.subr.bf16.mxu0 0
        %8530 = vmatpush1.bf16.msra.mxu0 0
        %8531 = vmatprep.subr.bf16.mxu0 0
        %8532 = vmatpush1.bf16.msra.mxu0 0
        %8533 = vmatprep.subr.bf16.mxu0 0
        %8534 = vmatpush1.bf16.msra.mxu0 0
        %8535 = vmatprep.subr.bf16.mxu0 0
        %8536 = vmatpush1.bf16.msra.mxu0 0
        %8537 = vmatprep.subr.bf16.mxu0 0
        %8538 = vmatpush1.bf16.msra.mxu0 0
        %8539 = vmatprep.subr.bf16.mxu0 0
        %8540 = vmatpush1.bf16.msra.mxu0 0
        %8541 = vmatprep.subr.bf16.mxu0 0
        %8542 = vmatpush1.bf16.msra.mxu0 0
        %8543 = vmatprep.subr.bf16.mxu0 0
        %8544 = vmatpush1.bf16.msra.mxu0 0
        %8545 = vmatprep.subr.bf16.mxu0 0
        %8546 = vmatpush1.bf16.msra.mxu0 0
        %8547 = vmatprep.subr.bf16.mxu0 0
        %8548 = vmatpush1.bf16.msra.mxu0 0
        %8549 = vmatprep.subr.bf16.mxu0 0
        %8550 = vmatpush1.bf16.msra.mxu0 0
        %8551 = vmatprep.subr.bf16.mxu0 0
        %8552 = vmatpush1.bf16.msra.mxu0 0
        %8553 = vmatprep.subr.bf16.mxu0 0
        %8554 = vmatpush1.bf16.msra.mxu0 0
        %8555 = vmatprep.subr.bf16.mxu0 0
        %8556 = vmatpush1.bf16.msra.mxu0 0
        %8557 = vmatprep.mubr.bf16.mxu0 0
        %8558 = vmatmul.mubr.bf16.gmra.mrb[0].mxu0 %v8502
        %v8559 = vpop.f32.mrb[0].mxu0
        %v8560 = vadd.f32 0.0, %v8559
        %v8561 = vpop.f32.mrb[0].mxu0
        %v8562 = vpop.f32.mrb[0].mxu0
        %v8563 = vadd.f32 0.0, %v8562
        %v8564 = vpop.f32.mrb[0].mxu0
        %8565 = vmatprep.mubr.bf16.mxu0 0
        %8566 = vmatmul.mubr.bf16.gmra.mrb[0].mxu0 %v8505
        %v8567 = vpop.f32.mrb[0].mxu0
        %v8568 = vadd.f32 0.0, %v8567
        %v8569 = vpop.f32.mrb[0].mxu0
        %v8570 = vpop.f32.mrb[0].mxu0
        %v8571 = vadd.f32 0.0, %v8570
        %v8572 = vpop.f32.mrb[0].mxu0
        %8573 = vmatprep.mubr.bf16.mxu0 0
        %8574 = vmatmul.mubr.bf16.gmra.mrb[0].mxu0 %v8508
        %v8575 = vpop.f32.mrb[0].mxu0
        %v8576 = vadd.f32 0.0, %v8575
        %v8577 = vpop.f32.mrb[0].mxu0
        %v8578 = vpop.f32.mrb[0].mxu0
        %v8579 = vadd.f32 0.0, %v8578
        %v8580 = vpop.f32.mrb[0].mxu0
        %8581 = vmatprep.mubr.bf16.mxu0 0
        %8582 = vmatmul.mubr.bf16.gmra.mrb[0].mxu0 %v8511
        %v8583 = vpop.f32.mrb[0].mxu0
        %v8584 = vadd.f32 0.0, %v8583
        %v8585 = vpop.f32.mrb[0].mxu0
        %v8586 = vpop.f32.mrb[0].mxu0
        %v8587 = vadd.f32 0.0, %v8586
        %v8588 = vpop.f32.mrb[0].mxu0
        %8589 = vmatprep.mubr.bf16.mxu0 0
        %8590 = vmatmul.mubr.bf16.gmra.mrb[0].mxu0 %v8514
        %v8591 = vpop.f32.mrb[0].mxu0
        %v8592 = vadd.f32 0.0, %v8591
        %v8593 = vpop.f32.mrb[0].mxu0
        %v8594 = vpop.f32.mrb[0].mxu0
        %v8595 = vadd.f32 0.0, %v8594
        %v8596 = vpop.f32.mrb[0].mxu0
        %8597 = vmatprep.mubr.bf16.mxu0 0
        %8598 = vmatmul.mubr.bf16.gmra.mrb[0].mxu0 %v8517
        %v8599 = vpop.f32.mrb[0].mxu0
        %v8600 = vadd.f32 0.0, %v8599
        %v8601 = vpop.f32.mrb[0].mxu0
        %v8602 = vpop.f32.mrb[0].mxu0
        %v8603 = vadd.f32 0.0, %v8602
        %v8604 = vpop.f32.mrb[0].mxu0
        %8605 = vmatprep.mubr.bf16.mxu0 0
        %8606 = vmatmul.mubr.bf16.gmra.mrb[0].mxu0 %v8520
        %v8607 = vpop.f32.mrb[0].mxu0
        %v8608 = vadd.f32 0.0, %v8607
        %v8609 = vpop.f32.mrb[0].mxu0
        %v8610 = vpop.f32.mrb[0].mxu0
        %v8611 = vadd.f32 0.0, %v8610
        %v8612 = vpop.f32.mrb[0].mxu0
        %8613 = vmatprep.mubr.bf16.mxu0 0
        %8614 = vmatmul.mubr.bf16.gmra.mrb[0].mxu0 %v8523
        %v8615 = vpop.f32.mrb[0].mxu0
        %v8616 = vadd.f32 0.0, %v8615
        %v8617 = vpop.f32.mrb[0].mxu0
        %v8618 = vpop.f32.mrb[0].mxu0
        %v8619 = vadd.f32 0.0, %v8618
        %v8620 = vpop.f32.mrb[0].mxu0
        %8621 = vdwg.mxu0
        %v8622 = vadd.f32 %v8394, %v8560
        %v8623 = vadd.f32 %v8397, %v8563
        %v8624 = vadd.f32 %v8402, %v8568
        %v8625 = vadd.f32 %v8405, %v8571
        %v8626 = vadd.f32 %v8410, %v8576
        %v8627 = vadd.f32 %v8413, %v8579
        %v8628 = vadd.f32 %v8418, %v8584
        %v8629 = vadd.f32 %v8421, %v8587
        %v8630 = vadd.f32 %v8426, %v8592
        %v8631 = vadd.f32 %v8429, %v8595
        %v8632 = vadd.f32 %v8434, %v8600
        %v8633 = vadd.f32 %v8437, %v8603
        %v8634 = vadd.f32 %v8442, %v8608
        %v8635 = vadd.f32 %v8445, %v8611
        %v8636 = vadd.f32 %v8450, %v8616
        %v8637 = vadd.f32 %v8453, %v8619
        %v8638 = vld [vmem:[%s873] sm:$0x1]
        %v8640 = vlaneseq
        %v8641 = vshrl.u32 %v8640, 7
        %v8642 = vsub.s32 0, %v8641
        %v8643 = vrot.slane %v8638, %v8642
        %v8645 = vadd.f32 %v8622, %v8643
        %v8646 = vadd.f32 %v8623, %v8643
        %v8647 = vadd.f32 %v8624, %v8643
        %v8648 = vadd.f32 %v8625, %v8643
        %v8649 = vadd.f32 %v8626, %v8643
        %v8650 = vadd.f32 %v8627, %v8643
        %v8651 = vadd.f32 %v8628, %v8643
        %v8652 = vadd.f32 %v8629, %v8643
        %v8653 = vadd.f32 %v8630, %v8643
        %v8654 = vadd.f32 %v8631, %v8643
        %v8655 = vadd.f32 %v8632, %v8643
        %v8656 = vadd.f32 %v8633, %v8643
        %v8657 = vadd.f32 %v8634, %v8643
        %v8658 = vadd.f32 %v8635, %v8643
        %v8659 = vadd.f32 %v8636, %v8643
        %v8660 = vadd.f32 %v8637, %v8643
        %v8661 = vmax.f32 %v8645, 0.0
        %v8662 = vmax.f32 %v8646, 0.0
        %v8663 = vmax.f32 %v8647, 0.0
        %v8664 = vmax.f32 %v8648, 0.0
        %v8665 = vmax.f32 %v8649, 0.0
        %v8666 = vmax.f32 %v8650, 0.0
        %v8667 = vmax.f32 %v8651, 0.0
        %v8668 = vmax.f32 %v8652, 0.0
        %v8669 = vmax.f32 %v8653, 0.0
        %v8670 = vmax.f32 %v8654, 0.0
        %v8671 = vmax.f32 %v8655, 0.0
        %v8672 = vmax.f32 %v8656, 0.0
        %v8673 = vmax.f32 %v8657, 0.0
        %v8674 = vmax.f32 %v8658, 0.0
        %v8675 = vmax.f32 %v8659, 0.0
        %v8676 = vmax.f32 %v8660, 0.0
        %v8677 = vmul.f32 %v8661, %v8020
        %v8678 = vmul.f32 %v8662, %v8025
        %v8679 = vmul.f32 %v8663, %v8030
        %v8680 = vmul.f32 %v8664, %v8035
        %v8681 = vmul.f32 %v8665, %v8040
        %v8682 = vmul.f32 %v8666, %v8045
        %v8683 = vmul.f32 %v8667, %v8050
        %v8684 = vmul.f32 %v8668, %v8055
        %v8685 = vmul.f32 %v8669, %v8060
        %v8686 = vmul.f32 %v8670, %v8065
        %v8687 = vmul.f32 %v8671, %v8070
        %v8688 = vmul.f32 %v8672, %v8075
        %v8689 = vmul.f32 %v8673, %v8080
        %v8690 = vmul.f32 %v8674, %v8085
        %v8691 = vmul.f32 %v8675, %v8090
        %v8692 = vmul.f32 %v8676, %v8095
        %v8693 = vpack.c.bf16 %v8678, %v8677
        %v8694 = vpack.c.bf16 %v8680, %v8679
        %v8695 = vpack.c.bf16 %v8682, %v8681
        %v8696 = vpack.c.bf16 %v8684, %v8683
        %v8697 = vpack.c.bf16 %v8686, %v8685
        %v8698 = vpack.c.bf16 %v8688, %v8687
        %v8699 = vpack.c.bf16 %v8690, %v8689
        %v8700 = vpack.c.bf16 %v8692, %v8691
        %v8702 = vshrl.u32 %v8693, 16
        %v8704 = vrot.slane %v8702, 7
        %v8705 = vshll.u32 %v8693, 16
        %v8707 = vor.u32 %v8704, %v8705
        %v8709 = vshrl.u32 %v8694, 16
        %v8711 = vrot.slane %v8709, 7
        %v8712 = vshll.u32 %v8694, 16
        %v8714 = vor.u32 %v8711, %v8712
        %v8715 = vsel %vm8121, %v8704, %v8714
        %v8717 = vshrl.u32 %v8695, 16
        %v8719 = vrot.slane %v8717, 7
        %v8720 = vshll.u32 %v8695, 16
        %v8722 = vor.u32 %v8719, %v8720
        %v8723 = vsel %vm8121, %v8711, %v8722
        %v8725 = vshrl.u32 %v8696, 16
        %v8727 = vrot.slane %v8725, 7
        %v8728 = vshll.u32 %v8696, 16
        %v8730 = vor.u32 %v8727, %v8728
        %v8731 = vsel %vm8121, %v8719, %v8730
        %v8733 = vshrl.u32 %v8697, 16
        %v8735 = vrot.slane %v8733, 7
        %v8736 = vshll.u32 %v8697, 16
        %v8738 = vor.u32 %v8735, %v8736
        %v8739 = vsel %vm8121, %v8727, %v8738
        %v8741 = vshrl.u32 %v8698, 16
        %v8743 = vrot.slane %v8741, 7
        %v8744 = vshll.u32 %v8698, 16
        %v8746 = vor.u32 %v8743, %v8744
        %v8747 = vsel %vm8121, %v8735, %v8746
        %v8749 = vshrl.u32 %v8699, 16
        %v8751 = vrot.slane %v8749, 7
        %v8752 = vshll.u32 %v8699, 16
        %v8754 = vor.u32 %v8751, %v8752
        %v8755 = vsel %vm8121, %v8743, %v8754
        %v8757 = vshrl.u32 %v8700, 16
        %v8759 = vrot.slane %v8757, 7
        %v8760 = vshll.u32 %v8700, 16
        %v8762 = vor.u32 %v8759, %v8760
        %v8763 = vsel %vm8121, %v8751, %v8762
        %v8765 = vsel %vm8187, 0, %v8707
        %v8766 = vld [vmem:[%s882] sm:$0xf]
        %v8767 = vld [vmem:[%s882 + $0x4] sm:$0xf]
        %v8768 = vld [vmem:[%s882 + $0x8] sm:$0xf]
        %v8769 = vld [vmem:[%s882 + $0xc] sm:$0xf]
        %v8770 = vld [vmem:[%s882 + $0x10] sm:$0xf]
        %v8771 = vld [vmem:[%s882 + $0x14] sm:$0xf]
        %v8772 = vld [vmem:[%s882 + $0x18] sm:$0xf]
        %v8773 = vld [vmem:[%s882 + $0x1c] sm:$0xf]
        %s8774 = scalar_lea.vmem %s882, 32 [#allocation19]
        %v8775 = vld [vmem:[%s8774] sm:$0xf]
        %v8776 = vld [vmem:[%s8774 + $0x4] sm:$0xf]
        %v8777 = vld [vmem:[%s8774 + $0x8] sm:$0xf]
        %v8778 = vld [vmem:[%s8774 + $0xc] sm:$0xf]
        %v8779 = vld [vmem:[%s8774 + $0x10] sm:$0xf]
        %v8780 = vld [vmem:[%s8774 + $0x14] sm:$0xf]
        %v8781 = vld [vmem:[%s8774 + $0x18] sm:$0xf]
        %v8782 = vld [vmem:[%s8774 + $0x1c] sm:$0xf]
        %v8791 = vunpack.c.l.b16 %v8775
        %v8792 = vunpack.c.l.b16 %v8776
        %v8793 = vunpack.c.l.b16 %v8777
        %v8794 = vunpack.c.l.b16 %v8778
        %v8795 = vunpack.c.l.b16 %v8779
        %v8796 = vunpack.c.l.b16 %v8780
        %v8797 = vunpack.c.l.b16 %v8781
        %v8798 = vunpack.c.l.b16 %v8782
        %v8799 = vpack.c.b16 %v8792, %v8791
        %v8800 = vpack.c.b16 %v8794, %v8793
        %v8801 = vpack.c.b16 %v8796, %v8795
        %v8802 = vpack.c.b16 %v8798, %v8797
        %vm8807 = vcmask 523264
        %v8808 = vsel %vm8807, %v8693, 0
        %v8810 = vsel %vm8807, %v8694, 0
        %v8812 = vsel %vm8807, %v8695, 0
        %v8814 = vsel %vm8807, %v8696, 0
        %v8816 = vsel %vm8807, %v8697, 0
        %v8818 = vsel %vm8807, %v8698, 0
        %v8820 = vsel %vm8807, %v8699, 0
        %v8822 = vsel %vm8807, %v8700, 0
        %8824 = vmatprep.subr.bf16.mxu0 0
        %8825 = vmatpush1.bf16.msra.mxu0 %v8799
        %8826 = vmatprep.subr.bf16.mxu0 0
        %8827 = vmatpush1.bf16.msra.mxu0 %v8800
        %8828 = vmatprep.subr.bf16.mxu0 0
        %8829 = vmatpush1.bf16.msra.mxu0 %v8801
        %8830 = vmatprep.subr.bf16.mxu0 0
        %8831 = vmatpush1.bf16.msra.mxu0 %v8802
        %8832 = vmatprep.subr.bf16.mxu0 0
        %8833 = vmatpush1.bf16.msra.mxu0 0
        %8834 = vmatprep.subr.bf16.mxu0 0
        %8835 = vmatpush1.bf16.msra.mxu0 0
        %8836 = vmatprep.subr.bf16.mxu0 0
        %8837 = vmatpush1.bf16.msra.mxu0 0
        %8838 = vmatprep.subr.bf16.mxu0 0
        %8839 = vmatpush1.bf16.msra.mxu0 0
        %8840 = vmatprep.subr.bf16.mxu0 0
        %8841 = vmatpush1.bf16.msra.mxu0 0
        %8842 = vmatprep.subr.bf16.mxu0 0
        %8843 = vmatpush1.bf16.msra.mxu0 0
        %8844 = vmatprep.subr.bf16.mxu0 0
        %8845 = vmatpush1.bf16.msra.mxu0 0
        %8846 = vmatprep.subr.bf16.mxu0 0
        %8847 = vmatpush1.bf16.msra.mxu0 0
        %8848 = vmatprep.subr.bf16.mxu0 0
        %8849 = vmatpush1.bf16.msra.mxu0 0
        %8850 = vmatprep.subr.bf16.mxu0 0
        %8851 = vmatpush1.bf16.msra.mxu0 0
        %8852 = vmatprep.subr.bf16.mxu0 0
        %8853 = vmatpush1.bf16.msra.mxu0 0
        %8854 = vmatprep.subr.bf16.mxu0 0
        %8855 = vmatpush1.bf16.msra.mxu0 0
        %8856 = vmatprep.mubr.bf16.mxu0 0
        %8857 = vmatmul.mubr.bf16.gmra.mrb[0].mxu0 %v8808
        %v8858 = vpop.f32.mrb[0].mxu0
        %v8859 = vadd.f32 0.0, %v8858
        %v8860 = vpop.f32.mrb[0].mxu0
        %v8861 = vpop.f32.mrb[0].mxu0
        %v8862 = vadd.f32 0.0, %v8861
        %v8863 = vpop.f32.mrb[0].mxu0
        %8864 = vmatprep.mubr.bf16.mxu0 0
        %8865 = vmatmul.mubr.bf16.gmra.mrb[0].mxu0 %v8810
        %v8866 = vpop.f32.mrb[0].mxu0
        %v8867 = vadd.f32 0.0, %v8866
        %v8868 = vpop.f32.mrb[0].mxu0
        %v8869 = vpop.f32.mrb[0].mxu0
        %v8870 = vadd.f32 0.0, %v8869
        %v8871 = vpop.f32.mrb[0].mxu0
        %8872 = vmatprep.mubr.bf16.mxu0 0
        %8873 = vmatmul.mubr.bf16.gmra.mrb[0].mxu0 %v8812
        %v8874 = vpop.f32.mrb[0].mxu0
        %v8875 = vadd.f32 0.0, %v8874
        %v8876 = vpop.f32.mrb[0].mxu0
        %v8877 = vpop.f32.mrb[0].mxu0
        %v8878 = vadd.f32 0.0, %v8877
        %v8879 = vpop.f32.mrb[0].mxu0
        %8880 = vmatprep.mubr.bf16.mxu0 0
        %8881 = vmatmul.mubr.bf16.gmra.mrb[0].mxu0 %v8814
        %v8882 = vpop.f32.mrb[0].mxu0
        %v8883 = vadd.f32 0.0, %v8882
        %v8884 = vpop.f32.mrb[0].mxu0
        %v8885 = vpop.f32.mrb[0].mxu0
        %v8886 = vadd.f32 0.0, %v8885
        %v8887 = vpop.f32.mrb[0].mxu0
        %8888 = vmatprep.mubr.bf16.mxu0 0
        %8889 = vmatmul.mubr.bf16.gmra.mrb[0].mxu0 %v8816
        %v8890 = vpop.f32.mrb[0].mxu0
        %v8891 = vadd.f32 0.0, %v8890
        %v8892 = vpop.f32.mrb[0].mxu0
        %v8893 = vpop.f32.mrb[0].mxu0
        %v8894 = vadd.f32 0.0, %v8893
        %v8895 = vpop.f32.mrb[0].mxu0
        %8896 = vmatprep.mubr.bf16.mxu0 0
        %8897 = vmatmul.mubr.bf16.gmra.mrb[0].mxu0 %v8818
        %v8898 = vpop.f32.mrb[0].mxu0
        %v8899 = vadd.f32 0.0, %v8898
        %v8900 = vpop.f32.mrb[0].mxu0
        %v8901 = vpop.f32.mrb[0].mxu0
        %v8902 = vadd.f32 0.0, %v8901
        %v8903 = vpop.f32.mrb[0].mxu0
        %8904 = vmatprep.mubr.bf16.mxu0 0
        %8905 = vmatmul.mubr.bf16.gmra.mrb[0].mxu0 %v8820
        %v8906 = vpop.f32.mrb[0].mxu0
        %v8907 = vadd.f32 0.0, %v8906
        %v8908 = vpop.f32.mrb[0].mxu0
        %v8909 = vpop.f32.mrb[0].mxu0
        %v8910 = vadd.f32 0.0, %v8909
        %v8911 = vpop.f32.mrb[0].mxu0
        %8912 = vmatprep.mubr.bf16.mxu0 0
        %8913 = vmatmul.mubr.bf16.gmra.mrb[0].mxu0 %v8822
        %v8914 = vpop.f32.mrb[0].mxu0
        %v8915 = vadd.f32 0.0, %v8914
        %v8916 = vpop.f32.mrb[0].mxu0
        %v8917 = vpop.f32.mrb[0].mxu0
        %v8918 = vadd.f32 0.0, %v8917
        %v8919 = vpop.f32.mrb[0].mxu0
        %8920 = vdwg.mxu0
        %v8929 = vunpack.c.l.b16 %v8766
        %v8930 = vunpack.c.l.b16 %v8767
        %v8931 = vunpack.c.l.b16 %v8768
        %v8932 = vunpack.c.l.b16 %v8769
        %v8933 = vunpack.c.l.b16 %v8770
        %v8934 = vunpack.c.l.b16 %v8771
        %v8935 = vunpack.c.l.b16 %v8772
        %v8936 = vunpack.c.l.b16 %v8773
        %v8937 = vpack.c.b16 %v8930, %v8929
        %v8938 = vpack.c.b16 %v8932, %v8931
        %v8939 = vpack.c.b16 %v8934, %v8933
        %v8940 = vpack.c.b16 %v8936, %v8935
        %v8946 = vsel %vm8807, %v8765, 0
        %v8949 = vsel %vm8807, %v8715, 0
        %v8952 = vsel %vm8807, %v8723, 0
        %v8955 = vsel %vm8807, %v8731, 0
        %v8958 = vsel %vm8807, %v8739, 0
        %v8961 = vsel %vm8807, %v8747, 0
        %v8964 = vsel %vm8807, %v8755, 0
        %v8967 = vsel %vm8807, %v8763, 0
        %8969 = vmatprep.subr.bf16.mxu0 0
        %8970 = vmatpush1.bf16.msra.mxu0 %v8937
        %8971 = vmatprep.subr.bf16.mxu0 0
        %8972 = vmatpush1.bf16.msra.mxu0 %v8938
        %8973 = vmatprep.subr.bf16.mxu0 0
        %8974 = vmatpush1.bf16.msra.mxu0 %v8939
        %8975 = vmatprep.subr.bf16.mxu0 0
        %8976 = vmatpush1.bf16.msra.mxu0 %v8940
        %8977 = vmatprep.subr.bf16.mxu0 0
        %8978 = vmatpush1.bf16.msra.mxu0 0
        %8979 = vmatprep.subr.bf16.mxu0 0
        %8980 = vmatpush1.bf16.msra.mxu0 0
        %8981 = vmatprep.subr.bf16.mxu0 0
        %8982 = vmatpush1.bf16.msra.mxu0 0
        %8983 = vmatprep.subr.bf16.mxu0 0
        %8984 = vmatpush1.bf16.msra.mxu0 0
        %8985 = vmatprep.subr.bf16.mxu0 0
        %8986 = vmatpush1.bf16.msra.mxu0 0
        %8987 = vmatprep.subr.bf16.mxu0 0
        %8988 = vmatpush1.bf16.msra.mxu0 0
        %8989 = vmatprep.subr.bf16.mxu0 0
        %8990 = vmatpush1.bf16.msra.mxu0 0
        %8991 = vmatprep.subr.bf16.mxu0 0
        %8992 = vmatpush1.bf16.msra.mxu0 0
        %8993 = vmatprep.subr.bf16.mxu0 0
        %8994 = vmatpush1.bf16.msra.mxu0 0
        %8995 = vmatprep.subr.bf16.mxu0 0
        %8996 = vmatpush1.bf16.msra.mxu0 0
        %8997 = vmatprep.subr.bf16.mxu0 0
        %8998 = vmatpush1.bf16.msra.mxu0 0
        %8999 = vmatprep.subr.bf16.mxu0 0
        %9000 = vmatpush1.bf16.msra.mxu0 0
        %9001 = vmatprep.mubr.bf16.mxu0 0
        %9002 = vmatmul.mubr.bf16.gmra.mrb[0].mxu0 %v8946
        %v9003 = vpop.f32.mrb[0].mxu0
        %v9004 = vadd.f32 %v8859, %v9003
        %v9005 = vpop.f32.mrb[0].mxu0
        %v9006 = vpop.f32.mrb[0].mxu0
        %v9007 = vadd.f32 %v8862, %v9006
        %v9008 = vpop.f32.mrb[0].mxu0
        %9009 = vmatprep.mubr.bf16.mxu0 0
        %9010 = vmatmul.mubr.bf16.gmra.mrb[0].mxu0 %v8949
        %v9011 = vpop.f32.mrb[0].mxu0
        %v9012 = vadd.f32 %v8867, %v9011
        %v9013 = vpop.f32.mrb[0].mxu0
        %v9014 = vpop.f32.mrb[0].mxu0
        %v9015 = vadd.f32 %v8870, %v9014
        %v9016 = vpop.f32.mrb[0].mxu0
        %9017 = vmatprep.mubr.bf16.mxu0 0
        %9018 = vmatmul.mubr.bf16.gmra.mrb[0].mxu0 %v8952
        %v9019 = vpop.f32.mrb[0].mxu0
        %v9020 = vadd.f32 %v8875, %v9019
        %v9021 = vpop.f32.mrb[0].mxu0
        %v9022 = vpop.f32.mrb[0].mxu0
        %v9023 = vadd.f32 %v8878, %v9022
        %v9024 = vpop.f32.mrb[0].mxu0
        %9025 = vmatprep.mubr.bf16.mxu0 0
        %9026 = vmatmul.mubr.bf16.gmra.mrb[0].mxu0 %v8955
        %v9027 = vpop.f32.mrb[0].mxu0
        %v9028 = vadd.f32 %v8883, %v9027
        %v9029 = vpop.f32.mrb[0].mxu0
        %v9030 = vpop.f32.mrb[0].mxu0
        %v9031 = vadd.f32 %v8886, %v9030
        %v9032 = vpop.f32.mrb[0].mxu0
        %9033 = vmatprep.mubr.bf16.mxu0 0
        %9034 = vmatmul.mubr.bf16.gmra.mrb[0].mxu0 %v8958
        %v9035 = vpop.f32.mrb[0].mxu0
        %v9036 = vadd.f32 %v8891, %v9035
        %v9037 = vpop.f32.mrb[0].mxu0
        %v9038 = vpop.f32.mrb[0].mxu0
        %v9039 = vadd.f32 %v8894, %v9038
        %v9040 = vpop.f32.mrb[0].mxu0
        %9041 = vmatprep.mubr.bf16.mxu0 0
        %9042 = vmatmul.mubr.bf16.gmra.mrb[0].mxu0 %v8961
        %v9043 = vpop.f32.mrb[0].mxu0
        %v9044 = vadd.f32 %v8899, %v9043
        %v9045 = vpop.f32.mrb[0].mxu0
        %v9046 = vpop.f32.mrb[0].mxu0
        %v9047 = vadd.f32 %v8902, %v9046
        %v9048 = vpop.f32.mrb[0].mxu0
        %9049 = vmatprep.mubr.bf16.mxu0 0
        %9050 = vmatmul.mubr.bf16.gmra.mrb[0].mxu0 %v8964
        %v9051 = vpop.f32.mrb[0].mxu0
        %v9052 = vadd.f32 %v8907, %v9051
        %v9053 = vpop.f32.mrb[0].mxu0
        %v9054 = vpop.f32.mrb[0].mxu0
        %v9055 = vadd.f32 %v8910, %v9054
        %v9056 = vpop.f32.mrb[0].mxu0
        %9057 = vmatprep.mubr.bf16.mxu0 0
        %9058 = vmatmul.mubr.bf16.gmra.mrb[0].mxu0 %v8967
        %v9059 = vpop.f32.mrb[0].mxu0
        %v9060 = vadd.f32 %v8915, %v9059
        %v9061 = vpop.f32.mrb[0].mxu0
        %v9062 = vpop.f32.mrb[0].mxu0
        %v9063 = vadd.f32 %v8918, %v9062
        %v9064 = vpop.f32.mrb[0].mxu0
        %9065 = vdwg.mxu0
        %v9066 = vrot.slane %v8705, 1
        %v9067 = vor.u32 %v8702, %v9066
        %v9068 = vrot.slane %v8712, 1
        %v9069 = vsel %vm8456, %v9067, %v9068
        %v9070 = vor.u32 %v8709, %v9068
        %v9071 = vrot.slane %v8720, 1
        %v9072 = vsel %vm8456, %v9070, %v9071
        %v9073 = vor.u32 %v8717, %v9071
        %v9074 = vrot.slane %v8728, 1
        %v9075 = vsel %vm8456, %v9073, %v9074
        %v9076 = vor.u32 %v8725, %v9074
        %v9077 = vrot.slane %v8736, 1
        %v9078 = vsel %vm8456, %v9076, %v9077
        %v9079 = vor.u32 %v8733, %v9077
        %v9080 = vrot.slane %v8744, 1
        %v9081 = vsel %vm8456, %v9079, %v9080
        %v9082 = vor.u32 %v8741, %v9080
        %v9083 = vrot.slane %v8752, 1
        %v9084 = vsel %vm8456, %v9082, %v9083
        %v9085 = vor.u32 %v8749, %v9083
        %v9086 = vrot.slane %v8760, 1
        %v9087 = vsel %vm8456, %v9085, %v9086
        %v9088 = vor.u32 %v8757, %v9086
        %v9090 = vsel %vm8482, %v9088, 0
        %s9091 = scalar_lea.vmem %s882, 64 [#allocation19]
        %v9092 = vld [vmem:[%s9091] sm:$0xf]
        %v9093 = vld [vmem:[%s9091 + $0x4] sm:$0xf]
        %v9094 = vld [vmem:[%s9091 + $0x8] sm:$0xf]
        %v9095 = vld [vmem:[%s9091 + $0xc] sm:$0xf]
        %v9096 = vld [vmem:[%s9091 + $0x10] sm:$0xf]
        %v9097 = vld [vmem:[%s9091 + $0x14] sm:$0xf]
        %v9098 = vld [vmem:[%s9091 + $0x18] sm:$0xf]
        %v9099 = vld [vmem:[%s9091 + $0x1c] sm:$0xf]
        %v9108 = vunpack.c.l.b16 %v9092
        %v9109 = vunpack.c.l.b16 %v9093
        %v9110 = vunpack.c.l.b16 %v9094
        %v9111 = vunpack.c.l.b16 %v9095
        %v9112 = vunpack.c.l.b16 %v9096
        %v9113 = vunpack.c.l.b16 %v9097
        %v9114 = vunpack.c.l.b16 %v9098
        %v9115 = vunpack.c.l.b16 %v9099
        %v9116 = vpack.c.b16 %v9109, %v9108
        %v9117 = vpack.c.b16 %v9111, %v9110
        %v9118 = vpack.c.b16 %v9113, %v9112
        %v9119 = vpack.c.b16 %v9115, %v9114
        %v9125 = vsel %vm8807, %v9069, 0
        %v9128 = vsel %vm8807, %v9072, 0
        %v9131 = vsel %vm8807, %v9075, 0
        %v9134 = vsel %vm8807, %v9078, 0
        %v9137 = vsel %vm8807, %v9081, 0
        %v9140 = vsel %vm8807, %v9084, 0
        %v9143 = vsel %vm8807, %v9087, 0
        %v9146 = vsel %vm8807, %v9090, 0
        %9148 = vmatprep.subr.bf16.mxu0 0
        %9149 = vmatpush1.bf16.msra.mxu0 %v9116
        %9150 = vmatprep.subr.bf16.mxu0 0
        %9151 = vmatpush1.bf16.msra.mxu0 %v9117
        %9152 = vmatprep.subr.bf16.mxu0 0
        %9153 = vmatpush1.bf16.msra.mxu0 %v9118
        %9154 = vmatprep.subr.bf16.mxu0 0
        %9155 = vmatpush1.bf16.msra.mxu0 %v9119
        %9156 = vmatprep.subr.bf16.mxu0 0
        %9157 = vmatpush1.bf16.msra.mxu0 0
        %9158 = vmatprep.subr.bf16.mxu0 0
        %9159 = vmatpush1.bf16.msra.mxu0 0
        %9160 = vmatprep.subr.bf16.mxu0 0
        %9161 = vmatpush1.bf16.msra.mxu0 0
        %9162 = vmatprep.subr.bf16.mxu0 0
        %9163 = vmatpush1.bf16.msra.mxu0 0
        %9164 = vmatprep.subr.bf16.mxu0 0
        %9165 = vmatpush1.bf16.msra.mxu0 0
        %9166 = vmatprep.subr.bf16.mxu0 0
        %9167 = vmatpush1.bf16.msra.mxu0 0
        %9168 = vmatprep.subr.bf16.mxu0 0
        %9169 = vmatpush1.bf16.msra.mxu0 0
        %9170 = vmatprep.subr.bf16.mxu0 0
        %9171 = vmatpush1.bf16.msra.mxu0 0
        %9172 = vmatprep.subr.bf16.mxu0 0
        %9173 = vmatpush1.bf16.msra.mxu0 0
        %9174 = vmatprep.subr.bf16.mxu0 0
        %9175 = vmatpush1.bf16.msra.mxu0 0
        %9176 = vmatprep.subr.bf16.mxu0 0
        %9177 = vmatpush1.bf16.msra.mxu0 0
        %9178 = vmatprep.subr.bf16.mxu0 0
        %9179 = vmatpush1.bf16.msra.mxu0 0
        %9180 = vmatprep.mubr.bf16.mxu0 0
        %9181 = vmatmul.mubr.bf16.gmra.mrb[0].mxu0 %v9125
        %v9182 = vpop.f32.mrb[0].mxu0
        %v9183 = vadd.f32 0.0, %v9182
        %v9184 = vpop.f32.mrb[0].mxu0
        %v9185 = vpop.f32.mrb[0].mxu0
        %v9186 = vadd.f32 0.0, %v9185
        %v9187 = vpop.f32.mrb[0].mxu0
        %9188 = vmatprep.mubr.bf16.mxu0 0
        %9189 = vmatmul.mubr.bf16.gmra.mrb[0].mxu0 %v9128
        %v9190 = vpop.f32.mrb[0].mxu0
        %v9191 = vadd.f32 0.0, %v9190
        %v9192 = vpop.f32.mrb[0].mxu0
        %v9193 = vpop.f32.mrb[0].mxu0
        %v9194 = vadd.f32 0.0, %v9193
        %v9195 = vpop.f32.mrb[0].mxu0
        %9196 = vmatprep.mubr.bf16.mxu0 0
        %9197 = vmatmul.mubr.bf16.gmra.mrb[0].mxu0 %v9131
        %v9198 = vpop.f32.mrb[0].mxu0
        %v9199 = vadd.f32 0.0, %v9198
        %v9200 = vpop.f32.mrb[0].mxu0
        %v9201 = vpop.f32.mrb[0].mxu0
        %v9202 = vadd.f32 0.0, %v9201
        %v9203 = vpop.f32.mrb[0].mxu0
        %9204 = vmatprep.mubr.bf16.mxu0 0
        %9205 = vmatmul.mubr.bf16.gmra.mrb[0].mxu0 %v9134
        %v9206 = vpop.f32.mrb[0].mxu0
        %v9207 = vadd.f32 0.0, %v9206
        %v9208 = vpop.f32.mrb[0].mxu0
        %v9209 = vpop.f32.mrb[0].mxu0
        %v9210 = vadd.f32 0.0, %v9209
        %v9211 = vpop.f32.mrb[0].mxu0
        %9212 = vmatprep.mubr.bf16.mxu0 0
        %9213 = vmatmul.mubr.bf16.gmra.mrb[0].mxu0 %v9137
        %v9214 = vpop.f32.mrb[0].mxu0
        %v9215 = vadd.f32 0.0, %v9214
        %v9216 = vpop.f32.mrb[0].mxu0
        %v9217 = vpop.f32.mrb[0].mxu0
        %v9218 = vadd.f32 0.0, %v9217
        %v9219 = vpop.f32.mrb[0].mxu0
        %9220 = vmatprep.mubr.bf16.mxu0 0
        %9221 = vmatmul.mubr.bf16.gmra.mrb[0].mxu0 %v9140
        %v9222 = vpop.f32.mrb[0].mxu0
        %v9223 = vadd.f32 0.0, %v9222
        %v9224 = vpop.f32.mrb[0].mxu0
        %v9225 = vpop.f32.mrb[0].mxu0
        %v9226 = vadd.f32 0.0, %v9225
        %v9227 = vpop.f32.mrb[0].mxu0
        %9228 = vmatprep.mubr.bf16.mxu0 0
        %9229 = vmatmul.mubr.bf16.gmra.mrb[0].mxu0 %v9143
        %v9230 = vpop.f32.mrb[0].mxu0
        %v9231 = vadd.f32 0.0, %v9230
        %v9232 = vpop.f32.mrb[0].mxu0
        %v9233 = vpop.f32.mrb[0].mxu0
        %v9234 = vadd.f32 0.0, %v9233
        %v9235 = vpop.f32.mrb[0].mxu0
        %9236 = vmatprep.mubr.bf16.mxu0 0
        %9237 = vmatmul.mubr.bf16.gmra.mrb[0].mxu0 %v9146
        %v9238 = vpop.f32.mrb[0].mxu0
        %v9239 = vadd.f32 0.0, %v9238
        %v9240 = vpop.f32.mrb[0].mxu0
        %v9241 = vpop.f32.mrb[0].mxu0
        %v9242 = vadd.f32 0.0, %v9241
        %v9243 = vpop.f32.mrb[0].mxu0
        %9244 = vdwg.mxu0
        %v9245 = vadd.f32 %v9004, %v9183
        %v9246 = vadd.f32 %v9007, %v9186
        %v9247 = vadd.f32 %v9012, %v9191
        %v9248 = vadd.f32 %v9015, %v9194
        %v9249 = vadd.f32 %v9020, %v9199
        %v9250 = vadd.f32 %v9023, %v9202
        %v9251 = vadd.f32 %v9028, %v9207
        %v9252 = vadd.f32 %v9031, %v9210
        %v9253 = vadd.f32 %v9036, %v9215
        %v9254 = vadd.f32 %v9039, %v9218
        %v9255 = vadd.f32 %v9044, %v9223
        %v9256 = vadd.f32 %v9047, %v9226
        %v9257 = vadd.f32 %v9052, %v9231
        %v9258 = vadd.f32 %v9055, %v9234
        %v9259 = vadd.f32 %v9060, %v9239
        %v9260 = vadd.f32 %v9063, %v9242
        %v9261 = vld [vmem:[%s838 + $0x3] sm:$0x1]
        %v9262 = vlaneseq
        %v9263 = vshrl.u32 %v9262, 7
        %v9264 = vsub.s32 0, %v9263
        %v9265 = vrot.slane %v9261, %v9264
        %v9266 = vadd.f32 %v9245, %v9265
        %v9267 = vadd.f32 %v9246, %v9265
        %v9268 = vadd.f32 %v9247, %v9265
        %v9269 = vadd.f32 %v9248, %v9265
        %v9270 = vadd.f32 %v9249, %v9265
        %v9271 = vadd.f32 %v9250, %v9265
        %v9272 = vadd.f32 %v9251, %v9265
        %v9273 = vadd.f32 %v9252, %v9265
        %v9274 = vadd.f32 %v9253, %v9265
        %v9275 = vadd.f32 %v9254, %v9265
        %v9276 = vadd.f32 %v9255, %v9265
        %v9277 = vadd.f32 %v9256, %v9265
        %v9278 = vadd.f32 %v9257, %v9265
        %v9279 = vadd.f32 %v9258, %v9265
        %v9280 = vadd.f32 %v9259, %v9265
        %v9281 = vadd.f32 %v9260, %v9265
        %v9282 = vmul.f32 %v9266, %v8020
        %v9283 = vmul.f32 %v9267, %v8025
        %v9284 = vmul.f32 %v9268, %v8030
        %v9285 = vmul.f32 %v9269, %v8035
        %v9286 = vmul.f32 %v9270, %v8040
        %v9287 = vmul.f32 %v9271, %v8045
        %v9288 = vmul.f32 %v9272, %v8050
        %v9289 = vmul.f32 %v9273, %v8055
        %v9290 = vmul.f32 %v9274, %v8060
        %v9291 = vmul.f32 %v9275, %v8065
        %v9292 = vmul.f32 %v9276, %v8070
        %v9293 = vmul.f32 %v9277, %v8075
        %v9294 = vmul.f32 %v9278, %v8080
        %v9295 = vmul.f32 %v9279, %v8085
        %v9296 = vmul.f32 %v9280, %v8090
        %v9297 = vmul.f32 %v9281, %v8095
        %v9298 = vadd.f32 %v8001, %v9282
        %v9299 = vadd.f32 %v8002, %v9283
        %v9300 = vadd.f32 %v8003, %v9284
        %v9301 = vadd.f32 %v8004, %v9285
        %v9302 = vadd.f32 %v8005, %v9286
        %v9303 = vadd.f32 %v8006, %v9287
        %v9304 = vadd.f32 %v8007, %v9288
        %v9305 = vadd.f32 %v8008, %v9289
        %v9306 = vadd.f32 %v8009, %v9290
        %v9307 = vadd.f32 %v8010, %v9291
        %v9308 = vadd.f32 %v8011, %v9292
        %v9309 = vadd.f32 %v8012, %v9293
        %v9310 = vadd.f32 %v8013, %v9294
        %v9311 = vadd.f32 %v8014, %v9295
        %v9312 = vadd.f32 %v8015, %v9296
        %v9313 = vadd.f32 %v8016, %v9297
        %v9314 = vld [vmem:[%s838 + $0x4] sm:$0x1]
        %v9315 = vld [vmem:[%s838 + $0x5] sm:$0x1]
        %v9316 = vsel %vm1196, %v9298, 0.0
        %9317 = vadd.xlane.f32.xlu0 %v9316
        %v9318 = vpop.xlane.xlu0 %9317
        %v9319 = vsel %vm1196, %v9299, 0.0
        %9320 = vadd.xlane.f32.xlu0 %v9319
        %v9321 = vpop.xlane.xlu0 %9320
        %v9322 = vsel %vm1196, %v9300, 0.0
        %9323 = vadd.xlane.f32.xlu0 %v9322
        %v9324 = vpop.xlane.xlu0 %9323
        %v9325 = vsel %vm1196, %v9301, 0.0
        %9326 = vadd.xlane.f32.xlu0 %v9325
        %v9327 = vpop.xlane.xlu0 %9326
        %v9328 = vsel %vm1196, %v9302, 0.0
        %9329 = vadd.xlane.f32.xlu0 %v9328
        %v9330 = vpop.xlane.xlu0 %9329
        %v9331 = vsel %vm1196, %v9303, 0.0
        %9332 = vadd.xlane.f32.xlu0 %v9331
        %v9333 = vpop.xlane.xlu0 %9332
        %v9334 = vsel %vm1196, %v9304, 0.0
        %9335 = vadd.xlane.f32.xlu0 %v9334
        %v9336 = vpop.xlane.xlu0 %9335
        %v9337 = vsel %vm1196, %v9305, 0.0
        %9338 = vadd.xlane.f32.xlu0 %v9337
        %v9339 = vpop.xlane.xlu0 %9338
        %v9340 = vsel %vm1196, %v9306, 0.0
        %9341 = vadd.xlane.f32.xlu0 %v9340
        %v9342 = vpop.xlane.xlu0 %9341
        %v9343 = vsel %vm1196, %v9307, 0.0
        %9344 = vadd.xlane.f32.xlu0 %v9343
        %v9345 = vpop.xlane.xlu0 %9344
        %v9346 = vsel %vm1196, %v9308, 0.0
        %9347 = vadd.xlane.f32.xlu0 %v9346
        %v9348 = vpop.xlane.xlu0 %9347
        %v9349 = vsel %vm1196, %v9309, 0.0
        %9350 = vadd.xlane.f32.xlu0 %v9349
        %v9351 = vpop.xlane.xlu0 %9350
        %v9352 = vsel %vm1196, %v9310, 0.0
        %9353 = vadd.xlane.f32.xlu0 %v9352
        %v9354 = vpop.xlane.xlu0 %9353
        %v9355 = vsel %vm1196, %v9311, 0.0
        %9356 = vadd.xlane.f32.xlu0 %v9355
        %v9357 = vpop.xlane.xlu0 %9356
        %v9358 = vsel %vm1196, %v9312, 0.0
        %9359 = vadd.xlane.f32.xlu0 %v9358
        %v9360 = vpop.xlane.xlu0 %9359
        %v9361 = vsel %vm1196, %v9313, 0.0
        %9362 = vadd.xlane.f32.xlu0 %v9361
        %v9363 = vpop.xlane.xlu0 %9362
        %v9364 = vmul.f32 %v9318, %v7816
        %v9365 = vmul.f32 %v9321, %v7816
        %v9366 = vmul.f32 %v9324, %v7816
        %v9367 = vmul.f32 %v9327, %v7816
        %v9368 = vmul.f32 %v9330, %v7816
        %v9369 = vmul.f32 %v9333, %v7816
        %v9370 = vmul.f32 %v9336, %v7816
        %v9371 = vmul.f32 %v9339, %v7816
        %v9372 = vmul.f32 %v9342, %v7816
        %v9373 = vmul.f32 %v9345, %v7816
        %v9374 = vmul.f32 %v9348, %v7816
        %v9375 = vmul.f32 %v9351, %v7816
        %v9376 = vmul.f32 %v9354, %v7816
        %v9377 = vmul.f32 %v9357, %v7816
        %v9378 = vmul.f32 %v9360, %v7816
        %v9379 = vmul.f32 %v9363, %v7816
        %v9380 = vsub.f32 %v9298, %v9364
        %v9381 = vsub.f32 %v9299, %v9365
        %v9382 = vsub.f32 %v9300, %v9366
        %v9383 = vsub.f32 %v9301, %v9367
        %v9384 = vsub.f32 %v9302, %v9368
        %v9385 = vsub.f32 %v9303, %v9369
        %v9386 = vsub.f32 %v9304, %v9370
        %v9387 = vsub.f32 %v9305, %v9371
        %v9388 = vsub.f32 %v9306, %v9372
        %v9389 = vsub.f32 %v9307, %v9373
        %v9390 = vsub.f32 %v9308, %v9374
        %v9391 = vsub.f32 %v9309, %v9375
        %v9392 = vsub.f32 %v9310, %v9376
        %v9393 = vsub.f32 %v9311, %v9377
        %v9394 = vsub.f32 %v9312, %v9378
        %v9395 = vsub.f32 %v9313, %v9379
        %v9396 = vmul.f32 %v9380, %v9380
        %v9397 = vmul.f32 %v9381, %v9381
        %v9398 = vmul.f32 %v9382, %v9382
        %v9399 = vmul.f32 %v9383, %v9383
        %v9400 = vmul.f32 %v9384, %v9384
        %v9401 = vmul.f32 %v9385, %v9385
        %v9402 = vmul.f32 %v9386, %v9386
        %v9403 = vmul.f32 %v9387, %v9387
        %v9404 = vmul.f32 %v9388, %v9388
        %v9405 = vmul.f32 %v9389, %v9389
        %v9406 = vmul.f32 %v9390, %v9390
        %v9407 = vmul.f32 %v9391, %v9391
        %v9408 = vmul.f32 %v9392, %v9392
        %v9409 = vmul.f32 %v9393, %v9393
        %v9410 = vmul.f32 %v9394, %v9394
        %v9411 = vmul.f32 %v9395, %v9395
        %v9412 = vsel %vm1196, %v9396, 0.0
        %9413 = vadd.xlane.f32.xlu0 %v9412
        %v9414 = vpop.xlane.xlu0 %9413
        %v9415 = vsel %vm1196, %v9397, 0.0
        %9416 = vadd.xlane.f32.xlu0 %v9415
        %v9417 = vpop.xlane.xlu0 %9416
        %v9418 = vsel %vm1196, %v9398, 0.0
        %9419 = vadd.xlane.f32.xlu0 %v9418
        %v9420 = vpop.xlane.xlu0 %9419
        %v9421 = vsel %vm1196, %v9399, 0.0
        %9422 = vadd.xlane.f32.xlu0 %v9421
        %v9423 = vpop.xlane.xlu0 %9422
        %v9424 = vsel %vm1196, %v9400, 0.0
        %9425 = vadd.xlane.f32.xlu0 %v9424
        %v9426 = vpop.xlane.xlu0 %9425
        %v9427 = vsel %vm1196, %v9401, 0.0
        %9428 = vadd.xlane.f32.xlu0 %v9427
        %v9429 = vpop.xlane.xlu0 %9428
        %v9430 = vsel %vm1196, %v9402, 0.0
        %9431 = vadd.xlane.f32.xlu0 %v9430
        %v9432 = vpop.xlane.xlu0 %9431
        %v9433 = vsel %vm1196, %v9403, 0.0
        %9434 = vadd.xlane.f32.xlu0 %v9433
        %v9435 = vpop.xlane.xlu0 %9434
        %v9436 = vsel %vm1196, %v9404, 0.0
        %9437 = vadd.xlane.f32.xlu0 %v9436
        %v9438 = vpop.xlane.xlu0 %9437
        %v9439 = vsel %vm1196, %v9405, 0.0
        %9440 = vadd.xlane.f32.xlu0 %v9439
        %v9441 = vpop.xlane.xlu0 %9440
        %v9442 = vsel %vm1196, %v9406, 0.0
        %9443 = vadd.xlane.f32.xlu0 %v9442
        %v9444 = vpop.xlane.xlu0 %9443
        %v9445 = vsel %vm1196, %v9407, 0.0
        %9446 = vadd.xlane.f32.xlu0 %v9445
        %v9447 = vpop.xlane.xlu0 %9446
        %v9448 = vsel %vm1196, %v9408, 0.0
        %9449 = vadd.xlane.f32.xlu0 %v9448
        %v9450 = vpop.xlane.xlu0 %9449
        %v9451 = vsel %vm1196, %v9409, 0.0
        %9452 = vadd.xlane.f32.xlu0 %v9451
        %v9453 = vpop.xlane.xlu0 %9452
        %v9454 = vsel %vm1196, %v9410, 0.0
        %9455 = vadd.xlane.f32.xlu0 %v9454
        %v9456 = vpop.xlane.xlu0 %9455
        %v9457 = vsel %vm1196, %v9411, 0.0
        %9458 = vadd.xlane.f32.xlu0 %v9457
        %v9459 = vpop.xlane.xlu0 %9458
        %v9460 = vmul.f32 %v9414, %v7816
        %v9461 = vmul.f32 %v9417, %v7816
        %v9462 = vmul.f32 %v9420, %v7816
        %v9463 = vmul.f32 %v9423, %v7816
        %v9464 = vmul.f32 %v9426, %v7816
        %v9465 = vmul.f32 %v9429, %v7816
        %v9466 = vmul.f32 %v9432, %v7816
        %v9467 = vmul.f32 %v9435, %v7816
        %v9468 = vmul.f32 %v9438, %v7816
        %v9469 = vmul.f32 %v9441, %v7816
        %v9470 = vmul.f32 %v9444, %v7816
        %v9471 = vmul.f32 %v9447, %v7816
        %v9472 = vmul.f32 %v9450, %v7816
        %v9473 = vmul.f32 %v9453, %v7816
        %v9474 = vmul.f32 %v9456, %v7816
        %v9475 = vmul.f32 %v9459, %v7816
        %v9476 = vadd.f32 %v9460, 1e-05
        %v9477 = vadd.f32 %v9461, 1e-05
        %v9478 = vadd.f32 %v9462, 1e-05
        %v9479 = vadd.f32 %v9463, 1e-05
        %v9480 = vadd.f32 %v9464, 1e-05
        %v9481 = vadd.f32 %v9465, 1e-05
        %v9482 = vadd.f32 %v9466, 1e-05
        %v9483 = vadd.f32 %v9467, 1e-05
        %v9484 = vadd.f32 %v9468, 1e-05
        %v9485 = vadd.f32 %v9469, 1e-05
        %v9486 = vadd.f32 %v9470, 1e-05
        %v9487 = vadd.f32 %v9471, 1e-05
        %v9488 = vadd.f32 %v9472, 1e-05
        %v9489 = vadd.f32 %v9473, 1e-05
        %v9490 = vadd.f32 %v9474, 1e-05
        %v9491 = vadd.f32 %v9475, 1e-05
        %v9492 = vrsqrt.pop %v9476
        %v9493 = vrsqrt.pop %v9477
        %v9494 = vrsqrt.pop %v9478
        %v9495 = vrsqrt.pop %v9479
        %v9496 = vrsqrt.pop %v9480
        %v9497 = vrsqrt.pop %v9481
        %v9498 = vrsqrt.pop %v9482
        %v9499 = vrsqrt.pop %v9483
        %v9500 = vrsqrt.pop %v9484
        %v9501 = vrsqrt.pop %v9485
        %v9502 = vrsqrt.pop %v9486
        %v9503 = vrsqrt.pop %v9487
        %v9504 = vrsqrt.pop %v9488
        %v9505 = vrsqrt.pop %v9489
        %v9506 = vrsqrt.pop %v9490
        %v9507 = vrsqrt.pop %v9491
        %v9508 = vmul.f32 %v9380, %v9492
        %v9509 = vmul.f32 %v9381, %v9493
        %v9510 = vmul.f32 %v9382, %v9494
        %v9511 = vmul.f32 %v9383, %v9495
        %v9512 = vmul.f32 %v9384, %v9496
        %v9513 = vmul.f32 %v9385, %v9497
        %v9514 = vmul.f32 %v9386, %v9498
        %v9515 = vmul.f32 %v9387, %v9499
        %v9516 = vmul.f32 %v9388, %v9500
        %v9517 = vmul.f32 %v9389, %v9501
        %v9518 = vmul.f32 %v9390, %v9502
        %v9519 = vmul.f32 %v9391, %v9503
        %v9520 = vmul.f32 %v9392, %v9504
        %v9521 = vmul.f32 %v9393, %v9505
        %v9522 = vmul.f32 %v9394, %v9506
        %v9523 = vmul.f32 %v9395, %v9507
        %v9524 = vlaneseq
        %v9525 = vshrl.u32 %v9524, 7
        %v9526 = vsub.s32 0, %v9525
        %v9527 = vrot.slane %v9314, %v9526
        %v9528 = vmul.f32 %v9508, %v9527
        %v9529 = vmul.f32 %v9509, %v9527
        %v9530 = vmul.f32 %v9510, %v9527
        %v9531 = vmul.f32 %v9511, %v9527
        %v9532 = vmul.f32 %v9512, %v9527
        %v9533 = vmul.f32 %v9513, %v9527
        %v9534 = vmul.f32 %v9514, %v9527
        %v9535 = vmul.f32 %v9515, %v9527
        %v9536 = vmul.f32 %v9516, %v9527
        %v9537 = vmul.f32 %v9517, %v9527
        %v9538 = vmul.f32 %v9518, %v9527
        %v9539 = vmul.f32 %v9519, %v9527
        %v9540 = vmul.f32 %v9520, %v9527
        %v9541 = vmul.f32 %v9521, %v9527
        %v9542 = vmul.f32 %v9522, %v9527
        %v9543 = vmul.f32 %v9523, %v9527
        %v9544 = vlaneseq
        %v9545 = vshrl.u32 %v9544, 7
        %v9546 = vsub.s32 0, %v9545
        %v9547 = vrot.slane %v9315, %v9546
        %v9548 = vadd.f32 %v9528, %v9547
        %v9549 = vadd.f32 %v9529, %v9547
        %v9550 = vadd.f32 %v9530, %v9547
        %v9551 = vadd.f32 %v9531, %v9547
        %v9552 = vadd.f32 %v9532, %v9547
        %v9553 = vadd.f32 %v9533, %v9547
        %v9554 = vadd.f32 %v9534, %v9547
        %v9555 = vadd.f32 %v9535, %v9547
        %v9556 = vadd.f32 %v9536, %v9547
        %v9557 = vadd.f32 %v9537, %v9547
        %v9558 = vadd.f32 %v9538, %v9547
        %v9559 = vadd.f32 %v9539, %v9547
        %v9560 = vadd.f32 %v9540, %v9547
        %v9561 = vadd.f32 %v9541, %v9547
        %v9562 = vadd.f32 %v9542, %v9547
        %v9563 = vadd.f32 %v9543, %v9547
        %9564 = vst.msk [vmem:[#allocation2] sm:$0xff] %vm1196, %v9548
        %9565 = vst.msk [vmem:[#allocation2 + $0x8] sm:$0xff] %vm1196, %v9549
        %9566 = vst.msk [vmem:[#allocation2 + $0x10] sm:$0xff] %vm1196, %v9550
        %9567 = vst.msk [vmem:[#allocation2 + $0x18] sm:$0xff] %vm1196, %v9551
        %9568 = vst.msk [vmem:[#allocation2 + $0x20] sm:$0xff] %vm1196, %v9552
        %9569 = vst.msk [vmem:[#allocation2 + $0x28] sm:$0xff] %vm1196, %v9553
        %9570 = vst.msk [vmem:[#allocation2 + $0x30] sm:$0xff] %vm1196, %v9554
        %9571 = vst.msk [vmem:[#allocation2 + $0x38] sm:$0xff] %vm1196, %v9555
        %9572 = vst.msk [vmem:[#allocation2 + $0x40] sm:$0xff] %vm1196, %v9556
        %9573 = vst.msk [vmem:[#allocation2 + $0x48] sm:$0xff] %vm1196, %v9557
        %9574 = vst.msk [vmem:[#allocation2 + $0x50] sm:$0xff] %vm1196, %v9558
        %9575 = vst.msk [vmem:[#allocation2 + $0x58] sm:$0xff] %vm1196, %v9559
        %9576 = vst.msk [vmem:[#allocation2 + $0x60] sm:$0xff] %vm1196, %v9560
        %9577 = vst.msk [vmem:[#allocation2 + $0x68] sm:$0xff] %vm1196, %v9561
        %9578 = vst.msk [vmem:[#allocation2 + $0x70] sm:$0xff] %vm1196, %v9562
        %9579 = vst.msk [vmem:[#allocation2 + $0x78] sm:$0xff] %vm1196, %v9563
        %p9580 = scmp.eq.s32.totalorder %s46, 1
        // Predicated region
        $region145: #{text_encoder_forward.1} parent=79 // pred_check
          %p9581 = pneg %p9580
        $region146: #{text_encoder_forward.1} parent=79 // pred_check_branch
          %9583 = sbr.rel (%p9581) target = $region148
        $region147: #{text_encoder_forward.1} parent=79 // pred_region
          %v9584 = vmul.f32 %v9548, %v8020
          %v9585 = vmul.f32 %v9549, %v8025
          %v9586 = vmul.f32 %v9550, %v8030
          %v9587 = vmul.f32 %v9551, %v8035
          %v9588 = vmul.f32 %v9552, %v8040
          %v9589 = vmul.f32 %v9553, %v8045
          %v9590 = vmul.f32 %v9554, %v8050
          %v9591 = vmul.f32 %v9555, %v8055
          %v9592 = vmul.f32 %v9556, %v8060
          %v9593 = vmul.f32 %v9557, %v8065
          %v9594 = vmul.f32 %v9558, %v8070
          %v9595 = vmul.f32 %v9559, %v8075
          %v9596 = vmul.f32 %v9560, %v8080
          %v9597 = vmul.f32 %v9561, %v8085
          %v9598 = vmul.f32 %v9562, %v8090
          %v9599 = vmul.f32 %v9563, %v8095
          %9600 = vst.msk [vmem:[%s989] sm:$0xff] %vm1196, %v9584
          %9601 = vst.msk [vmem:[%s989 + $0x8] sm:$0xff] %vm1196, %v9585
          %9602 = vst.msk [vmem:[%s989 + $0x10] sm:$0xff] %vm1196, %v9586
          %9603 = vst.msk [vmem:[%s989 + $0x18] sm:$0xff] %vm1196, %v9587
          %9604 = vst.msk [vmem:[%s989 + $0x20] sm:$0xff] %vm1196, %v9588
          %9605 = vst.msk [vmem:[%s989 + $0x28] sm:$0xff] %vm1196, %v9589
          %9606 = vst.msk [vmem:[%s989 + $0x30] sm:$0xff] %vm1196, %v9590
          %9607 = vst.msk [vmem:[%s989 + $0x38] sm:$0xff] %vm1196, %v9591
          %9608 = vst.msk [vmem:[%s989 + $0x40] sm:$0xff] %vm1196, %v9592
          %9609 = vst.msk [vmem:[%s989 + $0x48] sm:$0xff] %vm1196, %v9593
          %9610 = vst.msk [vmem:[%s989 + $0x50] sm:$0xff] %vm1196, %v9594
          %9611 = vst.msk [vmem:[%s989 + $0x58] sm:$0xff] %vm1196, %v9595
          %9612 = vst.msk [vmem:[%s989 + $0x60] sm:$0xff] %vm1196, %v9596
          %9613 = vst.msk [vmem:[%s989 + $0x68] sm:$0xff] %vm1196, %v9597
          %9614 = vst.msk [vmem:[%s989 + $0x70] sm:$0xff] %vm1196, %v9598
          %9615 = vst.msk [vmem:[%s989 + $0x78] sm:$0xff] %vm1196, %v9599
          %v9616 = vpack.c.bf16 %v9585, %v9584
          %v9617 = vpack.c.bf16 %v9587, %v9586
          %v9618 = vpack.c.bf16 %v9589, %v9588
          %v9619 = vpack.c.bf16 %v9591, %v9590
          %v9620 = vpack.c.bf16 %v9593, %v9592
          %v9621 = vpack.c.bf16 %v9595, %v9594
          %v9622 = vpack.c.bf16 %v9597, %v9596
          %v9623 = vpack.c.bf16 %v9599, %v9598
          %v9624 = vld [vmem:[#allocation20] sm:$0xf]
          %v9625 = vld [vmem:[#allocation20 + $0x4] sm:$0xf]
          %v9626 = vld [vmem:[#allocation20 + $0x8] sm:$0xf]
          %v9627 = vld [vmem:[#allocation20 + $0xc] sm:$0xf]
          %v9628 = vld [vmem:[#allocation21] sm:$0x1]
          %v9630 = vlaneseq
          %v9631 = vshrl.u32 %v9630, 7
          %v9632 = vsub.s32 0, %v9631
          %v9633 = vrot.slane %v9628, %v9632
          %v9639 = vunpack.c.l.b16 %v9624
          %v9640 = vunpack.c.l.b16 %v9625
          %v9641 = vunpack.c.l.b16 %v9626
          %v9642 = vunpack.c.l.b16 %v9627
          %v9643 = vpack.c.b16 %v9640, %v9639
          %v9644 = vpack.c.b16 %v9642, %v9641
          %v9648 = vsel %vm1196, %v9616, 0
          %v9651 = vsel %vm1196, %v9617, 0
          %v9654 = vsel %vm1196, %v9618, 0
          %v9657 = vsel %vm1196, %v9619, 0
          %v9660 = vsel %vm1196, %v9620, 0
          %v9663 = vsel %vm1196, %v9621, 0
          %v9666 = vsel %vm1196, %v9622, 0
          %v9669 = vsel %vm1196, %v9623, 0
          %9671 = vmatprep.subr.bf16.mxu0 0
          %9672 = vmatpush1.bf16.msra.mxu0 %v9643
          %9673 = vmatprep.subr.bf16.mxu0 0
          %9674 = vmatpush1.bf16.msra.mxu0 %v9644
          %9675 = vmatprep.subr.bf16.mxu0 0
          %9676 = vmatpush1.bf16.msra.mxu0 0
          %9677 = vmatprep.subr.bf16.mxu0 0
          %9678 = vmatpush1.bf16.msra.mxu0 0
          %9679 = vmatprep.subr.bf16.mxu0 0
          %9680 = vmatpush1.bf16.msra.mxu0 0
          %9681 = vmatprep.subr.bf16.mxu0 0
          %9682 = vmatpush1.bf16.msra.mxu0 0
          %9683 = vmatprep.subr.bf16.mxu0 0
          %9684 = vmatpush1.bf16.msra.mxu0 0
          %9685 = vmatprep.subr.bf16.mxu0 0
          %9686 = vmatpush1.bf16.msra.mxu0 0
          %9687 = vmatprep.subr.bf16.mxu0 0
          %9688 = vmatpush1.bf16.msra.mxu0 0
          %9689 = vmatprep.subr.bf16.mxu0 0
          %9690 = vmatpush1.bf16.msra.mxu0 0
          %9691 = vmatprep.subr.bf16.mxu0 0
          %9692 = vmatpush1.bf16.msra.mxu0 0
          %9693 = vmatprep.subr.bf16.mxu0 0
          %9694 = vmatpush1.bf16.msra.mxu0 0
          %9695 = vmatprep.subr.bf16.mxu0 0
          %9696 = vmatpush1.bf16.msra.mxu0 0
          %9697 = vmatprep.subr.bf16.mxu0 0
          %9698 = vmatpush1.bf16.msra.mxu0 0
          %9699 = vmatprep.subr.bf16.mxu0 0
          %9700 = vmatpush1.bf16.msra.mxu0 0
          %9701 = vmatprep.subr.bf16.mxu0 0
          %9702 = vmatpush1.bf16.msra.mxu0 0
          %9703 = vmatprep.mubr.bf16.mxu0 0
          %9704 = vmatmul.mubr.bf16.gmra.mrb[0].mxu0 %v9648
          %v9705 = vpop.f32.mrb[0].mxu0
          %v9706 = vadd.f32 %v9633, %v9705
          %v9707 = vpop.f32.mrb[0].mxu0
          %v9708 = vpop.f32.mrb[0].mxu0
          %v9709 = vadd.f32 %v9633, %v9708
          %v9710 = vpop.f32.mrb[0].mxu0
          %9711 = vmatprep.mubr.bf16.mxu0 0
          %9712 = vmatmul.mubr.bf16.gmra.mrb[0].mxu0 %v9651
          %v9713 = vpop.f32.mrb[0].mxu0
          %v9714 = vadd.f32 %v9633, %v9713
          %v9715 = vpop.f32.mrb[0].mxu0
          %v9716 = vpop.f32.mrb[0].mxu0
          %v9717 = vadd.f32 %v9633, %v9716
          %v9718 = vpop.f32.mrb[0].mxu0
          %9719 = vmatprep.mubr.bf16.mxu0 0
          %9720 = vmatmul.mubr.bf16.gmra.mrb[0].mxu0 %v9654
          %v9721 = vpop.f32.mrb[0].mxu0
          %v9722 = vadd.f32 %v9633, %v9721
          %v9723 = vpop.f32.mrb[0].mxu0
          %v9724 = vpop.f32.mrb[0].mxu0
          %v9725 = vadd.f32 %v9633, %v9724
          %v9726 = vpop.f32.mrb[0].mxu0
          %9727 = vmatprep.mubr.bf16.mxu0 0
          %9728 = vmatmul.mubr.bf16.gmra.mrb[0].mxu0 %v9657
          %v9729 = vpop.f32.mrb[0].mxu0
          %v9730 = vadd.f32 %v9633, %v9729
          %v9731 = vpop.f32.mrb[0].mxu0
          %v9732 = vpop.f32.mrb[0].mxu0
          %v9733 = vadd.f32 %v9633, %v9732
          %v9734 = vpop.f32.mrb[0].mxu0
          %9735 = vmatprep.mubr.bf16.mxu0 0
          %9736 = vmatmul.mubr.bf16.gmra.mrb[0].mxu0 %v9660
          %v9737 = vpop.f32.mrb[0].mxu0
          %v9738 = vadd.f32 %v9633, %v9737
          %v9739 = vpop.f32.mrb[0].mxu0
          %v9740 = vpop.f32.mrb[0].mxu0
          %v9741 = vadd.f32 %v9633, %v9740
          %v9742 = vpop.f32.mrb[0].mxu0
          %9743 = vmatprep.mubr.bf16.mxu0 0
          %9744 = vmatmul.mubr.bf16.gmra.mrb[0].mxu0 %v9663
          %v9745 = vpop.f32.mrb[0].mxu0
          %v9746 = vadd.f32 %v9633, %v9745
          %v9747 = vpop.f32.mrb[0].mxu0
          %v9748 = vpop.f32.mrb[0].mxu0
          %v9749 = vadd.f32 %v9633, %v9748
          %v9750 = vpop.f32.mrb[0].mxu0
          %9751 = vmatprep.mubr.bf16.mxu0 0
          %9752 = vmatmul.mubr.bf16.gmra.mrb[0].mxu0 %v9666
          %v9753 = vpop.f32.mrb[0].mxu0
          %v9754 = vadd.f32 %v9633, %v9753
          %v9755 = vpop.f32.mrb[0].mxu0
          %v9756 = vpop.f32.mrb[0].mxu0
          %v9757 = vadd.f32 %v9633, %v9756
          %v9758 = vpop.f32.mrb[0].mxu0
          %9759 = vmatprep.mubr.bf16.mxu0 0
          %9760 = vmatmul.mubr.bf16.gmra.mrb[0].mxu0 %v9669
          %v9761 = vpop.f32.mrb[0].mxu0
          %v9762 = vadd.f32 %v9633, %v9761
          %v9763 = vpop.f32.mrb[0].mxu0
          %v9764 = vpop.f32.mrb[0].mxu0
          %v9765 = vadd.f32 %v9633, %v9764
          %v9766 = vpop.f32.mrb[0].mxu0
          %9767 = vdwg.mxu0
          %v9768 = vmul.f32 %v9706, %v8020
          %v9769 = vmul.f32 %v9709, %v8025
          %v9770 = vmul.f32 %v9714, %v8030
          %v9771 = vmul.f32 %v9717, %v8035
          %v9772 = vmul.f32 %v9722, %v8040
          %v9773 = vmul.f32 %v9725, %v8045
          %v9774 = vmul.f32 %v9730, %v8050
          %v9775 = vmul.f32 %v9733, %v8055
          %v9776 = vmul.f32 %v9738, %v8060
          %v9777 = vmul.f32 %v9741, %v8065
          %v9778 = vmul.f32 %v9746, %v8070
          %v9779 = vmul.f32 %v9749, %v8075
          %v9780 = vmul.f32 %v9754, %v8080
          %v9781 = vmul.f32 %v9757, %v8085
          %v9782 = vmul.f32 %v9762, %v8090
          %v9783 = vmul.f32 %v9765, %v8095
          %9784 = vst [vmem:[%s996] sm:$0xff] %v9768
          %9785 = vst [vmem:[%s996 + $0x8] sm:$0xff] %v9769
          %9786 = vst [vmem:[%s996 + $0x10] sm:$0xff] %v9770
          %9787 = vst [vmem:[%s996 + $0x18] sm:$0xff] %v9771
          %9788 = vst [vmem:[%s996 + $0x20] sm:$0xff] %v9772
          %9789 = vst [vmem:[%s996 + $0x28] sm:$0xff] %v9773
          %9790 = vst [vmem:[%s996 + $0x30] sm:$0xff] %v9774
          %9791 = vst [vmem:[%s996 + $0x38] sm:$0xff] %v9775
          %9792 = vst [vmem:[%s996 + $0x40] sm:$0xff] %v9776
          %9793 = vst [vmem:[%s996 + $0x48] sm:$0xff] %v9777
          %9794 = vst [vmem:[%s996 + $0x50] sm:$0xff] %v9778
          %9795 = vst [vmem:[%s996 + $0x58] sm:$0xff] %v9779
          %9796 = vst [vmem:[%s996 + $0x60] sm:$0xff] %v9780
          %9797 = vst [vmem:[%s996 + $0x68] sm:$0xff] %v9781
          %9798 = vst [vmem:[%s996 + $0x70] sm:$0xff] %v9782
          %9799 = vst [vmem:[%s996 + $0x78] sm:$0xff] %v9783
        $region148: #{text_encoder_forward.1} parent=79 // pred_fallthru
          _
        %s9800 = sand.u32 %s436, 1
        %s9801 = scalar_lea.sflag [#allocation5], %s9800
        %s9802 = sand.u32 %s436, 1
        %s9803 = smul.addr %s9802, 128
        %s9804 = scalar_lea.vmem [#allocation22], %s9803
        %s9805 = sand.u32 %s462, 1
        %s9806 = scalar_lea.sflag [#allocation24], %s9805
        %s9807 = sand.u32 %s462, 1
        %s9808 = smul.addr %s9807, 128
        %s9809 = scalar_lea.vmem [#allocation23], %s9808
        // Predicated region
        $region149: #{text_encoder_forward.1} parent=79 // pred_check
          %p9810 = pneg %p446
        $region150: #{text_encoder_forward.1} parent=79 // pred_check_branch
          %9812 = sbr.rel (%p9810) target = $region152
        $region151: #{text_encoder_forward.1} parent=79 // pred_region
          %s9814 = ssub.s32 2048, 2048
          %9815 = vsyncadd %s9801, %s9814
          %s9816 = smul.addr %s45, 16
          %s9817 = smul.addr %s9816, 128
          %s9818 = scalar_lea.hbm %s15, %s9817
          %s9819 = sshll.u32 %s9804, 4
          %s9820 = int_to_ptr.vmem [resolvable:$true] %s9819
          %9825 = dma.vmem_to_hbm [thread:$0]  %s9820, 2048, %s9818, %s9801, 128, 128, 8
        $region152: #{text_encoder_forward.1} parent=79 // pred_fallthru
          _
        // Predicated region
        $region153: #{text_encoder_forward.1} parent=79 // pred_check
          %p9826 = pneg %p472
        $region154: #{text_encoder_forward.1} parent=79 // pred_check_branch
          %9828 = sbr.rel (%p9826) target = $region156
        $region155: #{text_encoder_forward.1} parent=79 // pred_region
          %s9830 = ssub.s32 2048, 2048
          %9831 = vsyncadd %s9806, %s9830
          %s9832 = smul.addr %s45, 16
          %s9833 = smul.addr %s9832, 128
          %s9834 = scalar_lea.hbm %s16, %s9833
          %s9835 = sshll.u32 %s9809, 4
          %s9836 = int_to_ptr.vmem [resolvable:$true] %s9835
          %9841 = dma.vmem_to_hbm [thread:$0]  %s9836, 2048, %s9834, %s9806, 128, 128, 8
        $region156: #{text_encoder_forward.1} parent=79 // pred_fallthru
          _
      $region80: #{text_encoder_forward.1} parent=5 // pred_fallthru
        _
      %p9842 = scmp.le.s32.totalorder 2, %s36
      // Predicated region
      $region157: #{text_encoder_forward.1} parent=5 // pred_check
        %p9843 = pneg %p9842
      $region158: #{text_encoder_forward.1} parent=5 // pred_check_branch
        %9845 = sbr.rel (%p9843) target = $region160
      $region159: #{text_encoder_forward.1} parent=5 // pred_region
        %s9846 = ssub.s32 %s36, 2
        // Predicated region
        $region161: #{text_encoder_forward.1} parent=159 // pred_check
          %p9847 = pneg %p452
        $region162: #{text_encoder_forward.1} parent=159 // pred_check_branch
          %9849 = sbr.rel (%p9847) target = $region164
        $region163: #{text_encoder_forward.1} parent=159 // pred_region
          %s9850 = sand.u32 %s437, 1
          %s9851 = scalar_lea.sflag [#allocation5], %s9850
          %s9852 = sand.u32 %s437, 1
          %s9853 = smul.addr %s9852, 128
          %s9854 = scalar_lea.vmem [#allocation22], %s9853
          %9855 = dma.done %s9851, 2048
        $region164: #{text_encoder_forward.1} parent=159 // pred_fallthru
          _
        // Predicated region
        $region165: #{text_encoder_forward.1} parent=159 // pred_check
          %p9856 = pneg %p478
        $region166: #{text_encoder_forward.1} parent=159 // pred_check_branch
          %9858 = sbr.rel (%p9856) target = $region168
        $region167: #{text_encoder_forward.1} parent=159 // pred_region
          %s9859 = sand.u32 %s463, 1
          %s9860 = scalar_lea.sflag [#allocation24], %s9859
          %s9861 = sand.u32 %s463, 1
          %s9862 = smul.addr %s9861, 128
          %s9863 = scalar_lea.vmem [#allocation23], %s9862
          %9864 = dma.done %s9860, 2048
        $region168: #{text_encoder_forward.1} parent=159 // pred_fallthru
          _
      $region160: #{text_encoder_forward.1} parent=5 // pred_fallthru
        _
    $region6: #{text_encoder_forward.1} parent=1 // loop_footer
      %s40 = sadd.s32 1, %s36
    $region7: #{text_encoder_forward.1} parent=1 // loop_footer_branch
      %35 = sbr.rel target = $region3
    $region8: #{text_encoder_forward.1} parent=1 // loop_exit
      _
    %9865 = vsyncpa [#allocation4], 1
    %s9866 = scalar_lea.sflag [#allocation4], 1
    %9867 = vsyncpa %s9866, 1
    %9868 = vsyncpa [#allocation7], 1
    %s9869 = scalar_lea.sflag [#allocation7], 1
    %9870 = vsyncpa %s9869, 1
    %9871 = vsyncpa [#allocation10], 1
    %9872 = vsyncpa [#allocation5], 1
    %s9873 = scalar_lea.sflag [#allocation5], 1
    %9874 = vsyncpa %s9873, 1
    %9875 = vsyncpa [#allocation24], 1
    %s9876 = scalar_lea.sflag [#allocation24], 1
    %9877 = vsyncpa %s9876, 1

</llo_original>
